<compile_context>
chip_gen: v7x
topology: tpu7x:2x2x1
jax: 0.10.0
libtpu: 0.0.40
codegen_flags: <defaults>
</compile_context>

<pallas_src>
import functools

import jax
import jax.numpy as jnp
from jax.experimental import pallas as pl
from jax.experimental.pallas import tpu as pltpu

MXU_DTYPE = jnp.bfloat16   # MXU operand dtype and intermediate storage dtype
BN_EPS = 1e-5
ROW_TILE = 1024            # row tile for mem-bound elementwise / reduction kernels


# ----------------------------- Pallas kernels ------------------------------

def bn_stats_kernel(x_ref, sum_ref, sq_ref, *, m_total, tm):
    """Per-channel sum / sum-of-squares, accumulated across the row grid axis."""
    i = pl.program_id(0)

    @pl.when(i == 0)
    def _():
        sum_ref[...] = jnp.zeros_like(sum_ref)
        sq_ref[...] = jnp.zeros_like(sq_ref)

    x = x_ref[...].astype(jnp.float32)                                 # (tm, C)
    rows = jax.lax.broadcasted_iota(jnp.int32, (tm, 1), 0) + i * tm
    x = jnp.where(rows < m_total, x, 0.0)                              # mask ragged tail
    sum_ref[...] += jnp.sum(x, axis=0, keepdims=True)
    sq_ref[...] += jnp.sum(x * x, axis=0, keepdims=True)


def conv_bn_taps_kernel(xph_ref, w_ref, sc_ref, sh_ref, b_ref,
                        o_ref, sum_ref, sq_ref, *,
                        taps, tho, wo, stride, pad, h_in, w_in,
                        apply_bn, apply_relu):
    """k*k conv as a sum of per-tap MXU matmuls over unit-stride phase windows,
    with the preceding BN*scale+shift (+ReLU, +padding mask) fused as a prologue
    and the per-channel sum / sum-of-squares of the output emitted as epilogue
    accumulators (grid: (image, Cout-tile, out-row-tile); row axis innermost).

    xph_ref: (ss, Hs, Ws, Cin)  polyphase view of one padded image (bf16)
    w_ref:   (k*k, Cin, TCo)    per-tap weights (bf16)
    sc_ref:  (1, 1, Cin) f32    fused-BN scale   (unused if apply_bn=False)
    sh_ref:  (1, 1, Cin) f32    fused-BN shift
    b_ref:   (1, TCo) f32       conv bias
    o_ref:   (1, tho*Wo, TCo)   bf16 output row slab
    sum_ref: (1, 1, TCo) f32    per-channel sum  (accumulated over row tiles)
    sq_ref:  (1, 1, TCo) f32    per-channel sum of squares
    """
    r = pl.program_id(2)
    h0 = r * tho
    cin = xph_ref.shape[-1]
    tco = o_ref.shape[-1]

    acc = jnp.zeros((tho * wo, tco), jnp.float32)
    if pad > 0:
        oh = jax.lax.broadcasted_iota(jnp.int32, (tho, wo, 1), 0) + h0
        ow = jax.lax.broadcasted_iota(jnp.int32, (tho, wo, 1), 1)

    for t, (g, dh, dw, kh, kw) in enumerate(taps):
        win = xph_ref[g, pl.ds(h0 + dh, tho), pl.ds(dw, wo), :]        # (tho, wo, Cin)
        if apply_bn or apply_relu or pad > 0:
            wf = win.astype(jnp.float32)
            if apply_bn:
                wf = wf * sc_ref[...] + sh_ref[...]
            if apply_relu:
                wf = jnp.maximum(wf, 0.0)
            if pad > 0:
                # PyTorch pads with zeros AFTER BN/ReLU; mask the halo so the
                # fused prologue does not turn padding into relu(shift) != 0.
                ph = oh * stride + kh
                pw = ow * stride + kw
                valid = ((ph >= pad) & (ph < pad + h_in)
                         & (pw >= pad) & (pw < pad + w_in))
                wf = jnp.where(valid, wf, 0.0)
            win = wf.astype(MXU_DTYPE)
        else:
            win = win.astype(MXU_DTYPE)
        a = win.reshape(tho * wo, cin)          # value-level, sublane-aligned when wo%8==0
        acc = acc + jnp.dot(a, w_ref[t], preferred_element_type=jnp.float32)

    y = acc + b_ref[...]                                               # (tho*wo, TCo) f32
    o_ref[0] = y.astype(o_ref.dtype)

    @pl.when(r == 0)
    def _():
        sum_ref[...] = jnp.zeros_like(sum_ref)
        sq_ref[...] = jnp.zeros_like(sq_ref)

    sum_ref[...] += jnp.sum(y, axis=0, keepdims=True)[None]
    sq_ref[...] += jnp.sum(y * y, axis=0, keepdims=True)[None]


def se_pool_kernel(h_ref, s_ref, sc_ref, sh_ref, y_ref, pooled_ref, *, m_img, tm):
    """y = h2 + bns(skip) written once (bf16) + global-average-pool accumulator."""
    m = pl.program_id(1)

    @pl.when(m == 0)
    def _():
        pooled_ref[...] = jnp.zeros_like(pooled_ref)

    y = (h_ref[0].astype(jnp.float32)
         + (s_ref[0].astype(jnp.float32) * sc_ref[...] + sh_ref[...]))  # (tm, C)
    y_ref[0] = y.astype(y_ref.dtype)
    rows = jax.lax.broadcasted_iota(jnp.int32, (tm, 1), 0) + m * tm
    ym = jnp.where(rows < m_img, y, 0.0)                                # mask ragged tail
    pooled_ref[...] += (jnp.sum(ym, axis=0, keepdims=True) * (1.0 / m_img))[None]


def se_scale_kernel(pooled_ref, w1_ref, w2_ref, y_ref, o_ref, gate_ref):
    """gate = sigmoid(relu(pool @ W1) @ W2) computed once per image (pl.when),
    then out = y * gate, tiled over rows (y is read only once, in bf16)."""
    @pl.when(pl.program_id(1) == 0)
    def _():
        mid = jnp.dot(pooled_ref[0], w1_ref[...], preferred_element_type=jnp.float32)
        mid = jnp.maximum(mid, 0.0)
        z = jnp.dot(mid, w2_ref[...], preferred_element_type=jnp.float32)
        gate_ref[...] = 1.0 / (1.0 + jnp.exp(-z))                       # exact sigmoid

    o_ref[0] = (y_ref[0].astype(jnp.float32) * gate_ref[...]).astype(o_ref.dtype)


# ------------------------------ wrappers ------------------------------------

def bn_stats(x2d):
    """Per-channel mean / biased variance of a flattened (M, C) activation.
    The C<128 path is lane-folded to a 128-wide layout (lane-dense vregs)."""
    m, c = x2d.shape
    fold = 1
    if c < 128 and 128 % c == 0 and m % (128 // c) == 0:
        fold = 128 // c
    xw = x2d.reshape(m // fold, c * fold)
    mw, cw = xw.shape
    tm = min(mw, ROW_TILE)
    s, q = pl.pallas_call(
        functools.partial(bn_stats_kernel, m_total=mw, tm=tm),
        grid=(pl.cdiv(mw, tm),),
        in_specs=[pl.BlockSpec((tm, cw), lambda i: (i, 0))],
        out_specs=(pl.BlockSpec((1, cw), lambda i: (0, 0)),
                   pl.BlockSpec((1, cw), lambda i: (0, 0))),
        out_shape=(jax.ShapeDtypeStruct((1, cw), jnp.float32),
                   jax.ShapeDtypeStruct((1, cw), jnp.float32)),
        compiler_params=pltpu.CompilerParams(dimension_semantics=("arbitrary",)),
    )(xw)
    if fold > 1:
        s = s.reshape(fold, c).sum(0, keepdims=True)
        q = q.reshape(fold, c).sum(0, keepdims=True)
    mean = s / m
    var = jnp.maximum(q / m - mean * mean, 0.0)      # biased (training-mode) variance
    return mean, var


def bn_scale_shift(mean, var, gamma, beta, eps=BN_EPS):
    scale = gamma.reshape(1, -1) * jax.lax.rsqrt(var + eps)
    shift = beta.reshape(1, -1) - mean * scale
    return scale, shift


def _pick_out_row_tile(ho, wo, tco):
    """Keep the f32 accumulator block ~<=2 MiB and the flattened row slab
    sublane-aligned; creates extra (parallel) grid steps on large maps."""
    budget_rows = max(1, (2 * 1024 * 1024) // max(1, wo * tco * 4))
    if ho <= budget_rows:
        return ho
    tho = ho
    for t in range(min(budget_rows, ho - 1), 0, -1):
        if ho % t == 0 and (t * wo) % 16 == 0:
            tho = t
            break
    return tho


def conv2d_bn(x_nhwc, w_oihw, bias, *, stride, ksize, padding,
              bn_scale=None, bn_shift=None, relu=False):
    """Conv (polyphase, multi-tap MXU matmuls) with fused BN/ReLU prologue and
    per-channel sum/sumsq epilogue.

    Returns (out(N, Ho*Wo, Cout) bf16, ch_sum(1,Cout) f32, ch_sq(1,Cout) f32, Ho, Wo)."""
    n, h, w, cin = x_nhwc.shape
    cout = w_oihw.shape[0]
    ho = (h + 2 * padding - ksize) // stride + 1
    wo = (w + 2 * padding - ksize) // stride + 1

    if ksize == 1:
        xph = x_nhwc[:, ::stride, ::stride, :]
        ss, hs, ws = 1, xph.shape[1], xph.shape[2]
        xph = xph.reshape(n, hs, ws, cin)
        taps = ((0, 0, 0, 0, 0),)
    else:
        s = stride
        hp, wp = h + 2 * padding, w + 2 * padding
        hp2 = pl.cdiv(hp, s) * s
        wp2 = pl.cdiv(wp, s) * s
        xp = jnp.pad(x_nhwc, ((0, 0),
                              (padding, padding + hp2 - hp),
                              (padding, padding + wp2 - wp),
                              (0, 0)))
        hs, ws, ss = hp2 // s, wp2 // s, s * s
        xph = xp.reshape(n, hs, s, ws, s, cin).transpose(0, 2, 4, 1, 3, 5)
        xph = xph.reshape(n * ss, hs, ws, cin)
        # tap (kh, kw): phase g = (kh%s)*s + (kw%s), unit-stride offset (kh//s, kw//s)
        taps = tuple(((kh % s) * s + (kw % s), kh // s, kw // s, kh, kw)
                     for kh in range(ksize) for kw in range(ksize))
        assert hs >= ho + max(t[1] for t in taps)
        assert ws >= wo + max(t[2] for t in taps)

    xph = xph.astype(MXU_DTYPE)
    wt = jnp.transpose(w_oihw, (2, 3, 1, 0)).reshape(ksize * ksize, cin, cout)
    wt = wt.astype(MXU_DTYPE)
    b2 = bias.reshape(1, cout).astype(jnp.float32)

    apply_bn = bn_scale is not None
    if apply_bn:
        sc3 = bn_scale.reshape(1, 1, cin).astype(jnp.float32)
        sh3 = bn_shift.reshape(1, 1, cin).astype(jnp.float32)
    else:
        sc3 = jnp.ones((1, 1, cin), jnp.float32)
        sh3 = jnp.zeros((1, 1, cin), jnp.float32)

    if cout % 256 == 0:
        tco = 256                                # 256-wide MXU on v6e/v7x
    elif cout % 128 == 0:
        tco = 128
    else:
        tco = cout
    tho = _pick_out_row_tile(ho, wo, tco)
    rt = ho // tho
    ct = cout // tco

    # Scoped-VMEM limit sized from the actual blocks (v5e default is only 16 MiB).
    per_img_in = (xph.size // n) * xph.dtype.itemsize
    w_block = ksize * ksize * cin * tco * wt.dtype.itemsize
    o_block = tho * wo * tco * 2
    small = cin * 8 + tco * 4 + 2 * tco * 4
    need = 2 * (per_img_in + w_block + o_block + small) + tho * wo * tco * 4 + (4 << 20)
    vmem_limit = int(min(64 << 20, max(32 << 20, need)))

    out, ch_sum, ch_sq = pl.pallas_call(
        functools.partial(conv_bn_taps_kernel, taps=taps, tho=tho, wo=wo,
                          stride=stride, pad=padding, h_in=h, w_in=w,
                          apply_bn=apply_bn, apply_relu=relu),
        grid=(n, ct, rt),
        in_specs=[pl.BlockSpec((ss, hs, ws, cin), lambda i, j, r: (i, 0, 0, 0)),
                  pl.BlockSpec((ksize * ksize, cin, tco), lambda i, j, r: (0, 0, j)),
                  pl.BlockSpec((1, 1, cin), lambda i, j, r: (0, 0, 0)),
                  pl.BlockSpec((1, 1, cin), lambda i, j, r: (0, 0, 0)),
                  pl.BlockSpec((1, tco), lambda i, j, r: (0, j))],
        out_specs=(pl.BlockSpec((1, tho * wo, tco), lambda i, j, r: (i, r, j)),
                   pl.BlockSpec((1, 1, tco), lambda i, j, r: (i, 0, j)),
                   pl.BlockSpec((1, 1, tco), lambda i, j, r: (i, 0, j))),
        out_shape=(jax.ShapeDtypeStruct((n, ho * wo, cout), MXU_DTYPE),
                   jax.ShapeDtypeStruct((n, 1, cout), jnp.float32),
                   jax.ShapeDtypeStruct((n, 1, cout), jnp.float32)),
        compiler_params=pltpu.CompilerParams(
            dimension_semantics=("parallel", "parallel", "arbitrary"),
            vmem_limit_bytes=vmem_limit),
    )(xph, wt, sc3, sh3, b2)

    ch_sum = jnp.sum(ch_sum, axis=0).reshape(1, cout)
    ch_sq = jnp.sum(ch_sq, axis=0).reshape(1, cout)
    return out, ch_sum, ch_sq, ho, wo


def se_residual(h2, skip, bns_scale, bns_shift, w1t, w2t):
    """SE attention over (h2 + bns(skip)); the shortcut BN apply is fused in,
    and the fused sum y is written once (bf16) and re-read once."""
    n, m_img, c = h2.shape
    hidden = w1t.shape[1]
    tm = min(m_img, ROW_TILE)
    mt = pl.cdiv(m_img, tm)
    sem = pltpu.CompilerParams(dimension_semantics=("parallel", "arbitrary"))

    y, pooled = pl.pallas_call(
        functools.partial(se_pool_kernel, m_img=m_img, tm=tm),
        grid=(n, mt),
        in_specs=[pl.BlockSpec((1, tm, c), lambda i, j: (i, j, 0)),
                  pl.BlockSpec((1, tm, c), lambda i, j: (i, j, 0)),
                  pl.BlockSpec((1, c), lambda i, j: (0, 0)),
                  pl.BlockSpec((1, c), lambda i, j: (0, 0))],
        out_specs=(pl.BlockSpec((1, tm, c), lambda i, j: (i, j, 0)),
                   pl.BlockSpec((1, 1, c), lambda i, j: (i, 0, 0))),
        out_shape=(jax.ShapeDtypeStruct((n, m_img, c), MXU_DTYPE),
                   jax.ShapeDtypeStruct((n, 1, c), jnp.float32)),
        compiler_params=sem,
    )(h2, skip, bns_scale, bns_shift)

    out = pl.pallas_call(
        se_scale_kernel,
        grid=(n, mt),
        in_specs=[pl.BlockSpec((1, 1, c), lambda i, j: (i, 0, 0)),
                  pl.BlockSpec((c, hidden), lambda i, j: (0, 0)),
                  pl.BlockSpec((hidden, c), lambda i, j: (0, 0)),
                  pl.BlockSpec((1, tm, c), lambda i, j: (i, j, 0))],
        out_specs=pl.BlockSpec((1, tm, c), lambda i, j: (i, j, 0)),
        out_shape=jax.ShapeDtypeStruct((n, m_img, c), jnp.float32),
        scratch_shapes=[pltpu.VMEM((1, c), jnp.float32)],
        compiler_params=sem,
    )(pooled, w1t.astype(jnp.float32), w2t.astype(jnp.float32), y)
    return out


# ------------------------------ module forward -------------------------------

def init_params(key, in_c, out_c, r=8):
    ks = jax.random.split(key, 7)
    hidden = out_c // r
    return {
        "bn1_g": jnp.ones((in_c,), jnp.float32),
        "bn1_b": jnp.zeros((in_c,), jnp.float32),
        "conv1_w": 0.05 * jax.random.normal(ks[0], (out_c, in_c, 3, 3), jnp.float32),
        "conv1_b": 0.01 * jax.random.normal(ks[1], (out_c,), jnp.float32),
        "bn2_g": jnp.ones((out_c,), jnp.float32),
        "bn2_b": jnp.zeros((out_c,), jnp.float32),
        "conv2_w": 0.05 * jax.random.normal(ks[2], (out_c, out_c, 3, 3), jnp.float32),
        "conv2_b": 0.01 * jax.random.normal(ks[3], (out_c,), jnp.float32),
        "convs_w": 0.05 * jax.random.normal(ks[4], (out_c, in_c, 1, 1), jnp.float32),
        "convs_b": jnp.zeros((out_c,), jnp.float32),
        "bns_g": jnp.ones((out_c,), jnp.float32),
        "bns_b": jnp.zeros((out_c,), jnp.float32),
        "se_w1": 0.1 * jax.random.normal(ks[5], (hidden, out_c), jnp.float32),  # Linear(C, C//r)
        "se_w2": 0.1 * jax.random.normal(ks[6], (out_c, hidden), jnp.float32),  # Linear(C//r, C)
    }


def resnet_block_forward(x_nchw, params, stride):
    x = jnp.transpose(x_nchw, (0, 2, 3, 1))                  # NCHW -> NHWC (module boundary)
    n, h, w, in_c = x.shape
    out_c = params["conv1_w"].shape[0]

    # BN1 statistics over the raw input: the only standalone stats pass left.
    m1, v1 = bn_stats(x.reshape(n * h * w, in_c))
    sc1, sh1 = bn_scale_shift(m1, v1, params["bn1_g"], params["bn1_b"])

    # --- c1 branch: [BN1+ReLU fused] Conv3x3(s) -> [BN2+ReLU fused] Conv3x3 --
    h1, h1_sum, h1_sq, ho, wo = conv2d_bn(
        x, params["conv1_w"], params["conv1_b"],
        stride=stride, ksize=3, padding=1,
        bn_scale=sc1, bn_shift=sh1, relu=True)

    m_out = n * ho * wo
    mean2 = h1_sum / m_out
    var2 = jnp.maximum(h1_sq / m_out - mean2 * mean2, 0.0)
    sc2, sh2 = bn_scale_shift(mean2, var2, params["bn2_g"], params["bn2_b"])

    h2, _, _, _, _ = conv2d_bn(
        h1.reshape(n, ho, wo, out_c), params["conv2_w"], params["conv2_b"],
        stride=1, ksize=3, padding=1,
        bn_scale=sc2, bn_shift=sh2, relu=True)

    # --- c2 branch (shortcut): Conv1x1(s); its BN apply is fused into SE ------
    s0, s_sum, s_sq, _, _ = conv2d_bn(
        x, params["convs_w"], params["convs_b"],
        stride=stride, ksize=1, padding=0)
    means = s_sum / m_out
    vars_ = jnp.maximum(s_sq / m_out - means * means, 0.0)
    scs, shs = bn_scale_shift(means, vars_, params["bns_g"], params["bns_b"])

    # --- Squeeze-Excitation over (h2 + bns(s0)) --------------------------------
    out = se_residual(h2, s0, scs, shs,
                      jnp.transpose(params["se_w1"]),          # (C, hidden)
                      jnp.transpose(params["se_w2"]))          # (hidden, C)

    out = out.reshape(n, ho, wo, out_c)
    return jnp.transpose(out, (0, 3, 1, 2))                    # NHWC -> NCHW


# ------------------------------ reference (pure JAX) --------------------------

def reference_forward(x_nchw, params, stride):
    x = x_nchw.astype(jnp.float32)

    def bn(t, g, b):
        mean = t.mean(axis=(0, 2, 3), keepdims=True)
        var = t.var(axis=(0, 2, 3), keepdims=True)              # biased, training-mode
        return ((t - mean) * jax.lax.rsqrt(var + BN_EPS)
                * g.reshape(1, -1, 1, 1) + b.reshape(1, -1, 1, 1))

    def conv(t, w, b, s, p):
        y = jax.lax.conv_general_dilated(
            t, w, (s, s), ((p, p), (p, p)),
            dimension_numbers=("NCHW", "OIHW", "NCHW"))
        return y + b.reshape(1, -1, 1, 1)

    a = jnp.maximum(bn(x, params["bn1_g"], params["bn1_b"]), 0.0)
    h = conv(a, params["conv1_w"], params["conv1_b"], stride, 1)
    a2 = jnp.maximum(bn(h, params["bn2_g"], params["bn2_b"]), 0.0)
    h2 = conv(a2, params["conv2_w"], params["conv2_b"], 1, 1)
    s0 = bn(conv(x, params["convs_w"], params["convs_b"], stride, 0),
            params["bns_g"], params["bns_b"])
    y = h2 + s0
    pooled = y.mean(axis=(2, 3))                                 # (N, C)
    mid = jnp.maximum(pooled @ params["se_w1"].T, 0.0)           # (N, hidden)
    gate = jax.nn.sigmoid(mid @ params["se_w2"].T)               # (N, C)
    return y * gate[:, :, None, None]


if __name__ == "__main__":
    in_c, out_c, stride = 64, 128, 2
    N, H, W = 2, 16, 16

    key = jax.random.PRNGKey(0)
    k_x, k_p = jax.random.split(key)
    x = jax.random.normal(k_x, (N, in_c, H, W), jnp.float32)     # NCHW like PyTorch
    params = init_params(k_p, in_c, out_c)

    fwd = jax.jit(functools.partial(resnet_block_forward, stride=stride))
    out = jax.block_until_ready(fwd(x, params))

    expected = (N, out_c, H // stride, W // stride)
    assert out.shape == expected, (out.shape, expected)
    assert bool(jnp.all(jnp.isfinite(out)))

    ref = reference_forward(x, params, stride)
    err = float(jnp.max(jnp.abs(out - ref)))
    assert err < 0.25, f"max abs error vs f32 reference too large: {err}"

    print("KERNEL_OK")
</pallas_src>

<mosaic_0001>
module attributes {stable_mosaic.version = 11 : i64} {
  func.func @conv_bn_taps_kernel(%arg0: i32, %arg1: i32, %arg2: i32, %arg3: memref<1x8x8x64xbf16, #tpu.memory_space<vmem>>, %arg4: memref<1x64x128xbf16, #tpu.memory_space<vmem>>, %arg5: memref<1x1x64xf32, #tpu.memory_space<vmem>>, %arg6: memref<1x1x64xf32, #tpu.memory_space<vmem>>, %arg7: memref<1x128xf32, #tpu.memory_space<vmem>>, %arg8: memref<1x64x128xbf16, #tpu.memory_space<vmem>>, %arg9: memref<1x1x128xf32, #tpu.memory_space<vmem>>, %arg10: memref<1x1x128xf32, #tpu.memory_space<vmem>>) attributes {dimension_semantics = [#tpu.dimension_semantics<parallel>, #tpu.dimension_semantics<parallel>, #tpu.dimension_semantics<arbitrary>], iteration_bounds = array<i64: 2, 1, 1>, scalar_prefetch = 0 : i64, scratch_operands = 0 : i64, tpu.core_type = #tpu.core_type<tc>, window_params = [{transform_indices = @transform_0, window_bounds = array<i64: 1, 8, 8, 64>}, {transform_indices = @transform_1, window_bounds = array<i64: 1, 64, 128>}, {pipeline_mode = #tpu.pipeline_mode<synchronous>, transform_indices = @transform_2, window_bounds = array<i64: 1, 1, 64>}, {pipeline_mode = #tpu.pipeline_mode<synchronous>, transform_indices = @transform_3, window_bounds = array<i64: 1, 1, 64>}, {transform_indices = @transform_4, window_bounds = array<i64: 1, 128>}, {transform_indices = @transform_5, window_bounds = array<i64: 1, 64, 128>}, {transform_indices = @transform_6, window_bounds = array<i64: 1, 1, 128>}, {transform_indices = @transform_7, window_bounds = array<i64: 1, 1, 128>}]} {
    %c8_i32 = arith.constant 8 : i32
    %0 = arith.muli %arg2, %c8_i32 : i32
    %cst = arith.constant 0.000000e+00 : f32
    %1 = vector.broadcast %cst : f32 to vector<64x128xf32>
    %c0_i32 = arith.constant 0 : i32
    %2 = arith.addi %0, %c0_i32 : i32
    %c0 = arith.constant 0 : index
    %3 = arith.index_cast %2 : i32 to index
    %c0_0 = arith.constant 0 : index
    %c0_1 = arith.constant 0 : index
    %4 = vector.load %arg3[%c0, %3, %c0_0, %c0_1] : memref<1x8x8x64xbf16, #tpu.memory_space<vmem>>, vector<1x8x8x64xbf16>
    %5 = vector.shape_cast %4 : vector<1x8x8x64xbf16> to vector<8x8x64xbf16>
    %6 = vector.shape_cast %5 : vector<8x8x64xbf16> to vector<64x64xbf16>
    %c0_2 = arith.constant 0 : index
    %c0_3 = arith.constant 0 : index
    %c0_4 = arith.constant 0 : index
    %7 = vector.load %arg4[%c0_2, %c0_3, %c0_4] : memref<1x64x128xbf16, #tpu.memory_space<vmem>>, vector<1x64x128xbf16>
    %8 = vector.shape_cast %7 : vector<1x64x128xbf16> to vector<64x128xbf16>
    %cst_5 = arith.constant dense<0.000000e+00> : vector<64x128xf32>
    %9 = tpu.matmul %6, %8, %cst_5 {dimension_numbers = #tpu.dot_dimension_numbers<[1], [0], [0], [1], [0, 0, 1, 1], [], []>} : vector<64x64xbf16>, vector<64x128xbf16>, vector<64x128xf32> -> vector<64x128xf32>
    %10 = arith.addf %1, %9 : vector<64x128xf32>
    %c0_6 = arith.constant 0 : index
    %c0_7 = arith.constant 0 : index
    %11 = vector.load %arg7[%c0_6, %c0_7] : memref<1x128xf32, #tpu.memory_space<vmem>>, vector<1x128xf32>
    %12 = vector.broadcast %11 : vector<1x128xf32> to vector<64x128xf32>
    %13 = arith.addf %10, %12 : vector<64x128xf32>
    %14 = arith.truncf %13 : vector<64x128xf32> to vector<64x128xbf16>
    %c0_8 = arith.constant 0 : index
    %c0_9 = arith.constant 0 : index
    %c0_10 = arith.constant 0 : index
    %15 = vector.load %arg8[%c0_8, %c0_9, %c0_10] : memref<1x64x128xbf16, #tpu.memory_space<vmem>>, vector<1x64x128xbf16>
    %16 = vector.shape_cast %15 : vector<1x64x128xbf16> to vector<64x128xbf16>
    %17 = vector.shape_cast %14 : vector<64x128xbf16> to vector<1x64x128xbf16>
    tpu.vector_store %arg8[%c0_8, %c0_9, %c0_10], %17 {strides = array<i32>} : memref<1x64x128xbf16, #tpu.memory_space<vmem>>, vector<1x64x128xbf16>,
    %c0_i32_11 = arith.constant 0 : i32
    %18 = arith.cmpi eq, %arg2, %c0_i32_11 : i32
    %19 = arith.extui %18 : i1 to i32
    %c0_i32_12 = arith.constant 0 : i32
    %20 = arith.cmpi ne, %19, %c0_i32_12 : i32
    scf.if %20 {
      %cst_27 = arith.constant 0.000000e+00 : f32
      %34 = vector.broadcast %cst_27 : f32 to vector<1x1x128xf32>
      %c0_28 = arith.constant 0 : index
      %c0_29 = arith.constant 0 : index
      %c0_30 = arith.constant 0 : index
      %35 = vector.load %arg9[%c0_28, %c0_29, %c0_30] : memref<1x1x128xf32, #tpu.memory_space<vmem>>, vector<1x1x128xf32>
      tpu.vector_store %arg9[%c0_28, %c0_29, %c0_30], %34 {strides = array<i32>} : memref<1x1x128xf32, #tpu.memory_space<vmem>>, vector<1x1x128xf32>,
      %cst_31 = arith.constant 0.000000e+00 : f32
      %36 = vector.broadcast %cst_31 : f32 to vector<1x1x128xf32>
      %c0_32 = arith.constant 0 : index
      %c0_33 = arith.constant 0 : index
      %c0_34 = arith.constant 0 : index
      %37 = vector.load %arg10[%c0_32, %c0_33, %c0_34] : memref<1x1x128xf32, #tpu.memory_space<vmem>>, vector<1x1x128xf32>
      tpu.vector_store %arg10[%c0_32, %c0_33, %c0_34], %36 {strides = array<i32>} : memref<1x1x128xf32, #tpu.memory_space<vmem>>, vector<1x1x128xf32>,
    } else {
    }
    %c0_13 = arith.constant 0 : index
    %c0_14 = arith.constant 0 : index
    %c0_15 = arith.constant 0 : index
    %21 = vector.load %arg9[%c0_13, %c0_14, %c0_15] : memref<1x1x128xf32, #tpu.memory_space<vmem>>, vector<1x1x128xf32>
    %cst_16 = arith.constant dense<0.000000e+00> : vector<128xf32>
    %22 = vector.multi_reduction <add>, %13, %cst_16 [0] : vector<64x128xf32> to vector<128xf32>
    %23 = vector.shape_cast %22 : vector<128xf32> to vector<1x128xf32>
    %24 = vector.shape_cast %23 : vector<1x128xf32> to vector<1x1x128xf32>
    %25 = arith.addf %21, %24 : vector<1x1x128xf32>
    %c0_17 = arith.constant 0 : index
    %c0_18 = arith.constant 0 : index
    %c0_19 = arith.constant 0 : index
    %26 = vector.load %arg9[%c0_17, %c0_18, %c0_19] : memref<1x1x128xf32, #tpu.memory_space<vmem>>, vector<1x1x128xf32>
    tpu.vector_store %arg9[%c0_17, %c0_18, %c0_19], %25 {strides = array<i32>} : memref<1x1x128xf32, #tpu.memory_space<vmem>>, vector<1x1x128xf32>,
    %c0_20 = arith.constant 0 : index
    %c0_21 = arith.constant 0 : index
    %c0_22 = arith.constant 0 : index
    %27 = vector.load %arg10[%c0_20, %c0_21, %c0_22] : memref<1x1x128xf32, #tpu.memory_space<vmem>>, vector<1x1x128xf32>
    %28 = arith.mulf %13, %13 : vector<64x128xf32>
    %cst_23 = arith.constant dense<0.000000e+00> : vector<128xf32>
    %29 = vector.multi_reduction <add>, %28, %cst_23 [0] : vector<64x128xf32> to vector<128xf32>
    %30 = vector.shape_cast %29 : vector<128xf32> to vector<1x128xf32>
    %31 = vector.shape_cast %30 : vector<1x128xf32> to vector<1x1x128xf32>
    %32 = arith.addf %27, %31 : vector<1x1x128xf32>
    %c0_24 = arith.constant 0 : index
    %c0_25 = arith.constant 0 : index
    %c0_26 = arith.constant 0 : index
    %33 = vector.load %arg10[%c0_24, %c0_25, %c0_26] : memref<1x1x128xf32, #tpu.memory_space<vmem>>, vector<1x1x128xf32>
    tpu.vector_store %arg10[%c0_24, %c0_25, %c0_26], %32 {strides = array<i32>} : memref<1x1x128xf32, #tpu.memory_space<vmem>>, vector<1x1x128xf32>,
    return
  }
  func.func @transform_0(%arg0: i32, %arg1: i32, %arg2: i32) -> (i32, i32, i32, i32) {
    %c0_i32 = arith.constant 0 : i32
    %c0_i32_0 = arith.constant 0 : i32
    %c0_i32_1 = arith.constant 0 : i32
    %c0_i32_2 = arith.constant 0 : i32
    return %arg0, %c0_i32, %c0_i32_0, %c0_i32_1 : i32, i32, i32, i32
  }
  func.func @transform_1(%arg0: i32, %arg1: i32, %arg2: i32) -> (i32, i32, i32) {
    %c0_i32 = arith.constant 0 : i32
    %c0_i32_0 = arith.constant 0 : i32
    %c0_i32_1 = arith.constant 0 : i32
    return %c0_i32, %c0_i32_0, %arg1 : i32, i32, i32
  }
  func.func @transform_2(%arg0: i32, %arg1: i32, %arg2: i32) -> (i32, i32, i32) {
    %c0_i32 = arith.constant 0 : i32
    %c0_i32_0 = arith.constant 0 : i32
    %c0_i32_1 = arith.constant 0 : i32
    %c0_i32_2 = arith.constant 0 : i32
    return %c0_i32, %c0_i32_0, %c0_i32_1 : i32, i32, i32
  }
  func.func @transform_3(%arg0: i32, %arg1: i32, %arg2: i32) -> (i32, i32, i32) {
    %c0_i32 = arith.constant 0 : i32
    %c0_i32_0 = arith.constant 0 : i32
    %c0_i32_1 = arith.constant 0 : i32
    %c0_i32_2 = arith.constant 0 : i32
    return %c0_i32, %c0_i32_0, %c0_i32_1 : i32, i32, i32
  }
  func.func @transform_4(%arg0: i32, %arg1: i32, %arg2: i32) -> (i32, i32) {
    %c0_i32 = arith.constant 0 : i32
    %c0_i32_0 = arith.constant 0 : i32
    return %c0_i32, %arg1 : i32, i32
  }
  func.func @transform_5(%arg0: i32, %arg1: i32, %arg2: i32) -> (i32, i32, i32) {
    %c0_i32 = arith.constant 0 : i32
    return %arg0, %arg2, %arg1 : i32, i32, i32
  }
  func.func @transform_6(%arg0: i32, %arg1: i32, %arg2: i32) -> (i32, i32, i32) {
    %c0_i32 = arith.constant 0 : i32
    %c0_i32_0 = arith.constant 0 : i32
    return %arg0, %c0_i32, %arg1 : i32, i32, i32
  }
  func.func @transform_7(%arg0: i32, %arg1: i32, %arg2: i32) -> (i32, i32, i32) {
    %c0_i32 = arith.constant 0 : i32
    %c0_i32_0 = arith.constant 0 : i32
    return %arg0, %c0_i32, %arg1 : i32, i32, i32
  }
}

module attributes {stable_mosaic.version = 11 : i64} {
  func.func @bn_stats_kernel(%arg0: i32, %arg1: memref<256x128xf32, #tpu.memory_space<vmem>>, %arg2: memref<1x128xf32, #tpu.memory_space<vmem>>, %arg3: memref<1x128xf32, #tpu.memory_space<vmem>>) attributes {dimension_semantics = [#tpu.dimension_semantics<arbitrary>], iteration_bounds = array<i64: 1>, scalar_prefetch = 0 : i64, scratch_operands = 0 : i64, tpu.core_type = #tpu.core_type<tc>, window_params = [{transform_indices = @transform_0, window_bounds = array<i64: 256, 128>}, {pipeline_mode = #tpu.pipeline_mode<synchronous>, transform_indices = @transform_1, window_bounds = array<i64: 1, 128>}, {pipeline_mode = #tpu.pipeline_mode<synchronous>, transform_indices = @transform_2, window_bounds = array<i64: 1, 128>}]} {
    %c0_i32 = arith.constant 0 : i32
    %0 = arith.cmpi eq, %arg0, %c0_i32 : i32
    %1 = arith.extui %0 : i1 to i32
    %c0_i32_0 = arith.constant 0 : i32
    %2 = arith.cmpi ne, %1, %c0_i32_0 : i32
    scf.if %2 {
      %cst_13 = arith.constant 0.000000e+00 : f32
      %25 = vector.broadcast %cst_13 : f32 to vector<1x128xf32>
      %c0_14 = arith.constant 0 : index
      %c0_15 = arith.constant 0 : index
      %26 = vector.load %arg2[%c0_14, %c0_15] : memref<1x128xf32, #tpu.memory_space<vmem>>, vector<1x128xf32>
      tpu.vector_store %arg2[%c0_14, %c0_15], %25 {strides = array<i32>} : memref<1x128xf32, #tpu.memory_space<vmem>>, vector<1x128xf32>,
      %cst_16 = arith.constant 0.000000e+00 : f32
      %27 = vector.broadcast %cst_16 : f32 to vector<1x128xf32>
      %c0_17 = arith.constant 0 : index
      %c0_18 = arith.constant 0 : index
      %28 = vector.load %arg3[%c0_17, %c0_18] : memref<1x128xf32, #tpu.memory_space<vmem>>, vector<1x128xf32>
      tpu.vector_store %arg3[%c0_17, %c0_18], %27 {strides = array<i32>} : memref<1x128xf32, #tpu.memory_space<vmem>>, vector<1x128xf32>,
    } else {
    }
    %c0 = arith.constant 0 : index
    %c0_1 = arith.constant 0 : index
    %3 = vector.load %arg1[%c0, %c0_1] : memref<256x128xf32, #tpu.memory_space<vmem>>, vector<256x128xf32>
    %4 = tpu.iota {dimensions = array<i32: 0>} : vector<256x1xi32>
    %c256_i32 = arith.constant 256 : i32
    %5 = arith.muli %arg0, %c256_i32 : i32
    %6 = vector.broadcast %5 : i32 to vector<256x1xi32>
    %7 = arith.addi %4, %6 : vector<256x1xi32>
    %c256_i32_2 = arith.constant 256 : i32
    %8 = vector.broadcast %c256_i32_2 : i32 to vector<256x1xi32>
    %9 = arith.cmpi slt, %7, %8 : vector<256x1xi32>
    %cst = arith.constant 0.000000e+00 : f32
    %10 = vector.shape_cast %9 : vector<256x1xi1> to vector<256x1xi1>
    %11 = vector.broadcast %10 : vector<256x1xi1> to vector<256x128xi1>
    %12 = vector.broadcast %cst : f32 to vector<256x128xf32>
    %13 = arith.select %11, %3, %12 : vector<256x128xi1>, vector<256x128xf32>
    %c0_3 = arith.constant 0 : index
    %c0_4 = arith.constant 0 : index
    %14 = vector.load %arg2[%c0_3, %c0_4] : memref<1x128xf32, #tpu.memory_space<vmem>>, vector<1x128xf32>
    %cst_5 = arith.constant dense<0.000000e+00> : vector<128xf32>
    %15 = vector.multi_reduction <add>, %13, %cst_5 [0] : vector<256x128xf32> to vector<128xf32>
    %16 = vector.shape_cast %15 : vector<128xf32> to vector<1x128xf32>
    %17 = arith.addf %14, %16 : vector<1x128xf32>
    %c0_6 = arith.constant 0 : index
    %c0_7 = arith.constant 0 : index
    %18 = vector.load %arg2[%c0_6, %c0_7] : memref<1x128xf32, #tpu.memory_space<vmem>>, vector<1x128xf32>
    tpu.vector_store %arg2[%c0_6, %c0_7], %17 {strides = array<i32>} : memref<1x128xf32, #tpu.memory_space<vmem>>, vector<1x128xf32>,
    %c0_8 = arith.constant 0 : index
    %c0_9 = arith.constant 0 : index
    %19 = vector.load %arg3[%c0_8, %c0_9] : memref<1x128xf32, #tpu.memory_space<vmem>>, vector<1x128xf32>
    %20 = arith.mulf %13, %13 : vector<256x128xf32>
    %cst_10 = arith.constant dense<0.000000e+00> : vector<128xf32>
    %21 = vector.multi_reduction <add>, %20, %cst_10 [0] : vector<256x128xf32> to vector<128xf32>
    %22 = vector.shape_cast %21 : vector<128xf32> to vector<1x128xf32>
    %23 = arith.addf %19, %22 : vector<1x128xf32>
    %c0_11 = arith.constant 0 : index
    %c0_12 = arith.constant 0 : index
    %24 = vector.load %arg3[%c0_11, %c0_12] : memref<1x128xf32, #tpu.memory_space<vmem>>, vector<1x128xf32>
    tpu.vector_store %arg3[%c0_11, %c0_12], %23 {strides = array<i32>} : memref<1x128xf32, #tpu.memory_space<vmem>>, vector<1x128xf32>,
    return
  }
  func.func @transform_0(%arg0: i32) -> (i32, i32) {
    %c0_i32 = arith.constant 0 : i32
    %c0_i32_0 = arith.constant 0 : i32
    return %arg0, %c0_i32 : i32, i32
  }
  func.func @transform_1(%arg0: i32) -> (i32, i32) {
    %c0_i32 = arith.constant 0 : i32
    %c0_i32_0 = arith.constant 0 : i32
    %c0_i32_1 = arith.constant 0 : i32
    return %c0_i32, %c0_i32_0 : i32, i32
  }
  func.func @transform_2(%arg0: i32) -> (i32, i32) {
    %c0_i32 = arith.constant 0 : i32
    %c0_i32_0 = arith.constant 0 : i32
    %c0_i32_1 = arith.constant 0 : i32
    return %c0_i32, %c0_i32_0 : i32, i32
  }
}

module attributes {stable_mosaic.version = 11 : i64} {
  func.func @conv_bn_taps_kernel(%arg0: i32, %arg1: i32, %arg2: i32, %arg3: memref<4x9x9x64xbf16, #tpu.memory_space<vmem>>, %arg4: memref<9x64x128xbf16, #tpu.memory_space<vmem>>, %arg5: memref<1x1x64xf32, #tpu.memory_space<vmem>>, %arg6: memref<1x1x64xf32, #tpu.memory_space<vmem>>, %arg7: memref<1x128xf32, #tpu.memory_space<vmem>>, %arg8: memref<1x64x128xbf16, #tpu.memory_space<vmem>>, %arg9: memref<1x1x128xf32, #tpu.memory_space<vmem>>, %arg10: memref<1x1x128xf32, #tpu.memory_space<vmem>>) attributes {dimension_semantics = [#tpu.dimension_semantics<parallel>, #tpu.dimension_semantics<parallel>, #tpu.dimension_semantics<arbitrary>], iteration_bounds = array<i64: 2, 1, 1>, scalar_prefetch = 0 : i64, scratch_operands = 0 : i64, tpu.core_type = #tpu.core_type<tc>, window_params = [{transform_indices = @transform_0, window_bounds = array<i64: 4, 9, 9, 64>}, {transform_indices = @transform_1, window_bounds = array<i64: 9, 64, 128>}, {pipeline_mode = #tpu.pipeline_mode<synchronous>, transform_indices = @transform_2, window_bounds = array<i64: 1, 1, 64>}, {pipeline_mode = #tpu.pipeline_mode<synchronous>, transform_indices = @transform_3, window_bounds = array<i64: 1, 1, 64>}, {transform_indices = @transform_4, window_bounds = array<i64: 1, 128>}, {transform_indices = @transform_5, window_bounds = array<i64: 1, 64, 128>}, {transform_indices = @transform_6, window_bounds = array<i64: 1, 1, 128>}, {transform_indices = @transform_7, window_bounds = array<i64: 1, 1, 128>}]} {
    %c8_i32 = arith.constant 8 : i32
    %0 = arith.muli %arg2, %c8_i32 : i32
    %cst = arith.constant 0.000000e+00 : f32
    %1 = vector.broadcast %cst : f32 to vector<64x128xf32>
    %2 = tpu.iota {dimensions = array<i32: 0>} : vector<8x8x1xi32>
    %3 = vector.broadcast %0 : i32 to vector<8x8x1xi32>
    %4 = arith.addi %2, %3 : vector<8x8x1xi32>
    %5 = tpu.iota {dimensions = array<i32: 1>} : vector<8x8x1xi32>
    %c0_i32 = arith.constant 0 : i32
    %6 = arith.addi %0, %c0_i32 : i32
    %c0 = arith.constant 0 : index
    %7 = arith.index_cast %6 : i32 to index
    %c0_0 = arith.constant 0 : index
    %c0_1 = arith.constant 0 : index
    %8 = vector.load %arg3[%c0, %7, %c0_0, %c0_1] : memref<4x9x9x64xbf16, #tpu.memory_space<vmem>>, vector<1x8x8x64xbf16>
    %9 = vector.shape_cast %8 : vector<1x8x8x64xbf16> to vector<8x8x64xbf16>
    %10 = arith.extf %9 : vector<8x8x64xbf16> to vector<8x8x64xf32>
    %c0_2 = arith.constant 0 : index
    %c0_3 = arith.constant 0 : index
    %c0_4 = arith.constant 0 : index
    %11 = vector.load %arg5[%c0_2, %c0_3, %c0_4] : memref<1x1x64xf32, #tpu.memory_space<vmem>>, vector<1x1x64xf32>
    %12 = vector.broadcast %11 : vector<1x1x64xf32> to vector<8x8x64xf32>
    %13 = arith.mulf %10, %12 : vector<8x8x64xf32>
    %c0_5 = arith.constant 0 : index
    %c0_6 = arith.constant 0 : index
    %c0_7 = arith.constant 0 : index
    %14 = vector.load %arg6[%c0_5, %c0_6, %c0_7] : memref<1x1x64xf32, #tpu.memory_space<vmem>>, vector<1x1x64xf32>
    %15 = vector.broadcast %14 : vector<1x1x64xf32> to vector<8x8x64xf32>
    %16 = arith.addf %13, %15 : vector<8x8x64xf32>
    %cst_8 = arith.constant 0.000000e+00 : f32
    %17 = vector.broadcast %cst_8 : f32 to vector<8x8x64xf32>
    %18 = arith.maximumf %16, %17 : vector<8x8x64xf32>
    %c2_i32 = arith.constant 2 : i32
    %19 = vector.broadcast %c2_i32 : i32 to vector<8x8x1xi32>
    %20 = arith.muli %4, %19 : vector<8x8x1xi32>
    %c0_i32_9 = arith.constant 0 : i32
    %21 = vector.broadcast %c0_i32_9 : i32 to vector<8x8x1xi32>
    %22 = arith.addi %20, %21 : vector<8x8x1xi32>
    %c2_i32_10 = arith.constant 2 : i32
    %23 = vector.broadcast %c2_i32_10 : i32 to vector<8x8x1xi32>
    %24 = arith.muli %5, %23 : vector<8x8x1xi32>
    %c0_i32_11 = arith.constant 0 : i32
    %25 = vector.broadcast %c0_i32_11 : i32 to vector<8x8x1xi32>
    %26 = arith.addi %24, %25 : vector<8x8x1xi32>
    %c1_i32 = arith.constant 1 : i32
    %27 = vector.broadcast %c1_i32 : i32 to vector<8x8x1xi32>
    %28 = arith.cmpi sge, %22, %27 : vector<8x8x1xi32>
    %c17_i32 = arith.constant 17 : i32
    %29 = vector.broadcast %c17_i32 : i32 to vector<8x8x1xi32>
    %30 = arith.cmpi slt, %22, %29 : vector<8x8x1xi32>
    %31 = arith.andi %28, %30 : vector<8x8x1xi1>
    %c1_i32_12 = arith.constant 1 : i32
    %32 = vector.broadcast %c1_i32_12 : i32 to vector<8x8x1xi32>
    %33 = arith.cmpi sge, %26, %32 : vector<8x8x1xi32>
    %34 = arith.andi %31, %33 : vector<8x8x1xi1>
    %c17_i32_13 = arith.constant 17 : i32
    %35 = vector.broadcast %c17_i32_13 : i32 to vector<8x8x1xi32>
    %36 = arith.cmpi slt, %26, %35 : vector<8x8x1xi32>
    %37 = arith.andi %34, %36 : vector<8x8x1xi1>
    %cst_14 = arith.constant 0.000000e+00 : f32
    %38 = vector.shape_cast %37 : vector<8x8x1xi1> to vector<8x8x1xi1>
    %39 = vector.broadcast %38 : vector<8x8x1xi1> to vector<8x8x64xi1>
    %40 = vector.broadcast %cst_14 : f32 to vector<8x8x64xf32>
    %41 = arith.select %39, %18, %40 : vector<8x8x64xi1>, vector<8x8x64xf32>
    %42 = arith.truncf %41 : vector<8x8x64xf32> to vector<8x8x64xbf16>
    %43 = vector.shape_cast %42 : vector<8x8x64xbf16> to vector<64x64xbf16>
    %c0_15 = arith.constant 0 : index
    %c0_16 = arith.constant 0 : index
    %c0_17 = arith.constant 0 : index
    %44 = vector.load %arg4[%c0_15, %c0_16, %c0_17] : memref<9x64x128xbf16, #tpu.memory_space<vmem>>, vector<1x64x128xbf16>
    %45 = vector.shape_cast %44 : vector<1x64x128xbf16> to vector<64x128xbf16>
    %cst_18 = arith.constant dense<0.000000e+00> : vector<64x128xf32>
    %46 = tpu.matmul %43, %45, %cst_18 {dimension_numbers = #tpu.dot_dimension_numbers<[1], [0], [0], [1], [0, 0, 1, 1], [], []>} : vector<64x64xbf16>, vector<64x128xbf16>, vector<64x128xf32> -> vector<64x128xf32>
    %47 = arith.addf %1, %46 : vector<64x128xf32>
    %c0_i32_19 = arith.constant 0 : i32
    %48 = arith.addi %0, %c0_i32_19 : i32
    %c1 = arith.constant 1 : index
    %49 = arith.index_cast %48 : i32 to index
    %c0_20 = arith.constant 0 : index
    %c0_21 = arith.constant 0 : index
    %50 = vector.load %arg3[%c1, %49, %c0_20, %c0_21] : memref<4x9x9x64xbf16, #tpu.memory_space<vmem>>, vector<1x8x8x64xbf16>
    %51 = vector.shape_cast %50 : vector<1x8x8x64xbf16> to vector<8x8x64xbf16>
    %52 = arith.extf %51 : vector<8x8x64xbf16> to vector<8x8x64xf32>
    %c0_22 = arith.constant 0 : index
    %c0_23 = arith.constant 0 : index
    %c0_24 = arith.constant 0 : index
    %53 = vector.load %arg5[%c0_22, %c0_23, %c0_24] : memref<1x1x64xf32, #tpu.memory_space<vmem>>, vector<1x1x64xf32>
    %54 = vector.broadcast %53 : vector<1x1x64xf32> to vector<8x8x64xf32>
    %55 = arith.mulf %52, %54 : vector<8x8x64xf32>
    %c0_25 = arith.constant 0 : index
    %c0_26 = arith.constant 0 : index
    %c0_27 = arith.constant 0 : index
    %56 = vector.load %arg6[%c0_25, %c0_26, %c0_27] : memref<1x1x64xf32, #tpu.memory_space<vmem>>, vector<1x1x64xf32>
    %57 = vector.broadcast %56 : vector<1x1x64xf32> to vector<8x8x64xf32>
    %58 = arith.addf %55, %57 : vector<8x8x64xf32>
    %cst_28 = arith.constant 0.000000e+00 : f32
    %59 = vector.broadcast %cst_28 : f32 to vector<8x8x64xf32>
    %60 = arith.maximumf %58, %59 : vector<8x8x64xf32>
    %c2_i32_29 = arith.constant 2 : i32
    %61 = vector.broadcast %c2_i32_29 : i32 to vector<8x8x1xi32>
    %62 = arith.muli %4, %61 : vector<8x8x1xi32>
    %c0_i32_30 = arith.constant 0 : i32
    %63 = vector.broadcast %c0_i32_30 : i32 to vector<8x8x1xi32>
    %64 = arith.addi %62, %63 : vector<8x8x1xi32>
    %c2_i32_31 = arith.constant 2 : i32
    %65 = vector.broadcast %c2_i32_31 : i32 to vector<8x8x1xi32>
    %66 = arith.muli %5, %65 : vector<8x8x1xi32>
    %c1_i32_32 = arith.constant 1 : i32
    %67 = vector.broadcast %c1_i32_32 : i32 to vector<8x8x1xi32>
    %68 = arith.addi %66, %67 : vector<8x8x1xi32>
    %c1_i32_33 = arith.constant 1 : i32
    %69 = vector.broadcast %c1_i32_33 : i32 to vector<8x8x1xi32>
    %70 = arith.cmpi sge, %64, %69 : vector<8x8x1xi32>
    %c17_i32_34 = arith.constant 17 : i32
    %71 = vector.broadcast %c17_i32_34 : i32 to vector<8x8x1xi32>
    %72 = arith.cmpi slt, %64, %71 : vector<8x8x1xi32>
    %73 = arith.andi %70, %72 : vector<8x8x1xi1>
    %c1_i32_35 = arith.constant 1 : i32
    %74 = vector.broadcast %c1_i32_35 : i32 to vector<8x8x1xi32>
    %75 = arith.cmpi sge, %68, %74 : vector<8x8x1xi32>
    %76 = arith.andi %73, %75 : vector<8x8x1xi1>
    %c17_i32_36 = arith.constant 17 : i32
    %77 = vector.broadcast %c17_i32_36 : i32 to vector<8x8x1xi32>
    %78 = arith.cmpi slt, %68, %77 : vector<8x8x1xi32>
    %79 = arith.andi %76, %78 : vector<8x8x1xi1>
    %cst_37 = arith.constant 0.000000e+00 : f32
    %80 = vector.shape_cast %79 : vector<8x8x1xi1> to vector<8x8x1xi1>
    %81 = vector.broadcast %80 : vector<8x8x1xi1> to vector<8x8x64xi1>
    %82 = vector.broadcast %cst_37 : f32 to vector<8x8x64xf32>
    %83 = arith.select %81, %60, %82 : vector<8x8x64xi1>, vector<8x8x64xf32>
    %84 = arith.truncf %83 : vector<8x8x64xf32> to vector<8x8x64xbf16>
    %85 = vector.shape_cast %84 : vector<8x8x64xbf16> to vector<64x64xbf16>
    %c1_38 = arith.constant 1 : index
    %c0_39 = arith.constant 0 : index
    %c0_40 = arith.constant 0 : index
    %86 = vector.load %arg4[%c1_38, %c0_39, %c0_40] : memref<9x64x128xbf16, #tpu.memory_space<vmem>>, vector<1x64x128xbf16>
    %87 = vector.shape_cast %86 : vector<1x64x128xbf16> to vector<64x128xbf16>
    %cst_41 = arith.constant dense<0.000000e+00> : vector<64x128xf32>
    %88 = tpu.matmul %85, %87, %cst_41 {dimension_numbers = #tpu.dot_dimension_numbers<[1], [0], [0], [1], [0, 0, 1, 1], [], []>} : vector<64x64xbf16>, vector<64x128xbf16>, vector<64x128xf32> -> vector<64x128xf32>
    %89 = arith.addf %47, %88 : vector<64x128xf32>
    %c0_i32_42 = arith.constant 0 : i32
    %90 = arith.addi %0, %c0_i32_42 : i32
    %c0_43 = arith.constant 0 : index
    %91 = arith.index_cast %90 : i32 to index
    %c1_44 = arith.constant 1 : index
    %c0_45 = arith.constant 0 : index
    %92 = vector.load %arg3[%c0_43, %91, %c1_44, %c0_45] : memref<4x9x9x64xbf16, #tpu.memory_space<vmem>>, vector<1x8x8x64xbf16>
    %93 = vector.shape_cast %92 : vector<1x8x8x64xbf16> to vector<8x8x64xbf16>
    %94 = arith.extf %93 : vector<8x8x64xbf16> to vector<8x8x64xf32>
    %c0_46 = arith.constant 0 : index
    %c0_47 = arith.constant 0 : index
    %c0_48 = arith.constant 0 : index
    %95 = vector.load %arg5[%c0_46, %c0_47, %c0_48] : memref<1x1x64xf32, #tpu.memory_space<vmem>>, vector<1x1x64xf32>
    %96 = vector.broadcast %95 : vector<1x1x64xf32> to vector<8x8x64xf32>
    %97 = arith.mulf %94, %96 : vector<8x8x64xf32>
    %c0_49 = arith.constant 0 : index
    %c0_50 = arith.constant 0 : index
    %c0_51 = arith.constant 0 : index
    %98 = vector.load %arg6[%c0_49, %c0_50, %c0_51] : memref<1x1x64xf32, #tpu.memory_space<vmem>>, vector<1x1x64xf32>
    %99 = vector.broadcast %98 : vector<1x1x64xf32> to vector<8x8x64xf32>
    %100 = arith.addf %97, %99 : vector<8x8x64xf32>
    %cst_52 = arith.constant 0.000000e+00 : f32
    %101 = vector.broadcast %cst_52 : f32 to vector<8x8x64xf32>
    %102 = arith.maximumf %100, %101 : vector<8x8x64xf32>
    %c2_i32_53 = arith.constant 2 : i32
    %103 = vector.broadcast %c2_i32_53 : i32 to vector<8x8x1xi32>
    %104 = arith.muli %4, %103 : vector<8x8x1xi32>
    %c0_i32_54 = arith.constant 0 : i32
    %105 = vector.broadcast %c0_i32_54 : i32 to vector<8x8x1xi32>
    %106 = arith.addi %104, %105 : vector<8x8x1xi32>
    %c2_i32_55 = arith.constant 2 : i32
    %107 = vector.broadcast %c2_i32_55 : i32 to vector<8x8x1xi32>
    %108 = arith.muli %5, %107 : vector<8x8x1xi32>
    %c2_i32_56 = arith.constant 2 : i32
    %109 = vector.broadcast %c2_i32_56 : i32 to vector<8x8x1xi32>
    %110 = arith.addi %108, %109 : vector<8x8x1xi32>
    %c1_i32_57 = arith.constant 1 : i32
    %111 = vector.broadcast %c1_i32_57 : i32 to vector<8x8x1xi32>
    %112 = arith.cmpi sge, %106, %111 : vector<8x8x1xi32>
    %c17_i32_58 = arith.constant 17 : i32
    %113 = vector.broadcast %c17_i32_58 : i32 to vector<8x8x1xi32>
    %114 = arith.cmpi slt, %106, %113 : vector<8x8x1xi32>
    %115 = arith.andi %112, %114 : vector<8x8x1xi1>
    %c1_i32_59 = arith.constant 1 : i32
    %116 = vector.broadcast %c1_i32_59 : i32 to vector<8x8x1xi32>
    %117 = arith.cmpi sge, %110, %116 : vector<8x8x1xi32>
    %118 = arith.andi %115, %117 : vector<8x8x1xi1>
    %c17_i32_60 = arith.constant 17 : i32
    %119 = vector.broadcast %c17_i32_60 : i32 to vector<8x8x1xi32>
    %120 = arith.cmpi slt, %110, %119 : vector<8x8x1xi32>
    %121 = arith.andi %118, %120 : vector<8x8x1xi1>
    %cst_61 = arith.constant 0.000000e+00 : f32
    %122 = vector.shape_cast %121 : vector<8x8x1xi1> to vector<8x8x1xi1>
    %123 = vector.broadcast %122 : vector<8x8x1xi1> to vector<8x8x64xi1>
    %124 = vector.broadcast %cst_61 : f32 to vector<8x8x64xf32>
    %125 = arith.select %123, %102, %124 : vector<8x8x64xi1>, vector<8x8x64xf32>
    %126 = arith.truncf %125 : vector<8x8x64xf32> to vector<8x8x64xbf16>
    %127 = vector.shape_cast %126 : vector<8x8x64xbf16> to vector<64x64xbf16>
    %c2 = arith.constant 2 : index
    %c0_62 = arith.constant 0 : index
    %c0_63 = arith.constant 0 : index
    %128 = vector.load %arg4[%c2, %c0_62, %c0_63] : memref<9x64x128xbf16, #tpu.memory_space<vmem>>, vector<1x64x128xbf16>
    %129 = vector.shape_cast %128 : vector<1x64x128xbf16> to vector<64x128xbf16>
    %cst_64 = arith.constant dense<0.000000e+00> : vector<64x128xf32>
    %130 = tpu.matmul %127, %129, %cst_64 {dimension_numbers = #tpu.dot_dimension_numbers<[1], [0], [0], [1], [0, 0, 1, 1], [], []>} : vector<64x64xbf16>, vector<64x128xbf16>, vector<64x128xf32> -> vector<64x128xf32>
    %131 = arith.addf %89, %130 : vector<64x128xf32>
    %c0_i32_65 = arith.constant 0 : i32
    %132 = arith.addi %0, %c0_i32_65 : i32
    %c2_66 = arith.constant 2 : index
    %133 = arith.index_cast %132 : i32 to index
    %c0_67 = arith.constant 0 : index
    %c0_68 = arith.constant 0 : index
    %134 = vector.load %arg3[%c2_66, %133, %c0_67, %c0_68] : memref<4x9x9x64xbf16, #tpu.memory_space<vmem>>, vector<1x8x8x64xbf16>
    %135 = vector.shape_cast %134 : vector<1x8x8x64xbf16> to vector<8x8x64xbf16>
    %136 = arith.extf %135 : vector<8x8x64xbf16> to vector<8x8x64xf32>
    %c0_69 = arith.constant 0 : index
    %c0_70 = arith.constant 0 : index
    %c0_71 = arith.constant 0 : index
    %137 = vector.load %arg5[%c0_69, %c0_70, %c0_71] : memref<1x1x64xf32, #tpu.memory_space<vmem>>, vector<1x1x64xf32>
    %138 = vector.broadcast %137 : vector<1x1x64xf32> to vector<8x8x64xf32>
    %139 = arith.mulf %136, %138 : vector<8x8x64xf32>
    %c0_72 = arith.constant 0 : index
    %c0_73 = arith.constant 0 : index
    %c0_74 = arith.constant 0 : index
    %140 = vector.load %arg6[%c0_72, %c0_73, %c0_74] : memref<1x1x64xf32, #tpu.memory_space<vmem>>, vector<1x1x64xf32>
    %141 = vector.broadcast %140 : vector<1x1x64xf32> to vector<8x8x64xf32>
    %142 = arith.addf %139, %141 : vector<8x8x64xf32>
    %cst_75 = arith.constant 0.000000e+00 : f32
    %143 = vector.broadcast %cst_75 : f32 to vector<8x8x64xf32>
    %144 = arith.maximumf %142, %143 : vector<8x8x64xf32>
    %c2_i32_76 = arith.constant 2 : i32
    %145 = vector.broadcast %c2_i32_76 : i32 to vector<8x8x1xi32>
    %146 = arith.muli %4, %145 : vector<8x8x1xi32>
    %c1_i32_77 = arith.constant 1 : i32
    %147 = vector.broadcast %c1_i32_77 : i32 to vector<8x8x1xi32>
    %148 = arith.addi %146, %147 : vector<8x8x1xi32>
    %c2_i32_78 = arith.constant 2 : i32
    %149 = vector.broadcast %c2_i32_78 : i32 to vector<8x8x1xi32>
    %150 = arith.muli %5, %149 : vector<8x8x1xi32>
    %c0_i32_79 = arith.constant 0 : i32
    %151 = vector.broadcast %c0_i32_79 : i32 to vector<8x8x1xi32>
    %152 = arith.addi %150, %151 : vector<8x8x1xi32>
    %c1_i32_80 = arith.constant 1 : i32
    %153 = vector.broadcast %c1_i32_80 : i32 to vector<8x8x1xi32>
    %154 = arith.cmpi sge, %148, %153 : vector<8x8x1xi32>
    %c17_i32_81 = arith.constant 17 : i32
    %155 = vector.broadcast %c17_i32_81 : i32 to vector<8x8x1xi32>
    %156 = arith.cmpi slt, %148, %155 : vector<8x8x1xi32>
    %157 = arith.andi %154, %156 : vector<8x8x1xi1>
    %c1_i32_82 = arith.constant 1 : i32
    %158 = vector.broadcast %c1_i32_82 : i32 to vector<8x8x1xi32>
    %159 = arith.cmpi sge, %152, %158 : vector<8x8x1xi32>
    %160 = arith.andi %157, %159 : vector<8x8x1xi1>
    %c17_i32_83 = arith.constant 17 : i32
    %161 = vector.broadcast %c17_i32_83 : i32 to vector<8x8x1xi32>
    %162 = arith.cmpi slt, %152, %161 : vector<8x8x1xi32>
    %163 = arith.andi %160, %162 : vector<8x8x1xi1>
    %cst_84 = arith.constant 0.000000e+00 : f32
    %164 = vector.shape_cast %163 : vector<8x8x1xi1> to vector<8x8x1xi1>
    %165 = vector.broadcast %164 : vector<8x8x1xi1> to vector<8x8x64xi1>
    %166 = vector.broadcast %cst_84 : f32 to vector<8x8x64xf32>
    %167 = arith.select %165, %144, %166 : vector<8x8x64xi1>, vector<8x8x64xf32>
    %168 = arith.truncf %167 : vector<8x8x64xf32> to vector<8x8x64xbf16>
    %169 = vector.shape_cast %168 : vector<8x8x64xbf16> to vector<64x64xbf16>
    %c3 = arith.constant 3 : index
    %c0_85 = arith.constant 0 : index
    %c0_86 = arith.constant 0 : index
    %170 = vector.load %arg4[%c3, %c0_85, %c0_86] : memref<9x64x128xbf16, #tpu.memory_space<vmem>>, vector<1x64x128xbf16>
    %171 = vector.shape_cast %170 : vector<1x64x128xbf16> to vector<64x128xbf16>
    %cst_87 = arith.constant dense<0.000000e+00> : vector<64x128xf32>
    %172 = tpu.matmul %169, %171, %cst_87 {dimension_numbers = #tpu.dot_dimension_numbers<[1], [0], [0], [1], [0, 0, 1, 1], [], []>} : vector<64x64xbf16>, vector<64x128xbf16>, vector<64x128xf32> -> vector<64x128xf32>
    %173 = arith.addf %131, %172 : vector<64x128xf32>
    %c0_i32_88 = arith.constant 0 : i32
    %174 = arith.addi %0, %c0_i32_88 : i32
    %c3_89 = arith.constant 3 : index
    %175 = arith.index_cast %174 : i32 to index
    %c0_90 = arith.constant 0 : index
    %c0_91 = arith.constant 0 : index
    %176 = vector.load %arg3[%c3_89, %175, %c0_90, %c0_91] : memref<4x9x9x64xbf16, #tpu.memory_space<vmem>>, vector<1x8x8x64xbf16>
    %177 = vector.shape_cast %176 : vector<1x8x8x64xbf16> to vector<8x8x64xbf16>
    %178 = arith.extf %177 : vector<8x8x64xbf16> to vector<8x8x64xf32>
    %c0_92 = arith.constant 0 : index
    %c0_93 = arith.constant 0 : index
    %c0_94 = arith.constant 0 : index
    %179 = vector.load %arg5[%c0_92, %c0_93, %c0_94] : memref<1x1x64xf32, #tpu.memory_space<vmem>>, vector<1x1x64xf32>
    %180 = vector.broadcast %179 : vector<1x1x64xf32> to vector<8x8x64xf32>
    %181 = arith.mulf %178, %180 : vector<8x8x64xf32>
    %c0_95 = arith.constant 0 : index
    %c0_96 = arith.constant 0 : index
    %c0_97 = arith.constant 0 : index
    %182 = vector.load %arg6[%c0_95, %c0_96, %c0_97] : memref<1x1x64xf32, #tpu.memory_space<vmem>>, vector<1x1x64xf32>
    %183 = vector.broadcast %182 : vector<1x1x64xf32> to vector<8x8x64xf32>
    %184 = arith.addf %181, %183 : vector<8x8x64xf32>
    %cst_98 = arith.constant 0.000000e+00 : f32
    %185 = vector.broadcast %cst_98 : f32 to vector<8x8x64xf32>
    %186 = arith.maximumf %184, %185 : vector<8x8x64xf32>
    %c2_i32_99 = arith.constant 2 : i32
    %187 = vector.broadcast %c2_i32_99 : i32 to vector<8x8x1xi32>
    %188 = arith.muli %4, %187 : vector<8x8x1xi32>
    %c1_i32_100 = arith.constant 1 : i32
    %189 = vector.broadcast %c1_i32_100 : i32 to vector<8x8x1xi32>
    %190 = arith.addi %188, %189 : vector<8x8x1xi32>
    %c2_i32_101 = arith.constant 2 : i32
    %191 = vector.broadcast %c2_i32_101 : i32 to vector<8x8x1xi32>
    %192 = arith.muli %5, %191 : vector<8x8x1xi32>
    %c1_i32_102 = arith.constant 1 : i32
    %193 = vector.broadcast %c1_i32_102 : i32 to vector<8x8x1xi32>
    %194 = arith.addi %192, %193 : vector<8x8x1xi32>
    %c1_i32_103 = arith.constant 1 : i32
    %195 = vector.broadcast %c1_i32_103 : i32 to vector<8x8x1xi32>
    %196 = arith.cmpi sge, %190, %195 : vector<8x8x1xi32>
    %c17_i32_104 = arith.constant 17 : i32
    %197 = vector.broadcast %c17_i32_104 : i32 to vector<8x8x1xi32>
    %198 = arith.cmpi slt, %190, %197 : vector<8x8x1xi32>
    %199 = arith.andi %196, %198 : vector<8x8x1xi1>
    %c1_i32_105 = arith.constant 1 : i32
    %200 = vector.broadcast %c1_i32_105 : i32 to vector<8x8x1xi32>
    %201 = arith.cmpi sge, %194, %200 : vector<8x8x1xi32>
    %202 = arith.andi %199, %201 : vector<8x8x1xi1>
    %c17_i32_106 = arith.constant 17 : i32
    %203 = vector.broadcast %c17_i32_106 : i32 to vector<8x8x1xi32>
    %204 = arith.cmpi slt, %194, %203 : vector<8x8x1xi32>
    %205 = arith.andi %202, %204 : vector<8x8x1xi1>
    %cst_107 = arith.constant 0.000000e+00 : f32
    %206 = vector.shape_cast %205 : vector<8x8x1xi1> to vector<8x8x1xi1>
    %207 = vector.broadcast %206 : vector<8x8x1xi1> to vector<8x8x64xi1>
    %208 = vector.broadcast %cst_107 : f32 to vector<8x8x64xf32>
    %209 = arith.select %207, %186, %208 : vector<8x8x64xi1>, vector<8x8x64xf32>
    %210 = arith.truncf %209 : vector<8x8x64xf32> to vector<8x8x64xbf16>
    %211 = vector.shape_cast %210 : vector<8x8x64xbf16> to vector<64x64xbf16>
    %c4 = arith.constant 4 : index
    %c0_108 = arith.constant 0 : index
    %c0_109 = arith.constant 0 : index
    %212 = vector.load %arg4[%c4, %c0_108, %c0_109] : memref<9x64x128xbf16, #tpu.memory_space<vmem>>, vector<1x64x128xbf16>
    %213 = vector.shape_cast %212 : vector<1x64x128xbf16> to vector<64x128xbf16>
    %cst_110 = arith.constant dense<0.000000e+00> : vector<64x128xf32>
    %214 = tpu.matmul %211, %213, %cst_110 {dimension_numbers = #tpu.dot_dimension_numbers<[1], [0], [0], [1], [0, 0, 1, 1], [], []>} : vector<64x64xbf16>, vector<64x128xbf16>, vector<64x128xf32> -> vector<64x128xf32>
    %215 = arith.addf %173, %214 : vector<64x128xf32>
    %c0_i32_111 = arith.constant 0 : i32
    %216 = arith.addi %0, %c0_i32_111 : i32
    %c2_112 = arith.constant 2 : index
    %217 = arith.index_cast %216 : i32 to index
    %c1_113 = arith.constant 1 : index
    %c0_114 = arith.constant 0 : index
    %218 = vector.load %arg3[%c2_112, %217, %c1_113, %c0_114] : memref<4x9x9x64xbf16, #tpu.memory_space<vmem>>, vector<1x8x8x64xbf16>
    %219 = vector.shape_cast %218 : vector<1x8x8x64xbf16> to vector<8x8x64xbf16>
    %220 = arith.extf %219 : vector<8x8x64xbf16> to vector<8x8x64xf32>
    %c0_115 = arith.constant 0 : index
    %c0_116 = arith.constant 0 : index
    %c0_117 = arith.constant 0 : index
    %221 = vector.load %arg5[%c0_115, %c0_116, %c0_117] : memref<1x1x64xf32, #tpu.memory_space<vmem>>, vector<1x1x64xf32>
    %222 = vector.broadcast %221 : vector<1x1x64xf32> to vector<8x8x64xf32>
    %223 = arith.mulf %220, %222 : vector<8x8x64xf32>
    %c0_118 = arith.constant 0 : index
    %c0_119 = arith.constant 0 : index
    %c0_120 = arith.constant 0 : index
    %224 = vector.load %arg6[%c0_118, %c0_119, %c0_120] : memref<1x1x64xf32, #tpu.memory_space<vmem>>, vector<1x1x64xf32>
    %225 = vector.broadcast %224 : vector<1x1x64xf32> to vector<8x8x64xf32>
    %226 = arith.addf %223, %225 : vector<8x8x64xf32>
    %cst_121 = arith.constant 0.000000e+00 : f32
    %227 = vector.broadcast %cst_121 : f32 to vector<8x8x64xf32>
    %228 = arith.maximumf %226, %227 : vector<8x8x64xf32>
    %c2_i32_122 = arith.constant 2 : i32
    %229 = vector.broadcast %c2_i32_122 : i32 to vector<8x8x1xi32>
    %230 = arith.muli %4, %229 : vector<8x8x1xi32>
    %c1_i32_123 = arith.constant 1 : i32
    %231 = vector.broadcast %c1_i32_123 : i32 to vector<8x8x1xi32>
    %232 = arith.addi %230, %231 : vector<8x8x1xi32>
    %c2_i32_124 = arith.constant 2 : i32
    %233 = vector.broadcast %c2_i32_124 : i32 to vector<8x8x1xi32>
    %234 = arith.muli %5, %233 : vector<8x8x1xi32>
    %c2_i32_125 = arith.constant 2 : i32
    %235 = vector.broadcast %c2_i32_125 : i32 to vector<8x8x1xi32>
    %236 = arith.addi %234, %235 : vector<8x8x1xi32>
    %c1_i32_126 = arith.constant 1 : i32
    %237 = vector.broadcast %c1_i32_126 : i32 to vector<8x8x1xi32>
    %238 = arith.cmpi sge, %232, %237 : vector<8x8x1xi32>
    %c17_i32_127 = arith.constant 17 : i32
    %239 = vector.broadcast %c17_i32_127 : i32 to vector<8x8x1xi32>
    %240 = arith.cmpi slt, %232, %239 : vector<8x8x1xi32>
    %241 = arith.andi %238, %240 : vector<8x8x1xi1>
    %c1_i32_128 = arith.constant 1 : i32
    %242 = vector.broadcast %c1_i32_128 : i32 to vector<8x8x1xi32>
    %243 = arith.cmpi sge, %236, %242 : vector<8x8x1xi32>
    %244 = arith.andi %241, %243 : vector<8x8x1xi1>
    %c17_i32_129 = arith.constant 17 : i32
    %245 = vector.broadcast %c17_i32_129 : i32 to vector<8x8x1xi32>
    %246 = arith.cmpi slt, %236, %245 : vector<8x8x1xi32>
    %247 = arith.andi %244, %246 : vector<8x8x1xi1>
    %cst_130 = arith.constant 0.000000e+00 : f32
    %248 = vector.shape_cast %247 : vector<8x8x1xi1> to vector<8x8x1xi1>
    %249 = vector.broadcast %248 : vector<8x8x1xi1> to vector<8x8x64xi1>
    %250 = vector.broadcast %cst_130 : f32 to vector<8x8x64xf32>
    %251 = arith.select %249, %228, %250 : vector<8x8x64xi1>, vector<8x8x64xf32>
    %252 = arith.truncf %251 : vector<8x8x64xf32> to vector<8x8x64xbf16>
    %253 = vector.shape_cast %252 : vector<8x8x64xbf16> to vector<64x64xbf16>
    %c5 = arith.constant 5 : index
    %c0_131 = arith.constant 0 : index
    %c0_132 = arith.constant 0 : index
    %254 = vector.load %arg4[%c5, %c0_131, %c0_132] : memref<9x64x128xbf16, #tpu.memory_space<vmem>>, vector<1x64x128xbf16>
    %255 = vector.shape_cast %254 : vector<1x64x128xbf16> to vector<64x128xbf16>
    %cst_133 = arith.constant dense<0.000000e+00> : vector<64x128xf32>
    %256 = tpu.matmul %253, %255, %cst_133 {dimension_numbers = #tpu.dot_dimension_numbers<[1], [0], [0], [1], [0, 0, 1, 1], [], []>} : vector<64x64xbf16>, vector<64x128xbf16>, vector<64x128xf32> -> vector<64x128xf32>
    %257 = arith.addf %215, %256 : vector<64x128xf32>
    %c1_i32_134 = arith.constant 1 : i32
    %258 = arith.addi %0, %c1_i32_134 : i32
    %c0_135 = arith.constant 0 : index
    %259 = arith.index_cast %258 : i32 to index
    %c0_136 = arith.constant 0 : index
    %c0_137 = arith.constant 0 : index
    %260 = vector.load %arg3[%c0_135, %259, %c0_136, %c0_137] : memref<4x9x9x64xbf16, #tpu.memory_space<vmem>>, vector<1x8x8x64xbf16>
    %261 = vector.shape_cast %260 : vector<1x8x8x64xbf16> to vector<8x8x64xbf16>
    %262 = arith.extf %261 : vector<8x8x64xbf16> to vector<8x8x64xf32>
    %c0_138 = arith.constant 0 : index
    %c0_139 = arith.constant 0 : index
    %c0_140 = arith.constant 0 : index
    %263 = vector.load %arg5[%c0_138, %c0_139, %c0_140] : memref<1x1x64xf32, #tpu.memory_space<vmem>>, vector<1x1x64xf32>
    %264 = vector.broadcast %263 : vector<1x1x64xf32> to vector<8x8x64xf32>
    %265 = arith.mulf %262, %264 : vector<8x8x64xf32>
    %c0_141 = arith.constant 0 : index
    %c0_142 = arith.constant 0 : index
    %c0_143 = arith.constant 0 : index
    %266 = vector.load %arg6[%c0_141, %c0_142, %c0_143] : memref<1x1x64xf32, #tpu.memory_space<vmem>>, vector<1x1x64xf32>
    %267 = vector.broadcast %266 : vector<1x1x64xf32> to vector<8x8x64xf32>
    %268 = arith.addf %265, %267 : vector<8x8x64xf32>
    %cst_144 = arith.constant 0.000000e+00 : f32
    %269 = vector.broadcast %cst_144 : f32 to vector<8x8x64xf32>
    %270 = arith.maximumf %268, %269 : vector<8x8x64xf32>
    %c2_i32_145 = arith.constant 2 : i32
    %271 = vector.broadcast %c2_i32_145 : i32 to vector<8x8x1xi32>
    %272 = arith.muli %4, %271 : vector<8x8x1xi32>
    %c2_i32_146 = arith.constant 2 : i32
    %273 = vector.broadcast %c2_i32_146 : i32 to vector<8x8x1xi32>
    %274 = arith.addi %272, %273 : vector<8x8x1xi32>
    %c2_i32_147 = arith.constant 2 : i32
    %275 = vector.broadcast %c2_i32_147 : i32 to vector<8x8x1xi32>
    %276 = arith.muli %5, %275 : vector<8x8x1xi32>
    %c0_i32_148 = arith.constant 0 : i32
    %277 = vector.broadcast %c0_i32_148 : i32 to vector<8x8x1xi32>
    %278 = arith.addi %276, %277 : vector<8x8x1xi32>
    %c1_i32_149 = arith.constant 1 : i32
    %279 = vector.broadcast %c1_i32_149 : i32 to vector<8x8x1xi32>
    %280 = arith.cmpi sge, %274, %279 : vector<8x8x1xi32>
    %c17_i32_150 = arith.constant 17 : i32
    %281 = vector.broadcast %c17_i32_150 : i32 to vector<8x8x1xi32>
    %282 = arith.cmpi slt, %274, %281 : vector<8x8x1xi32>
    %283 = arith.andi %280, %282 : vector<8x8x1xi1>
    %c1_i32_151 = arith.constant 1 : i32
    %284 = vector.broadcast %c1_i32_151 : i32 to vector<8x8x1xi32>
    %285 = arith.cmpi sge, %278, %284 : vector<8x8x1xi32>
    %286 = arith.andi %283, %285 : vector<8x8x1xi1>
    %c17_i32_152 = arith.constant 17 : i32
    %287 = vector.broadcast %c17_i32_152 : i32 to vector<8x8x1xi32>
    %288 = arith.cmpi slt, %278, %287 : vector<8x8x1xi32>
    %289 = arith.andi %286, %288 : vector<8x8x1xi1>
    %cst_153 = arith.constant 0.000000e+00 : f32
    %290 = vector.shape_cast %289 : vector<8x8x1xi1> to vector<8x8x1xi1>
    %291 = vector.broadcast %290 : vector<8x8x1xi1> to vector<8x8x64xi1>
    %292 = vector.broadcast %cst_153 : f32 to vector<8x8x64xf32>
    %293 = arith.select %291, %270, %292 : vector<8x8x64xi1>, vector<8x8x64xf32>
    %294 = arith.truncf %293 : vector<8x8x64xf32> to vector<8x8x64xbf16>
    %295 = vector.shape_cast %294 : vector<8x8x64xbf16> to vector<64x64xbf16>
    %c6 = arith.constant 6 : index
    %c0_154 = arith.constant 0 : index
    %c0_155 = arith.constant 0 : index
    %296 = vector.load %arg4[%c6, %c0_154, %c0_155] : memref<9x64x128xbf16, #tpu.memory_space<vmem>>, vector<1x64x128xbf16>
    %297 = vector.shape_cast %296 : vector<1x64x128xbf16> to vector<64x128xbf16>
    %cst_156 = arith.constant dense<0.000000e+00> : vector<64x128xf32>
    %298 = tpu.matmul %295, %297, %cst_156 {dimension_numbers = #tpu.dot_dimension_numbers<[1], [0], [0], [1], [0, 0, 1, 1], [], []>} : vector<64x64xbf16>, vector<64x128xbf16>, vector<64x128xf32> -> vector<64x128xf32>
    %299 = arith.addf %257, %298 : vector<64x128xf32>
    %c1_i32_157 = arith.constant 1 : i32
    %300 = arith.addi %0, %c1_i32_157 : i32
    %c1_158 = arith.constant 1 : index
    %301 = arith.index_cast %300 : i32 to index
    %c0_159 = arith.constant 0 : index
    %c0_160 = arith.constant 0 : index
    %302 = vector.load %arg3[%c1_158, %301, %c0_159, %c0_160] : memref<4x9x9x64xbf16, #tpu.memory_space<vmem>>, vector<1x8x8x64xbf16>
    %303 = vector.shape_cast %302 : vector<1x8x8x64xbf16> to vector<8x8x64xbf16>
    %304 = arith.extf %303 : vector<8x8x64xbf16> to vector<8x8x64xf32>
    %c0_161 = arith.constant 0 : index
    %c0_162 = arith.constant 0 : index
    %c0_163 = arith.constant 0 : index
    %305 = vector.load %arg5[%c0_161, %c0_162, %c0_163] : memref<1x1x64xf32, #tpu.memory_space<vmem>>, vector<1x1x64xf32>
    %306 = vector.broadcast %305 : vector<1x1x64xf32> to vector<8x8x64xf32>
    %307 = arith.mulf %304, %306 : vector<8x8x64xf32>
    %c0_164 = arith.constant 0 : index
    %c0_165 = arith.constant 0 : index
    %c0_166 = arith.constant 0 : index
    %308 = vector.load %arg6[%c0_164, %c0_165, %c0_166] : memref<1x1x64xf32, #tpu.memory_space<vmem>>, vector<1x1x64xf32>
    %309 = vector.broadcast %308 : vector<1x1x64xf32> to vector<8x8x64xf32>
    %310 = arith.addf %307, %309 : vector<8x8x64xf32>
    %cst_167 = arith.constant 0.000000e+00 : f32
    %311 = vector.broadcast %cst_167 : f32 to vector<8x8x64xf32>
    %312 = arith.maximumf %310, %311 : vector<8x8x64xf32>
    %c2_i32_168 = arith.constant 2 : i32
    %313 = vector.broadcast %c2_i32_168 : i32 to vector<8x8x1xi32>
    %314 = arith.muli %4, %313 : vector<8x8x1xi32>
    %c2_i32_169 = arith.constant 2 : i32
    %315 = vector.broadcast %c2_i32_169 : i32 to vector<8x8x1xi32>
    %316 = arith.addi %314, %315 : vector<8x8x1xi32>
    %c2_i32_170 = arith.constant 2 : i32
    %317 = vector.broadcast %c2_i32_170 : i32 to vector<8x8x1xi32>
    %318 = arith.muli %5, %317 : vector<8x8x1xi32>
    %c1_i32_171 = arith.constant 1 : i32
    %319 = vector.broadcast %c1_i32_171 : i32 to vector<8x8x1xi32>
    %320 = arith.addi %318, %319 : vector<8x8x1xi32>
    %c1_i32_172 = arith.constant 1 : i32
    %321 = vector.broadcast %c1_i32_172 : i32 to vector<8x8x1xi32>
    %322 = arith.cmpi sge, %316, %321 : vector<8x8x1xi32>
    %c17_i32_173 = arith.constant 17 : i32
    %323 = vector.broadcast %c17_i32_173 : i32 to vector<8x8x1xi32>
    %324 = arith.cmpi slt, %316, %323 : vector<8x8x1xi32>
    %325 = arith.andi %322, %324 : vector<8x8x1xi1>
    %c1_i32_174 = arith.constant 1 : i32
    %326 = vector.broadcast %c1_i32_174 : i32 to vector<8x8x1xi32>
    %327 = arith.cmpi sge, %320, %326 : vector<8x8x1xi32>
    %328 = arith.andi %325, %327 : vector<8x8x1xi1>
    %c17_i32_175 = arith.constant 17 : i32
    %329 = vector.broadcast %c17_i32_175 : i32 to vector<8x8x1xi32>
    %330 = arith.cmpi slt, %320, %329 : vector<8x8x1xi32>
    %331 = arith.andi %328, %330 : vector<8x8x1xi1>
    %cst_176 = arith.constant 0.000000e+00 : f32
    %332 = vector.shape_cast %331 : vector<8x8x1xi1> to vector<8x8x1xi1>
    %333 = vector.broadcast %332 : vector<8x8x1xi1> to vector<8x8x64xi1>
    %334 = vector.broadcast %cst_176 : f32 to vector<8x8x64xf32>
    %335 = arith.select %333, %312, %334 : vector<8x8x64xi1>, vector<8x8x64xf32>
    %336 = arith.truncf %335 : vector<8x8x64xf32> to vector<8x8x64xbf16>
    %337 = vector.shape_cast %336 : vector<8x8x64xbf16> to vector<64x64xbf16>
    %c7 = arith.constant 7 : index
    %c0_177 = arith.constant 0 : index
    %c0_178 = arith.constant 0 : index
    %338 = vector.load %arg4[%c7, %c0_177, %c0_178] : memref<9x64x128xbf16, #tpu.memory_space<vmem>>, vector<1x64x128xbf16>
    %339 = vector.shape_cast %338 : vector<1x64x128xbf16> to vector<64x128xbf16>
    %cst_179 = arith.constant dense<0.000000e+00> : vector<64x128xf32>
    %340 = tpu.matmul %337, %339, %cst_179 {dimension_numbers = #tpu.dot_dimension_numbers<[1], [0], [0], [1], [0, 0, 1, 1], [], []>} : vector<64x64xbf16>, vector<64x128xbf16>, vector<64x128xf32> -> vector<64x128xf32>
    %341 = arith.addf %299, %340 : vector<64x128xf32>
    %c1_i32_180 = arith.constant 1 : i32
    %342 = arith.addi %0, %c1_i32_180 : i32
    %c0_181 = arith.constant 0 : index
    %343 = arith.index_cast %342 : i32 to index
    %c1_182 = arith.constant 1 : index
    %c0_183 = arith.constant 0 : index
    %344 = vector.load %arg3[%c0_181, %343, %c1_182, %c0_183] : memref<4x9x9x64xbf16, #tpu.memory_space<vmem>>, vector<1x8x8x64xbf16>
    %345 = vector.shape_cast %344 : vector<1x8x8x64xbf16> to vector<8x8x64xbf16>
    %346 = arith.extf %345 : vector<8x8x64xbf16> to vector<8x8x64xf32>
    %c0_184 = arith.constant 0 : index
    %c0_185 = arith.constant 0 : index
    %c0_186 = arith.constant 0 : index
    %347 = vector.load %arg5[%c0_184, %c0_185, %c0_186] : memref<1x1x64xf32, #tpu.memory_space<vmem>>, vector<1x1x64xf32>
    %348 = vector.broadcast %347 : vector<1x1x64xf32> to vector<8x8x64xf32>
    %349 = arith.mulf %346, %348 : vector<8x8x64xf32>
    %c0_187 = arith.constant 0 : index
    %c0_188 = arith.constant 0 : index
    %c0_189 = arith.constant 0 : index
    %350 = vector.load %arg6[%c0_187, %c0_188, %c0_189] : memref<1x1x64xf32, #tpu.memory_space<vmem>>, vector<1x1x64xf32>
    %351 = vector.broadcast %350 : vector<1x1x64xf32> to vector<8x8x64xf32>
    %352 = arith.addf %349, %351 : vector<8x8x64xf32>
    %cst_190 = arith.constant 0.000000e+00 : f32
    %353 = vector.broadcast %cst_190 : f32 to vector<8x8x64xf32>
    %354 = arith.maximumf %352, %353 : vector<8x8x64xf32>
    %c2_i32_191 = arith.constant 2 : i32
    %355 = vector.broadcast %c2_i32_191 : i32 to vector<8x8x1xi32>
    %356 = arith.muli %4, %355 : vector<8x8x1xi32>
    %c2_i32_192 = arith.constant 2 : i32
    %357 = vector.broadcast %c2_i32_192 : i32 to vector<8x8x1xi32>
    %358 = arith.addi %356, %357 : vector<8x8x1xi32>
    %c2_i32_193 = arith.constant 2 : i32
    %359 = vector.broadcast %c2_i32_193 : i32 to vector<8x8x1xi32>
    %360 = arith.muli %5, %359 : vector<8x8x1xi32>
    %c2_i32_194 = arith.constant 2 : i32
    %361 = vector.broadcast %c2_i32_194 : i32 to vector<8x8x1xi32>
    %362 = arith.addi %360, %361 : vector<8x8x1xi32>
    %c1_i32_195 = arith.constant 1 : i32
    %363 = vector.broadcast %c1_i32_195 : i32 to vector<8x8x1xi32>
    %364 = arith.cmpi sge, %358, %363 : vector<8x8x1xi32>
    %c17_i32_196 = arith.constant 17 : i32
    %365 = vector.broadcast %c17_i32_196 : i32 to vector<8x8x1xi32>
    %366 = arith.cmpi slt, %358, %365 : vector<8x8x1xi32>
    %367 = arith.andi %364, %366 : vector<8x8x1xi1>
    %c1_i32_197 = arith.constant 1 : i32
    %368 = vector.broadcast %c1_i32_197 : i32 to vector<8x8x1xi32>
    %369 = arith.cmpi sge, %362, %368 : vector<8x8x1xi32>
    %370 = arith.andi %367, %369 : vector<8x8x1xi1>
    %c17_i32_198 = arith.constant 17 : i32
    %371 = vector.broadcast %c17_i32_198 : i32 to vector<8x8x1xi32>
    %372 = arith.cmpi slt, %362, %371 : vector<8x8x1xi32>
    %373 = arith.andi %370, %372 : vector<8x8x1xi1>
    %cst_199 = arith.constant 0.000000e+00 : f32
    %374 = vector.shape_cast %373 : vector<8x8x1xi1> to vector<8x8x1xi1>
    %375 = vector.broadcast %374 : vector<8x8x1xi1> to vector<8x8x64xi1>
    %376 = vector.broadcast %cst_199 : f32 to vector<8x8x64xf32>
    %377 = arith.select %375, %354, %376 : vector<8x8x64xi1>, vector<8x8x64xf32>
    %378 = arith.truncf %377 : vector<8x8x64xf32> to vector<8x8x64xbf16>
    %379 = vector.shape_cast %378 : vector<8x8x64xbf16> to vector<64x64xbf16>
    %c8 = arith.constant 8 : index
    %c0_200 = arith.constant 0 : index
    %c0_201 = arith.constant 0 : index
    %380 = vector.load %arg4[%c8, %c0_200, %c0_201] : memref<9x64x128xbf16, #tpu.memory_space<vmem>>, vector<1x64x128xbf16>
    %381 = vector.shape_cast %380 : vector<1x64x128xbf16> to vector<64x128xbf16>
    %cst_202 = arith.constant dense<0.000000e+00> : vector<64x128xf32>
    %382 = tpu.matmul %379, %381, %cst_202 {dimension_numbers = #tpu.dot_dimension_numbers<[1], [0], [0], [1], [0, 0, 1, 1], [], []>} : vector<64x64xbf16>, vector<64x128xbf16>, vector<64x128xf32> -> vector<64x128xf32>
    %383 = arith.addf %341, %382 : vector<64x128xf32>
    %c0_203 = arith.constant 0 : index
    %c0_204 = arith.constant 0 : index
    %384 = vector.load %arg7[%c0_203, %c0_204] : memref<1x128xf32, #tpu.memory_space<vmem>>, vector<1x128xf32>
    %385 = vector.broadcast %384 : vector<1x128xf32> to vector<64x128xf32>
    %386 = arith.addf %383, %385 : vector<64x128xf32>
    %387 = arith.truncf %386 : vector<64x128xf32> to vector<64x128xbf16>
    %c0_205 = arith.constant 0 : index
    %c0_206 = arith.constant 0 : index
    %c0_207 = arith.constant 0 : index
    %388 = vector.load %arg8[%c0_205, %c0_206, %c0_207] : memref<1x64x128xbf16, #tpu.memory_space<vmem>>, vector<1x64x128xbf16>
    %389 = vector.shape_cast %388 : vector<1x64x128xbf16> to vector<64x128xbf16>
    %390 = vector.shape_cast %387 : vector<64x128xbf16> to vector<1x64x128xbf16>
    tpu.vector_store %arg8[%c0_205, %c0_206, %c0_207], %390 {strides = array<i32>} : memref<1x64x128xbf16, #tpu.memory_space<vmem>>, vector<1x64x128xbf16>,
    %c0_i32_208 = arith.constant 0 : i32
    %391 = arith.cmpi eq, %arg2, %c0_i32_208 : i32
    %392 = arith.extui %391 : i1 to i32
    %c0_i32_209 = arith.constant 0 : i32
    %393 = arith.cmpi ne, %392, %c0_i32_209 : i32
    scf.if %393 {
      %cst_224 = arith.constant 0.000000e+00 : f32
      %407 = vector.broadcast %cst_224 : f32 to vector<1x1x128xf32>
      %c0_225 = arith.constant 0 : index
      %c0_226 = arith.constant 0 : index
      %c0_227 = arith.constant 0 : index
      %408 = vector.load %arg9[%c0_225, %c0_226, %c0_227] : memref<1x1x128xf32, #tpu.memory_space<vmem>>, vector<1x1x128xf32>
      tpu.vector_store %arg9[%c0_225, %c0_226, %c0_227], %407 {strides = array<i32>} : memref<1x1x128xf32, #tpu.memory_space<vmem>>, vector<1x1x128xf32>,
      %cst_228 = arith.constant 0.000000e+00 : f32
      %409 = vector.broadcast %cst_228 : f32 to vector<1x1x128xf32>
      %c0_229 = arith.constant 0 : index
      %c0_230 = arith.constant 0 : index
      %c0_231 = arith.constant 0 : index
      %410 = vector.load %arg10[%c0_229, %c0_230, %c0_231] : memref<1x1x128xf32, #tpu.memory_space<vmem>>, vector<1x1x128xf32>
      tpu.vector_store %arg10[%c0_229, %c0_230, %c0_231], %409 {strides = array<i32>} : memref<1x1x128xf32, #tpu.memory_space<vmem>>, vector<1x1x128xf32>,
    } else {
    }
    %c0_210 = arith.constant 0 : index
    %c0_211 = arith.constant 0 : index
    %c0_212 = arith.constant 0 : index
    %394 = vector.load %arg9[%c0_210, %c0_211, %c0_212] : memref<1x1x128xf32, #tpu.memory_space<vmem>>, vector<1x1x128xf32>
    %cst_213 = arith.constant dense<0.000000e+00> : vector<128xf32>
    %395 = vector.multi_reduction <add>, %386, %cst_213 [0] : vector<64x128xf32> to vector<128xf32>
    %396 = vector.shape_cast %395 : vector<128xf32> to vector<1x128xf32>
    %397 = vector.shape_cast %396 : vector<1x128xf32> to vector<1x1x128xf32>
    %398 = arith.addf %394, %397 : vector<1x1x128xf32>
    %c0_214 = arith.constant 0 : index
    %c0_215 = arith.constant 0 : index
    %c0_216 = arith.constant 0 : index
    %399 = vector.load %arg9[%c0_214, %c0_215, %c0_216] : memref<1x1x128xf32, #tpu.memory_space<vmem>>, vector<1x1x128xf32>
    tpu.vector_store %arg9[%c0_214, %c0_215, %c0_216], %398 {strides = array<i32>} : memref<1x1x128xf32, #tpu.memory_space<vmem>>, vector<1x1x128xf32>,
    %c0_217 = arith.constant 0 : index
    %c0_218 = arith.constant 0 : index
    %c0_219 = arith.constant 0 : index
    %400 = vector.load %arg10[%c0_217, %c0_218, %c0_219] : memref<1x1x128xf32, #tpu.memory_space<vmem>>, vector<1x1x128xf32>
    %401 = arith.mulf %386, %386 : vector<64x128xf32>
    %cst_220 = arith.constant dense<0.000000e+00> : vector<128xf32>
    %402 = vector.multi_reduction <add>, %401, %cst_220 [0] : vector<64x128xf32> to vector<128xf32>
    %403 = vector.shape_cast %402 : vector<128xf32> to vector<1x128xf32>
    %404 = vector.shape_cast %403 : vector<1x128xf32> to vector<1x1x128xf32>
    %405 = arith.addf %400, %404 : vector<1x1x128xf32>
    %c0_221 = arith.constant 0 : index
    %c0_222 = arith.constant 0 : index
    %c0_223 = arith.constant 0 : index
    %406 = vector.load %arg10[%c0_221, %c0_222, %c0_223] : memref<1x1x128xf32, #tpu.memory_space<vmem>>, vector<1x1x128xf32>
    tpu.vector_store %arg10[%c0_221, %c0_222, %c0_223], %405 {strides = array<i32>} : memref<1x1x128xf32, #tpu.memory_space<vmem>>, vector<1x1x128xf32>,
    return
  }
  func.func @transform_0(%arg0: i32, %arg1: i32, %arg2: i32) -> (i32, i32, i32, i32) {
    %c0_i32 = arith.constant 0 : i32
    %c0_i32_0 = arith.constant 0 : i32
    %c0_i32_1 = arith.constant 0 : i32
    %c0_i32_2 = arith.constant 0 : i32
    return %arg0, %c0_i32, %c0_i32_0, %c0_i32_1 : i32, i32, i32, i32
  }
  func.func @transform_1(%arg0: i32, %arg1: i32, %arg2: i32) -> (i32, i32, i32) {
    %c0_i32 = arith.constant 0 : i32
    %c0_i32_0 = arith.constant 0 : i32
    %c0_i32_1 = arith.constant 0 : i32
    return %c0_i32, %c0_i32_0, %arg1 : i32, i32, i32
  }
  func.func @transform_2(%arg0: i32, %arg1: i32, %arg2: i32) -> (i32, i32, i32) {
    %c0_i32 = arith.constant 0 : i32
    %c0_i32_0 = arith.constant 0 : i32
    %c0_i32_1 = arith.constant 0 : i32
    %c0_i32_2 = arith.constant 0 : i32
    return %c0_i32, %c0_i32_0, %c0_i32_1 : i32, i32, i32
  }
  func.func @transform_3(%arg0: i32, %arg1: i32, %arg2: i32) -> (i32, i32, i32) {
    %c0_i32 = arith.constant 0 : i32
    %c0_i32_0 = arith.constant 0 : i32
    %c0_i32_1 = arith.constant 0 : i32
    %c0_i32_2 = arith.constant 0 : i32
    return %c0_i32, %c0_i32_0, %c0_i32_1 : i32, i32, i32
  }
  func.func @transform_4(%arg0: i32, %arg1: i32, %arg2: i32) -> (i32, i32) {
    %c0_i32 = arith.constant 0 : i32
    %c0_i32_0 = arith.constant 0 : i32
    return %c0_i32, %arg1 : i32, i32
  }
  func.func @transform_5(%arg0: i32, %arg1: i32, %arg2: i32) -> (i32, i32, i32) {
    %c0_i32 = arith.constant 0 : i32
    return %arg0, %arg2, %arg1 : i32, i32, i32
  }
  func.func @transform_6(%arg0: i32, %arg1: i32, %arg2: i32) -> (i32, i32, i32) {
    %c0_i32 = arith.constant 0 : i32
    %c0_i32_0 = arith.constant 0 : i32
    return %arg0, %c0_i32, %arg1 : i32, i32, i32
  }
  func.func @transform_7(%arg0: i32, %arg1: i32, %arg2: i32) -> (i32, i32, i32) {
    %c0_i32 = arith.constant 0 : i32
    %c0_i32_0 = arith.constant 0 : i32
    return %arg0, %c0_i32, %arg1 : i32, i32, i32
  }
}

module attributes {stable_mosaic.version = 11 : i64} {
  func.func @conv_bn_taps_kernel(%arg0: i32, %arg1: i32, %arg2: i32, %arg3: memref<1x10x10x128xbf16, #tpu.memory_space<vmem>>, %arg4: memref<9x128x128xbf16, #tpu.memory_space<vmem>>, %arg5: memref<1x1x128xf32, #tpu.memory_space<vmem>>, %arg6: memref<1x1x128xf32, #tpu.memory_space<vmem>>, %arg7: memref<1x128xf32, #tpu.memory_space<vmem>>, %arg8: memref<1x64x128xbf16, #tpu.memory_space<vmem>>, %arg9: memref<1x1x128xf32, #tpu.memory_space<vmem>>, %arg10: memref<1x1x128xf32, #tpu.memory_space<vmem>>) attributes {dimension_semantics = [#tpu.dimension_semantics<parallel>, #tpu.dimension_semantics<parallel>, #tpu.dimension_semantics<arbitrary>], iteration_bounds = array<i64: 2, 1, 1>, scalar_prefetch = 0 : i64, scratch_operands = 0 : i64, tpu.core_type = #tpu.core_type<tc>, window_params = [{transform_indices = @transform_0, window_bounds = array<i64: 1, 10, 10, 128>}, {transform_indices = @transform_1, window_bounds = array<i64: 9, 128, 128>}, {pipeline_mode = #tpu.pipeline_mode<synchronous>, transform_indices = @transform_2, window_bounds = array<i64: 1, 1, 128>}, {pipeline_mode = #tpu.pipeline_mode<synchronous>, transform_indices = @transform_3, window_bounds = array<i64: 1, 1, 128>}, {transform_indices = @transform_4, window_bounds = array<i64: 1, 128>}, {transform_indices = @transform_5, window_bounds = array<i64: 1, 64, 128>}, {transform_indices = @transform_6, window_bounds = array<i64: 1, 1, 128>}, {transform_indices = @transform_7, window_bounds = array<i64: 1, 1, 128>}]} {
    %c8_i32 = arith.constant 8 : i32
    %0 = arith.muli %arg2, %c8_i32 : i32
    %cst = arith.constant 0.000000e+00 : f32
    %1 = vector.broadcast %cst : f32 to vector<64x128xf32>
    %2 = tpu.iota {dimensions = array<i32: 0>} : vector<8x8x1xi32>
    %3 = vector.broadcast %0 : i32 to vector<8x8x1xi32>
    %4 = arith.addi %2, %3 : vector<8x8x1xi32>
    %5 = tpu.iota {dimensions = array<i32: 1>} : vector<8x8x1xi32>
    %c0_i32 = arith.constant 0 : i32
    %6 = arith.addi %0, %c0_i32 : i32
    %c0 = arith.constant 0 : index
    %7 = arith.index_cast %6 : i32 to index
    %c0_0 = arith.constant 0 : index
    %c0_1 = arith.constant 0 : index
    %8 = vector.load %arg3[%c0, %7, %c0_0, %c0_1] : memref<1x10x10x128xbf16, #tpu.memory_space<vmem>>, vector<1x8x8x128xbf16>
    %9 = vector.shape_cast %8 : vector<1x8x8x128xbf16> to vector<8x8x128xbf16>
    %10 = arith.extf %9 : vector<8x8x128xbf16> to vector<8x8x128xf32>
    %c0_2 = arith.constant 0 : index
    %c0_3 = arith.constant 0 : index
    %c0_4 = arith.constant 0 : index
    %11 = vector.load %arg5[%c0_2, %c0_3, %c0_4] : memref<1x1x128xf32, #tpu.memory_space<vmem>>, vector<1x1x128xf32>
    %12 = vector.broadcast %11 : vector<1x1x128xf32> to vector<8x8x128xf32>
    %13 = arith.mulf %10, %12 : vector<8x8x128xf32>
    %c0_5 = arith.constant 0 : index
    %c0_6 = arith.constant 0 : index
    %c0_7 = arith.constant 0 : index
    %14 = vector.load %arg6[%c0_5, %c0_6, %c0_7] : memref<1x1x128xf32, #tpu.memory_space<vmem>>, vector<1x1x128xf32>
    %15 = vector.broadcast %14 : vector<1x1x128xf32> to vector<8x8x128xf32>
    %16 = arith.addf %13, %15 : vector<8x8x128xf32>
    %cst_8 = arith.constant 0.000000e+00 : f32
    %17 = vector.broadcast %cst_8 : f32 to vector<8x8x128xf32>
    %18 = arith.maximumf %16, %17 : vector<8x8x128xf32>
    %c1_i32 = arith.constant 1 : i32
    %19 = vector.broadcast %c1_i32 : i32 to vector<8x8x1xi32>
    %20 = arith.muli %4, %19 : vector<8x8x1xi32>
    %c0_i32_9 = arith.constant 0 : i32
    %21 = vector.broadcast %c0_i32_9 : i32 to vector<8x8x1xi32>
    %22 = arith.addi %20, %21 : vector<8x8x1xi32>
    %c1_i32_10 = arith.constant 1 : i32
    %23 = vector.broadcast %c1_i32_10 : i32 to vector<8x8x1xi32>
    %24 = arith.muli %5, %23 : vector<8x8x1xi32>
    %c0_i32_11 = arith.constant 0 : i32
    %25 = vector.broadcast %c0_i32_11 : i32 to vector<8x8x1xi32>
    %26 = arith.addi %24, %25 : vector<8x8x1xi32>
    %c1_i32_12 = arith.constant 1 : i32
    %27 = vector.broadcast %c1_i32_12 : i32 to vector<8x8x1xi32>
    %28 = arith.cmpi sge, %22, %27 : vector<8x8x1xi32>
    %c9_i32 = arith.constant 9 : i32
    %29 = vector.broadcast %c9_i32 : i32 to vector<8x8x1xi32>
    %30 = arith.cmpi slt, %22, %29 : vector<8x8x1xi32>
    %31 = arith.andi %28, %30 : vector<8x8x1xi1>
    %c1_i32_13 = arith.constant 1 : i32
    %32 = vector.broadcast %c1_i32_13 : i32 to vector<8x8x1xi32>
    %33 = arith.cmpi sge, %26, %32 : vector<8x8x1xi32>
    %34 = arith.andi %31, %33 : vector<8x8x1xi1>
    %c9_i32_14 = arith.constant 9 : i32
    %35 = vector.broadcast %c9_i32_14 : i32 to vector<8x8x1xi32>
    %36 = arith.cmpi slt, %26, %35 : vector<8x8x1xi32>
    %37 = arith.andi %34, %36 : vector<8x8x1xi1>
    %cst_15 = arith.constant 0.000000e+00 : f32
    %38 = vector.shape_cast %37 : vector<8x8x1xi1> to vector<8x8x1xi1>
    %39 = vector.broadcast %38 : vector<8x8x1xi1> to vector<8x8x128xi1>
    %40 = vector.broadcast %cst_15 : f32 to vector<8x8x128xf32>
    %41 = arith.select %39, %18, %40 : vector<8x8x128xi1>, vector<8x8x128xf32>
    %42 = arith.truncf %41 : vector<8x8x128xf32> to vector<8x8x128xbf16>
    %43 = vector.shape_cast %42 : vector<8x8x128xbf16> to vector<64x128xbf16>
    %c0_16 = arith.constant 0 : index
    %c0_17 = arith.constant 0 : index
    %c0_18 = arith.constant 0 : index
    %44 = vector.load %arg4[%c0_16, %c0_17, %c0_18] : memref<9x128x128xbf16, #tpu.memory_space<vmem>>, vector<1x128x128xbf16>
    %45 = vector.shape_cast %44 : vector<1x128x128xbf16> to vector<128x128xbf16>
    %cst_19 = arith.constant dense<0.000000e+00> : vector<64x128xf32>
    %46 = tpu.matmul %43, %45, %cst_19 {dimension_numbers = #tpu.dot_dimension_numbers<[1], [0], [0], [1], [0, 0, 1, 1], [], []>} : vector<64x128xbf16>, vector<128x128xbf16>, vector<64x128xf32> -> vector<64x128xf32>
    %47 = arith.addf %1, %46 : vector<64x128xf32>
    %c0_i32_20 = arith.constant 0 : i32
    %48 = arith.addi %0, %c0_i32_20 : i32
    %c0_21 = arith.constant 0 : index
    %49 = arith.index_cast %48 : i32 to index
    %c1 = arith.constant 1 : index
    %c0_22 = arith.constant 0 : index
    %50 = vector.load %arg3[%c0_21, %49, %c1, %c0_22] : memref<1x10x10x128xbf16, #tpu.memory_space<vmem>>, vector<1x8x8x128xbf16>
    %51 = vector.shape_cast %50 : vector<1x8x8x128xbf16> to vector<8x8x128xbf16>
    %52 = arith.extf %51 : vector<8x8x128xbf16> to vector<8x8x128xf32>
    %c0_23 = arith.constant 0 : index
    %c0_24 = arith.constant 0 : index
    %c0_25 = arith.constant 0 : index
    %53 = vector.load %arg5[%c0_23, %c0_24, %c0_25] : memref<1x1x128xf32, #tpu.memory_space<vmem>>, vector<1x1x128xf32>
    %54 = vector.broadcast %53 : vector<1x1x128xf32> to vector<8x8x128xf32>
    %55 = arith.mulf %52, %54 : vector<8x8x128xf32>
    %c0_26 = arith.constant 0 : index
    %c0_27 = arith.constant 0 : index
    %c0_28 = arith.constant 0 : index
    %56 = vector.load %arg6[%c0_26, %c0_27, %c0_28] : memref<1x1x128xf32, #tpu.memory_space<vmem>>, vector<1x1x128xf32>
    %57 = vector.broadcast %56 : vector<1x1x128xf32> to vector<8x8x128xf32>
    %58 = arith.addf %55, %57 : vector<8x8x128xf32>
    %cst_29 = arith.constant 0.000000e+00 : f32
    %59 = vector.broadcast %cst_29 : f32 to vector<8x8x128xf32>
    %60 = arith.maximumf %58, %59 : vector<8x8x128xf32>
    %c1_i32_30 = arith.constant 1 : i32
    %61 = vector.broadcast %c1_i32_30 : i32 to vector<8x8x1xi32>
    %62 = arith.muli %4, %61 : vector<8x8x1xi32>
    %c0_i32_31 = arith.constant 0 : i32
    %63 = vector.broadcast %c0_i32_31 : i32 to vector<8x8x1xi32>
    %64 = arith.addi %62, %63 : vector<8x8x1xi32>
    %c1_i32_32 = arith.constant 1 : i32
    %65 = vector.broadcast %c1_i32_32 : i32 to vector<8x8x1xi32>
    %66 = arith.muli %5, %65 : vector<8x8x1xi32>
    %c1_i32_33 = arith.constant 1 : i32
    %67 = vector.broadcast %c1_i32_33 : i32 to vector<8x8x1xi32>
    %68 = arith.addi %66, %67 : vector<8x8x1xi32>
    %c1_i32_34 = arith.constant 1 : i32
    %69 = vector.broadcast %c1_i32_34 : i32 to vector<8x8x1xi32>
    %70 = arith.cmpi sge, %64, %69 : vector<8x8x1xi32>
    %c9_i32_35 = arith.constant 9 : i32
    %71 = vector.broadcast %c9_i32_35 : i32 to vector<8x8x1xi32>
    %72 = arith.cmpi slt, %64, %71 : vector<8x8x1xi32>
    %73 = arith.andi %70, %72 : vector<8x8x1xi1>
    %c1_i32_36 = arith.constant 1 : i32
    %74 = vector.broadcast %c1_i32_36 : i32 to vector<8x8x1xi32>
    %75 = arith.cmpi sge, %68, %74 : vector<8x8x1xi32>
    %76 = arith.andi %73, %75 : vector<8x8x1xi1>
    %c9_i32_37 = arith.constant 9 : i32
    %77 = vector.broadcast %c9_i32_37 : i32 to vector<8x8x1xi32>
    %78 = arith.cmpi slt, %68, %77 : vector<8x8x1xi32>
    %79 = arith.andi %76, %78 : vector<8x8x1xi1>
    %cst_38 = arith.constant 0.000000e+00 : f32
    %80 = vector.shape_cast %79 : vector<8x8x1xi1> to vector<8x8x1xi1>
    %81 = vector.broadcast %80 : vector<8x8x1xi1> to vector<8x8x128xi1>
    %82 = vector.broadcast %cst_38 : f32 to vector<8x8x128xf32>
    %83 = arith.select %81, %60, %82 : vector<8x8x128xi1>, vector<8x8x128xf32>
    %84 = arith.truncf %83 : vector<8x8x128xf32> to vector<8x8x128xbf16>
    %85 = vector.shape_cast %84 : vector<8x8x128xbf16> to vector<64x128xbf16>
    %c1_39 = arith.constant 1 : index
    %c0_40 = arith.constant 0 : index
    %c0_41 = arith.constant 0 : index
    %86 = vector.load %arg4[%c1_39, %c0_40, %c0_41] : memref<9x128x128xbf16, #tpu.memory_space<vmem>>, vector<1x128x128xbf16>
    %87 = vector.shape_cast %86 : vector<1x128x128xbf16> to vector<128x128xbf16>
    %cst_42 = arith.constant dense<0.000000e+00> : vector<64x128xf32>
    %88 = tpu.matmul %85, %87, %cst_42 {dimension_numbers = #tpu.dot_dimension_numbers<[1], [0], [0], [1], [0, 0, 1, 1], [], []>} : vector<64x128xbf16>, vector<128x128xbf16>, vector<64x128xf32> -> vector<64x128xf32>
    %89 = arith.addf %47, %88 : vector<64x128xf32>
    %c0_i32_43 = arith.constant 0 : i32
    %90 = arith.addi %0, %c0_i32_43 : i32
    %c0_44 = arith.constant 0 : index
    %91 = arith.index_cast %90 : i32 to index
    %c2 = arith.constant 2 : index
    %c0_45 = arith.constant 0 : index
    %92 = vector.load %arg3[%c0_44, %91, %c2, %c0_45] : memref<1x10x10x128xbf16, #tpu.memory_space<vmem>>, vector<1x8x8x128xbf16>
    %93 = vector.shape_cast %92 : vector<1x8x8x128xbf16> to vector<8x8x128xbf16>
    %94 = arith.extf %93 : vector<8x8x128xbf16> to vector<8x8x128xf32>
    %c0_46 = arith.constant 0 : index
    %c0_47 = arith.constant 0 : index
    %c0_48 = arith.constant 0 : index
    %95 = vector.load %arg5[%c0_46, %c0_47, %c0_48] : memref<1x1x128xf32, #tpu.memory_space<vmem>>, vector<1x1x128xf32>
    %96 = vector.broadcast %95 : vector<1x1x128xf32> to vector<8x8x128xf32>
    %97 = arith.mulf %94, %96 : vector<8x8x128xf32>
    %c0_49 = arith.constant 0 : index
    %c0_50 = arith.constant 0 : index
    %c0_51 = arith.constant 0 : index
    %98 = vector.load %arg6[%c0_49, %c0_50, %c0_51] : memref<1x1x128xf32, #tpu.memory_space<vmem>>, vector<1x1x128xf32>
    %99 = vector.broadcast %98 : vector<1x1x128xf32> to vector<8x8x128xf32>
    %100 = arith.addf %97, %99 : vector<8x8x128xf32>
    %cst_52 = arith.constant 0.000000e+00 : f32
    %101 = vector.broadcast %cst_52 : f32 to vector<8x8x128xf32>
    %102 = arith.maximumf %100, %101 : vector<8x8x128xf32>
    %c1_i32_53 = arith.constant 1 : i32
    %103 = vector.broadcast %c1_i32_53 : i32 to vector<8x8x1xi32>
    %104 = arith.muli %4, %103 : vector<8x8x1xi32>
    %c0_i32_54 = arith.constant 0 : i32
    %105 = vector.broadcast %c0_i32_54 : i32 to vector<8x8x1xi32>
    %106 = arith.addi %104, %105 : vector<8x8x1xi32>
    %c1_i32_55 = arith.constant 1 : i32
    %107 = vector.broadcast %c1_i32_55 : i32 to vector<8x8x1xi32>
    %108 = arith.muli %5, %107 : vector<8x8x1xi32>
    %c2_i32 = arith.constant 2 : i32
    %109 = vector.broadcast %c2_i32 : i32 to vector<8x8x1xi32>
    %110 = arith.addi %108, %109 : vector<8x8x1xi32>
    %c1_i32_56 = arith.constant 1 : i32
    %111 = vector.broadcast %c1_i32_56 : i32 to vector<8x8x1xi32>
    %112 = arith.cmpi sge, %106, %111 : vector<8x8x1xi32>
    %c9_i32_57 = arith.constant 9 : i32
    %113 = vector.broadcast %c9_i32_57 : i32 to vector<8x8x1xi32>
    %114 = arith.cmpi slt, %106, %113 : vector<8x8x1xi32>
    %115 = arith.andi %112, %114 : vector<8x8x1xi1>
    %c1_i32_58 = arith.constant 1 : i32
    %116 = vector.broadcast %c1_i32_58 : i32 to vector<8x8x1xi32>
    %117 = arith.cmpi sge, %110, %116 : vector<8x8x1xi32>
    %118 = arith.andi %115, %117 : vector<8x8x1xi1>
    %c9_i32_59 = arith.constant 9 : i32
    %119 = vector.broadcast %c9_i32_59 : i32 to vector<8x8x1xi32>
    %120 = arith.cmpi slt, %110, %119 : vector<8x8x1xi32>
    %121 = arith.andi %118, %120 : vector<8x8x1xi1>
    %cst_60 = arith.constant 0.000000e+00 : f32
    %122 = vector.shape_cast %121 : vector<8x8x1xi1> to vector<8x8x1xi1>
    %123 = vector.broadcast %122 : vector<8x8x1xi1> to vector<8x8x128xi1>
    %124 = vector.broadcast %cst_60 : f32 to vector<8x8x128xf32>
    %125 = arith.select %123, %102, %124 : vector<8x8x128xi1>, vector<8x8x128xf32>
    %126 = arith.truncf %125 : vector<8x8x128xf32> to vector<8x8x128xbf16>
    %127 = vector.shape_cast %126 : vector<8x8x128xbf16> to vector<64x128xbf16>
    %c2_61 = arith.constant 2 : index
    %c0_62 = arith.constant 0 : index
    %c0_63 = arith.constant 0 : index
    %128 = vector.load %arg4[%c2_61, %c0_62, %c0_63] : memref<9x128x128xbf16, #tpu.memory_space<vmem>>, vector<1x128x128xbf16>
    %129 = vector.shape_cast %128 : vector<1x128x128xbf16> to vector<128x128xbf16>
    %cst_64 = arith.constant dense<0.000000e+00> : vector<64x128xf32>
    %130 = tpu.matmul %127, %129, %cst_64 {dimension_numbers = #tpu.dot_dimension_numbers<[1], [0], [0], [1], [0, 0, 1, 1], [], []>} : vector<64x128xbf16>, vector<128x128xbf16>, vector<64x128xf32> -> vector<64x128xf32>
    %131 = arith.addf %89, %130 : vector<64x128xf32>
    %c1_i32_65 = arith.constant 1 : i32
    %132 = arith.addi %0, %c1_i32_65 : i32
    %c0_66 = arith.constant 0 : index
    %133 = arith.index_cast %132 : i32 to index
    %c0_67 = arith.constant 0 : index
    %c0_68 = arith.constant 0 : index
    %134 = vector.load %arg3[%c0_66, %133, %c0_67, %c0_68] : memref<1x10x10x128xbf16, #tpu.memory_space<vmem>>, vector<1x8x8x128xbf16>
    %135 = vector.shape_cast %134 : vector<1x8x8x128xbf16> to vector<8x8x128xbf16>
    %136 = arith.extf %135 : vector<8x8x128xbf16> to vector<8x8x128xf32>
    %c0_69 = arith.constant 0 : index
    %c0_70 = arith.constant 0 : index
    %c0_71 = arith.constant 0 : index
    %137 = vector.load %arg5[%c0_69, %c0_70, %c0_71] : memref<1x1x128xf32, #tpu.memory_space<vmem>>, vector<1x1x128xf32>
    %138 = vector.broadcast %137 : vector<1x1x128xf32> to vector<8x8x128xf32>
    %139 = arith.mulf %136, %138 : vector<8x8x128xf32>
    %c0_72 = arith.constant 0 : index
    %c0_73 = arith.constant 0 : index
    %c0_74 = arith.constant 0 : index
    %140 = vector.load %arg6[%c0_72, %c0_73, %c0_74] : memref<1x1x128xf32, #tpu.memory_space<vmem>>, vector<1x1x128xf32>
    %141 = vector.broadcast %140 : vector<1x1x128xf32> to vector<8x8x128xf32>
    %142 = arith.addf %139, %141 : vector<8x8x128xf32>
    %cst_75 = arith.constant 0.000000e+00 : f32
    %143 = vector.broadcast %cst_75 : f32 to vector<8x8x128xf32>
    %144 = arith.maximumf %142, %143 : vector<8x8x128xf32>
    %c1_i32_76 = arith.constant 1 : i32
    %145 = vector.broadcast %c1_i32_76 : i32 to vector<8x8x1xi32>
    %146 = arith.muli %4, %145 : vector<8x8x1xi32>
    %c1_i32_77 = arith.constant 1 : i32
    %147 = vector.broadcast %c1_i32_77 : i32 to vector<8x8x1xi32>
    %148 = arith.addi %146, %147 : vector<8x8x1xi32>
    %c1_i32_78 = arith.constant 1 : i32
    %149 = vector.broadcast %c1_i32_78 : i32 to vector<8x8x1xi32>
    %150 = arith.muli %5, %149 : vector<8x8x1xi32>
    %c0_i32_79 = arith.constant 0 : i32
    %151 = vector.broadcast %c0_i32_79 : i32 to vector<8x8x1xi32>
    %152 = arith.addi %150, %151 : vector<8x8x1xi32>
    %c1_i32_80 = arith.constant 1 : i32
    %153 = vector.broadcast %c1_i32_80 : i32 to vector<8x8x1xi32>
    %154 = arith.cmpi sge, %148, %153 : vector<8x8x1xi32>
    %c9_i32_81 = arith.constant 9 : i32
    %155 = vector.broadcast %c9_i32_81 : i32 to vector<8x8x1xi32>
    %156 = arith.cmpi slt, %148, %155 : vector<8x8x1xi32>
    %157 = arith.andi %154, %156 : vector<8x8x1xi1>
    %c1_i32_82 = arith.constant 1 : i32
    %158 = vector.broadcast %c1_i32_82 : i32 to vector<8x8x1xi32>
    %159 = arith.cmpi sge, %152, %158 : vector<8x8x1xi32>
    %160 = arith.andi %157, %159 : vector<8x8x1xi1>
    %c9_i32_83 = arith.constant 9 : i32
    %161 = vector.broadcast %c9_i32_83 : i32 to vector<8x8x1xi32>
    %162 = arith.cmpi slt, %152, %161 : vector<8x8x1xi32>
    %163 = arith.andi %160, %162 : vector<8x8x1xi1>
    %cst_84 = arith.constant 0.000000e+00 : f32
    %164 = vector.shape_cast %163 : vector<8x8x1xi1> to vector<8x8x1xi1>
    %165 = vector.broadcast %164 : vector<8x8x1xi1> to vector<8x8x128xi1>
    %166 = vector.broadcast %cst_84 : f32 to vector<8x8x128xf32>
    %167 = arith.select %165, %144, %166 : vector<8x8x128xi1>, vector<8x8x128xf32>
    %168 = arith.truncf %167 : vector<8x8x128xf32> to vector<8x8x128xbf16>
    %169 = vector.shape_cast %168 : vector<8x8x128xbf16> to vector<64x128xbf16>
    %c3 = arith.constant 3 : index
    %c0_85 = arith.constant 0 : index
    %c0_86 = arith.constant 0 : index
    %170 = vector.load %arg4[%c3, %c0_85, %c0_86] : memref<9x128x128xbf16, #tpu.memory_space<vmem>>, vector<1x128x128xbf16>
    %171 = vector.shape_cast %170 : vector<1x128x128xbf16> to vector<128x128xbf16>
    %cst_87 = arith.constant dense<0.000000e+00> : vector<64x128xf32>
    %172 = tpu.matmul %169, %171, %cst_87 {dimension_numbers = #tpu.dot_dimension_numbers<[1], [0], [0], [1], [0, 0, 1, 1], [], []>} : vector<64x128xbf16>, vector<128x128xbf16>, vector<64x128xf32> -> vector<64x128xf32>
    %173 = arith.addf %131, %172 : vector<64x128xf32>
    %c1_i32_88 = arith.constant 1 : i32
    %174 = arith.addi %0, %c1_i32_88 : i32
    %c0_89 = arith.constant 0 : index
    %175 = arith.index_cast %174 : i32 to index
    %c1_90 = arith.constant 1 : index
    %c0_91 = arith.constant 0 : index
    %176 = vector.load %arg3[%c0_89, %175, %c1_90, %c0_91] : memref<1x10x10x128xbf16, #tpu.memory_space<vmem>>, vector<1x8x8x128xbf16>
    %177 = vector.shape_cast %176 : vector<1x8x8x128xbf16> to vector<8x8x128xbf16>
    %178 = arith.extf %177 : vector<8x8x128xbf16> to vector<8x8x128xf32>
    %c0_92 = arith.constant 0 : index
    %c0_93 = arith.constant 0 : index
    %c0_94 = arith.constant 0 : index
    %179 = vector.load %arg5[%c0_92, %c0_93, %c0_94] : memref<1x1x128xf32, #tpu.memory_space<vmem>>, vector<1x1x128xf32>
    %180 = vector.broadcast %179 : vector<1x1x128xf32> to vector<8x8x128xf32>
    %181 = arith.mulf %178, %180 : vector<8x8x128xf32>
    %c0_95 = arith.constant 0 : index
    %c0_96 = arith.constant 0 : index
    %c0_97 = arith.constant 0 : index
    %182 = vector.load %arg6[%c0_95, %c0_96, %c0_97] : memref<1x1x128xf32, #tpu.memory_space<vmem>>, vector<1x1x128xf32>
    %183 = vector.broadcast %182 : vector<1x1x128xf32> to vector<8x8x128xf32>
    %184 = arith.addf %181, %183 : vector<8x8x128xf32>
    %cst_98 = arith.constant 0.000000e+00 : f32
    %185 = vector.broadcast %cst_98 : f32 to vector<8x8x128xf32>
    %186 = arith.maximumf %184, %185 : vector<8x8x128xf32>
    %c1_i32_99 = arith.constant 1 : i32
    %187 = vector.broadcast %c1_i32_99 : i32 to vector<8x8x1xi32>
    %188 = arith.muli %4, %187 : vector<8x8x1xi32>
    %c1_i32_100 = arith.constant 1 : i32
    %189 = vector.broadcast %c1_i32_100 : i32 to vector<8x8x1xi32>
    %190 = arith.addi %188, %189 : vector<8x8x1xi32>
    %c1_i32_101 = arith.constant 1 : i32
    %191 = vector.broadcast %c1_i32_101 : i32 to vector<8x8x1xi32>
    %192 = arith.muli %5, %191 : vector<8x8x1xi32>
    %c1_i32_102 = arith.constant 1 : i32
    %193 = vector.broadcast %c1_i32_102 : i32 to vector<8x8x1xi32>
    %194 = arith.addi %192, %193 : vector<8x8x1xi32>
    %c1_i32_103 = arith.constant 1 : i32
    %195 = vector.broadcast %c1_i32_103 : i32 to vector<8x8x1xi32>
    %196 = arith.cmpi sge, %190, %195 : vector<8x8x1xi32>
    %c9_i32_104 = arith.constant 9 : i32
    %197 = vector.broadcast %c9_i32_104 : i32 to vector<8x8x1xi32>
    %198 = arith.cmpi slt, %190, %197 : vector<8x8x1xi32>
    %199 = arith.andi %196, %198 : vector<8x8x1xi1>
    %c1_i32_105 = arith.constant 1 : i32
    %200 = vector.broadcast %c1_i32_105 : i32 to vector<8x8x1xi32>
    %201 = arith.cmpi sge, %194, %200 : vector<8x8x1xi32>
    %202 = arith.andi %199, %201 : vector<8x8x1xi1>
    %c9_i32_106 = arith.constant 9 : i32
    %203 = vector.broadcast %c9_i32_106 : i32 to vector<8x8x1xi32>
    %204 = arith.cmpi slt, %194, %203 : vector<8x8x1xi32>
    %205 = arith.andi %202, %204 : vector<8x8x1xi1>
    %cst_107 = arith.constant 0.000000e+00 : f32
    %206 = vector.shape_cast %205 : vector<8x8x1xi1> to vector<8x8x1xi1>
    %207 = vector.broadcast %206 : vector<8x8x1xi1> to vector<8x8x128xi1>
    %208 = vector.broadcast %cst_107 : f32 to vector<8x8x128xf32>
    %209 = arith.select %207, %186, %208 : vector<8x8x128xi1>, vector<8x8x128xf32>
    %210 = arith.truncf %209 : vector<8x8x128xf32> to vector<8x8x128xbf16>
    %211 = vector.shape_cast %210 : vector<8x8x128xbf16> to vector<64x128xbf16>
    %c4 = arith.constant 4 : index
    %c0_108 = arith.constant 0 : index
    %c0_109 = arith.constant 0 : index
    %212 = vector.load %arg4[%c4, %c0_108, %c0_109] : memref<9x128x128xbf16, #tpu.memory_space<vmem>>, vector<1x128x128xbf16>
    %213 = vector.shape_cast %212 : vector<1x128x128xbf16> to vector<128x128xbf16>
    %cst_110 = arith.constant dense<0.000000e+00> : vector<64x128xf32>
    %214 = tpu.matmul %211, %213, %cst_110 {dimension_numbers = #tpu.dot_dimension_numbers<[1], [0], [0], [1], [0, 0, 1, 1], [], []>} : vector<64x128xbf16>, vector<128x128xbf16>, vector<64x128xf32> -> vector<64x128xf32>
    %215 = arith.addf %173, %214 : vector<64x128xf32>
    %c1_i32_111 = arith.constant 1 : i32
    %216 = arith.addi %0, %c1_i32_111 : i32
    %c0_112 = arith.constant 0 : index
    %217 = arith.index_cast %216 : i32 to index
    %c2_113 = arith.constant 2 : index
    %c0_114 = arith.constant 0 : index
    %218 = vector.load %arg3[%c0_112, %217, %c2_113, %c0_114] : memref<1x10x10x128xbf16, #tpu.memory_space<vmem>>, vector<1x8x8x128xbf16>
    %219 = vector.shape_cast %218 : vector<1x8x8x128xbf16> to vector<8x8x128xbf16>
    %220 = arith.extf %219 : vector<8x8x128xbf16> to vector<8x8x128xf32>
    %c0_115 = arith.constant 0 : index
    %c0_116 = arith.constant 0 : index
    %c0_117 = arith.constant 0 : index
    %221 = vector.load %arg5[%c0_115, %c0_116, %c0_117] : memref<1x1x128xf32, #tpu.memory_space<vmem>>, vector<1x1x128xf32>
    %222 = vector.broadcast %221 : vector<1x1x128xf32> to vector<8x8x128xf32>
    %223 = arith.mulf %220, %222 : vector<8x8x128xf32>
    %c0_118 = arith.constant 0 : index
    %c0_119 = arith.constant 0 : index
    %c0_120 = arith.constant 0 : index
    %224 = vector.load %arg6[%c0_118, %c0_119, %c0_120] : memref<1x1x128xf32, #tpu.memory_space<vmem>>, vector<1x1x128xf32>
    %225 = vector.broadcast %224 : vector<1x1x128xf32> to vector<8x8x128xf32>
    %226 = arith.addf %223, %225 : vector<8x8x128xf32>
    %cst_121 = arith.constant 0.000000e+00 : f32
    %227 = vector.broadcast %cst_121 : f32 to vector<8x8x128xf32>
    %228 = arith.maximumf %226, %227 : vector<8x8x128xf32>
    %c1_i32_122 = arith.constant 1 : i32
    %229 = vector.broadcast %c1_i32_122 : i32 to vector<8x8x1xi32>
    %230 = arith.muli %4, %229 : vector<8x8x1xi32>
    %c1_i32_123 = arith.constant 1 : i32
    %231 = vector.broadcast %c1_i32_123 : i32 to vector<8x8x1xi32>
    %232 = arith.addi %230, %231 : vector<8x8x1xi32>
    %c1_i32_124 = arith.constant 1 : i32
    %233 = vector.broadcast %c1_i32_124 : i32 to vector<8x8x1xi32>
    %234 = arith.muli %5, %233 : vector<8x8x1xi32>
    %c2_i32_125 = arith.constant 2 : i32
    %235 = vector.broadcast %c2_i32_125 : i32 to vector<8x8x1xi32>
    %236 = arith.addi %234, %235 : vector<8x8x1xi32>
    %c1_i32_126 = arith.constant 1 : i32
    %237 = vector.broadcast %c1_i32_126 : i32 to vector<8x8x1xi32>
    %238 = arith.cmpi sge, %232, %237 : vector<8x8x1xi32>
    %c9_i32_127 = arith.constant 9 : i32
    %239 = vector.broadcast %c9_i32_127 : i32 to vector<8x8x1xi32>
    %240 = arith.cmpi slt, %232, %239 : vector<8x8x1xi32>
    %241 = arith.andi %238, %240 : vector<8x8x1xi1>
    %c1_i32_128 = arith.constant 1 : i32
    %242 = vector.broadcast %c1_i32_128 : i32 to vector<8x8x1xi32>
    %243 = arith.cmpi sge, %236, %242 : vector<8x8x1xi32>
    %244 = arith.andi %241, %243 : vector<8x8x1xi1>
    %c9_i32_129 = arith.constant 9 : i32
    %245 = vector.broadcast %c9_i32_129 : i32 to vector<8x8x1xi32>
    %246 = arith.cmpi slt, %236, %245 : vector<8x8x1xi32>
    %247 = arith.andi %244, %246 : vector<8x8x1xi1>
    %cst_130 = arith.constant 0.000000e+00 : f32
    %248 = vector.shape_cast %247 : vector<8x8x1xi1> to vector<8x8x1xi1>
    %249 = vector.broadcast %248 : vector<8x8x1xi1> to vector<8x8x128xi1>
    %250 = vector.broadcast %cst_130 : f32 to vector<8x8x128xf32>
    %251 = arith.select %249, %228, %250 : vector<8x8x128xi1>, vector<8x8x128xf32>
    %252 = arith.truncf %251 : vector<8x8x128xf32> to vector<8x8x128xbf16>
    %253 = vector.shape_cast %252 : vector<8x8x128xbf16> to vector<64x128xbf16>
    %c5 = arith.constant 5 : index
    %c0_131 = arith.constant 0 : index
    %c0_132 = arith.constant 0 : index
    %254 = vector.load %arg4[%c5, %c0_131, %c0_132] : memref<9x128x128xbf16, #tpu.memory_space<vmem>>, vector<1x128x128xbf16>
    %255 = vector.shape_cast %254 : vector<1x128x128xbf16> to vector<128x128xbf16>
    %cst_133 = arith.constant dense<0.000000e+00> : vector<64x128xf32>
    %256 = tpu.matmul %253, %255, %cst_133 {dimension_numbers = #tpu.dot_dimension_numbers<[1], [0], [0], [1], [0, 0, 1, 1], [], []>} : vector<64x128xbf16>, vector<128x128xbf16>, vector<64x128xf32> -> vector<64x128xf32>
    %257 = arith.addf %215, %256 : vector<64x128xf32>
    %c2_i32_134 = arith.constant 2 : i32
    %258 = arith.addi %0, %c2_i32_134 : i32
    %c0_135 = arith.constant 0 : index
    %259 = arith.index_cast %258 : i32 to index
    %c0_136 = arith.constant 0 : index
    %c0_137 = arith.constant 0 : index
    %260 = vector.load %arg3[%c0_135, %259, %c0_136, %c0_137] : memref<1x10x10x128xbf16, #tpu.memory_space<vmem>>, vector<1x8x8x128xbf16>
    %261 = vector.shape_cast %260 : vector<1x8x8x128xbf16> to vector<8x8x128xbf16>
    %262 = arith.extf %261 : vector<8x8x128xbf16> to vector<8x8x128xf32>
    %c0_138 = arith.constant 0 : index
    %c0_139 = arith.constant 0 : index
    %c0_140 = arith.constant 0 : index
    %263 = vector.load %arg5[%c0_138, %c0_139, %c0_140] : memref<1x1x128xf32, #tpu.memory_space<vmem>>, vector<1x1x128xf32>
    %264 = vector.broadcast %263 : vector<1x1x128xf32> to vector<8x8x128xf32>
    %265 = arith.mulf %262, %264 : vector<8x8x128xf32>
    %c0_141 = arith.constant 0 : index
    %c0_142 = arith.constant 0 : index
    %c0_143 = arith.constant 0 : index
    %266 = vector.load %arg6[%c0_141, %c0_142, %c0_143] : memref<1x1x128xf32, #tpu.memory_space<vmem>>, vector<1x1x128xf32>
    %267 = vector.broadcast %266 : vector<1x1x128xf32> to vector<8x8x128xf32>
    %268 = arith.addf %265, %267 : vector<8x8x128xf32>
    %cst_144 = arith.constant 0.000000e+00 : f32
    %269 = vector.broadcast %cst_144 : f32 to vector<8x8x128xf32>
    %270 = arith.maximumf %268, %269 : vector<8x8x128xf32>
    %c1_i32_145 = arith.constant 1 : i32
    %271 = vector.broadcast %c1_i32_145 : i32 to vector<8x8x1xi32>
    %272 = arith.muli %4, %271 : vector<8x8x1xi32>
    %c2_i32_146 = arith.constant 2 : i32
    %273 = vector.broadcast %c2_i32_146 : i32 to vector<8x8x1xi32>
    %274 = arith.addi %272, %273 : vector<8x8x1xi32>
    %c1_i32_147 = arith.constant 1 : i32
    %275 = vector.broadcast %c1_i32_147 : i32 to vector<8x8x1xi32>
    %276 = arith.muli %5, %275 : vector<8x8x1xi32>
    %c0_i32_148 = arith.constant 0 : i32
    %277 = vector.broadcast %c0_i32_148 : i32 to vector<8x8x1xi32>
    %278 = arith.addi %276, %277 : vector<8x8x1xi32>
    %c1_i32_149 = arith.constant 1 : i32
    %279 = vector.broadcast %c1_i32_149 : i32 to vector<8x8x1xi32>
    %280 = arith.cmpi sge, %274, %279 : vector<8x8x1xi32>
    %c9_i32_150 = arith.constant 9 : i32
    %281 = vector.broadcast %c9_i32_150 : i32 to vector<8x8x1xi32>
    %282 = arith.cmpi slt, %274, %281 : vector<8x8x1xi32>
    %283 = arith.andi %280, %282 : vector<8x8x1xi1>
    %c1_i32_151 = arith.constant 1 : i32
    %284 = vector.broadcast %c1_i32_151 : i32 to vector<8x8x1xi32>
    %285 = arith.cmpi sge, %278, %284 : vector<8x8x1xi32>
    %286 = arith.andi %283, %285 : vector<8x8x1xi1>
    %c9_i32_152 = arith.constant 9 : i32
    %287 = vector.broadcast %c9_i32_152 : i32 to vector<8x8x1xi32>
    %288 = arith.cmpi slt, %278, %287 : vector<8x8x1xi32>
    %289 = arith.andi %286, %288 : vector<8x8x1xi1>
    %cst_153 = arith.constant 0.000000e+00 : f32
    %290 = vector.shape_cast %289 : vector<8x8x1xi1> to vector<8x8x1xi1>
    %291 = vector.broadcast %290 : vector<8x8x1xi1> to vector<8x8x128xi1>
    %292 = vector.broadcast %cst_153 : f32 to vector<8x8x128xf32>
    %293 = arith.select %291, %270, %292 : vector<8x8x128xi1>, vector<8x8x128xf32>
    %294 = arith.truncf %293 : vector<8x8x128xf32> to vector<8x8x128xbf16>
    %295 = vector.shape_cast %294 : vector<8x8x128xbf16> to vector<64x128xbf16>
    %c6 = arith.constant 6 : index
    %c0_154 = arith.constant 0 : index
    %c0_155 = arith.constant 0 : index
    %296 = vector.load %arg4[%c6, %c0_154, %c0_155] : memref<9x128x128xbf16, #tpu.memory_space<vmem>>, vector<1x128x128xbf16>
    %297 = vector.shape_cast %296 : vector<1x128x128xbf16> to vector<128x128xbf16>
    %cst_156 = arith.constant dense<0.000000e+00> : vector<64x128xf32>
    %298 = tpu.matmul %295, %297, %cst_156 {dimension_numbers = #tpu.dot_dimension_numbers<[1], [0], [0], [1], [0, 0, 1, 1], [], []>} : vector<64x128xbf16>, vector<128x128xbf16>, vector<64x128xf32> -> vector<64x128xf32>
    %299 = arith.addf %257, %298 : vector<64x128xf32>
    %c2_i32_157 = arith.constant 2 : i32
    %300 = arith.addi %0, %c2_i32_157 : i32
    %c0_158 = arith.constant 0 : index
    %301 = arith.index_cast %300 : i32 to index
    %c1_159 = arith.constant 1 : index
    %c0_160 = arith.constant 0 : index
    %302 = vector.load %arg3[%c0_158, %301, %c1_159, %c0_160] : memref<1x10x10x128xbf16, #tpu.memory_space<vmem>>, vector<1x8x8x128xbf16>
    %303 = vector.shape_cast %302 : vector<1x8x8x128xbf16> to vector<8x8x128xbf16>
    %304 = arith.extf %303 : vector<8x8x128xbf16> to vector<8x8x128xf32>
    %c0_161 = arith.constant 0 : index
    %c0_162 = arith.constant 0 : index
    %c0_163 = arith.constant 0 : index
    %305 = vector.load %arg5[%c0_161, %c0_162, %c0_163] : memref<1x1x128xf32, #tpu.memory_space<vmem>>, vector<1x1x128xf32>
    %306 = vector.broadcast %305 : vector<1x1x128xf32> to vector<8x8x128xf32>
    %307 = arith.mulf %304, %306 : vector<8x8x128xf32>
    %c0_164 = arith.constant 0 : index
    %c0_165 = arith.constant 0 : index
    %c0_166 = arith.constant 0 : index
    %308 = vector.load %arg6[%c0_164, %c0_165, %c0_166] : memref<1x1x128xf32, #tpu.memory_space<vmem>>, vector<1x1x128xf32>
    %309 = vector.broadcast %308 : vector<1x1x128xf32> to vector<8x8x128xf32>
    %310 = arith.addf %307, %309 : vector<8x8x128xf32>
    %cst_167 = arith.constant 0.000000e+00 : f32
    %311 = vector.broadcast %cst_167 : f32 to vector<8x8x128xf32>
    %312 = arith.maximumf %310, %311 : vector<8x8x128xf32>
    %c1_i32_168 = arith.constant 1 : i32
    %313 = vector.broadcast %c1_i32_168 : i32 to vector<8x8x1xi32>
    %314 = arith.muli %4, %313 : vector<8x8x1xi32>
    %c2_i32_169 = arith.constant 2 : i32
    %315 = vector.broadcast %c2_i32_169 : i32 to vector<8x8x1xi32>
    %316 = arith.addi %314, %315 : vector<8x8x1xi32>
    %c1_i32_170 = arith.constant 1 : i32
    %317 = vector.broadcast %c1_i32_170 : i32 to vector<8x8x1xi32>
    %318 = arith.muli %5, %317 : vector<8x8x1xi32>
    %c1_i32_171 = arith.constant 1 : i32
    %319 = vector.broadcast %c1_i32_171 : i32 to vector<8x8x1xi32>
    %320 = arith.addi %318, %319 : vector<8x8x1xi32>
    %c1_i32_172 = arith.constant 1 : i32
    %321 = vector.broadcast %c1_i32_172 : i32 to vector<8x8x1xi32>
    %322 = arith.cmpi sge, %316, %321 : vector<8x8x1xi32>
    %c9_i32_173 = arith.constant 9 : i32
    %323 = vector.broadcast %c9_i32_173 : i32 to vector<8x8x1xi32>
    %324 = arith.cmpi slt, %316, %323 : vector<8x8x1xi32>
    %325 = arith.andi %322, %324 : vector<8x8x1xi1>
    %c1_i32_174 = arith.constant 1 : i32
    %326 = vector.broadcast %c1_i32_174 : i32 to vector<8x8x1xi32>
    %327 = arith.cmpi sge, %320, %326 : vector<8x8x1xi32>
    %328 = arith.andi %325, %327 : vector<8x8x1xi1>
    %c9_i32_175 = arith.constant 9 : i32
    %329 = vector.broadcast %c9_i32_175 : i32 to vector<8x8x1xi32>
    %330 = arith.cmpi slt, %320, %329 : vector<8x8x1xi32>
    %331 = arith.andi %328, %330 : vector<8x8x1xi1>
    %cst_176 = arith.constant 0.000000e+00 : f32
    %332 = vector.shape_cast %331 : vector<8x8x1xi1> to vector<8x8x1xi1>
    %333 = vector.broadcast %332 : vector<8x8x1xi1> to vector<8x8x128xi1>
    %334 = vector.broadcast %cst_176 : f32 to vector<8x8x128xf32>
    %335 = arith.select %333, %312, %334 : vector<8x8x128xi1>, vector<8x8x128xf32>
    %336 = arith.truncf %335 : vector<8x8x128xf32> to vector<8x8x128xbf16>
    %337 = vector.shape_cast %336 : vector<8x8x128xbf16> to vector<64x128xbf16>
    %c7 = arith.constant 7 : index
    %c0_177 = arith.constant 0 : index
    %c0_178 = arith.constant 0 : index
    %338 = vector.load %arg4[%c7, %c0_177, %c0_178] : memref<9x128x128xbf16, #tpu.memory_space<vmem>>, vector<1x128x128xbf16>
    %339 = vector.shape_cast %338 : vector<1x128x128xbf16> to vector<128x128xbf16>
    %cst_179 = arith.constant dense<0.000000e+00> : vector<64x128xf32>
    %340 = tpu.matmul %337, %339, %cst_179 {dimension_numbers = #tpu.dot_dimension_numbers<[1], [0], [0], [1], [0, 0, 1, 1], [], []>} : vector<64x128xbf16>, vector<128x128xbf16>, vector<64x128xf32> -> vector<64x128xf32>
    %341 = arith.addf %299, %340 : vector<64x128xf32>
    %c2_i32_180 = arith.constant 2 : i32
    %342 = arith.addi %0, %c2_i32_180 : i32
    %c0_181 = arith.constant 0 : index
    %343 = arith.index_cast %342 : i32 to index
    %c2_182 = arith.constant 2 : index
    %c0_183 = arith.constant 0 : index
    %344 = vector.load %arg3[%c0_181, %343, %c2_182, %c0_183] : memref<1x10x10x128xbf16, #tpu.memory_space<vmem>>, vector<1x8x8x128xbf16>
    %345 = vector.shape_cast %344 : vector<1x8x8x128xbf16> to vector<8x8x128xbf16>
    %346 = arith.extf %345 : vector<8x8x128xbf16> to vector<8x8x128xf32>
    %c0_184 = arith.constant 0 : index
    %c0_185 = arith.constant 0 : index
    %c0_186 = arith.constant 0 : index
    %347 = vector.load %arg5[%c0_184, %c0_185, %c0_186] : memref<1x1x128xf32, #tpu.memory_space<vmem>>, vector<1x1x128xf32>
    %348 = vector.broadcast %347 : vector<1x1x128xf32> to vector<8x8x128xf32>
    %349 = arith.mulf %346, %348 : vector<8x8x128xf32>
    %c0_187 = arith.constant 0 : index
    %c0_188 = arith.constant 0 : index
    %c0_189 = arith.constant 0 : index
    %350 = vector.load %arg6[%c0_187, %c0_188, %c0_189] : memref<1x1x128xf32, #tpu.memory_space<vmem>>, vector<1x1x128xf32>
    %351 = vector.broadcast %350 : vector<1x1x128xf32> to vector<8x8x128xf32>
    %352 = arith.addf %349, %351 : vector<8x8x128xf32>
    %cst_190 = arith.constant 0.000000e+00 : f32
    %353 = vector.broadcast %cst_190 : f32 to vector<8x8x128xf32>
    %354 = arith.maximumf %352, %353 : vector<8x8x128xf32>
    %c1_i32_191 = arith.constant 1 : i32
    %355 = vector.broadcast %c1_i32_191 : i32 to vector<8x8x1xi32>
    %356 = arith.muli %4, %355 : vector<8x8x1xi32>
    %c2_i32_192 = arith.constant 2 : i32
    %357 = vector.broadcast %c2_i32_192 : i32 to vector<8x8x1xi32>
    %358 = arith.addi %356, %357 : vector<8x8x1xi32>
    %c1_i32_193 = arith.constant 1 : i32
    %359 = vector.broadcast %c1_i32_193 : i32 to vector<8x8x1xi32>
    %360 = arith.muli %5, %359 : vector<8x8x1xi32>
    %c2_i32_194 = arith.constant 2 : i32
    %361 = vector.broadcast %c2_i32_194 : i32 to vector<8x8x1xi32>
    %362 = arith.addi %360, %361 : vector<8x8x1xi32>
    %c1_i32_195 = arith.constant 1 : i32
    %363 = vector.broadcast %c1_i32_195 : i32 to vector<8x8x1xi32>
    %364 = arith.cmpi sge, %358, %363 : vector<8x8x1xi32>
    %c9_i32_196 = arith.constant 9 : i32
    %365 = vector.broadcast %c9_i32_196 : i32 to vector<8x8x1xi32>
    %366 = arith.cmpi slt, %358, %365 : vector<8x8x1xi32>
    %367 = arith.andi %364, %366 : vector<8x8x1xi1>
    %c1_i32_197 = arith.constant 1 : i32
    %368 = vector.broadcast %c1_i32_197 : i32 to vector<8x8x1xi32>
    %369 = arith.cmpi sge, %362, %368 : vector<8x8x1xi32>
    %370 = arith.andi %367, %369 : vector<8x8x1xi1>
    %c9_i32_198 = arith.constant 9 : i32
    %371 = vector.broadcast %c9_i32_198 : i32 to vector<8x8x1xi32>
    %372 = arith.cmpi slt, %362, %371 : vector<8x8x1xi32>
    %373 = arith.andi %370, %372 : vector<8x8x1xi1>
    %cst_199 = arith.constant 0.000000e+00 : f32
    %374 = vector.shape_cast %373 : vector<8x8x1xi1> to vector<8x8x1xi1>
    %375 = vector.broadcast %374 : vector<8x8x1xi1> to vector<8x8x128xi1>
    %376 = vector.broadcast %cst_199 : f32 to vector<8x8x128xf32>
    %377 = arith.select %375, %354, %376 : vector<8x8x128xi1>, vector<8x8x128xf32>
    %378 = arith.truncf %377 : vector<8x8x128xf32> to vector<8x8x128xbf16>
    %379 = vector.shape_cast %378 : vector<8x8x128xbf16> to vector<64x128xbf16>
    %c8 = arith.constant 8 : index
    %c0_200 = arith.constant 0 : index
    %c0_201 = arith.constant 0 : index
    %380 = vector.load %arg4[%c8, %c0_200, %c0_201] : memref<9x128x128xbf16, #tpu.memory_space<vmem>>, vector<1x128x128xbf16>
    %381 = vector.shape_cast %380 : vector<1x128x128xbf16> to vector<128x128xbf16>
    %cst_202 = arith.constant dense<0.000000e+00> : vector<64x128xf32>
    %382 = tpu.matmul %379, %381, %cst_202 {dimension_numbers = #tpu.dot_dimension_numbers<[1], [0], [0], [1], [0, 0, 1, 1], [], []>} : vector<64x128xbf16>, vector<128x128xbf16>, vector<64x128xf32> -> vector<64x128xf32>
    %383 = arith.addf %341, %382 : vector<64x128xf32>
    %c0_203 = arith.constant 0 : index
    %c0_204 = arith.constant 0 : index
    %384 = vector.load %arg7[%c0_203, %c0_204] : memref<1x128xf32, #tpu.memory_space<vmem>>, vector<1x128xf32>
    %385 = vector.broadcast %384 : vector<1x128xf32> to vector<64x128xf32>
    %386 = arith.addf %383, %385 : vector<64x128xf32>
    %387 = arith.truncf %386 : vector<64x128xf32> to vector<64x128xbf16>
    %c0_205 = arith.constant 0 : index
    %c0_206 = arith.constant 0 : index
    %c0_207 = arith.constant 0 : index
    %388 = vector.load %arg8[%c0_205, %c0_206, %c0_207] : memref<1x64x128xbf16, #tpu.memory_space<vmem>>, vector<1x64x128xbf16>
    %389 = vector.shape_cast %388 : vector<1x64x128xbf16> to vector<64x128xbf16>
    %390 = vector.shape_cast %387 : vector<64x128xbf16> to vector<1x64x128xbf16>
    tpu.vector_store %arg8[%c0_205, %c0_206, %c0_207], %390 {strides = array<i32>} : memref<1x64x128xbf16, #tpu.memory_space<vmem>>, vector<1x64x128xbf16>,
    %c0_i32_208 = arith.constant 0 : i32
    %391 = arith.cmpi eq, %arg2, %c0_i32_208 : i32
    %392 = arith.extui %391 : i1 to i32
    %c0_i32_209 = arith.constant 0 : i32
    %393 = arith.cmpi ne, %392, %c0_i32_209 : i32
    scf.if %393 {
      %cst_224 = arith.constant 0.000000e+00 : f32
      %407 = vector.broadcast %cst_224 : f32 to vector<1x1x128xf32>
      %c0_225 = arith.constant 0 : index
      %c0_226 = arith.constant 0 : index
      %c0_227 = arith.constant 0 : index
      %408 = vector.load %arg9[%c0_225, %c0_226, %c0_227] : memref<1x1x128xf32, #tpu.memory_space<vmem>>, vector<1x1x128xf32>
      tpu.vector_store %arg9[%c0_225, %c0_226, %c0_227], %407 {strides = array<i32>} : memref<1x1x128xf32, #tpu.memory_space<vmem>>, vector<1x1x128xf32>,
      %cst_228 = arith.constant 0.000000e+00 : f32
      %409 = vector.broadcast %cst_228 : f32 to vector<1x1x128xf32>
      %c0_229 = arith.constant 0 : index
      %c0_230 = arith.constant 0 : index
      %c0_231 = arith.constant 0 : index
      %410 = vector.load %arg10[%c0_229, %c0_230, %c0_231] : memref<1x1x128xf32, #tpu.memory_space<vmem>>, vector<1x1x128xf32>
      tpu.vector_store %arg10[%c0_229, %c0_230, %c0_231], %409 {strides = array<i32>} : memref<1x1x128xf32, #tpu.memory_space<vmem>>, vector<1x1x128xf32>,
    } else {
    }
    %c0_210 = arith.constant 0 : index
    %c0_211 = arith.constant 0 : index
    %c0_212 = arith.constant 0 : index
    %394 = vector.load %arg9[%c0_210, %c0_211, %c0_212] : memref<1x1x128xf32, #tpu.memory_space<vmem>>, vector<1x1x128xf32>
    %cst_213 = arith.constant dense<0.000000e+00> : vector<128xf32>
    %395 = vector.multi_reduction <add>, %386, %cst_213 [0] : vector<64x128xf32> to vector<128xf32>
    %396 = vector.shape_cast %395 : vector<128xf32> to vector<1x128xf32>
    %397 = vector.shape_cast %396 : vector<1x128xf32> to vector<1x1x128xf32>
    %398 = arith.addf %394, %397 : vector<1x1x128xf32>
    %c0_214 = arith.constant 0 : index
    %c0_215 = arith.constant 0 : index
    %c0_216 = arith.constant 0 : index
    %399 = vector.load %arg9[%c0_214, %c0_215, %c0_216] : memref<1x1x128xf32, #tpu.memory_space<vmem>>, vector<1x1x128xf32>
    tpu.vector_store %arg9[%c0_214, %c0_215, %c0_216], %398 {strides = array<i32>} : memref<1x1x128xf32, #tpu.memory_space<vmem>>, vector<1x1x128xf32>,
    %c0_217 = arith.constant 0 : index
    %c0_218 = arith.constant 0 : index
    %c0_219 = arith.constant 0 : index
    %400 = vector.load %arg10[%c0_217, %c0_218, %c0_219] : memref<1x1x128xf32, #tpu.memory_space<vmem>>, vector<1x1x128xf32>
    %401 = arith.mulf %386, %386 : vector<64x128xf32>
    %cst_220 = arith.constant dense<0.000000e+00> : vector<128xf32>
    %402 = vector.multi_reduction <add>, %401, %cst_220 [0] : vector<64x128xf32> to vector<128xf32>
    %403 = vector.shape_cast %402 : vector<128xf32> to vector<1x128xf32>
    %404 = vector.shape_cast %403 : vector<1x128xf32> to vector<1x1x128xf32>
    %405 = arith.addf %400, %404 : vector<1x1x128xf32>
    %c0_221 = arith.constant 0 : index
    %c0_222 = arith.constant 0 : index
    %c0_223 = arith.constant 0 : index
    %406 = vector.load %arg10[%c0_221, %c0_222, %c0_223] : memref<1x1x128xf32, #tpu.memory_space<vmem>>, vector<1x1x128xf32>
    tpu.vector_store %arg10[%c0_221, %c0_222, %c0_223], %405 {strides = array<i32>} : memref<1x1x128xf32, #tpu.memory_space<vmem>>, vector<1x1x128xf32>,
    return
  }
  func.func @transform_0(%arg0: i32, %arg1: i32, %arg2: i32) -> (i32, i32, i32, i32) {
    %c0_i32 = arith.constant 0 : i32
    %c0_i32_0 = arith.constant 0 : i32
    %c0_i32_1 = arith.constant 0 : i32
    %c0_i32_2 = arith.constant 0 : i32
    return %arg0, %c0_i32, %c0_i32_0, %c0_i32_1 : i32, i32, i32, i32
  }
  func.func @transform_1(%arg0: i32, %arg1: i32, %arg2: i32) -> (i32, i32, i32) {
    %c0_i32 = arith.constant 0 : i32
    %c0_i32_0 = arith.constant 0 : i32
    %c0_i32_1 = arith.constant 0 : i32
    return %c0_i32, %c0_i32_0, %arg1 : i32, i32, i32
  }
  func.func @transform_2(%arg0: i32, %arg1: i32, %arg2: i32) -> (i32, i32, i32) {
    %c0_i32 = arith.constant 0 : i32
    %c0_i32_0 = arith.constant 0 : i32
    %c0_i32_1 = arith.constant 0 : i32
    %c0_i32_2 = arith.constant 0 : i32
    return %c0_i32, %c0_i32_0, %c0_i32_1 : i32, i32, i32
  }
  func.func @transform_3(%arg0: i32, %arg1: i32, %arg2: i32) -> (i32, i32, i32) {
    %c0_i32 = arith.constant 0 : i32
    %c0_i32_0 = arith.constant 0 : i32
    %c0_i32_1 = arith.constant 0 : i32
    %c0_i32_2 = arith.constant 0 : i32
    return %c0_i32, %c0_i32_0, %c0_i32_1 : i32, i32, i32
  }
  func.func @transform_4(%arg0: i32, %arg1: i32, %arg2: i32) -> (i32, i32) {
    %c0_i32 = arith.constant 0 : i32
    %c0_i32_0 = arith.constant 0 : i32
    return %c0_i32, %arg1 : i32, i32
  }
  func.func @transform_5(%arg0: i32, %arg1: i32, %arg2: i32) -> (i32, i32, i32) {
    %c0_i32 = arith.constant 0 : i32
    return %arg0, %arg2, %arg1 : i32, i32, i32
  }
  func.func @transform_6(%arg0: i32, %arg1: i32, %arg2: i32) -> (i32, i32, i32) {
    %c0_i32 = arith.constant 0 : i32
    %c0_i32_0 = arith.constant 0 : i32
    return %arg0, %c0_i32, %arg1 : i32, i32, i32
  }
  func.func @transform_7(%arg0: i32, %arg1: i32, %arg2: i32) -> (i32, i32, i32) {
    %c0_i32 = arith.constant 0 : i32
    %c0_i32_0 = arith.constant 0 : i32
    return %arg0, %c0_i32, %arg1 : i32, i32, i32
  }
}

module attributes {stable_mosaic.version = 11 : i64} {
  func.func @se_pool_kernel(%arg0: i32, %arg1: i32, %arg2: memref<1x64x128xbf16, #tpu.memory_space<vmem>>, %arg3: memref<1x64x128xbf16, #tpu.memory_space<vmem>>, %arg4: memref<1x128xf32, #tpu.memory_space<vmem>>, %arg5: memref<1x128xf32, #tpu.memory_space<vmem>>, %arg6: memref<1x64x128xbf16, #tpu.memory_space<vmem>>, %arg7: memref<1x1x128xf32, #tpu.memory_space<vmem>>) attributes {dimension_semantics = [#tpu.dimension_semantics<parallel>, #tpu.dimension_semantics<arbitrary>], iteration_bounds = array<i64: 2, 1>, scalar_prefetch = 0 : i64, scratch_operands = 0 : i64, tpu.core_type = #tpu.core_type<tc>, window_params = [{transform_indices = @transform_0, window_bounds = array<i64: 1, 64, 128>}, {transform_indices = @transform_1, window_bounds = array<i64: 1, 64, 128>}, {pipeline_mode = #tpu.pipeline_mode<synchronous>, transform_indices = @transform_2, window_bounds = array<i64: 1, 128>}, {pipeline_mode = #tpu.pipeline_mode<synchronous>, transform_indices = @transform_3, window_bounds = array<i64: 1, 128>}, {transform_indices = @transform_4, window_bounds = array<i64: 1, 64, 128>}, {transform_indices = @transform_5, window_bounds = array<i64: 1, 1, 128>}]} {
    %c0_i32 = arith.constant 0 : i32
    %0 = arith.cmpi eq, %arg1, %c0_i32 : i32
    %1 = arith.extui %0 : i1 to i32
    %c0_i32_0 = arith.constant 0 : i32
    %2 = arith.cmpi ne, %1, %c0_i32_0 : i32
    scf.if %2 {
      %cst_22 = arith.constant 0.000000e+00 : f32
      %38 = vector.broadcast %cst_22 : f32 to vector<1x1x128xf32>
      %c0_23 = arith.constant 0 : index
      %c0_24 = arith.constant 0 : index
      %c0_25 = arith.constant 0 : index
      %39 = vector.load %arg7[%c0_23, %c0_24, %c0_25] : memref<1x1x128xf32, #tpu.memory_space<vmem>>, vector<1x1x128xf32>
      tpu.vector_store %arg7[%c0_23, %c0_24, %c0_25], %38 {strides = array<i32>} : memref<1x1x128xf32, #tpu.memory_space<vmem>>, vector<1x1x128xf32>,
    } else {
    }
    %c0 = arith.constant 0 : index
    %c0_1 = arith.constant 0 : index
    %c0_2 = arith.constant 0 : index
    %3 = vector.load %arg2[%c0, %c0_1, %c0_2] : memref<1x64x128xbf16, #tpu.memory_space<vmem>>, vector<1x64x128xbf16>
    %4 = vector.shape_cast %3 : vector<1x64x128xbf16> to vector<64x128xbf16>
    %5 = arith.extf %4 : vector<64x128xbf16> to vector<64x128xf32>
    %c0_3 = arith.constant 0 : index
    %c0_4 = arith.constant 0 : index
    %c0_5 = arith.constant 0 : index
    %6 = vector.load %arg3[%c0_3, %c0_4, %c0_5] : memref<1x64x128xbf16, #tpu.memory_space<vmem>>, vector<1x64x128xbf16>
    %7 = vector.shape_cast %6 : vector<1x64x128xbf16> to vector<64x128xbf16>
    %8 = arith.extf %7 : vector<64x128xbf16> to vector<64x128xf32>
    %c0_6 = arith.constant 0 : index
    %c0_7 = arith.constant 0 : index
    %9 = vector.load %arg4[%c0_6, %c0_7] : memref<1x128xf32, #tpu.memory_space<vmem>>, vector<1x128xf32>
    %10 = vector.broadcast %9 : vector<1x128xf32> to vector<64x128xf32>
    %11 = arith.mulf %8, %10 : vector<64x128xf32>
    %c0_8 = arith.constant 0 : index
    %c0_9 = arith.constant 0 : index
    %12 = vector.load %arg5[%c0_8, %c0_9] : memref<1x128xf32, #tpu.memory_space<vmem>>, vector<1x128xf32>
    %13 = vector.broadcast %12 : vector<1x128xf32> to vector<64x128xf32>
    %14 = arith.addf %11, %13 : vector<64x128xf32>
    %15 = arith.addf %5, %14 : vector<64x128xf32>
    %16 = arith.truncf %15 : vector<64x128xf32> to vector<64x128xbf16>
    %c0_10 = arith.constant 0 : index
    %c0_11 = arith.constant 0 : index
    %c0_12 = arith.constant 0 : index
    %17 = vector.load %arg6[%c0_10, %c0_11, %c0_12] : memref<1x64x128xbf16, #tpu.memory_space<vmem>>, vector<1x64x128xbf16>
    %18 = vector.shape_cast %17 : vector<1x64x128xbf16> to vector<64x128xbf16>
    %19 = vector.shape_cast %16 : vector<64x128xbf16> to vector<1x64x128xbf16>
    tpu.vector_store %arg6[%c0_10, %c0_11, %c0_12], %19 {strides = array<i32>} : memref<1x64x128xbf16, #tpu.memory_space<vmem>>, vector<1x64x128xbf16>,
    %20 = tpu.iota {dimensions = array<i32: 0>} : vector<64x1xi32>
    %c64_i32 = arith.constant 64 : i32
    %21 = arith.muli %arg1, %c64_i32 : i32
    %22 = vector.broadcast %21 : i32 to vector<64x1xi32>
    %23 = arith.addi %20, %22 : vector<64x1xi32>
    %c64_i32_13 = arith.constant 64 : i32
    %24 = vector.broadcast %c64_i32_13 : i32 to vector<64x1xi32>
    %25 = arith.cmpi slt, %23, %24 : vector<64x1xi32>
    %cst = arith.constant 0.000000e+00 : f32
    %26 = vector.shape_cast %25 : vector<64x1xi1> to vector<64x1xi1>
    %27 = vector.broadcast %26 : vector<64x1xi1> to vector<64x128xi1>
    %28 = vector.broadcast %cst : f32 to vector<64x128xf32>
    %29 = arith.select %27, %15, %28 : vector<64x128xi1>, vector<64x128xf32>
    %c0_14 = arith.constant 0 : index
    %c0_15 = arith.constant 0 : index
    %c0_16 = arith.constant 0 : index
    %30 = vector.load %arg7[%c0_14, %c0_15, %c0_16] : memref<1x1x128xf32, #tpu.memory_space<vmem>>, vector<1x1x128xf32>
    %cst_17 = arith.constant dense<0.000000e+00> : vector<128xf32>
    %31 = vector.multi_reduction <add>, %29, %cst_17 [0] : vector<64x128xf32> to vector<128xf32>
    %32 = vector.shape_cast %31 : vector<128xf32> to vector<1x128xf32>
    %cst_18 = arith.constant 1.562500e-02 : f32
    %33 = vector.broadcast %cst_18 : f32 to vector<1x128xf32>
    %34 = arith.mulf %32, %33 : vector<1x128xf32>
    %35 = vector.shape_cast %34 : vector<1x128xf32> to vector<1x1x128xf32>
    %36 = arith.addf %30, %35 : vector<1x1x128xf32>
    %c0_19 = arith.constant 0 : index
    %c0_20 = arith.constant 0 : index
    %c0_21 = arith.constant 0 : index
    %37 = vector.load %arg7[%c0_19, %c0_20, %c0_21] : memref<1x1x128xf32, #tpu.memory_space<vmem>>, vector<1x1x128xf32>
    tpu.vector_store %arg7[%c0_19, %c0_20, %c0_21], %36 {strides = array<i32>} : memref<1x1x128xf32, #tpu.memory_space<vmem>>, vector<1x1x128xf32>,
    return
  }
  func.func @transform_0(%arg0: i32, %arg1: i32) -> (i32, i32, i32) {
    %c0_i32 = arith.constant 0 : i32
    %c0_i32_0 = arith.constant 0 : i32
    return %arg0, %arg1, %c0_i32 : i32, i32, i32
  }
  func.func @transform_1(%arg0: i32, %arg1: i32) -> (i32, i32, i32) {
    %c0_i32 = arith.constant 0 : i32
    %c0_i32_0 = arith.constant 0 : i32
    return %arg0, %arg1, %c0_i32 : i32, i32, i32
  }
  func.func @transform_2(%arg0: i32, %arg1: i32) -> (i32, i32) {
    %c0_i32 = arith.constant 0 : i32
    %c0_i32_0 = arith.constant 0 : i32
    %c0_i32_1 = arith.constant 0 : i32
    return %c0_i32, %c0_i32_0 : i32, i32
  }
  func.func @transform_3(%arg0: i32, %arg1: i32) -> (i32, i32) {
    %c0_i32 = arith.constant 0 : i32
    %c0_i32_0 = arith.constant 0 : i32
    %c0_i32_1 = arith.constant 0 : i32
    return %c0_i32, %c0_i32_0 : i32, i32
  }
  func.func @transform_4(%arg0: i32, %arg1: i32) -> (i32, i32, i32) {
    %c0_i32 = arith.constant 0 : i32
    %c0_i32_0 = arith.constant 0 : i32
    return %arg0, %arg1, %c0_i32 : i32, i32, i32
  }
  func.func @transform_5(%arg0: i32, %arg1: i32) -> (i32, i32, i32) {
    %c0_i32 = arith.constant 0 : i32
    %c0_i32_0 = arith.constant 0 : i32
    %c0_i32_1 = arith.constant 0 : i32
    return %arg0, %c0_i32, %c0_i32_0 : i32, i32, i32
  }
}

module attributes {stable_mosaic.version = 11 : i64} {
  func.func @se_scale_kernel(%arg0: i32, %arg1: i32, %arg2: memref<1x1x128xf32, #tpu.memory_space<vmem>>, %arg3: memref<128x16xf32, #tpu.memory_space<vmem>>, %arg4: memref<16x128xf32, #tpu.memory_space<vmem>>, %arg5: memref<1x64x128xbf16, #tpu.memory_space<vmem>>, %arg6: memref<1x64x128xf32, #tpu.memory_space<vmem>>, %arg7: memref<1x128xf32, #tpu.memory_space<vmem>>) attributes {dimension_semantics = [#tpu.dimension_semantics<parallel>, #tpu.dimension_semantics<arbitrary>], iteration_bounds = array<i64: 2, 1>, scalar_prefetch = 0 : i64, scratch_operands = 1 : i64, tpu.core_type = #tpu.core_type<tc>, window_params = [{transform_indices = @transform_0, window_bounds = array<i64: 1, 1, 128>}, {pipeline_mode = #tpu.pipeline_mode<synchronous>, transform_indices = @transform_1, window_bounds = array<i64: 128, 16>}, {pipeline_mode = #tpu.pipeline_mode<synchronous>, transform_indices = @transform_2, window_bounds = array<i64: 16, 128>}, {transform_indices = @transform_3, window_bounds = array<i64: 1, 64, 128>}, {transform_indices = @transform_4, window_bounds = array<i64: 1, 64, 128>}]} {
    %c0_i32 = arith.constant 0 : i32
    %0 = arith.cmpi eq, %arg1, %c0_i32 : i32
    %1 = arith.extui %0 : i1 to i32
    %c0_i32_0 = arith.constant 0 : i32
    %2 = arith.cmpi ne, %1, %c0_i32_0 : i32
    scf.if %2 {
      %c0_8 = arith.constant 0 : index
      %c0_9 = arith.constant 0 : index
      %c0_10 = arith.constant 0 : index
      %12 = vector.load %arg2[%c0_8, %c0_9, %c0_10] : memref<1x1x128xf32, #tpu.memory_space<vmem>>, vector<1x1x128xf32>
      %13 = vector.shape_cast %12 : vector<1x1x128xf32> to vector<1x128xf32>
      %c0_11 = arith.constant 0 : index
      %c0_12 = arith.constant 0 : index
      %14 = vector.load %arg3[%c0_11, %c0_12] : memref<128x16xf32, #tpu.memory_space<vmem>>, vector<128x16xf32>
      %cst = arith.constant dense<0.000000e+00> : vector<1x16xf32>
      %15 = tpu.matmul %13, %14, %cst {dimension_numbers = #tpu.dot_dimension_numbers<[1], [0], [0], [1], [0, 0, 1, 1], [], []>} : vector<1x128xf32>, vector<128x16xf32>, vector<1x16xf32> -> vector<1x16xf32>
      %cst_13 = arith.constant 0.000000e+00 : f32
      %16 = vector.broadcast %cst_13 : f32 to vector<1x16xf32>
      %17 = arith.maximumf %15, %16 : vector<1x16xf32>
      %c0_14 = arith.constant 0 : index
      %c0_15 = arith.constant 0 : index
      %18 = vector.load %arg4[%c0_14, %c0_15] : memref<16x128xf32, #tpu.memory_space<vmem>>, vector<16x128xf32>
      %cst_16 = arith.constant dense<0.000000e+00> : vector<1x128xf32>
      %19 = tpu.matmul %17, %18, %cst_16 {dimension_numbers = #tpu.dot_dimension_numbers<[1], [0], [0], [1], [0, 0, 1, 1], [], []>} : vector<1x16xf32>, vector<16x128xf32>, vector<1x128xf32> -> vector<1x128xf32>
      %cst_17 = arith.constant 0.000000e+00 : f32
      %20 = vector.broadcast %cst_17 : f32 to vector<1x128xf32>
      %21 = arith.subf %20, %19 : vector<1x128xf32>
      %22 = math.exp %21 : vector<1x128xf32>
      %cst_18 = arith.constant 1.000000e+00 : f32
      %23 = vector.broadcast %cst_18 : f32 to vector<1x128xf32>
      %24 = arith.addf %23, %22 : vector<1x128xf32>
      %cst_19 = arith.constant 1.000000e+00 : f32
      %25 = vector.broadcast %cst_19 : f32 to vector<1x128xf32>
      %26 = arith.divf %25, %24 : vector<1x128xf32>
      %c0_20 = arith.constant 0 : index
      %c0_21 = arith.constant 0 : index
      %27 = vector.load %arg7[%c0_20, %c0_21] : memref<1x128xf32, #tpu.memory_space<vmem>>, vector<1x128xf32>
      tpu.vector_store %arg7[%c0_20, %c0_21], %26 {strides = array<i32>} : memref<1x128xf32, #tpu.memory_space<vmem>>, vector<1x128xf32>,
    } else {
    }
    %c0 = arith.constant 0 : index
    %c0_1 = arith.constant 0 : index
    %c0_2 = arith.constant 0 : index
    %3 = vector.load %arg5[%c0, %c0_1, %c0_2] : memref<1x64x128xbf16, #tpu.memory_space<vmem>>, vector<1x64x128xbf16>
    %4 = vector.shape_cast %3 : vector<1x64x128xbf16> to vector<64x128xbf16>
    %5 = arith.extf %4 : vector<64x128xbf16> to vector<64x128xf32>
    %c0_3 = arith.constant 0 : index
    %c0_4 = arith.constant 0 : index
    %6 = vector.load %arg7[%c0_3, %c0_4] : memref<1x128xf32, #tpu.memory_space<vmem>>, vector<1x128xf32>
    %7 = vector.broadcast %6 : vector<1x128xf32> to vector<64x128xf32>
    %8 = arith.mulf %5, %7 : vector<64x128xf32>
    %c0_5 = arith.constant 0 : index
    %c0_6 = arith.constant 0 : index
    %c0_7 = arith.constant 0 : index
    %9 = vector.load %arg6[%c0_5, %c0_6, %c0_7] : memref<1x64x128xf32, #tpu.memory_space<vmem>>, vector<1x64x128xf32>
    %10 = vector.shape_cast %9 : vector<1x64x128xf32> to vector<64x128xf32>
    %11 = vector.shape_cast %8 : vector<64x128xf32> to vector<1x64x128xf32>
    tpu.vector_store %arg6[%c0_5, %c0_6, %c0_7], %11 {strides = array<i32>} : memref<1x64x128xf32, #tpu.memory_space<vmem>>, vector<1x64x128xf32>,
    return
  }
  func.func @transform_0(%arg0: i32, %arg1: i32) -> (i32, i32, i32) {
    %c0_i32 = arith.constant 0 : i32
    %c0_i32_0 = arith.constant 0 : i32
    %c0_i32_1 = arith.constant 0 : i32
    return %arg0, %c0_i32, %c0_i32_0 : i32, i32, i32
  }
  func.func @transform_1(%arg0: i32, %arg1: i32) -> (i32, i32) {
    %c0_i32 = arith.constant 0 : i32
    %c0_i32_0 = arith.constant 0 : i32
    %c0_i32_1 = arith.constant 0 : i32
    return %c0_i32, %c0_i32_0 : i32, i32
  }
  func.func @transform_2(%arg0: i32, %arg1: i32) -> (i32, i32) {
    %c0_i32 = arith.constant 0 : i32
    %c0_i32_0 = arith.constant 0 : i32
    %c0_i32_1 = arith.constant 0 : i32
    return %c0_i32, %c0_i32_0 : i32, i32
  }
  func.func @transform_3(%arg0: i32, %arg1: i32) -> (i32, i32, i32) {
    %c0_i32 = arith.constant 0 : i32
    %c0_i32_0 = arith.constant 0 : i32
    return %arg0, %arg1, %c0_i32 : i32, i32, i32
  }
  func.func @transform_4(%arg0: i32, %arg1: i32) -> (i32, i32, i32) {
    %c0_i32 = arith.constant 0 : i32
    %c0_i32_0 = arith.constant 0 : i32
    return %arg0, %arg1, %c0_i32 : i32, i32, i32
  }
}

</mosaic_0001>

<llo_original>
// kernel: resnet_block_forward.9
$region0: #{resnet_block_forward.9}
  #allocation0 [shape = 'u32[]', space=smem, size = 0x4, offset = 0x4, fixed_abs, tag = 'smem constant byte address 0x4 - core index']
  #allocation1 [shape = 'u32[144,128]{1,0:T(1,128)}', space=vmem, size = 0x12000, scoped, tag = 'internal scratch']
  %s0 = inlined_call_operand.vmem [shape: bf16[2,8,8,64], index: 0, kind: input, shape index: {}]
  %s1 = inlined_call_operand.vmem [shape: bf16[1,64,128], index: 1, kind: input, shape index: {}]
  %s2 = inlined_call_operand.vmem [shape: f32[1,1,64], index: 2, kind: input, shape index: {}]
  %s3 = inlined_call_operand.vmem [shape: f32[1,1,64], index: 3, kind: input, shape index: {}]
  %s4 = inlined_call_operand.vmem [shape: f32[1,128], index: 4, kind: input, shape index: {}]
  %s5 = inlined_call_operand.vmem [shape: bf16[2,64,128], index: 5, kind: output, shape index: {0}]
  %s6 = inlined_call_operand.vmem [shape: f32[2,1,128], index: 6, kind: output, shape index: {1}]
  %s7 = inlined_call_operand.vmem [shape: f32[2,1,128], index: 7, kind: output, shape index: {2}]
  %8 = xla_tuple %s5, %s6, %s7
  %s9 = sld [smem:[#allocation0]]
  $region73: #{resnet_block_forward.9} parent=0
    _
  %s11 = ssub.s32 1, %s9
  %s12 = scalar_select 0, %s11, %s9
  loop: start=0, step=1, limit=4
  $region2: #{resnet_block_forward.9} parent=0 // loop_pre_header
    _
  $region3: #{resnet_block_forward.9} parent=0 // loop_header
    %s14 = sphi 0, %s18
    %p15 = scmp.ge.s32.totalorder %s14, 4
    %s21 = sphi 0, %s40
    %s22 = sphi 0, %s36
    %s23 = sphi 0, %s32
    %s24 = sphi 0, %s21
    %s25 = sphi 0, %s22
    %s26 = sphi 0, %s23
    %s27 = sphi 0, %s24
    %s28 = sphi 0, %s25
    %s29 = sphi 0, %s26
    %s43 = sphi 0, %s45
    %s46 = sphi 0, %s43
    %s47 = sphi 0, %s46
    %s63 = sphi 0, %s47
    %s69 = sphi 0, %s71
    %s72 = sphi 0, %s69
    %s73 = sphi 0, %s72
    %s89 = sphi 0, %s73
    %s93 = sphi 0, %s93
    %s95 = sphi 0, %s93
    %s96 = sphi 0, %s95
    %s110 = sphi 0, %s96
    %s114 = sphi 0, %s114
    %s116 = sphi 0, %s114
    %s117 = sphi 0, %s116
    %s131 = sphi 0, %s117
    %s137 = sphi 0, %s139
    %s140 = sphi 0, %s137
    %s141 = sphi 0, %s140
    %s157 = sphi 0, %s141
    %s167 = sphi 0, %s169
    %s170 = sphi 0, %s167
    %s171 = sphi 0, %s170
    %s187 = sphi 0, %s171
    %s195 = sphi 0, %s197
    %s198 = sphi 0, %s195
    %s199 = sphi 0, %s198
    %s215 = sphi 0, %s199
    %s223 = sphi 0, %s225
    %s226 = sphi 0, %s223
    %s227 = sphi 0, %s226
    %s243 = sphi 0, %s227
  $region4: #{resnet_block_forward.9} parent=0 // loop_header_branch
    %17 = sbr.rel (%p15) target = $region8
  $region5: #{resnet_block_forward.9} parent=0 // loop_body
    %s19 = ssub.s32 %s14, 1
    %s20 = ssub.s32 %s14, 2
    %s30 = sadd.s32 1, %s23
    %p31 = scmp.ge.s32.totalorder %s30, 1
    %s32 = scalar_select %p31, 0, %s30
    %s33 = sadd.s32 1, %s22
    %s34 = scalar_select %p31, %s33, %s22
    %p35 = scmp.ge.s32.totalorder %s34, 1
    %s36 = scalar_select %p35, 0, %s34
    %s37 = sadd.s32 1, %s21
    %s38 = scalar_select %p35, %s37, %s21
    %p39 = scmp.ge.s32.totalorder %s38, 2
    %s40 = scalar_select %p39, 0, %s38
    %s41 = ssub.s32 %s21, %s40
    %p42 = scmp.eq.s32.totalorder %s41, 0
    %s44 = sadd.s32 %s43, 1
    %s45 = scalar_select %p42, %s43, %s44
    %p48 = pneg %p42
    %p49 = scmp.eq.s32.totalorder %s14, 1
    %p50 = por %p48, %p49
    %p51 = scmp.ne.s32.totalorder %s43, %s46
    %p52 = scmp.eq.s32.totalorder %s14, 0
    %p53 = por %p51, %p52
    %p54 = scmp.ne.s32.totalorder %s43, %s46
    %p55 = scmp.eq.s32.totalorder %s19, 1
    %p56 = por %p54, %p55
    %p57 = scmp.ne.s32.totalorder %s46, %s47
    %p58 = scmp.eq.s32.totalorder %s19, 0
    %p59 = por %p57, %p58
    %p60 = scmp.ne.s32.totalorder %s46, %s47
    %p61 = scmp.eq.s32.totalorder %s20, 1
    %p62 = por %p60, %p61
    %p64 = scmp.ne.s32.totalorder %s47, %s63
    %p65 = scmp.eq.s32.totalorder %s20, 0
    %p66 = por %p64, %p65
    %s67 = ssub.s32 %s22, %s36
    %p68 = scmp.eq.s32.totalorder %s67, 0
    %s70 = sadd.s32 %s69, 1
    %s71 = scalar_select %p68, %s69, %s70
    %p74 = pneg %p68
    %p75 = scmp.eq.s32.totalorder %s14, 1
    %p76 = por %p74, %p75
    %p77 = scmp.ne.s32.totalorder %s69, %s72
    %p78 = scmp.eq.s32.totalorder %s14, 0
    %p79 = por %p77, %p78
    %p80 = scmp.ne.s32.totalorder %s69, %s72
    %p81 = scmp.eq.s32.totalorder %s19, 1
    %p82 = por %p80, %p81
    %p83 = scmp.ne.s32.totalorder %s72, %s73
    %p84 = scmp.eq.s32.totalorder %s19, 0
    %p85 = por %p83, %p84
    %p86 = scmp.ne.s32.totalorder %s72, %s73
    %p87 = scmp.eq.s32.totalorder %s20, 1
    %p88 = por %p86, %p87
    %p90 = scmp.ne.s32.totalorder %s73, %s89
    %p91 = scmp.eq.s32.totalorder %s20, 0
    %p92 = por %p90, %p91
    %s94 = sadd.s32 %s93, 1
    %p97 = scmp.eq.s32.totalorder %s14, 1
    %p98 = scmp.ne.s32.totalorder %s93, %s95
    %p99 = scmp.eq.s32.totalorder %s14, 0
    %p100 = por %p98, %p99
    %p101 = scmp.ne.s32.totalorder %s93, %s95
    %p102 = scmp.eq.s32.totalorder %s19, 1
    %p103 = por %p101, %p102
    %p104 = scmp.ne.s32.totalorder %s95, %s96
    %p105 = scmp.eq.s32.totalorder %s19, 0
    %p106 = por %p104, %p105
    %p107 = scmp.ne.s32.totalorder %s95, %s96
    %p108 = scmp.eq.s32.totalorder %s20, 1
    %p109 = por %p107, %p108
    %p111 = scmp.ne.s32.totalorder %s96, %s110
    %p112 = scmp.eq.s32.totalorder %s20, 0
    %p113 = por %p111, %p112
    %s115 = sadd.s32 %s114, 1
    %p118 = scmp.eq.s32.totalorder %s14, 1
    %p119 = scmp.ne.s32.totalorder %s114, %s116
    %p120 = scmp.eq.s32.totalorder %s14, 0
    %p121 = por %p119, %p120
    %p122 = scmp.ne.s32.totalorder %s114, %s116
    %p123 = scmp.eq.s32.totalorder %s19, 1
    %p124 = por %p122, %p123
    %p125 = scmp.ne.s32.totalorder %s116, %s117
    %p126 = scmp.eq.s32.totalorder %s19, 0
    %p127 = por %p125, %p126
    %p128 = scmp.ne.s32.totalorder %s116, %s117
    %p129 = scmp.eq.s32.totalorder %s20, 1
    %p130 = por %p128, %p129
    %p132 = scmp.ne.s32.totalorder %s117, %s131
    %p133 = scmp.eq.s32.totalorder %s20, 0
    %p134 = por %p132, %p133
    %s135 = ssub.s32 %s22, %s36
    %p136 = scmp.eq.s32.totalorder %s135, 0
    %s138 = sadd.s32 %s137, 1
    %s139 = scalar_select %p136, %s137, %s138
    %p142 = pneg %p136
    %p143 = scmp.eq.s32.totalorder %s14, 1
    %p144 = por %p142, %p143
    %p145 = scmp.ne.s32.totalorder %s137, %s140
    %p146 = scmp.eq.s32.totalorder %s14, 0
    %p147 = por %p145, %p146
    %p148 = scmp.ne.s32.totalorder %s137, %s140
    %p149 = scmp.eq.s32.totalorder %s19, 1
    %p150 = por %p148, %p149
    %p151 = scmp.ne.s32.totalorder %s140, %s141
    %p152 = scmp.eq.s32.totalorder %s19, 0
    %p153 = por %p151, %p152
    %p154 = scmp.ne.s32.totalorder %s140, %s141
    %p155 = scmp.eq.s32.totalorder %s20, 1
    %p156 = por %p154, %p155
    %p158 = scmp.ne.s32.totalorder %s141, %s157
    %p159 = scmp.eq.s32.totalorder %s20, 0
    %p160 = por %p158, %p159
    %s161 = ssub.s32 %s21, %s40
    %s162 = ssub.s32 %s23, %s32
    %s163 = sor.u32 %s161, %s162
    %s164 = ssub.s32 %s22, %s36
    %s165 = sor.u32 %s163, %s164
    %p166 = scmp.eq.s32.totalorder %s165, 0
    %s168 = sadd.s32 %s167, 1
    %s169 = scalar_select %p166, %s167, %s168
    %p172 = pneg %p166
    %p173 = scmp.eq.s32.totalorder %s14, 1
    %p174 = por %p172, %p173
    %p175 = scmp.ne.s32.totalorder %s167, %s170
    %p176 = scmp.eq.s32.totalorder %s14, 0
    %p177 = por %p175, %p176
    %p178 = scmp.ne.s32.totalorder %s167, %s170
    %p179 = scmp.eq.s32.totalorder %s19, 1
    %p180 = por %p178, %p179
    %p181 = scmp.ne.s32.totalorder %s170, %s171
    %p182 = scmp.eq.s32.totalorder %s19, 0
    %p183 = por %p181, %p182
    %p184 = scmp.ne.s32.totalorder %s170, %s171
    %p185 = scmp.eq.s32.totalorder %s20, 1
    %p186 = por %p184, %p185
    %p188 = scmp.ne.s32.totalorder %s171, %s187
    %p189 = scmp.eq.s32.totalorder %s20, 0
    %p190 = por %p188, %p189
    %s191 = ssub.s32 %s21, %s40
    %s192 = ssub.s32 %s22, %s36
    %s193 = sor.u32 %s191, %s192
    %p194 = scmp.eq.s32.totalorder %s193, 0
    %s196 = sadd.s32 %s195, 1
    %s197 = scalar_select %p194, %s195, %s196
    %p200 = pneg %p194
    %p201 = scmp.eq.s32.totalorder %s14, 1
    %p202 = por %p200, %p201
    %p203 = scmp.ne.s32.totalorder %s195, %s198
    %p204 = scmp.eq.s32.totalorder %s14, 0
    %p205 = por %p203, %p204
    %p206 = scmp.ne.s32.totalorder %s195, %s198
    %p207 = scmp.eq.s32.totalorder %s19, 1
    %p208 = por %p206, %p207
    %p209 = scmp.ne.s32.totalorder %s198, %s199
    %p210 = scmp.eq.s32.totalorder %s19, 0
    %p211 = por %p209, %p210
    %p212 = scmp.ne.s32.totalorder %s198, %s199
    %p213 = scmp.eq.s32.totalorder %s20, 1
    %p214 = por %p212, %p213
    %p216 = scmp.ne.s32.totalorder %s199, %s215
    %p217 = scmp.eq.s32.totalorder %s20, 0
    %p218 = por %p216, %p217
    %s219 = ssub.s32 %s21, %s40
    %s220 = ssub.s32 %s22, %s36
    %s221 = sor.u32 %s219, %s220
    %p222 = scmp.eq.s32.totalorder %s221, 0
    %s224 = sadd.s32 %s223, 1
    %s225 = scalar_select %p222, %s223, %s224
    %p228 = pneg %p222
    %p229 = scmp.eq.s32.totalorder %s14, 1
    %p230 = por %p228, %p229
    %p231 = scmp.ne.s32.totalorder %s223, %s226
    %p232 = scmp.eq.s32.totalorder %s14, 0
    %p233 = por %p231, %p232
    %p234 = scmp.ne.s32.totalorder %s223, %s226
    %p235 = scmp.eq.s32.totalorder %s19, 1
    %p236 = por %p234, %p235
    %p237 = scmp.ne.s32.totalorder %s226, %s227
    %p238 = scmp.eq.s32.totalorder %s19, 0
    %p239 = por %p237, %p238
    %p240 = scmp.ne.s32.totalorder %s226, %s227
    %p241 = scmp.eq.s32.totalorder %s20, 1
    %p242 = por %p240, %p241
    %p244 = scmp.ne.s32.totalorder %s227, %s243
    %p245 = scmp.eq.s32.totalorder %s20, 0
    %p246 = por %p244, %p245
    %p247 = scmp.le.s32.totalorder 1, %s14
    %p248 = scmp.lt.s32.totalorder %s14, 3
    %p249 = pnand %p247, %p248
    %p250 = pneg %p249
    // Predicated region
    $region9: #{resnet_block_forward.9} parent=5 // pred_check
      _
    $region10: #{resnet_block_forward.9} parent=5 // pred_check_branch
      %252 = sbr.rel (%p249) target = $region12
    $region11: #{resnet_block_forward.9} parent=5 // pred_region
      %s253 = ssub.s32 %s14, 1
      // Predicated region
      $region13: #{resnet_block_forward.9} parent=11 // pred_check
        %p254 = pneg %p85
      $region14: #{resnet_block_forward.9} parent=11 // pred_check_branch
        %256 = sbr.rel (%p254) target = $region16
      $region15: #{resnet_block_forward.9} parent=11 // pred_region
        %p257 = scmp.lt.s32.totalorder %s25, 0
        %s258 = scalar_select %p257, %s25, 0
        %s259 = smul.addr %s258, 4
        %s260 = scalar_lea.vmem %s1, %s259
      $region16: #{resnet_block_forward.9} parent=11 // pred_fallthru
        _
      // Predicated region
      $region17: #{resnet_block_forward.9} parent=11 // pred_check
        %p261 = pneg %p106
      $region18: #{resnet_block_forward.9} parent=11 // pred_check_branch
        %263 = sbr.rel (%p261) target = $region20
      $region19: #{resnet_block_forward.9} parent=11 // pred_region
        _
      $region20: #{resnet_block_forward.9} parent=11 // pred_fallthru
        _
      // Predicated region
      $region21: #{resnet_block_forward.9} parent=11 // pred_check
        %p264 = pneg %p127
      $region22: #{resnet_block_forward.9} parent=11 // pred_check_branch
        %266 = sbr.rel (%p264) target = $region24
      $region23: #{resnet_block_forward.9} parent=11 // pred_region
        _
      $region24: #{resnet_block_forward.9} parent=11 // pred_fallthru
        _
      // Predicated region
      $region25: #{resnet_block_forward.9} parent=11 // pred_check
        %p267 = pneg %p153
      $region26: #{resnet_block_forward.9} parent=11 // pred_check_branch
        %269 = sbr.rel (%p267) target = $region28
      $region27: #{resnet_block_forward.9} parent=11 // pred_region
        %p270 = scmp.lt.s32.totalorder %s25, 0
        %s271 = scalar_select %p270, %s25, 0
        %s272 = scalar_lea.vmem %s4, %s271
      $region28: #{resnet_block_forward.9} parent=11 // pred_fallthru
        _
    $region12: #{resnet_block_forward.9} parent=5 // pred_fallthru
      _
    %p273 = scmp.lt.s32.totalorder %s14, 2
    // Predicated region
    $region29: #{resnet_block_forward.9} parent=5 // pred_check
      %p274 = pneg %p273
    $region30: #{resnet_block_forward.9} parent=5 // pred_check_branch
      %276 = sbr.rel (%p274) target = $region32
    $region31: #{resnet_block_forward.9} parent=5 // pred_region
      // Predicated region
      $region33: #{resnet_block_forward.9} parent=31 // pred_check
        %p277 = pneg %p53
      $region34: #{resnet_block_forward.9} parent=31 // pred_check_branch
        %279 = sbr.rel (%p277) target = $region36
      $region35: #{resnet_block_forward.9} parent=31 // pred_region
        %p280 = scmp.lt.s32.totalorder %s21, 1
        %s281 = scalar_select %p280, %s21, 1
        %s282 = smul.addr %s281, 8
        %s283 = smul.addr %s282, 4
        %s284 = scalar_lea.vmem %s0, %s283
      $region36: #{resnet_block_forward.9} parent=31 // pred_fallthru
        _
    $region32: #{resnet_block_forward.9} parent=5 // pred_fallthru
      _
    %p285 = scmp.le.s32.totalorder 1, %s14
    %p286 = scmp.lt.s32.totalorder %s14, 3
    %p287 = pnand %p285, %p286
    %p288 = pneg %p287
    // Predicated region
    $region37: #{resnet_block_forward.9} parent=5 // pred_check
      _
    $region38: #{resnet_block_forward.9} parent=5 // pred_check_branch
      %290 = sbr.rel (%p287) target = $region40
    $region39: #{resnet_block_forward.9} parent=5 // pred_region
      %s291 = ssub.s32 %s14, 1
      %p292 = scmp.lt.s32.totalorder %s24, 1
      %s293 = scalar_select %p292, %s24, 1
      %s294 = smul.addr %s293, 8
      %s295 = smul.addr %s294, 4
      %s296 = scalar_lea.vmem %s0, %s295
      %p297 = pneg %p59
      %p298 = pneg %p56
      %p299 = scmp.lt.s32.totalorder %s25, 0
      %s300 = scalar_select %p299, %s25, 0
      %s301 = smul.addr %s300, 4
      %s302 = scalar_lea.vmem %s1, %s301
      %p303 = pneg %p85
      %p304 = pneg %p82
      %p305 = pneg %p106
      %p306 = pneg %p103
      %p307 = pneg %p127
      %p308 = pneg %p124
      %p309 = scmp.lt.s32.totalorder %s25, 0
      %s310 = scalar_select %p309, %s25, 0
      %s311 = scalar_lea.vmem %s4, %s310
      %p312 = pneg %p153
      %p313 = pneg %p150
      %p314 = pneg %p183
      %p315 = pneg %p180
      %s316 = smul.u32 8, %s26
      %p317 = scmp.lt.s32.totalorder %s24, 1
      %s318 = scalar_select %p317, %s24, 1
      %p319 = scmp.lt.s32.totalorder %s316, 7
      %s320 = scalar_select %p319, %s316, 7
      %p321 = scmp.lt.s32.totalorder %s25, 0
      %s322 = scalar_select %p321, %s25, 0
      %s323 = sadd.s32 %s322, %s320
      %s324 = smul.addr %s318, 8
      %s325 = sadd.s32 %s323, %s324
      %s326 = smul.addr %s325, 4
      %s327 = scalar_lea.vmem %s5, %s326
      %p328 = pneg %p211
      %p329 = pneg %p208
      %p330 = scmp.lt.s32.totalorder %s24, 1
      %s331 = scalar_select %p330, %s24, 1
      %p332 = scmp.lt.s32.totalorder %s25, 0
      %s333 = scalar_select %p332, %s25, 0
      %s334 = sadd.s32 %s333, %s331
      %s335 = scalar_lea.vmem %s6, %s334
      %p336 = pneg %p239
      %p337 = pneg %p236
      %p338 = scmp.lt.s32.totalorder %s24, 1
      %s339 = scalar_select %p338, %s24, 1
      %p340 = scmp.lt.s32.totalorder %s25, 0
      %s341 = scalar_select %p340, %s25, 0
      %s342 = sadd.s32 %s341, %s339
      %s343 = scalar_lea.vmem %s7, %s342
      %p344 = scmp.lt.s32.totalorder %s24, 1
      %s345 = scalar_select %p344, %s24, 1
      %s346 = smul.addr %s345, 8
      %s347 = smul.addr %s346, 4
      %s348 = scalar_lea.vmem %s0, %s347
      %p349 = scmp.lt.s32.totalorder %s25, 0
      %s350 = scalar_select %p349, %s25, 0
      %s351 = smul.addr %s350, 4
      %s352 = scalar_lea.vmem %s1, %s351
      %p353 = scmp.lt.s32.totalorder %s25, 0
      %s354 = scalar_select %p353, %s25, 0
      %s355 = scalar_lea.vmem %s4, %s354
      %s356 = smul.u32 8, %s26
      %p357 = scmp.lt.s32.totalorder %s24, 1
      %s358 = scalar_select %p357, %s24, 1
      %p359 = scmp.lt.s32.totalorder %s356, 7
      %s360 = scalar_select %p359, %s356, 7
      %p361 = scmp.lt.s32.totalorder %s25, 0
      %s362 = scalar_select %p361, %s25, 0
      %s363 = sadd.s32 %s362, %s360
      %s364 = smul.addr %s358, 8
      %s365 = sadd.s32 %s363, %s364
      %s366 = smul.addr %s365, 4
      %s367 = scalar_lea.vmem %s5, %s366
      %s368 = smul.u32 8, %s26
      %p369 = scmp.lt.s32.totalorder %s24, 1
      %s370 = scalar_select %p369, %s24, 1
      %p371 = scmp.lt.s32.totalorder %s25, 0
      %s372 = scalar_select %p371, %s25, 0
      %s373 = sadd.s32 %s372, %s370
      %s374 = scalar_lea.vmem %s6, %s373
      %p375 = scmp.lt.s32.totalorder %s24, 1
      %s376 = scalar_select %p375, %s24, 1
      %p377 = scmp.lt.s32.totalorder %s25, 0
      %s378 = scalar_select %p377, %s25, 0
      %s379 = sadd.s32 %s378, %s376
      %s380 = scalar_lea.vmem %s7, %s379
      %s382 = smul.u32 %s26, 8
      %s383 = smul.addr %s382, 4
      %s384 = scalar_lea.vmem %s348, %s383
      %v385 = vld [vmem:[%s384] sm:$0xf]
      %v386 = vld [vmem:[%s384 + $0x4] sm:$0xf]
      %v387 = vld [vmem:[%s384 + $0x8] sm:$0xf]
      %v388 = vld [vmem:[%s384 + $0xc] sm:$0xf]
      %v389 = vld [vmem:[%s384 + $0x10] sm:$0xf]
      %v390 = vld [vmem:[%s384 + $0x14] sm:$0xf]
      %v391 = vld [vmem:[%s384 + $0x18] sm:$0xf]
      %v392 = vld [vmem:[%s384 + $0x1c] sm:$0xf]
      %v393 = vld [vmem:[%s352] sm:$0xf]
      %v394 = vld [vmem:[%s352 + $0x4] sm:$0xf]
      %v395 = vld [vmem:[%s352 + $0x8] sm:$0xf]
      %v396 = vld [vmem:[%s352 + $0xc] sm:$0xf]
      %v397 = vld [vmem:[%s352 + $0x10] sm:$0xf]
      %v398 = vld [vmem:[%s352 + $0x14] sm:$0xf]
      %v399 = vld [vmem:[%s352 + $0x18] sm:$0xf]
      %v400 = vld [vmem:[%s352 + $0x1c] sm:$0xf]
      %v401 = vld [vmem:[%s355] sm:$0x1]
      %v403 = vlaneseq
      %v404 = vshrl.u32 %v403, 7
      %v405 = vsub.s32 0, %v404
      %v406 = vrot.slane %v401, %v405
      %v416 = vunpack.c.l.b16 %v385
      %v417 = vunpack.c.l.b16 %v386
      %v418 = vunpack.c.l.b16 %v387
      %v419 = vunpack.c.l.b16 %v388
      %v420 = vunpack.c.l.b16 %v389
      %v421 = vunpack.c.l.b16 %v390
      %v422 = vunpack.c.l.b16 %v391
      %v423 = vunpack.c.l.b16 %v392
      %v424 = vpack.c.b16 %v417, %v416
      %v425 = vpack.c.b16 %v419, %v418
      %v426 = vpack.c.b16 %v421, %v420
      %v427 = vpack.c.b16 %v423, %v422
      %v436 = vunpack.c.l.b16 %v393
      %v437 = vunpack.c.l.b16 %v394
      %v438 = vunpack.c.l.b16 %v395
      %v439 = vunpack.c.l.b16 %v396
      %v440 = vunpack.c.l.b16 %v397
      %v441 = vunpack.c.l.b16 %v398
      %v442 = vunpack.c.l.b16 %v399
      %v443 = vunpack.c.l.b16 %v400
      %v444 = vpack.c.b16 %v437, %v436
      %v445 = vpack.c.b16 %v439, %v438
      %v446 = vpack.c.b16 %v441, %v440
      %v447 = vpack.c.b16 %v443, %v442
      %vm452 = vcmask 523264
      %v454 = vsel %vm452, %v424, 0
      %v457 = vsel %vm452, %v425, 0
      %v460 = vsel %vm452, %v426, 0
      %v463 = vsel %vm452, %v427, 0
      %465 = vmatprep.subr.bf16.mxu0 0
      %466 = vmatpush1.bf16.msra.mxu0 %v444
      %467 = vmatprep.subr.bf16.mxu0 0
      %468 = vmatpush1.bf16.msra.mxu0 %v445
      %469 = vmatprep.subr.bf16.mxu0 0
      %470 = vmatpush1.bf16.msra.mxu0 %v446
      %471 = vmatprep.subr.bf16.mxu0 0
      %472 = vmatpush1.bf16.msra.mxu0 %v447
      %473 = vmatprep.subr.bf16.mxu0 0
      %474 = vmatpush1.bf16.msra.mxu0 0
      %475 = vmatprep.subr.bf16.mxu0 0
      %476 = vmatpush1.bf16.msra.mxu0 0
      %477 = vmatprep.subr.bf16.mxu0 0
      %478 = vmatpush1.bf16.msra.mxu0 0
      %479 = vmatprep.subr.bf16.mxu0 0
      %480 = vmatpush1.bf16.msra.mxu0 0
      %481 = vmatprep.subr.bf16.mxu0 0
      %482 = vmatpush1.bf16.msra.mxu0 0
      %483 = vmatprep.subr.bf16.mxu0 0
      %484 = vmatpush1.bf16.msra.mxu0 0
      %485 = vmatprep.subr.bf16.mxu0 0
      %486 = vmatpush1.bf16.msra.mxu0 0
      %487 = vmatprep.subr.bf16.mxu0 0
      %488 = vmatpush1.bf16.msra.mxu0 0
      %489 = vmatprep.subr.bf16.mxu0 0
      %490 = vmatpush1.bf16.msra.mxu0 0
      %491 = vmatprep.subr.bf16.mxu0 0
      %492 = vmatpush1.bf16.msra.mxu0 0
      %493 = vmatprep.subr.bf16.mxu0 0
      %494 = vmatpush1.bf16.msra.mxu0 0
      %495 = vmatprep.subr.bf16.mxu0 0
      %496 = vmatpush1.bf16.msra.mxu0 0
      %497 = vmatprep.mubr.bf16.mxu0 0
      %498 = vmatmul.mubr.bf16.gmra.mrb[0].mxu0 %v454
      %v499 = vpop.f32.mrb[0].mxu0
      %v500 = vadd.f32 %v406, %v499
      %v501 = vpop.f32.mrb[0].mxu0
      %v502 = vpop.f32.mrb[0].mxu0
      %v503 = vadd.f32 %v406, %v502
      %v504 = vpop.f32.mrb[0].mxu0
      %505 = vmatprep.mubr.bf16.mxu0 0
      %506 = vmatmul.mubr.bf16.gmra.mrb[0].mxu0 %v457
      %v507 = vpop.f32.mrb[0].mxu0
      %v508 = vadd.f32 %v406, %v507
      %v509 = vpop.f32.mrb[0].mxu0
      %v510 = vpop.f32.mrb[0].mxu0
      %v511 = vadd.f32 %v406, %v510
      %v512 = vpop.f32.mrb[0].mxu0
      %513 = vmatprep.mubr.bf16.mxu0 0
      %514 = vmatmul.mubr.bf16.gmra.mrb[0].mxu0 %v460
      %v515 = vpop.f32.mrb[0].mxu0
      %v516 = vadd.f32 %v406, %v515
      %v517 = vpop.f32.mrb[0].mxu0
      %v518 = vpop.f32.mrb[0].mxu0
      %v519 = vadd.f32 %v406, %v518
      %v520 = vpop.f32.mrb[0].mxu0
      %521 = vmatprep.mubr.bf16.mxu0 0
      %522 = vmatmul.mubr.bf16.gmra.mrb[0].mxu0 %v463
      %v523 = vpop.f32.mrb[0].mxu0
      %v524 = vadd.f32 %v406, %v523
      %v525 = vpop.f32.mrb[0].mxu0
      %v526 = vpop.f32.mrb[0].mxu0
      %v527 = vadd.f32 %v406, %v526
      %v528 = vpop.f32.mrb[0].mxu0
      %529 = vdwg.mxu0
      %v530 = vpack.c.bf16 %v503, %v500
      %v531 = vpack.c.bf16 %v511, %v508
      %v532 = vpack.c.bf16 %v519, %v516
      %v533 = vpack.c.bf16 %v527, %v524
      %v538 = vunpack.c.l.b16 %v530
      %v539 = vunpack.c.h.b16 %v530
      %v540 = vunpack.c.l.b16 %v531
      %v541 = vunpack.c.h.b16 %v531
      %v542 = vunpack.c.l.b16 %v532
      %v543 = vunpack.c.h.b16 %v532
      %v544 = vunpack.c.l.b16 %v533
      %v545 = vunpack.c.h.b16 %v533
      %v546 = vpack.c.b16 %v538, %v538
      %v547 = vpack.c.b16 %v539, %v539
      %v548 = vpack.c.b16 %v540, %v540
      %v549 = vpack.c.b16 %v541, %v541
      %v550 = vpack.c.b16 %v542, %v542
      %v551 = vpack.c.b16 %v543, %v543
      %v552 = vpack.c.b16 %v544, %v544
      %v553 = vpack.c.b16 %v545, %v545
      %562 = vst [vmem:[%s367] sm:$0xf] %v546
      %563 = vst [vmem:[%s367 + $0x4] sm:$0xf] %v547
      %564 = vst [vmem:[%s367 + $0x8] sm:$0xf] %v548
      %565 = vst [vmem:[%s367 + $0xc] sm:$0xf] %v549
      %566 = vst [vmem:[%s367 + $0x10] sm:$0xf] %v550
      %567 = vst [vmem:[%s367 + $0x14] sm:$0xf] %v551
      %568 = vst [vmem:[%s367 + $0x18] sm:$0xf] %v552
      %569 = vst [vmem:[%s367 + $0x1c] sm:$0xf] %v553
      %p570 = scmp.eq.s32.totalorder %s26, 0
      // Predicated region
      $region41: #{resnet_block_forward.9} parent=39 // pred_check
        %p571 = pneg %p570
      $region42: #{resnet_block_forward.9} parent=39 // pred_check_branch
        %573 = sbr.rel (%p571) target = $region44
      $region43: #{resnet_block_forward.9} parent=39 // pred_region
        %574 = vst [vmem:[%s374] sm:$0x1] 0.0
        %575 = vst [vmem:[%s380] sm:$0x1] 0.0
      $region44: #{resnet_block_forward.9} parent=39 // pred_fallthru
        _
      %v576 = vld [vmem:[%s374] sm:$0x1]
      %v577 = vadd.f32 %v500, %v503
      %v578 = vadd.f32 %v577, %v508
      %v579 = vadd.f32 %v578, %v511
      %v580 = vadd.f32 %v579, %v516
      %v581 = vadd.f32 %v580, %v519
      %v582 = vadd.f32 %v581, %v524
      %v583 = vadd.f32 %v582, %v527
      %v584 = vrot.slane %v583, 4
      %v585 = vadd.f32 %v583, %v584
      %v586 = vrot.slane %v585, 2
      %v587 = vadd.f32 %v585, %v586
      %v588 = vrot.slane %v587, 1
      %v589 = vadd.f32 %v587, %v588
      %v590 = vadd.f32 %v576, %v589
      %591 = vst [vmem:[%s374] sm:$0x1] %v590
      %v592 = vld [vmem:[%s380] sm:$0x1]
      %v593 = vmul.f32 %v500, %v500
      %v594 = vmul.f32 %v503, %v503
      %v595 = vmul.f32 %v508, %v508
      %v596 = vmul.f32 %v511, %v511
      %v597 = vmul.f32 %v516, %v516
      %v598 = vmul.f32 %v519, %v519
      %v599 = vmul.f32 %v524, %v524
      %v600 = vmul.f32 %v527, %v527
      %v601 = vadd.f32 %v593, %v594
      %v602 = vadd.f32 %v601, %v595
      %v603 = vadd.f32 %v602, %v596
      %v604 = vadd.f32 %v603, %v597
      %v605 = vadd.f32 %v604, %v598
      %v606 = vadd.f32 %v605, %v599
      %v607 = vadd.f32 %v606, %v600
      %v608 = vrot.slane %v607, 4
      %v609 = vadd.f32 %v607, %v608
      %v610 = vrot.slane %v609, 2
      %v611 = vadd.f32 %v609, %v610
      %v612 = vrot.slane %v611, 1
      %v613 = vadd.f32 %v611, %v612
      %v614 = vadd.f32 %v592, %v613
      %615 = vst [vmem:[%s380] sm:$0x1] %v614
      %s616 = smul.u32 8, %s26
      %p617 = scmp.lt.s32.totalorder %s24, 1
      %s618 = scalar_select %p617, %s24, 1
      %p619 = scmp.lt.s32.totalorder %s616, 7
      %s620 = scalar_select %p619, %s616, 7
      %p621 = scmp.lt.s32.totalorder %s25, 0
      %s622 = scalar_select %p621, %s25, 0
      %s623 = sadd.s32 %s622, %s620
      %s624 = smul.addr %s618, 8
      %s625 = sadd.s32 %s623, %s624
      %s626 = smul.addr %s625, 4
      %s627 = scalar_lea.vmem %s5, %s626
      %p628 = scmp.lt.s32.totalorder %s24, 1
      %s629 = scalar_select %p628, %s24, 1
      %p630 = scmp.lt.s32.totalorder %s25, 0
      %s631 = scalar_select %p630, %s25, 0
      %s632 = sadd.s32 %s631, %s629
      %s633 = scalar_lea.vmem %s6, %s632
      %p634 = scmp.lt.s32.totalorder %s24, 1
      %s635 = scalar_select %p634, %s24, 1
      %p636 = scmp.lt.s32.totalorder %s25, 0
      %s637 = scalar_select %p636, %s25, 0
      %s638 = sadd.s32 %s637, %s635
      %s639 = scalar_lea.vmem %s7, %s638
      // Predicated region
      $region45: #{resnet_block_forward.9} parent=39 // pred_check
        %p640 = pneg %p180
      $region46: #{resnet_block_forward.9} parent=39 // pred_check_branch
        %642 = sbr.rel (%p640) target = $region48
      $region47: #{resnet_block_forward.9} parent=39 // pred_region
        %s643 = smul.u32 8, %s26
      $region48: #{resnet_block_forward.9} parent=39 // pred_fallthru
        _
      // Predicated region
      $region49: #{resnet_block_forward.9} parent=39 // pred_check
        %p644 = pneg %p208
      $region50: #{resnet_block_forward.9} parent=39 // pred_check_branch
        %646 = sbr.rel (%p644) target = $region52
      $region51: #{resnet_block_forward.9} parent=39 // pred_region
        _
      $region52: #{resnet_block_forward.9} parent=39 // pred_fallthru
        _
      // Predicated region
      $region53: #{resnet_block_forward.9} parent=39 // pred_check
        %p647 = pneg %p236
      $region54: #{resnet_block_forward.9} parent=39 // pred_check_branch
        %649 = sbr.rel (%p647) target = $region56
      $region55: #{resnet_block_forward.9} parent=39 // pred_region
        _
      $region56: #{resnet_block_forward.9} parent=39 // pred_fallthru
        _
    $region40: #{resnet_block_forward.9} parent=5 // pred_fallthru
      _
    %p650 = scmp.le.s32.totalorder 2, %s14
    // Predicated region
    $region57: #{resnet_block_forward.9} parent=5 // pred_check
      %p651 = pneg %p650
    $region58: #{resnet_block_forward.9} parent=5 // pred_check_branch
      %653 = sbr.rel (%p651) target = $region60
    $region59: #{resnet_block_forward.9} parent=5 // pred_region
      %s654 = ssub.s32 %s14, 2
      // Predicated region
      $region61: #{resnet_block_forward.9} parent=59 // pred_check
        %p655 = pneg %p186
      $region62: #{resnet_block_forward.9} parent=59 // pred_check_branch
        %657 = sbr.rel (%p655) target = $region64
      $region63: #{resnet_block_forward.9} parent=59 // pred_region
        %s658 = smul.u32 8, %s29
        %p659 = scmp.lt.s32.totalorder %s27, 1
        %s660 = scalar_select %p659, %s27, 1
        %p661 = scmp.lt.s32.totalorder %s658, 7
        %s662 = scalar_select %p661, %s658, 7
        %p663 = scmp.lt.s32.totalorder %s28, 0
        %s664 = scalar_select %p663, %s28, 0
        %s665 = sadd.s32 %s664, %s662
        %s666 = smul.addr %s660, 8
        %s667 = sadd.s32 %s665, %s666
        %s668 = smul.addr %s667, 4
        %s669 = scalar_lea.vmem %s5, %s668
      $region64: #{resnet_block_forward.9} parent=59 // pred_fallthru
        _
      // Predicated region
      $region65: #{resnet_block_forward.9} parent=59 // pred_check
        %p670 = pneg %p214
      $region66: #{resnet_block_forward.9} parent=59 // pred_check_branch
        %672 = sbr.rel (%p670) target = $region68
      $region67: #{resnet_block_forward.9} parent=59 // pred_region
        %p673 = scmp.lt.s32.totalorder %s27, 1
        %s674 = scalar_select %p673, %s27, 1
        %p675 = scmp.lt.s32.totalorder %s28, 0
        %s676 = scalar_select %p675, %s28, 0
        %s677 = sadd.s32 %s676, %s674
        %s678 = scalar_lea.vmem %s6, %s677
      $region68: #{resnet_block_forward.9} parent=59 // pred_fallthru
        _
      // Predicated region
      $region69: #{resnet_block_forward.9} parent=59 // pred_check
        %p679 = pneg %p242
      $region70: #{resnet_block_forward.9} parent=59 // pred_check_branch
        %681 = sbr.rel (%p679) target = $region72
      $region71: #{resnet_block_forward.9} parent=59 // pred_region
        %p682 = scmp.lt.s32.totalorder %s27, 1
        %s683 = scalar_select %p682, %s27, 1
        %p684 = scmp.lt.s32.totalorder %s28, 0
        %s685 = scalar_select %p684, %s28, 0
        %s686 = sadd.s32 %s685, %s683
        %s687 = scalar_lea.vmem %s7, %s686
      $region72: #{resnet_block_forward.9} parent=59 // pred_fallthru
        _
    $region60: #{resnet_block_forward.9} parent=5 // pred_fallthru
      _
  $region6: #{resnet_block_forward.9} parent=0 // loop_footer
    %s18 = sadd.s32 1, %s14
  $region7: #{resnet_block_forward.9} parent=0 // loop_footer_branch
    %13 = sbr.rel target = $region3
  $region8: #{resnet_block_forward.9} parent=0 // loop_exit
    _

// kernel: resnet_block_forward.6
$region0: #{resnet_block_forward.6}
  #allocation0 [shape = 'u32[]', space=smem, size = 0x4, offset = 0x4, fixed_abs, tag = 'smem constant byte address 0x4 - core index']
  #allocation1 [shape = 'u32[144,128]{1,0:T(1,128)}', space=vmem, size = 0x12000, scoped, tag = 'internal scratch']
  %s0 = inlined_call_operand.vmem [shape: f32[256,128], index: 0, kind: input, shape index: {}]
  %s1 = inlined_call_operand.vmem [shape: f32[1,128], index: 1, kind: output, shape index: {0}]
  %s2 = inlined_call_operand.vmem [shape: f32[1,128], index: 2, kind: output, shape index: {1}]
  %3 = xla_tuple %s1, %s2
  %s4 = sld [smem:[#allocation0]]
  $region26: #{resnet_block_forward.6} parent=0
    _
  %s6 = ssub.s32 1, %s4
  %s7 = scalar_select 0, %s6, %s4
  // Predicated region
  $region2: #{resnet_block_forward.6} parent=0 // pred_check
    _
  $region3: #{resnet_block_forward.6} parent=0 // pred_check_branch
    %9 = sbr.rel (0) target = $region5
  $region4: #{resnet_block_forward.6} parent=0 // pred_region
    _
  $region5: #{resnet_block_forward.6} parent=0 // pred_fallthru
    _
  %p10 = scmp.eq.s32.totalorder 0, 0
  // Predicated region
  $region6: #{resnet_block_forward.6} parent=0 // pred_check
    %p11 = pneg %p10
  $region7: #{resnet_block_forward.6} parent=0 // pred_check_branch
    %13 = sbr.rel (%p11) target = $region9
  $region8: #{resnet_block_forward.6} parent=0 // pred_region
    %14 = vst [vmem:[%s1] sm:$0x1] 0.0
    %15 = vst [vmem:[%s2] sm:$0x1] 0.0
  $region9: #{resnet_block_forward.6} parent=0 // pred_fallthru
    _
  %v16 = vld [vmem:[%s0] sm:$0xff]
  %v17 = vld [vmem:[%s0 + $0x8] sm:$0xff]
  %v18 = vld [vmem:[%s0 + $0x10] sm:$0xff]
  %v19 = vld [vmem:[%s0 + $0x18] sm:$0xff]
  %v20 = vld [vmem:[%s0 + $0x20] sm:$0xff]
  %v21 = vld [vmem:[%s0 + $0x28] sm:$0xff]
  %v22 = vld [vmem:[%s0 + $0x30] sm:$0xff]
  %v23 = vld [vmem:[%s0 + $0x38] sm:$0xff]
  %v24 = vld [vmem:[%s0 + $0x40] sm:$0xff]
  %v25 = vld [vmem:[%s0 + $0x48] sm:$0xff]
  %v26 = vld [vmem:[%s0 + $0x50] sm:$0xff]
  %v27 = vld [vmem:[%s0 + $0x58] sm:$0xff]
  %v28 = vld [vmem:[%s0 + $0x60] sm:$0xff]
  %v29 = vld [vmem:[%s0 + $0x68] sm:$0xff]
  %v30 = vld [vmem:[%s0 + $0x70] sm:$0xff]
  %v31 = vld [vmem:[%s0 + $0x78] sm:$0xff]
  %v32 = vld [vmem:[%s0 + $0x80] sm:$0xff]
  %v33 = vld [vmem:[%s0 + $0x88] sm:$0xff]
  %v34 = vld [vmem:[%s0 + $0x90] sm:$0xff]
  %v35 = vld [vmem:[%s0 + $0x98] sm:$0xff]
  %v36 = vld [vmem:[%s0 + $0xa0] sm:$0xff]
  %v37 = vld [vmem:[%s0 + $0xa8] sm:$0xff]
  %v38 = vld [vmem:[%s0 + $0xb0] sm:$0xff]
  %v39 = vld [vmem:[%s0 + $0xb8] sm:$0xff]
  %v40 = vld [vmem:[%s0 + $0xc0] sm:$0xff]
  %v41 = vld [vmem:[%s0 + $0xc8] sm:$0xff]
  %v42 = vld [vmem:[%s0 + $0xd0] sm:$0xff]
  %v43 = vld [vmem:[%s0 + $0xd8] sm:$0xff]
  %v44 = vld [vmem:[%s0 + $0xe0] sm:$0xff]
  %v45 = vld [vmem:[%s0 + $0xe8] sm:$0xff]
  %v46 = vld [vmem:[%s0 + $0xf0] sm:$0xff]
  %v47 = vld [vmem:[%s0 + $0xf8] sm:$0xff]
  %v48 = vlaneseq
  %v49 = vshrl.u32 %v48, 7
  %v50 = vadd.s32 %v49, 8
  %v51 = vadd.s32 %v49, 16
  %v52 = vadd.s32 %v49, 24
  %v53 = vadd.s32 %v49, 32
  %v54 = vadd.s32 %v49, 40
  %v55 = vadd.s32 %v49, 48
  %v56 = vadd.s32 %v49, 56
  %v57 = vadd.s32 %v49, 64
  %v58 = vadd.s32 %v49, 72
  %v59 = vadd.s32 %v49, 80
  %v60 = vadd.s32 %v49, 88
  %v61 = vadd.s32 %v49, 96
  %v62 = vadd.s32 %v49, 104
  %v63 = vadd.s32 %v49, 112
  %v64 = vadd.s32 %v49, 120
  %v65 = vadd.s32 %v49, 128
  %v66 = vadd.s32 %v49, 136
  %v67 = vadd.s32 %v49, 144
  %v68 = vadd.s32 %v49, 152
  %v69 = vadd.s32 %v49, 160
  %v70 = vadd.s32 %v49, 168
  %v71 = vadd.s32 %v49, 176
  %v72 = vadd.s32 %v49, 184
  %v73 = vadd.s32 %v49, 192
  %v74 = vadd.s32 %v49, 200
  %v75 = vadd.s32 %v49, 208
  %v76 = vadd.s32 %v49, 216
  %v77 = vadd.s32 %v49, 224
  %v78 = vadd.s32 %v49, 232
  %v79 = vadd.s32 %v49, 240
  %v80 = vadd.s32 %v49, 248
  %s81 = smul.u32 0, 256
  %v82 = vstv %s81
  %v83 = vadd.s32 %v49, %v82
  %v84 = vadd.s32 %v50, %v82
  %v85 = vadd.s32 %v51, %v82
  %v86 = vadd.s32 %v52, %v82
  %v87 = vadd.s32 %v53, %v82
  %v88 = vadd.s32 %v54, %v82
  %v89 = vadd.s32 %v55, %v82
  %v90 = vadd.s32 %v56, %v82
  %v91 = vadd.s32 %v57, %v82
  %v92 = vadd.s32 %v58, %v82
  %v93 = vadd.s32 %v59, %v82
  %v94 = vadd.s32 %v60, %v82
  %v95 = vadd.s32 %v61, %v82
  %v96 = vadd.s32 %v62, %v82
  %v97 = vadd.s32 %v63, %v82
  %v98 = vadd.s32 %v64, %v82
  %v99 = vadd.s32 %v65, %v82
  %v100 = vadd.s32 %v66, %v82
  %v101 = vadd.s32 %v67, %v82
  %v102 = vadd.s32 %v68, %v82
  %v103 = vadd.s32 %v69, %v82
  %v104 = vadd.s32 %v70, %v82
  %v105 = vadd.s32 %v71, %v82
  %v106 = vadd.s32 %v72, %v82
  %v107 = vadd.s32 %v73, %v82
  %v108 = vadd.s32 %v74, %v82
  %v109 = vadd.s32 %v75, %v82
  %v110 = vadd.s32 %v76, %v82
  %v111 = vadd.s32 %v77, %v82
  %v112 = vadd.s32 %v78, %v82
  %v113 = vadd.s32 %v79, %v82
  %v114 = vadd.s32 %v80, %v82
  %vm115 = vcmp.lt.s32.totalorder %v83, 256
  %vm116 = vcmp.lt.s32.totalorder %v84, 256
  %vm117 = vcmp.lt.s32.totalorder %v85, 256
  %vm118 = vcmp.lt.s32.totalorder %v86, 256
  %vm119 = vcmp.lt.s32.totalorder %v87, 256
  %vm120 = vcmp.lt.s32.totalorder %v88, 256
  %vm121 = vcmp.lt.s32.totalorder %v89, 256
  %vm122 = vcmp.lt.s32.totalorder %v90, 256
  %vm123 = vcmp.lt.s32.totalorder %v91, 256
  %vm124 = vcmp.lt.s32.totalorder %v92, 256
  %vm125 = vcmp.lt.s32.totalorder %v93, 256
  %vm126 = vcmp.lt.s32.totalorder %v94, 256
  %vm127 = vcmp.lt.s32.totalorder %v95, 256
  %vm128 = vcmp.lt.s32.totalorder %v96, 256
  %vm129 = vcmp.lt.s32.totalorder %v97, 256
  %vm130 = vcmp.lt.s32.totalorder %v98, 256
  %vm131 = vcmp.lt.s32.totalorder %v99, 256
  %vm132 = vcmp.lt.s32.totalorder %v100, 256
  %vm133 = vcmp.lt.s32.totalorder %v101, 256
  %vm134 = vcmp.lt.s32.totalorder %v102, 256
  %vm135 = vcmp.lt.s32.totalorder %v103, 256
  %vm136 = vcmp.lt.s32.totalorder %v104, 256
  %vm137 = vcmp.lt.s32.totalorder %v105, 256
  %vm138 = vcmp.lt.s32.totalorder %v106, 256
  %vm139 = vcmp.lt.s32.totalorder %v107, 256
  %vm140 = vcmp.lt.s32.totalorder %v108, 256
  %vm141 = vcmp.lt.s32.totalorder %v109, 256
  %vm142 = vcmp.lt.s32.totalorder %v110, 256
  %vm143 = vcmp.lt.s32.totalorder %v111, 256
  %vm144 = vcmp.lt.s32.totalorder %v112, 256
  %vm145 = vcmp.lt.s32.totalorder %v113, 256
  %vm146 = vcmp.lt.s32.totalorder %v114, 256
  %v147 = vsel %vm115, 1, 0
  %v148 = vsel %vm116, 1, 0
  %v149 = vsel %vm117, 1, 0
  %v150 = vsel %vm118, 1, 0
  %v151 = vsel %vm119, 1, 0
  %v152 = vsel %vm120, 1, 0
  %v153 = vsel %vm121, 1, 0
  %v154 = vsel %vm122, 1, 0
  %v155 = vsel %vm123, 1, 0
  %v156 = vsel %vm124, 1, 0
  %v157 = vsel %vm125, 1, 0
  %v158 = vsel %vm126, 1, 0
  %v159 = vsel %vm127, 1, 0
  %v160 = vsel %vm128, 1, 0
  %v161 = vsel %vm129, 1, 0
  %v162 = vsel %vm130, 1, 0
  %v163 = vsel %vm131, 1, 0
  %v164 = vsel %vm132, 1, 0
  %v165 = vsel %vm133, 1, 0
  %v166 = vsel %vm134, 1, 0
  %v167 = vsel %vm135, 1, 0
  %v168 = vsel %vm136, 1, 0
  %v169 = vsel %vm137, 1, 0
  %v170 = vsel %vm138, 1, 0
  %v171 = vsel %vm139, 1, 0
  %v172 = vsel %vm140, 1, 0
  %v173 = vsel %vm141, 1, 0
  %v174 = vsel %vm142, 1, 0
  %v175 = vsel %vm143, 1, 0
  %v176 = vsel %vm144, 1, 0
  %v177 = vsel %vm145, 1, 0
  %v178 = vsel %vm146, 1, 0
  %vm179 = vcmp.eq.s32.totalorder %v147, 1
  %vm180 = vcmp.eq.s32.totalorder %v148, 1
  %vm181 = vcmp.eq.s32.totalorder %v149, 1
  %vm182 = vcmp.eq.s32.totalorder %v150, 1
  %vm183 = vcmp.eq.s32.totalorder %v151, 1
  %vm184 = vcmp.eq.s32.totalorder %v152, 1
  %vm185 = vcmp.eq.s32.totalorder %v153, 1
  %vm186 = vcmp.eq.s32.totalorder %v154, 1
  %vm187 = vcmp.eq.s32.totalorder %v155, 1
  %vm188 = vcmp.eq.s32.totalorder %v156, 1
  %vm189 = vcmp.eq.s32.totalorder %v157, 1
  %vm190 = vcmp.eq.s32.totalorder %v158, 1
  %vm191 = vcmp.eq.s32.totalorder %v159, 1
  %vm192 = vcmp.eq.s32.totalorder %v160, 1
  %vm193 = vcmp.eq.s32.totalorder %v161, 1
  %vm194 = vcmp.eq.s32.totalorder %v162, 1
  %vm195 = vcmp.eq.s32.totalorder %v163, 1
  %vm196 = vcmp.eq.s32.totalorder %v164, 1
  %vm197 = vcmp.eq.s32.totalorder %v165, 1
  %vm198 = vcmp.eq.s32.totalorder %v166, 1
  %vm199 = vcmp.eq.s32.totalorder %v167, 1
  %vm200 = vcmp.eq.s32.totalorder %v168, 1
  %vm201 = vcmp.eq.s32.totalorder %v169, 1
  %vm202 = vcmp.eq.s32.totalorder %v170, 1
  %vm203 = vcmp.eq.s32.totalorder %v171, 1
  %vm204 = vcmp.eq.s32.totalorder %v172, 1
  %vm205 = vcmp.eq.s32.totalorder %v173, 1
  %vm206 = vcmp.eq.s32.totalorder %v174, 1
  %vm207 = vcmp.eq.s32.totalorder %v175, 1
  %vm208 = vcmp.eq.s32.totalorder %v176, 1
  %vm209 = vcmp.eq.s32.totalorder %v177, 1
  %vm210 = vcmp.eq.s32.totalorder %v178, 1
  %v211 = vsel %vm179, %v16, 0.0
  %v212 = vsel %vm180, %v17, 0.0
  %v213 = vsel %vm181, %v18, 0.0
  %v214 = vsel %vm182, %v19, 0.0
  %v215 = vsel %vm183, %v20, 0.0
  %v216 = vsel %vm184, %v21, 0.0
  %v217 = vsel %vm185, %v22, 0.0
  %v218 = vsel %vm186, %v23, 0.0
  %v219 = vsel %vm187, %v24, 0.0
  %v220 = vsel %vm188, %v25, 0.0
  %v221 = vsel %vm189, %v26, 0.0
  %v222 = vsel %vm190, %v27, 0.0
  %v223 = vsel %vm191, %v28, 0.0
  %v224 = vsel %vm192, %v29, 0.0
  %v225 = vsel %vm193, %v30, 0.0
  %v226 = vsel %vm194, %v31, 0.0
  %v227 = vsel %vm195, %v32, 0.0
  %v228 = vsel %vm196, %v33, 0.0
  %v229 = vsel %vm197, %v34, 0.0
  %v230 = vsel %vm198, %v35, 0.0
  %v231 = vsel %vm199, %v36, 0.0
  %v232 = vsel %vm200, %v37, 0.0
  %v233 = vsel %vm201, %v38, 0.0
  %v234 = vsel %vm202, %v39, 0.0
  %v235 = vsel %vm203, %v40, 0.0
  %v236 = vsel %vm204, %v41, 0.0
  %v237 = vsel %vm205, %v42, 0.0
  %v238 = vsel %vm206, %v43, 0.0
  %v239 = vsel %vm207, %v44, 0.0
  %v240 = vsel %vm208, %v45, 0.0
  %v241 = vsel %vm209, %v46, 0.0
  %v242 = vsel %vm210, %v47, 0.0
  %v243 = vld [vmem:[%s1] sm:$0x1]
  %v244 = vadd.f32 %v211, %v212
  %v245 = vadd.f32 %v244, %v213
  %v246 = vadd.f32 %v245, %v214
  %v247 = vadd.f32 %v246, %v215
  %v248 = vadd.f32 %v247, %v216
  %v249 = vadd.f32 %v248, %v217
  %v250 = vadd.f32 %v249, %v218
  %v251 = vadd.f32 %v250, %v219
  %v252 = vadd.f32 %v251, %v220
  %v253 = vadd.f32 %v252, %v221
  %v254 = vadd.f32 %v253, %v222
  %v255 = vadd.f32 %v254, %v223
  %v256 = vadd.f32 %v255, %v224
  %v257 = vadd.f32 %v256, %v225
  %v258 = vadd.f32 %v257, %v226
  %v259 = vadd.f32 %v258, %v227
  %v260 = vadd.f32 %v259, %v228
  %v261 = vadd.f32 %v260, %v229
  %v262 = vadd.f32 %v261, %v230
  %v263 = vadd.f32 %v262, %v231
  %v264 = vadd.f32 %v263, %v232
  %v265 = vadd.f32 %v264, %v233
  %v266 = vadd.f32 %v265, %v234
  %v267 = vadd.f32 %v266, %v235
  %v268 = vadd.f32 %v267, %v236
  %v269 = vadd.f32 %v268, %v237
  %v270 = vadd.f32 %v269, %v238
  %v271 = vadd.f32 %v270, %v239
  %v272 = vadd.f32 %v271, %v240
  %v273 = vadd.f32 %v272, %v241
  %v274 = vadd.f32 %v273, %v242
  %v275 = vrot.slane %v274, 4
  %v276 = vadd.f32 %v274, %v275
  %v277 = vrot.slane %v276, 2
  %v278 = vadd.f32 %v276, %v277
  %v279 = vrot.slane %v278, 1
  %v280 = vadd.f32 %v278, %v279
  %v281 = vadd.f32 %v243, %v280
  %282 = vst [vmem:[%s1] sm:$0x1] %v281
  %v283 = vld [vmem:[%s2] sm:$0x1]
  %v284 = vmul.f32 %v211, %v211
  %v285 = vmul.f32 %v212, %v212
  %v286 = vmul.f32 %v213, %v213
  %v287 = vmul.f32 %v214, %v214
  %v288 = vmul.f32 %v215, %v215
  %v289 = vmul.f32 %v216, %v216
  %v290 = vmul.f32 %v217, %v217
  %v291 = vmul.f32 %v218, %v218
  %v292 = vmul.f32 %v219, %v219
  %v293 = vmul.f32 %v220, %v220
  %v294 = vmul.f32 %v221, %v221
  %v295 = vmul.f32 %v222, %v222
  %v296 = vmul.f32 %v223, %v223
  %v297 = vmul.f32 %v224, %v224
  %v298 = vmul.f32 %v225, %v225
  %v299 = vmul.f32 %v226, %v226
  %v300 = vmul.f32 %v227, %v227
  %v301 = vmul.f32 %v228, %v228
  %v302 = vmul.f32 %v229, %v229
  %v303 = vmul.f32 %v230, %v230
  %v304 = vmul.f32 %v231, %v231
  %v305 = vmul.f32 %v232, %v232
  %v306 = vmul.f32 %v233, %v233
  %v307 = vmul.f32 %v234, %v234
  %v308 = vmul.f32 %v235, %v235
  %v309 = vmul.f32 %v236, %v236
  %v310 = vmul.f32 %v237, %v237
  %v311 = vmul.f32 %v238, %v238
  %v312 = vmul.f32 %v239, %v239
  %v313 = vmul.f32 %v240, %v240
  %v314 = vmul.f32 %v241, %v241
  %v315 = vmul.f32 %v242, %v242
  %v316 = vadd.f32 %v284, %v285
  %v317 = vadd.f32 %v316, %v286
  %v318 = vadd.f32 %v317, %v287
  %v319 = vadd.f32 %v318, %v288
  %v320 = vadd.f32 %v319, %v289
  %v321 = vadd.f32 %v320, %v290
  %v322 = vadd.f32 %v321, %v291
  %v323 = vadd.f32 %v322, %v292
  %v324 = vadd.f32 %v323, %v293
  %v325 = vadd.f32 %v324, %v294
  %v326 = vadd.f32 %v325, %v295
  %v327 = vadd.f32 %v326, %v296
  %v328 = vadd.f32 %v327, %v297
  %v329 = vadd.f32 %v328, %v298
  %v330 = vadd.f32 %v329, %v299
  %v331 = vadd.f32 %v330, %v300
  %v332 = vadd.f32 %v331, %v301
  %v333 = vadd.f32 %v332, %v302
  %v334 = vadd.f32 %v333, %v303
  %v335 = vadd.f32 %v334, %v304
  %v336 = vadd.f32 %v335, %v305
  %v337 = vadd.f32 %v336, %v306
  %v338 = vadd.f32 %v337, %v307
  %v339 = vadd.f32 %v338, %v308
  %v340 = vadd.f32 %v339, %v309
  %v341 = vadd.f32 %v340, %v310
  %v342 = vadd.f32 %v341, %v311
  %v343 = vadd.f32 %v342, %v312
  %v344 = vadd.f32 %v343, %v313
  %v345 = vadd.f32 %v344, %v314
  %v346 = vadd.f32 %v345, %v315
  %v347 = vrot.slane %v346, 4
  %v348 = vadd.f32 %v346, %v347
  %v349 = vrot.slane %v348, 2
  %v350 = vadd.f32 %v348, %v349
  %v351 = vrot.slane %v350, 1
  %v352 = vadd.f32 %v350, %v351
  %v353 = vadd.f32 %v283, %v352
  %354 = vst [vmem:[%s2] sm:$0x1] %v353
  // Predicated region
  $region10: #{resnet_block_forward.6} parent=0 // pred_check
    _
  $region11: #{resnet_block_forward.6} parent=0 // pred_check_branch
    %356 = sbr.rel (0) target = $region13
  $region12: #{resnet_block_forward.6} parent=0 // pred_region
    _
  $region13: #{resnet_block_forward.6} parent=0 // pred_fallthru
    _
  // Predicated region
  $region14: #{resnet_block_forward.6} parent=0 // pred_check
    _
  $region15: #{resnet_block_forward.6} parent=0 // pred_check_branch
    %358 = sbr.rel (0) target = $region17
  $region16: #{resnet_block_forward.6} parent=0 // pred_region
    _
  $region17: #{resnet_block_forward.6} parent=0 // pred_fallthru
    _
  // Predicated region
  $region18: #{resnet_block_forward.6} parent=0 // pred_check
    _
  $region19: #{resnet_block_forward.6} parent=0 // pred_check_branch
    %360 = sbr.rel (0) target = $region21
  $region20: #{resnet_block_forward.6} parent=0 // pred_region
    _
  $region21: #{resnet_block_forward.6} parent=0 // pred_fallthru
    _
  // Predicated region
  $region22: #{resnet_block_forward.6} parent=0 // pred_check
    _
  $region23: #{resnet_block_forward.6} parent=0 // pred_check_branch
    %362 = sbr.rel (0) target = $region25
  $region24: #{resnet_block_forward.6} parent=0 // pred_region
    _
  $region25: #{resnet_block_forward.6} parent=0 // pred_fallthru
    _

// kernel: resnet_block_forward.10
$region0: #{resnet_block_forward.10}
  #allocation0 [shape = 'u32[]', space=smem, size = 0x4, offset = 0x4, fixed_abs, tag = 'smem constant byte address 0x4 - core index']
  #allocation1 [shape = 'u32[144,128]{1,0:T(1,128)}', space=vmem, size = 0x12000, scoped, tag = 'internal scratch']
  %s0 = inlined_call_operand.vmem [shape: bf16[2,64,128], index: 0, kind: input, shape index: {}]
  %s1 = inlined_call_operand.vmem [shape: bf16[2,64,128], index: 1, kind: input, shape index: {}]
  %s2 = inlined_call_operand.vmem [shape: f32[1,128], index: 2, kind: input, shape index: {}]
  %s3 = inlined_call_operand.vmem [shape: f32[1,128], index: 3, kind: input, shape index: {}]
  %s4 = inlined_call_operand.vmem [shape: bf16[2,64,128], index: 4, kind: output, shape index: {0}]
  %s5 = inlined_call_operand.vmem [shape: f32[2,1,128], index: 5, kind: output, shape index: {1}]
  %6 = xla_tuple %s4, %s5
  %s7 = sld [smem:[#allocation0]]
  $region61: #{resnet_block_forward.10} parent=0
    _
  %s9 = ssub.s32 1, %s7
  %s10 = scalar_select 0, %s9, %s7
  loop: start=0, step=1, limit=4
  $region2: #{resnet_block_forward.10} parent=0 // loop_pre_header
    _
  $region3: #{resnet_block_forward.10} parent=0 // loop_header
    %s12 = sphi 0, %s16
    %p13 = scmp.ge.s32.totalorder %s12, 4
    %s19 = sphi 0, %s31
    %s20 = sphi 0, %s27
    %s21 = sphi 0, %s19
    %s22 = sphi 0, %s20
    %s23 = sphi 0, %s21
    %s24 = sphi 0, %s22
    %s36 = sphi 0, %s38
    %s39 = sphi 0, %s36
    %s40 = sphi 0, %s39
    %s56 = sphi 0, %s40
    %s64 = sphi 0, %s66
    %s67 = sphi 0, %s64
    %s68 = sphi 0, %s67
    %s84 = sphi 0, %s68
    %s88 = sphi 0, %s88
    %s90 = sphi 0, %s88
    %s91 = sphi 0, %s90
    %s105 = sphi 0, %s91
    %s109 = sphi 0, %s109
    %s111 = sphi 0, %s109
    %s112 = sphi 0, %s111
    %s126 = sphi 0, %s112
    %s134 = sphi 0, %s136
    %s137 = sphi 0, %s134
    %s138 = sphi 0, %s137
    %s154 = sphi 0, %s138
    %s160 = sphi 0, %s162
    %s163 = sphi 0, %s160
    %s164 = sphi 0, %s163
    %s180 = sphi 0, %s164
  $region4: #{resnet_block_forward.10} parent=0 // loop_header_branch
    %15 = sbr.rel (%p13) target = $region8
  $region5: #{resnet_block_forward.10} parent=0 // loop_body
    %s17 = ssub.s32 %s12, 1
    %s18 = ssub.s32 %s12, 2
    %s25 = sadd.s32 1, %s20
    %p26 = scmp.ge.s32.totalorder %s25, 1
    %s27 = scalar_select %p26, 0, %s25
    %s28 = sadd.s32 1, %s19
    %s29 = scalar_select %p26, %s28, %s19
    %p30 = scmp.ge.s32.totalorder %s29, 2
    %s31 = scalar_select %p30, 0, %s29
    %s32 = ssub.s32 %s19, %s31
    %s33 = ssub.s32 %s20, %s27
    %s34 = sor.u32 %s32, %s33
    %p35 = scmp.eq.s32.totalorder %s34, 0
    %s37 = sadd.s32 %s36, 1
    %s38 = scalar_select %p35, %s36, %s37
    %p41 = pneg %p35
    %p42 = scmp.eq.s32.totalorder %s12, 1
    %p43 = por %p41, %p42
    %p44 = scmp.ne.s32.totalorder %s36, %s39
    %p45 = scmp.eq.s32.totalorder %s12, 0
    %p46 = por %p44, %p45
    %p47 = scmp.ne.s32.totalorder %s36, %s39
    %p48 = scmp.eq.s32.totalorder %s17, 1
    %p49 = por %p47, %p48
    %p50 = scmp.ne.s32.totalorder %s39, %s40
    %p51 = scmp.eq.s32.totalorder %s17, 0
    %p52 = por %p50, %p51
    %p53 = scmp.ne.s32.totalorder %s39, %s40
    %p54 = scmp.eq.s32.totalorder %s18, 1
    %p55 = por %p53, %p54
    %p57 = scmp.ne.s32.totalorder %s40, %s56
    %p58 = scmp.eq.s32.totalorder %s18, 0
    %p59 = por %p57, %p58
    %s60 = ssub.s32 %s19, %s31
    %s61 = ssub.s32 %s20, %s27
    %s62 = sor.u32 %s60, %s61
    %p63 = scmp.eq.s32.totalorder %s62, 0
    %s65 = sadd.s32 %s64, 1
    %s66 = scalar_select %p63, %s64, %s65
    %p69 = pneg %p63
    %p70 = scmp.eq.s32.totalorder %s12, 1
    %p71 = por %p69, %p70
    %p72 = scmp.ne.s32.totalorder %s64, %s67
    %p73 = scmp.eq.s32.totalorder %s12, 0
    %p74 = por %p72, %p73
    %p75 = scmp.ne.s32.totalorder %s64, %s67
    %p76 = scmp.eq.s32.totalorder %s17, 1
    %p77 = por %p75, %p76
    %p78 = scmp.ne.s32.totalorder %s67, %s68
    %p79 = scmp.eq.s32.totalorder %s17, 0
    %p80 = por %p78, %p79
    %p81 = scmp.ne.s32.totalorder %s67, %s68
    %p82 = scmp.eq.s32.totalorder %s18, 1
    %p83 = por %p81, %p82
    %p85 = scmp.ne.s32.totalorder %s68, %s84
    %p86 = scmp.eq.s32.totalorder %s18, 0
    %p87 = por %p85, %p86
    %s89 = sadd.s32 %s88, 1
    %p92 = scmp.eq.s32.totalorder %s12, 1
    %p93 = scmp.ne.s32.totalorder %s88, %s90
    %p94 = scmp.eq.s32.totalorder %s12, 0
    %p95 = por %p93, %p94
    %p96 = scmp.ne.s32.totalorder %s88, %s90
    %p97 = scmp.eq.s32.totalorder %s17, 1
    %p98 = por %p96, %p97
    %p99 = scmp.ne.s32.totalorder %s90, %s91
    %p100 = scmp.eq.s32.totalorder %s17, 0
    %p101 = por %p99, %p100
    %p102 = scmp.ne.s32.totalorder %s90, %s91
    %p103 = scmp.eq.s32.totalorder %s18, 1
    %p104 = por %p102, %p103
    %p106 = scmp.ne.s32.totalorder %s91, %s105
    %p107 = scmp.eq.s32.totalorder %s18, 0
    %p108 = por %p106, %p107
    %s110 = sadd.s32 %s109, 1
    %p113 = scmp.eq.s32.totalorder %s12, 1
    %p114 = scmp.ne.s32.totalorder %s109, %s111
    %p115 = scmp.eq.s32.totalorder %s12, 0
    %p116 = por %p114, %p115
    %p117 = scmp.ne.s32.totalorder %s109, %s111
    %p118 = scmp.eq.s32.totalorder %s17, 1
    %p119 = por %p117, %p118
    %p120 = scmp.ne.s32.totalorder %s111, %s112
    %p121 = scmp.eq.s32.totalorder %s17, 0
    %p122 = por %p120, %p121
    %p123 = scmp.ne.s32.totalorder %s111, %s112
    %p124 = scmp.eq.s32.totalorder %s18, 1
    %p125 = por %p123, %p124
    %p127 = scmp.ne.s32.totalorder %s112, %s126
    %p128 = scmp.eq.s32.totalorder %s18, 0
    %p129 = por %p127, %p128
    %s130 = ssub.s32 %s19, %s31
    %s131 = ssub.s32 %s20, %s27
    %s132 = sor.u32 %s130, %s131
    %p133 = scmp.eq.s32.totalorder %s132, 0
    %s135 = sadd.s32 %s134, 1
    %s136 = scalar_select %p133, %s134, %s135
    %p139 = pneg %p133
    %p140 = scmp.eq.s32.totalorder %s12, 1
    %p141 = por %p139, %p140
    %p142 = scmp.ne.s32.totalorder %s134, %s137
    %p143 = scmp.eq.s32.totalorder %s12, 0
    %p144 = por %p142, %p143
    %p145 = scmp.ne.s32.totalorder %s134, %s137
    %p146 = scmp.eq.s32.totalorder %s17, 1
    %p147 = por %p145, %p146
    %p148 = scmp.ne.s32.totalorder %s137, %s138
    %p149 = scmp.eq.s32.totalorder %s17, 0
    %p150 = por %p148, %p149
    %p151 = scmp.ne.s32.totalorder %s137, %s138
    %p152 = scmp.eq.s32.totalorder %s18, 1
    %p153 = por %p151, %p152
    %p155 = scmp.ne.s32.totalorder %s138, %s154
    %p156 = scmp.eq.s32.totalorder %s18, 0
    %p157 = por %p155, %p156
    %s158 = ssub.s32 %s19, %s31
    %p159 = scmp.eq.s32.totalorder %s158, 0
    %s161 = sadd.s32 %s160, 1
    %s162 = scalar_select %p159, %s160, %s161
    %p165 = pneg %p159
    %p166 = scmp.eq.s32.totalorder %s12, 1
    %p167 = por %p165, %p166
    %p168 = scmp.ne.s32.totalorder %s160, %s163
    %p169 = scmp.eq.s32.totalorder %s12, 0
    %p170 = por %p168, %p169
    %p171 = scmp.ne.s32.totalorder %s160, %s163
    %p172 = scmp.eq.s32.totalorder %s17, 1
    %p173 = por %p171, %p172
    %p174 = scmp.ne.s32.totalorder %s163, %s164
    %p175 = scmp.eq.s32.totalorder %s17, 0
    %p176 = por %p174, %p175
    %p177 = scmp.ne.s32.totalorder %s163, %s164
    %p178 = scmp.eq.s32.totalorder %s18, 1
    %p179 = por %p177, %p178
    %p181 = scmp.ne.s32.totalorder %s164, %s180
    %p182 = scmp.eq.s32.totalorder %s18, 0
    %p183 = por %p181, %p182
    %p184 = scmp.le.s32.totalorder 1, %s12
    %p185 = scmp.lt.s32.totalorder %s12, 3
    %p186 = pnand %p184, %p185
    %p187 = pneg %p186
    // Predicated region
    $region9: #{resnet_block_forward.10} parent=5 // pred_check
      _
    $region10: #{resnet_block_forward.10} parent=5 // pred_check_branch
      %189 = sbr.rel (%p186) target = $region12
    $region11: #{resnet_block_forward.10} parent=5 // pred_region
      %s190 = ssub.s32 %s12, 1
      // Predicated region
      $region13: #{resnet_block_forward.10} parent=11 // pred_check
        %p191 = pneg %p101
      $region14: #{resnet_block_forward.10} parent=11 // pred_check_branch
        %193 = sbr.rel (%p191) target = $region16
      $region15: #{resnet_block_forward.10} parent=11 // pred_region
        _
      $region16: #{resnet_block_forward.10} parent=11 // pred_fallthru
        _
      // Predicated region
      $region17: #{resnet_block_forward.10} parent=11 // pred_check
        %p194 = pneg %p122
      $region18: #{resnet_block_forward.10} parent=11 // pred_check_branch
        %196 = sbr.rel (%p194) target = $region20
      $region19: #{resnet_block_forward.10} parent=11 // pred_region
        _
      $region20: #{resnet_block_forward.10} parent=11 // pred_fallthru
        _
    $region12: #{resnet_block_forward.10} parent=5 // pred_fallthru
      _
    %p197 = scmp.lt.s32.totalorder %s12, 2
    // Predicated region
    $region21: #{resnet_block_forward.10} parent=5 // pred_check
      %p198 = pneg %p197
    $region22: #{resnet_block_forward.10} parent=5 // pred_check_branch
      %200 = sbr.rel (%p198) target = $region24
    $region23: #{resnet_block_forward.10} parent=5 // pred_region
      // Predicated region
      $region25: #{resnet_block_forward.10} parent=23 // pred_check
        %p201 = pneg %p46
      $region26: #{resnet_block_forward.10} parent=23 // pred_check_branch
        %203 = sbr.rel (%p201) target = $region28
      $region27: #{resnet_block_forward.10} parent=23 // pred_region
        %s204 = smul.u32 8, %s20
        %p205 = scmp.lt.s32.totalorder %s19, 1
        %s206 = scalar_select %p205, %s19, 1
        %p207 = scmp.lt.s32.totalorder %s204, 7
        %s208 = scalar_select %p207, %s204, 7
        %s209 = smul.addr %s206, 8
        %s210 = sadd.s32 %s208, %s209
        %s211 = smul.addr %s210, 4
        %s212 = scalar_lea.vmem %s0, %s211
        %s213 = smul.u32 8, %s20
      $region28: #{resnet_block_forward.10} parent=23 // pred_fallthru
        _
      // Predicated region
      $region29: #{resnet_block_forward.10} parent=23 // pred_check
        %p214 = pneg %p74
      $region30: #{resnet_block_forward.10} parent=23 // pred_check_branch
        %216 = sbr.rel (%p214) target = $region32
      $region31: #{resnet_block_forward.10} parent=23 // pred_region
        %s217 = smul.u32 8, %s20
        %p218 = scmp.lt.s32.totalorder %s19, 1
        %s219 = scalar_select %p218, %s19, 1
        %p220 = scmp.lt.s32.totalorder %s217, 7
        %s221 = scalar_select %p220, %s217, 7
        %s222 = smul.addr %s219, 8
        %s223 = sadd.s32 %s221, %s222
        %s224 = smul.addr %s223, 4
        %s225 = scalar_lea.vmem %s1, %s224
        %s226 = smul.u32 8, %s20
      $region32: #{resnet_block_forward.10} parent=23 // pred_fallthru
        _
    $region24: #{resnet_block_forward.10} parent=5 // pred_fallthru
      _
    %p227 = scmp.le.s32.totalorder 1, %s12
    %p228 = scmp.lt.s32.totalorder %s12, 3
    %p229 = pnand %p227, %p228
    %p230 = pneg %p229
    // Predicated region
    $region33: #{resnet_block_forward.10} parent=5 // pred_check
      _
    $region34: #{resnet_block_forward.10} parent=5 // pred_check_branch
      %232 = sbr.rel (%p229) target = $region36
    $region35: #{resnet_block_forward.10} parent=5 // pred_region
      %s233 = ssub.s32 %s12, 1
      %s234 = smul.u32 8, %s22
      %p235 = scmp.lt.s32.totalorder %s21, 1
      %s236 = scalar_select %p235, %s21, 1
      %p237 = scmp.lt.s32.totalorder %s234, 7
      %s238 = scalar_select %p237, %s234, 7
      %s239 = smul.addr %s236, 8
      %s240 = sadd.s32 %s238, %s239
      %s241 = smul.addr %s240, 4
      %s242 = scalar_lea.vmem %s0, %s241
      %p243 = pneg %p52
      %p244 = pneg %p49
      %s245 = smul.u32 8, %s22
      %p246 = scmp.lt.s32.totalorder %s21, 1
      %s247 = scalar_select %p246, %s21, 1
      %p248 = scmp.lt.s32.totalorder %s245, 7
      %s249 = scalar_select %p248, %s245, 7
      %s250 = smul.addr %s247, 8
      %s251 = sadd.s32 %s249, %s250
      %s252 = smul.addr %s251, 4
      %s253 = scalar_lea.vmem %s1, %s252
      %p254 = pneg %p80
      %p255 = pneg %p77
      %p256 = pneg %p101
      %p257 = pneg %p98
      %p258 = pneg %p122
      %p259 = pneg %p119
      %p260 = pneg %p150
      %p261 = pneg %p147
      %s262 = smul.u32 8, %s22
      %p263 = scmp.lt.s32.totalorder %s21, 1
      %s264 = scalar_select %p263, %s21, 1
      %p265 = scmp.lt.s32.totalorder %s262, 7
      %s266 = scalar_select %p265, %s262, 7
      %s267 = smul.addr %s264, 8
      %s268 = sadd.s32 %s266, %s267
      %s269 = smul.addr %s268, 4
      %s270 = scalar_lea.vmem %s4, %s269
      %p271 = pneg %p176
      %p272 = pneg %p173
      %p273 = scmp.lt.s32.totalorder %s21, 1
      %s274 = scalar_select %p273, %s21, 1
      %s275 = scalar_lea.vmem %s5, %s274
      %s276 = smul.u32 8, %s22
      %p277 = scmp.lt.s32.totalorder %s21, 1
      %s278 = scalar_select %p277, %s21, 1
      %p279 = scmp.lt.s32.totalorder %s276, 7
      %s280 = scalar_select %p279, %s276, 7
      %s281 = smul.addr %s278, 8
      %s282 = sadd.s32 %s280, %s281
      %s283 = smul.addr %s282, 4
      %s284 = scalar_lea.vmem %s0, %s283
      %s285 = smul.u32 8, %s22
      %s286 = smul.u32 8, %s22
      %p287 = scmp.lt.s32.totalorder %s21, 1
      %s288 = scalar_select %p287, %s21, 1
      %p289 = scmp.lt.s32.totalorder %s286, 7
      %s290 = scalar_select %p289, %s286, 7
      %s291 = smul.addr %s288, 8
      %s292 = sadd.s32 %s290, %s291
      %s293 = smul.addr %s292, 4
      %s294 = scalar_lea.vmem %s1, %s293
      %s295 = smul.u32 8, %s22
      %s296 = smul.u32 8, %s22
      %p297 = scmp.lt.s32.totalorder %s21, 1
      %s298 = scalar_select %p297, %s21, 1
      %p299 = scmp.lt.s32.totalorder %s296, 7
      %s300 = scalar_select %p299, %s296, 7
      %s301 = smul.addr %s298, 8
      %s302 = sadd.s32 %s300, %s301
      %s303 = smul.addr %s302, 4
      %s304 = scalar_lea.vmem %s4, %s303
      %s305 = smul.u32 8, %s22
      %p306 = scmp.lt.s32.totalorder %s21, 1
      %s307 = scalar_select %p306, %s21, 1
      %s308 = scalar_lea.vmem %s5, %s307
      %p309 = scmp.eq.s32.totalorder %s22, 0
      // Predicated region
      $region37: #{resnet_block_forward.10} parent=35 // pred_check
        %p310 = pneg %p309
      $region38: #{resnet_block_forward.10} parent=35 // pred_check_branch
        %312 = sbr.rel (%p310) target = $region40
      $region39: #{resnet_block_forward.10} parent=35 // pred_region
        %313 = vst [vmem:[%s308] sm:$0x1] 0.0
      $region40: #{resnet_block_forward.10} parent=35 // pred_fallthru
        _
      %v314 = vld [vmem:[%s284] sm:$0xf]
      %v315 = vld [vmem:[%s284 + $0x4] sm:$0xf]
      %v316 = vld [vmem:[%s284 + $0x8] sm:$0xf]
      %v317 = vld [vmem:[%s284 + $0xc] sm:$0xf]
      %v318 = vld [vmem:[%s284 + $0x10] sm:$0xf]
      %v319 = vld [vmem:[%s284 + $0x14] sm:$0xf]
      %v320 = vld [vmem:[%s284 + $0x18] sm:$0xf]
      %v321 = vld [vmem:[%s284 + $0x1c] sm:$0xf]
      %v322 = vunpack.c.l.bf16 %v314
      %v323 = vunpack.c.l.bf16 %v315
      %v324 = vunpack.c.l.bf16 %v316
      %v325 = vunpack.c.l.bf16 %v317
      %v326 = vunpack.c.l.bf16 %v318
      %v327 = vunpack.c.l.bf16 %v319
      %v328 = vunpack.c.l.bf16 %v320
      %v329 = vunpack.c.l.bf16 %v321
      %v330 = vld [vmem:[%s294] sm:$0xf]
      %v331 = vld [vmem:[%s294 + $0x4] sm:$0xf]
      %v332 = vld [vmem:[%s294 + $0x8] sm:$0xf]
      %v333 = vld [vmem:[%s294 + $0xc] sm:$0xf]
      %v334 = vld [vmem:[%s294 + $0x10] sm:$0xf]
      %v335 = vld [vmem:[%s294 + $0x14] sm:$0xf]
      %v336 = vld [vmem:[%s294 + $0x18] sm:$0xf]
      %v337 = vld [vmem:[%s294 + $0x1c] sm:$0xf]
      %v338 = vunpack.c.l.bf16 %v330
      %v339 = vunpack.c.l.bf16 %v331
      %v340 = vunpack.c.l.bf16 %v332
      %v341 = vunpack.c.l.bf16 %v333
      %v342 = vunpack.c.l.bf16 %v334
      %v343 = vunpack.c.l.bf16 %v335
      %v344 = vunpack.c.l.bf16 %v336
      %v345 = vunpack.c.l.bf16 %v337
      %v346 = vld [vmem:[%s2] sm:$0x1]
      %v348 = vlaneseq
      %v349 = vshrl.u32 %v348, 7
      %v350 = vsub.s32 0, %v349
      %v351 = vrot.slane %v346, %v350
      %v353 = vmul.f32 %v338, %v351
      %v354 = vmul.f32 %v339, %v351
      %v355 = vmul.f32 %v340, %v351
      %v356 = vmul.f32 %v341, %v351
      %v357 = vmul.f32 %v342, %v351
      %v358 = vmul.f32 %v343, %v351
      %v359 = vmul.f32 %v344, %v351
      %v360 = vmul.f32 %v345, %v351
      %v361 = vld [vmem:[%s3] sm:$0x1]
      %v363 = vlaneseq
      %v364 = vshrl.u32 %v363, 7
      %v365 = vsub.s32 0, %v364
      %v366 = vrot.slane %v361, %v365
      %v368 = vadd.f32 %v353, %v366
      %v369 = vadd.f32 %v354, %v366
      %v370 = vadd.f32 %v355, %v366
      %v371 = vadd.f32 %v356, %v366
      %v372 = vadd.f32 %v357, %v366
      %v373 = vadd.f32 %v358, %v366
      %v374 = vadd.f32 %v359, %v366
      %v375 = vadd.f32 %v360, %v366
      %v376 = vadd.f32 %v322, %v368
      %v377 = vadd.f32 %v323, %v369
      %v378 = vadd.f32 %v324, %v370
      %v379 = vadd.f32 %v325, %v371
      %v380 = vadd.f32 %v326, %v372
      %v381 = vadd.f32 %v327, %v373
      %v382 = vadd.f32 %v328, %v374
      %v383 = vadd.f32 %v329, %v375
      %v384 = vpack.c.bf16 %v377, %v376
      %v385 = vpack.c.bf16 %v379, %v378
      %v386 = vpack.c.bf16 %v381, %v380
      %v387 = vpack.c.bf16 %v383, %v382
      %v392 = vunpack.c.l.b16 %v384
      %v393 = vunpack.c.h.b16 %v384
      %v394 = vunpack.c.l.b16 %v385
      %v395 = vunpack.c.h.b16 %v385
      %v396 = vunpack.c.l.b16 %v386
      %v397 = vunpack.c.h.b16 %v386
      %v398 = vunpack.c.l.b16 %v387
      %v399 = vunpack.c.h.b16 %v387
      %v400 = vpack.c.b16 %v392, %v392
      %v401 = vpack.c.b16 %v393, %v393
      %v402 = vpack.c.b16 %v394, %v394
      %v403 = vpack.c.b16 %v395, %v395
      %v404 = vpack.c.b16 %v396, %v396
      %v405 = vpack.c.b16 %v397, %v397
      %v406 = vpack.c.b16 %v398, %v398
      %v407 = vpack.c.b16 %v399, %v399
      %416 = vst [vmem:[%s304] sm:$0xf] %v400
      %417 = vst [vmem:[%s304 + $0x4] sm:$0xf] %v401
      %418 = vst [vmem:[%s304 + $0x8] sm:$0xf] %v402
      %419 = vst [vmem:[%s304 + $0xc] sm:$0xf] %v403
      %420 = vst [vmem:[%s304 + $0x10] sm:$0xf] %v404
      %421 = vst [vmem:[%s304 + $0x14] sm:$0xf] %v405
      %422 = vst [vmem:[%s304 + $0x18] sm:$0xf] %v406
      %423 = vst [vmem:[%s304 + $0x1c] sm:$0xf] %v407
      %v424 = vlaneseq
      %v425 = vshrl.u32 %v424, 7
      %v426 = vadd.s32 %v425, 8
      %v427 = vadd.s32 %v425, 16
      %v428 = vadd.s32 %v425, 24
      %v429 = vadd.s32 %v425, 32
      %v430 = vadd.s32 %v425, 40
      %v431 = vadd.s32 %v425, 48
      %v432 = vadd.s32 %v425, 56
      %s433 = smul.u32 %s22, 64
      %v434 = vstv %s433
      %v435 = vadd.s32 %v425, %v434
      %v436 = vadd.s32 %v426, %v434
      %v437 = vadd.s32 %v427, %v434
      %v438 = vadd.s32 %v428, %v434
      %v439 = vadd.s32 %v429, %v434
      %v440 = vadd.s32 %v430, %v434
      %v441 = vadd.s32 %v431, %v434
      %v442 = vadd.s32 %v432, %v434
      %vm443 = vcmp.lt.s32.totalorder %v435, 64
      %vm444 = vcmp.lt.s32.totalorder %v436, 64
      %vm445 = vcmp.lt.s32.totalorder %v437, 64
      %vm446 = vcmp.lt.s32.totalorder %v438, 64
      %vm447 = vcmp.lt.s32.totalorder %v439, 64
      %vm448 = vcmp.lt.s32.totalorder %v440, 64
      %vm449 = vcmp.lt.s32.totalorder %v441, 64
      %vm450 = vcmp.lt.s32.totalorder %v442, 64
      %v451 = vsel %vm443, 1, 0
      %v452 = vsel %vm444, 1, 0
      %v453 = vsel %vm445, 1, 0
      %v454 = vsel %vm446, 1, 0
      %v455 = vsel %vm447, 1, 0
      %v456 = vsel %vm448, 1, 0
      %v457 = vsel %vm449, 1, 0
      %v458 = vsel %vm450, 1, 0
      %vm459 = vcmp.eq.s32.totalorder %v451, 1
      %vm460 = vcmp.eq.s32.totalorder %v452, 1
      %vm461 = vcmp.eq.s32.totalorder %v453, 1
      %vm462 = vcmp.eq.s32.totalorder %v454, 1
      %vm463 = vcmp.eq.s32.totalorder %v455, 1
      %vm464 = vcmp.eq.s32.totalorder %v456, 1
      %vm465 = vcmp.eq.s32.totalorder %v457, 1
      %vm466 = vcmp.eq.s32.totalorder %v458, 1
      %v467 = vsel %vm459, %v376, 0.0
      %v468 = vsel %vm460, %v377, 0.0
      %v469 = vsel %vm461, %v378, 0.0
      %v470 = vsel %vm462, %v379, 0.0
      %v471 = vsel %vm463, %v380, 0.0
      %v472 = vsel %vm464, %v381, 0.0
      %v473 = vsel %vm465, %v382, 0.0
      %v474 = vsel %vm466, %v383, 0.0
      %v475 = vld [vmem:[%s308] sm:$0x1]
      %v476 = vadd.f32 %v467, %v468
      %v477 = vadd.f32 %v476, %v469
      %v478 = vadd.f32 %v477, %v470
      %v479 = vadd.f32 %v478, %v471
      %v480 = vadd.f32 %v479, %v472
      %v481 = vadd.f32 %v480, %v473
      %v482 = vadd.f32 %v481, %v474
      %v483 = vrot.slane %v482, 4
      %v484 = vadd.f32 %v482, %v483
      %v485 = vrot.slane %v484, 2
      %v486 = vadd.f32 %v484, %v485
      %v487 = vrot.slane %v486, 1
      %v488 = vadd.f32 %v486, %v487
      %v489 = vmul.f32 %v488, 0.015625
      %v490 = vadd.f32 %v475, %v489
      %491 = vst [vmem:[%s308] sm:$0x1] %v490
      %s492 = smul.u32 8, %s22
      %p493 = scmp.lt.s32.totalorder %s21, 1
      %s494 = scalar_select %p493, %s21, 1
      %p495 = scmp.lt.s32.totalorder %s492, 7
      %s496 = scalar_select %p495, %s492, 7
      %s497 = smul.addr %s494, 8
      %s498 = sadd.s32 %s496, %s497
      %s499 = smul.addr %s498, 4
      %s500 = scalar_lea.vmem %s4, %s499
      %p501 = scmp.lt.s32.totalorder %s21, 1
      %s502 = scalar_select %p501, %s21, 1
      %s503 = scalar_lea.vmem %s5, %s502
      // Predicated region
      $region41: #{resnet_block_forward.10} parent=35 // pred_check
        %p504 = pneg %p147
      $region42: #{resnet_block_forward.10} parent=35 // pred_check_branch
        %506 = sbr.rel (%p504) target = $region44
      $region43: #{resnet_block_forward.10} parent=35 // pred_region
        %s507 = smul.u32 8, %s22
      $region44: #{resnet_block_forward.10} parent=35 // pred_fallthru
        _
      // Predicated region
      $region45: #{resnet_block_forward.10} parent=35 // pred_check
        %p508 = pneg %p173
      $region46: #{resnet_block_forward.10} parent=35 // pred_check_branch
        %510 = sbr.rel (%p508) target = $region48
      $region47: #{resnet_block_forward.10} parent=35 // pred_region
        _
      $region48: #{resnet_block_forward.10} parent=35 // pred_fallthru
        _
    $region36: #{resnet_block_forward.10} parent=5 // pred_fallthru
      _
    %p511 = scmp.le.s32.totalorder 2, %s12
    // Predicated region
    $region49: #{resnet_block_forward.10} parent=5 // pred_check
      %p512 = pneg %p511
    $region50: #{resnet_block_forward.10} parent=5 // pred_check_branch
      %514 = sbr.rel (%p512) target = $region52
    $region51: #{resnet_block_forward.10} parent=5 // pred_region
      %s515 = ssub.s32 %s12, 2
      // Predicated region
      $region53: #{resnet_block_forward.10} parent=51 // pred_check
        %p516 = pneg %p153
      $region54: #{resnet_block_forward.10} parent=51 // pred_check_branch
        %518 = sbr.rel (%p516) target = $region56
      $region55: #{resnet_block_forward.10} parent=51 // pred_region
        %s519 = smul.u32 8, %s24
        %p520 = scmp.lt.s32.totalorder %s23, 1
        %s521 = scalar_select %p520, %s23, 1
        %p522 = scmp.lt.s32.totalorder %s519, 7
        %s523 = scalar_select %p522, %s519, 7
        %s524 = smul.addr %s521, 8
        %s525 = sadd.s32 %s523, %s524
        %s526 = smul.addr %s525, 4
        %s527 = scalar_lea.vmem %s4, %s526
      $region56: #{resnet_block_forward.10} parent=51 // pred_fallthru
        _
      // Predicated region
      $region57: #{resnet_block_forward.10} parent=51 // pred_check
        %p528 = pneg %p179
      $region58: #{resnet_block_forward.10} parent=51 // pred_check_branch
        %530 = sbr.rel (%p528) target = $region60
      $region59: #{resnet_block_forward.10} parent=51 // pred_region
        %p531 = scmp.lt.s32.totalorder %s23, 1
        %s532 = scalar_select %p531, %s23, 1
        %s533 = scalar_lea.vmem %s5, %s532
      $region60: #{resnet_block_forward.10} parent=51 // pred_fallthru
        _
    $region52: #{resnet_block_forward.10} parent=5 // pred_fallthru
      _
  $region6: #{resnet_block_forward.10} parent=0 // loop_footer
    %s16 = sadd.s32 1, %s12
  $region7: #{resnet_block_forward.10} parent=0 // loop_footer_branch
    %11 = sbr.rel target = $region3
  $region8: #{resnet_block_forward.10} parent=0 // loop_exit
    _

// kernel: resnet_block_forward.11
$region0: #{resnet_block_forward.11}
  #allocation0 [shape = 'u32[]', space=smem, size = 0x4, offset = 0x4, fixed_abs, tag = 'smem constant byte address 0x4 - core index']
  #allocation1 [shape = 'u32[144,128]{1,0:T(1,128)}', space=vmem, size = 0x12000, scoped, tag = 'internal scratch']
  #allocation2 [shape = 'f32[1,128]{1,0:T(1,128)}', space=vmem, size = 0x200, scoped, tag = 'scratch operand']
  %s0 = inlined_call_operand.vmem [shape: f32[2,1,128], index: 0, kind: input, shape index: {}]
  %s1 = inlined_call_operand.vmem [shape: f32[128,16], index: 1, kind: input, shape index: {}]
  %s2 = inlined_call_operand.vmem [shape: f32[16,128], index: 2, kind: input, shape index: {}]
  %s3 = inlined_call_operand.vmem [shape: bf16[2,64,128], index: 3, kind: input, shape index: {}]
  %s4 = inlined_call_operand.hbm [shape: f32[2,64,128], index: 4, kind: output, shape index: {}]
  %s5 = sld [smem:[#allocation0]]
  $region53: #{resnet_block_forward.11} parent=0
    _
  %s7 = ssub.s32 1, %s5
  %s8 = scalar_select 0, %s7, %s5
  $region1: #{resnet_block_forward.11} parent=0
    #allocation3 [shape = 'u8[65536]{0}', space=vmem, size = 0x10000, scoped, tag = 'output window, operand 0']
    #allocation4 [shape = 's32[2]{0}', space=sflag, size = 0x8, scoped, tag = 'scoped memory for resnet_block_forward.11']
    %9 = vsyncpa [#allocation4], 0
    %s10 = scalar_lea.sflag [#allocation4], 1
    %11 = vsyncpa %s10, 0
    loop: start=0, step=1, limit=4
    $region2: #{resnet_block_forward.11} parent=1 // loop_pre_header
      _
    $region3: #{resnet_block_forward.11} parent=1 // loop_header
      %s13 = sphi 0, %s17
      %p14 = scmp.ge.s32.totalorder %s13, 4
      %s20 = sphi 0, %s32
      %s21 = sphi 0, %s28
      %s22 = sphi 0, %s20
      %s23 = sphi 0, %s21
      %s24 = sphi 0, %s22
      %s25 = sphi 0, %s23
      %s35 = sphi 0, %s37
      %s38 = sphi 0, %s35
      %s39 = sphi 0, %s38
      %s55 = sphi 0, %s39
      %s59 = sphi 0, %s59
      %s61 = sphi 0, %s59
      %s62 = sphi 0, %s61
      %s76 = sphi 0, %s62
      %s80 = sphi 0, %s80
      %s82 = sphi 0, %s80
      %s83 = sphi 0, %s82
      %s97 = sphi 0, %s83
      %s105 = sphi 0, %s107
      %s108 = sphi 0, %s105
      %s109 = sphi 0, %s108
      %s125 = sphi 0, %s109
      %s133 = sphi 0, %s135
      %s136 = sphi 0, %s133
      %s137 = sphi 0, %s136
      %s153 = sphi 0, %s137
    $region4: #{resnet_block_forward.11} parent=1 // loop_header_branch
      %16 = sbr.rel (%p14) target = $region8
    $region5: #{resnet_block_forward.11} parent=1 // loop_body
      %s18 = ssub.s32 %s13, 1
      %s19 = ssub.s32 %s13, 2
      %s26 = sadd.s32 1, %s21
      %p27 = scmp.ge.s32.totalorder %s26, 1
      %s28 = scalar_select %p27, 0, %s26
      %s29 = sadd.s32 1, %s20
      %s30 = scalar_select %p27, %s29, %s20
      %p31 = scmp.ge.s32.totalorder %s30, 2
      %s32 = scalar_select %p31, 0, %s30
      %s33 = ssub.s32 %s20, %s32
      %p34 = scmp.eq.s32.totalorder %s33, 0
      %s36 = sadd.s32 %s35, 1
      %s37 = scalar_select %p34, %s35, %s36
      %p40 = pneg %p34
      %p41 = scmp.eq.s32.totalorder %s13, 1
      %p42 = por %p40, %p41
      %p43 = scmp.ne.s32.totalorder %s35, %s38
      %p44 = scmp.eq.s32.totalorder %s13, 0
      %p45 = por %p43, %p44
      %p46 = scmp.ne.s32.totalorder %s35, %s38
      %p47 = scmp.eq.s32.totalorder %s18, 1
      %p48 = por %p46, %p47
      %p49 = scmp.ne.s32.totalorder %s38, %s39
      %p50 = scmp.eq.s32.totalorder %s18, 0
      %p51 = por %p49, %p50
      %p52 = scmp.ne.s32.totalorder %s38, %s39
      %p53 = scmp.eq.s32.totalorder %s19, 1
      %p54 = por %p52, %p53
      %p56 = scmp.ne.s32.totalorder %s39, %s55
      %p57 = scmp.eq.s32.totalorder %s19, 0
      %p58 = por %p56, %p57
      %s60 = sadd.s32 %s59, 1
      %p63 = scmp.eq.s32.totalorder %s13, 1
      %p64 = scmp.ne.s32.totalorder %s59, %s61
      %p65 = scmp.eq.s32.totalorder %s13, 0
      %p66 = por %p64, %p65
      %p67 = scmp.ne.s32.totalorder %s59, %s61
      %p68 = scmp.eq.s32.totalorder %s18, 1
      %p69 = por %p67, %p68
      %p70 = scmp.ne.s32.totalorder %s61, %s62
      %p71 = scmp.eq.s32.totalorder %s18, 0
      %p72 = por %p70, %p71
      %p73 = scmp.ne.s32.totalorder %s61, %s62
      %p74 = scmp.eq.s32.totalorder %s19, 1
      %p75 = por %p73, %p74
      %p77 = scmp.ne.s32.totalorder %s62, %s76
      %p78 = scmp.eq.s32.totalorder %s19, 0
      %p79 = por %p77, %p78
      %s81 = sadd.s32 %s80, 1
      %p84 = scmp.eq.s32.totalorder %s13, 1
      %p85 = scmp.ne.s32.totalorder %s80, %s82
      %p86 = scmp.eq.s32.totalorder %s13, 0
      %p87 = por %p85, %p86
      %p88 = scmp.ne.s32.totalorder %s80, %s82
      %p89 = scmp.eq.s32.totalorder %s18, 1
      %p90 = por %p88, %p89
      %p91 = scmp.ne.s32.totalorder %s82, %s83
      %p92 = scmp.eq.s32.totalorder %s18, 0
      %p93 = por %p91, %p92
      %p94 = scmp.ne.s32.totalorder %s82, %s83
      %p95 = scmp.eq.s32.totalorder %s19, 1
      %p96 = por %p94, %p95
      %p98 = scmp.ne.s32.totalorder %s83, %s97
      %p99 = scmp.eq.s32.totalorder %s19, 0
      %p100 = por %p98, %p99
      %s101 = ssub.s32 %s20, %s32
      %s102 = ssub.s32 %s21, %s28
      %s103 = sor.u32 %s101, %s102
      %p104 = scmp.eq.s32.totalorder %s103, 0
      %s106 = sadd.s32 %s105, 1
      %s107 = scalar_select %p104, %s105, %s106
      %p110 = pneg %p104
      %p111 = scmp.eq.s32.totalorder %s13, 1
      %p112 = por %p110, %p111
      %p113 = scmp.ne.s32.totalorder %s105, %s108
      %p114 = scmp.eq.s32.totalorder %s13, 0
      %p115 = por %p113, %p114
      %p116 = scmp.ne.s32.totalorder %s105, %s108
      %p117 = scmp.eq.s32.totalorder %s18, 1
      %p118 = por %p116, %p117
      %p119 = scmp.ne.s32.totalorder %s108, %s109
      %p120 = scmp.eq.s32.totalorder %s18, 0
      %p121 = por %p119, %p120
      %p122 = scmp.ne.s32.totalorder %s108, %s109
      %p123 = scmp.eq.s32.totalorder %s19, 1
      %p124 = por %p122, %p123
      %p126 = scmp.ne.s32.totalorder %s109, %s125
      %p127 = scmp.eq.s32.totalorder %s19, 0
      %p128 = por %p126, %p127
      %s129 = ssub.s32 %s20, %s32
      %s130 = ssub.s32 %s21, %s28
      %s131 = sor.u32 %s129, %s130
      %p132 = scmp.eq.s32.totalorder %s131, 0
      %s134 = sadd.s32 %s133, 1
      %s135 = scalar_select %p132, %s133, %s134
      %p138 = pneg %p132
      %p139 = scmp.eq.s32.totalorder %s13, 1
      %p140 = por %p138, %p139
      %p141 = scmp.ne.s32.totalorder %s133, %s136
      %p142 = scmp.eq.s32.totalorder %s13, 0
      %p143 = por %p141, %p142
      %p144 = scmp.ne.s32.totalorder %s133, %s136
      %p145 = scmp.eq.s32.totalorder %s18, 1
      %p146 = por %p144, %p145
      %p147 = scmp.ne.s32.totalorder %s136, %s137
      %p148 = scmp.eq.s32.totalorder %s18, 0
      %p149 = por %p147, %p148
      %p150 = scmp.ne.s32.totalorder %s136, %s137
      %p151 = scmp.eq.s32.totalorder %s19, 1
      %p152 = por %p150, %p151
      %p154 = scmp.ne.s32.totalorder %s137, %s153
      %p155 = scmp.eq.s32.totalorder %s19, 0
      %p156 = por %p154, %p155
      %p157 = scmp.le.s32.totalorder 1, %s13
      %p158 = scmp.lt.s32.totalorder %s13, 3
      %p159 = pnand %p157, %p158
      %p160 = pneg %p159
      // Predicated region
      $region9: #{resnet_block_forward.11} parent=5 // pred_check
        _
      $region10: #{resnet_block_forward.11} parent=5 // pred_check_branch
        %162 = sbr.rel (%p159) target = $region12
      $region11: #{resnet_block_forward.11} parent=5 // pred_region
        %s163 = ssub.s32 %s13, 1
        // Predicated region
        $region13: #{resnet_block_forward.11} parent=11 // pred_check
          %p164 = pneg %p72
        $region14: #{resnet_block_forward.11} parent=11 // pred_check_branch
          %166 = sbr.rel (%p164) target = $region16
        $region15: #{resnet_block_forward.11} parent=11 // pred_region
          _
        $region16: #{resnet_block_forward.11} parent=11 // pred_fallthru
          _
        // Predicated region
        $region17: #{resnet_block_forward.11} parent=11 // pred_check
          %p167 = pneg %p93
        $region18: #{resnet_block_forward.11} parent=11 // pred_check_branch
          %169 = sbr.rel (%p167) target = $region20
        $region19: #{resnet_block_forward.11} parent=11 // pred_region
          _
        $region20: #{resnet_block_forward.11} parent=11 // pred_fallthru
          _
      $region12: #{resnet_block_forward.11} parent=5 // pred_fallthru
        _
      %p170 = scmp.lt.s32.totalorder %s13, 2
      // Predicated region
      $region21: #{resnet_block_forward.11} parent=5 // pred_check
        %p171 = pneg %p170
      $region22: #{resnet_block_forward.11} parent=5 // pred_check_branch
        %173 = sbr.rel (%p171) target = $region24
      $region23: #{resnet_block_forward.11} parent=5 // pred_region
        // Predicated region
        $region25: #{resnet_block_forward.11} parent=23 // pred_check
          %p174 = pneg %p45
        $region26: #{resnet_block_forward.11} parent=23 // pred_check_branch
          %176 = sbr.rel (%p174) target = $region28
        $region27: #{resnet_block_forward.11} parent=23 // pred_region
          %p177 = scmp.lt.s32.totalorder %s20, 1
          %s178 = scalar_select %p177, %s20, 1
          %s179 = scalar_lea.vmem %s0, %s178
        $region28: #{resnet_block_forward.11} parent=23 // pred_fallthru
          _
        // Predicated region
        $region29: #{resnet_block_forward.11} parent=23 // pred_check
          %p180 = pneg %p115
        $region30: #{resnet_block_forward.11} parent=23 // pred_check_branch
          %182 = sbr.rel (%p180) target = $region32
        $region31: #{resnet_block_forward.11} parent=23 // pred_region
          %s183 = smul.u32 8, %s21
          %p184 = scmp.lt.s32.totalorder %s20, 1
          %s185 = scalar_select %p184, %s20, 1
          %p186 = scmp.lt.s32.totalorder %s183, 7
          %s187 = scalar_select %p186, %s183, 7
          %s188 = smul.addr %s185, 8
          %s189 = sadd.s32 %s187, %s188
          %s190 = smul.addr %s189, 4
          %s191 = scalar_lea.vmem %s3, %s190
          %s192 = smul.u32 8, %s21
        $region32: #{resnet_block_forward.11} parent=23 // pred_fallthru
          _
      $region24: #{resnet_block_forward.11} parent=5 // pred_fallthru
        _
      %p193 = scmp.le.s32.totalorder 1, %s13
      %p194 = scmp.lt.s32.totalorder %s13, 3
      %p195 = pnand %p193, %p194
      %p196 = pneg %p195
      // Predicated region
      $region33: #{resnet_block_forward.11} parent=5 // pred_check
        _
      $region34: #{resnet_block_forward.11} parent=5 // pred_check_branch
        %198 = sbr.rel (%p195) target = $region36
      $region35: #{resnet_block_forward.11} parent=5 // pred_region
        %s199 = ssub.s32 %s13, 1
        %p200 = scmp.lt.s32.totalorder %s22, 1
        %s201 = scalar_select %p200, %s22, 1
        %s202 = scalar_lea.vmem %s0, %s201
        %p203 = pneg %p51
        %p204 = pneg %p48
        %p205 = pneg %p72
        %p206 = pneg %p69
        %p207 = pneg %p93
        %p208 = pneg %p90
        %s209 = smul.u32 8, %s23
        %p210 = scmp.lt.s32.totalorder %s22, 1
        %s211 = scalar_select %p210, %s22, 1
        %p212 = scmp.lt.s32.totalorder %s209, 7
        %s213 = scalar_select %p212, %s209, 7
        %s214 = smul.addr %s211, 8
        %s215 = sadd.s32 %s213, %s214
        %s216 = smul.addr %s215, 4
        %s217 = scalar_lea.vmem %s3, %s216
        %p218 = pneg %p121
        %p219 = pneg %p118
        %p220 = pneg %p149
        %p221 = pneg %p146
        %s222 = sand.u32 %s136, 1
        %s223 = scalar_lea.sflag [#allocation4], %s222
        %s224 = sand.u32 %s136, 1
        %s225 = smul.addr %s224, 64
        %s226 = scalar_lea.vmem [#allocation3], %s225
        %p227 = scmp.lt.s32.totalorder %s22, 1
        %s228 = scalar_select %p227, %s22, 1
        %s229 = scalar_lea.vmem %s0, %s228
        %s230 = smul.u32 8, %s23
        %p231 = scmp.lt.s32.totalorder %s22, 1
        %s232 = scalar_select %p231, %s22, 1
        %p233 = scmp.lt.s32.totalorder %s230, 7
        %s234 = scalar_select %p233, %s230, 7
        %s235 = smul.addr %s232, 8
        %s236 = sadd.s32 %s234, %s235
        %s237 = smul.addr %s236, 4
        %s238 = scalar_lea.vmem %s3, %s237
        %s239 = smul.u32 8, %s23
        %s240 = smul.u32 8, %s23
        %p241 = scmp.eq.s32.totalorder %s23, 0
        // Predicated region
        $region37: #{resnet_block_forward.11} parent=35 // pred_check
          %p242 = pneg %p241
        $region38: #{resnet_block_forward.11} parent=35 // pred_check_branch
          %244 = sbr.rel (%p242) target = $region40
        $region39: #{resnet_block_forward.11} parent=35 // pred_region
          %v245 = vld [vmem:[%s229] sm:$0x1]
          %v246 = vld [vmem:[%s1] sm:$0xff]
          %v247 = vld [vmem:[%s1 + $0x8] sm:$0xff]
          %v248 = vld [vmem:[%s1 + $0x10] sm:$0xff]
          %v249 = vld [vmem:[%s1 + $0x18] sm:$0xff]
          %v250 = vld [vmem:[%s1 + $0x20] sm:$0xff]
          %v251 = vld [vmem:[%s1 + $0x28] sm:$0xff]
          %v252 = vld [vmem:[%s1 + $0x30] sm:$0xff]
          %v253 = vld [vmem:[%s1 + $0x38] sm:$0xff]
          %v254 = vld [vmem:[%s1 + $0x40] sm:$0xff]
          %v255 = vld [vmem:[%s1 + $0x48] sm:$0xff]
          %v256 = vld [vmem:[%s1 + $0x50] sm:$0xff]
          %v257 = vld [vmem:[%s1 + $0x58] sm:$0xff]
          %v258 = vld [vmem:[%s1 + $0x60] sm:$0xff]
          %v259 = vld [vmem:[%s1 + $0x68] sm:$0xff]
          %v260 = vld [vmem:[%s1 + $0x70] sm:$0xff]
          %v261 = vld [vmem:[%s1 + $0x78] sm:$0xff]
          %262 = vmatprep.subr.mxu0 0.0
          %263 = vmatpush1.msra.mxu0 %v246
          %264 = vmatprep.subr.mxu0 0.0
          %265 = vmatpush1.msra.mxu0 %v247
          %266 = vmatprep.subr.mxu0 0.0
          %267 = vmatpush1.msra.mxu0 %v248
          %268 = vmatprep.subr.mxu0 0.0
          %269 = vmatpush1.msra.mxu0 %v249
          %270 = vmatprep.subr.mxu0 0.0
          %271 = vmatpush1.msra.mxu0 %v250
          %272 = vmatprep.subr.mxu0 0.0
          %273 = vmatpush1.msra.mxu0 %v251
          %274 = vmatprep.subr.mxu0 0.0
          %275 = vmatpush1.msra.mxu0 %v252
          %276 = vmatprep.subr.mxu0 0.0
          %277 = vmatpush1.msra.mxu0 %v253
          %278 = vmatprep.subr.mxu0 0.0
          %279 = vmatpush1.msra.mxu0 %v254
          %280 = vmatprep.subr.mxu0 0.0
          %281 = vmatpush1.msra.mxu0 %v255
          %282 = vmatprep.subr.mxu0 0.0
          %283 = vmatpush1.msra.mxu0 %v256
          %284 = vmatprep.subr.mxu0 0.0
          %285 = vmatpush1.msra.mxu0 %v257
          %286 = vmatprep.subr.mxu0 0.0
          %287 = vmatpush1.msra.mxu0 %v258
          %288 = vmatprep.subr.mxu0 0.0
          %289 = vmatpush1.msra.mxu0 %v259
          %290 = vmatprep.subr.mxu0 0.0
          %291 = vmatpush1.msra.mxu0 %v260
          %292 = vmatprep.subr.mxu0 0.0
          %293 = vmatpush1.msra.mxu0 %v261
          %294 = vmatprep.subr.mxu0 0.0
          %295 = vmatpush1.msra.mxu0 0.0
          %296 = vmatprep.subr.mxu0 0.0
          %297 = vmatpush1.msra.mxu0 0.0
          %298 = vmatprep.subr.mxu0 0.0
          %299 = vmatpush1.msra.mxu0 0.0
          %300 = vmatprep.subr.mxu0 0.0
          %301 = vmatpush1.msra.mxu0 0.0
          %302 = vmatprep.subr.mxu0 0.0
          %303 = vmatpush1.msra.mxu0 0.0
          %304 = vmatprep.subr.mxu0 0.0
          %305 = vmatpush1.msra.mxu0 0.0
          %306 = vmatprep.subr.mxu0 0.0
          %307 = vmatpush1.msra.mxu0 0.0
          %308 = vmatprep.subr.mxu0 0.0
          %309 = vmatpush1.msra.mxu0 0.0
          %310 = vmatprep.subr.mxu0 0.0
          %311 = vmatpush1.msra.mxu0 0.0
          %312 = vmatprep.subr.mxu0 0.0
          %313 = vmatpush1.msra.mxu0 0.0
          %314 = vmatprep.subr.mxu0 0.0
          %315 = vmatpush1.msra.mxu0 0.0
          %316 = vmatprep.subr.mxu0 0.0
          %317 = vmatpush1.msra.mxu0 0.0
          %318 = vmatprep.subr.mxu0 0.0
          %319 = vmatpush1.msra.mxu0 0.0
          %320 = vmatprep.subr.mxu0 0.0
          %321 = vmatpush1.msra.mxu0 0.0
          %322 = vmatprep.subr.mxu0 0.0
          %323 = vmatpush1.msra.mxu0 0.0
          %324 = vmatprep.subr.mxu0 0.0
          %325 = vmatpush1.msra.mxu0 0.0
          %326 = vmatprep.mubr.f32.mxu0 0.0
          %327 = vmatmul.mubr.f32.gmra.mrb[0].mxu0 %v245
          %v328 = vpop.f32.mrb[0].mxu0
          %v329 = vadd.f32 0.0, %v328
          %v330 = vpop.f32.mrb[0].mxu0
          %331 = vdwg.mxu0
          %v332 = vmax.f32 %v329, 0.0
          %v333 = vld [vmem:[%s2] sm:$0xff]
          %v334 = vld [vmem:[%s2 + $0x8] sm:$0xff]
          %vm335 = vcmask 130048
          %v337 = vsel %vm335, %v332, 0
          %339 = vmatprep.subr.mxu0 0.0
          %340 = vmatpush1.msra.mxu0 %v333
          %341 = vmatprep.subr.mxu0 0.0
          %342 = vmatpush1.msra.mxu0 %v334
          %343 = vmatprep.subr.mxu0 0.0
          %344 = vmatpush1.msra.mxu0 0.0
          %345 = vmatprep.subr.mxu0 0.0
          %346 = vmatpush1.msra.mxu0 0.0
          %347 = vmatprep.subr.mxu0 0.0
          %348 = vmatpush1.msra.mxu0 0.0
          %349 = vmatprep.subr.mxu0 0.0
          %350 = vmatpush1.msra.mxu0 0.0
          %351 = vmatprep.subr.mxu0 0.0
          %352 = vmatpush1.msra.mxu0 0.0
          %353 = vmatprep.subr.mxu0 0.0
          %354 = vmatpush1.msra.mxu0 0.0
          %355 = vmatprep.subr.mxu0 0.0
          %356 = vmatpush1.msra.mxu0 0.0
          %357 = vmatprep.subr.mxu0 0.0
          %358 = vmatpush1.msra.mxu0 0.0
          %359 = vmatprep.subr.mxu0 0.0
          %360 = vmatpush1.msra.mxu0 0.0
          %361 = vmatprep.subr.mxu0 0.0
          %362 = vmatpush1.msra.mxu0 0.0
          %363 = vmatprep.subr.mxu0 0.0
          %364 = vmatpush1.msra.mxu0 0.0
          %365 = vmatprep.subr.mxu0 0.0
          %366 = vmatpush1.msra.mxu0 0.0
          %367 = vmatprep.subr.mxu0 0.0
          %368 = vmatpush1.msra.mxu0 0.0
          %369 = vmatprep.subr.mxu0 0.0
          %370 = vmatpush1.msra.mxu0 0.0
          %371 = vmatprep.subr.mxu0 0.0
          %372 = vmatpush1.msra.mxu0 0.0
          %373 = vmatprep.subr.mxu0 0.0
          %374 = vmatpush1.msra.mxu0 0.0
          %375 = vmatprep.subr.mxu0 0.0
          %376 = vmatpush1.msra.mxu0 0.0
          %377 = vmatprep.subr.mxu0 0.0
          %378 = vmatpush1.msra.mxu0 0.0
          %379 = vmatprep.subr.mxu0 0.0
          %380 = vmatpush1.msra.mxu0 0.0
          %381 = vmatprep.subr.mxu0 0.0
          %382 = vmatpush1.msra.mxu0 0.0
          %383 = vmatprep.subr.mxu0 0.0
          %384 = vmatpush1.msra.mxu0 0.0
          %385 = vmatprep.subr.mxu0 0.0
          %386 = vmatpush1.msra.mxu0 0.0
          %387 = vmatprep.subr.mxu0 0.0
          %388 = vmatpush1.msra.mxu0 0.0
          %389 = vmatprep.subr.mxu0 0.0
          %390 = vmatpush1.msra.mxu0 0.0
          %391 = vmatprep.subr.mxu0 0.0
          %392 = vmatpush1.msra.mxu0 0.0
          %393 = vmatprep.subr.mxu0 0.0
          %394 = vmatpush1.msra.mxu0 0.0
          %395 = vmatprep.subr.mxu0 0.0
          %396 = vmatpush1.msra.mxu0 0.0
          %397 = vmatprep.subr.mxu0 0.0
          %398 = vmatpush1.msra.mxu0 0.0
          %399 = vmatprep.subr.mxu0 0.0
          %400 = vmatpush1.msra.mxu0 0.0
          %401 = vmatprep.subr.mxu0 0.0
          %402 = vmatpush1.msra.mxu0 0.0
          %403 = vmatprep.mubr.f32.mxu0 0.0
          %404 = vmatmul.mubr.f32.gmra.mrb[0].mxu0 %v337
          %v405 = vpop.f32.mrb[0].mxu0
          %v406 = vadd.f32 0.0, %v405
          %v407 = vpop.f32.mrb[0].mxu0
          %408 = vdwg.mxu0
          %v409 = vsub.f32 0.0, %v406
          %v410 = vmul.f32 %v409, 1.442695
          %v411 = vpow.pop %v410
          %v412 = vadd.f32 %v411, 1.0
          %v413 = vrcp.pop %v412
          %v414 = vmul.f32 1.0, %v413
          %415 = vst [vmem:[#allocation2] sm:$0x1] %v414
        $region40: #{resnet_block_forward.11} parent=35 // pred_fallthru
          _
        %v416 = vld [vmem:[%s238] sm:$0xf]
        %v417 = vld [vmem:[%s238 + $0x4] sm:$0xf]
        %v418 = vld [vmem:[%s238 + $0x8] sm:$0xf]
        %v419 = vld [vmem:[%s238 + $0xc] sm:$0xf]
        %v420 = vld [vmem:[%s238 + $0x10] sm:$0xf]
        %v421 = vld [vmem:[%s238 + $0x14] sm:$0xf]
        %v422 = vld [vmem:[%s238 + $0x18] sm:$0xf]
        %v423 = vld [vmem:[%s238 + $0x1c] sm:$0xf]
        %v424 = vunpack.c.l.bf16 %v416
        %v425 = vunpack.c.l.bf16 %v417
        %v426 = vunpack.c.l.bf16 %v418
        %v427 = vunpack.c.l.bf16 %v419
        %v428 = vunpack.c.l.bf16 %v420
        %v429 = vunpack.c.l.bf16 %v421
        %v430 = vunpack.c.l.bf16 %v422
        %v431 = vunpack.c.l.bf16 %v423
        %v432 = vld [vmem:[#allocation2] sm:$0x1]
        %v434 = vlaneseq
        %v435 = vshrl.u32 %v434, 7
        %v436 = vsub.s32 0, %v435
        %v437 = vrot.slane %v432, %v436
        %v439 = vmul.f32 %v424, %v437
        %v440 = vmul.f32 %v425, %v437
        %v441 = vmul.f32 %v426, %v437
        %v442 = vmul.f32 %v427, %v437
        %v443 = vmul.f32 %v428, %v437
        %v444 = vmul.f32 %v429, %v437
        %v445 = vmul.f32 %v430, %v437
        %v446 = vmul.f32 %v431, %v437
        %447 = vst [vmem:[%s226] sm:$0xff] %v439
        %448 = vst [vmem:[%s226 + $0x8] sm:$0xff] %v440
        %449 = vst [vmem:[%s226 + $0x10] sm:$0xff] %v441
        %450 = vst [vmem:[%s226 + $0x18] sm:$0xff] %v442
        %451 = vst [vmem:[%s226 + $0x20] sm:$0xff] %v443
        %452 = vst [vmem:[%s226 + $0x28] sm:$0xff] %v444
        %453 = vst [vmem:[%s226 + $0x30] sm:$0xff] %v445
        %454 = vst [vmem:[%s226 + $0x38] sm:$0xff] %v446
        %s455 = sand.u32 %s136, 1
        %s456 = scalar_lea.sflag [#allocation4], %s455
        %s457 = sand.u32 %s136, 1
        %s458 = smul.addr %s457, 64
        %s459 = scalar_lea.vmem [#allocation3], %s458
        // Predicated region
        $region41: #{resnet_block_forward.11} parent=35 // pred_check
          %p460 = pneg %p146
        $region42: #{resnet_block_forward.11} parent=35 // pred_check_branch
          %462 = sbr.rel (%p460) target = $region44
        $region43: #{resnet_block_forward.11} parent=35 // pred_region
          %s463 = smul.u32 8, %s23
          %s465 = ssub.s32 1024, 1024
          %466 = vsyncadd %s456, %s465
          %s467 = smul.addr %s22, 8
          %s468 = sadd.s32 %s463, %s467
          %s469 = smul.addr %s468, 128
          %s470 = scalar_lea.hbm %s4, %s469
          %s471 = sshll.u32 %s459, 4
          %s472 = int_to_ptr.vmem [resolvable:$true] %s471
          %477 = dma.vmem_to_hbm [thread:$0]  %s472, 1024, %s470, %s456, 128, 128, 8
        $region44: #{resnet_block_forward.11} parent=35 // pred_fallthru
          _
      $region36: #{resnet_block_forward.11} parent=5 // pred_fallthru
        _
      %p478 = scmp.le.s32.totalorder 2, %s13
      // Predicated region
      $region45: #{resnet_block_forward.11} parent=5 // pred_check
        %p479 = pneg %p478
      $region46: #{resnet_block_forward.11} parent=5 // pred_check_branch
        %481 = sbr.rel (%p479) target = $region48
      $region47: #{resnet_block_forward.11} parent=5 // pred_region
        %s482 = ssub.s32 %s13, 2
        // Predicated region
        $region49: #{resnet_block_forward.11} parent=47 // pred_check
          %p483 = pneg %p152
        $region50: #{resnet_block_forward.11} parent=47 // pred_check_branch
          %485 = sbr.rel (%p483) target = $region52
        $region51: #{resnet_block_forward.11} parent=47 // pred_region
          %s486 = sand.u32 %s137, 1
          %s487 = scalar_lea.sflag [#allocation4], %s486
          %s488 = sand.u32 %s137, 1
          %s489 = smul.addr %s488, 64
          %s490 = scalar_lea.vmem [#allocation3], %s489
          %491 = dma.done %s487, 1024
        $region52: #{resnet_block_forward.11} parent=47 // pred_fallthru
          _
      $region48: #{resnet_block_forward.11} parent=5 // pred_fallthru
        _
    $region6: #{resnet_block_forward.11} parent=1 // loop_footer
      %s17 = sadd.s32 1, %s13
    $region7: #{resnet_block_forward.11} parent=1 // loop_footer_branch
      %12 = sbr.rel target = $region3
    $region8: #{resnet_block_forward.11} parent=1 // loop_exit
      _
    %492 = vsyncpa [#allocation4], 1
    %s493 = scalar_lea.sflag [#allocation4], 1
    %494 = vsyncpa %s493, 1

// kernel: resnet_block_forward.7
$region0: #{resnet_block_forward.7}
  #allocation0 [shape = 'u32[]', space=smem, size = 0x4, offset = 0x4, fixed_abs, tag = 'smem constant byte address 0x4 - core index']
  #allocation1 [shape = 'u32[144,128]{1,0:T(1,128)}', space=vmem, size = 0x12000, scoped, tag = 'internal scratch']
  %s0 = inlined_call_operand.vmem [shape: bf16[8,9,9,64], index: 0, kind: input, shape index: {}]
  %s1 = inlined_call_operand.vmem [shape: bf16[9,64,128], index: 1, kind: input, shape index: {}]
  %s2 = inlined_call_operand.vmem [shape: f32[1,1,64], index: 2, kind: input, shape index: {}]
  %s3 = inlined_call_operand.vmem [shape: f32[1,1,64], index: 3, kind: input, shape index: {}]
  %s4 = inlined_call_operand.vmem [shape: f32[1,128], index: 4, kind: input, shape index: {}]
  %s5 = inlined_call_operand.vmem [shape: bf16[2,64,128], index: 5, kind: output, shape index: {0}]
  %s6 = inlined_call_operand.vmem [shape: f32[2,1,128], index: 6, kind: output, shape index: {1}]
  %s7 = inlined_call_operand.vmem [shape: f32[2,1,128], index: 7, kind: output, shape index: {2}]
  %8 = xla_tuple %s5, %s6, %s7
  %s9 = sld [smem:[#allocation0]]
  $region73: #{resnet_block_forward.7} parent=0
    _
  %s11 = ssub.s32 1, %s9
  %s12 = scalar_select 0, %s11, %s9
  loop: start=0, step=1, limit=4
  $region2: #{resnet_block_forward.7} parent=0 // loop_pre_header
    _
  $region3: #{resnet_block_forward.7} parent=0 // loop_header
    %s14 = sphi 0, %s18
    %p15 = scmp.ge.s32.totalorder %s14, 4
    %s21 = sphi 0, %s40
    %s22 = sphi 0, %s36
    %s23 = sphi 0, %s32
    %s24 = sphi 0, %s21
    %s25 = sphi 0, %s22
    %s26 = sphi 0, %s23
    %s27 = sphi 0, %s24
    %s28 = sphi 0, %s25
    %s29 = sphi 0, %s26
    %s43 = sphi 0, %s45
    %s46 = sphi 0, %s43
    %s47 = sphi 0, %s46
    %s63 = sphi 0, %s47
    %s69 = sphi 0, %s71
    %s72 = sphi 0, %s69
    %s73 = sphi 0, %s72
    %s89 = sphi 0, %s73
    %s93 = sphi 0, %s93
    %s95 = sphi 0, %s93
    %s96 = sphi 0, %s95
    %s110 = sphi 0, %s96
    %s114 = sphi 0, %s114
    %s116 = sphi 0, %s114
    %s117 = sphi 0, %s116
    %s131 = sphi 0, %s117
    %s137 = sphi 0, %s139
    %s140 = sphi 0, %s137
    %s141 = sphi 0, %s140
    %s157 = sphi 0, %s141
    %s167 = sphi 0, %s169
    %s170 = sphi 0, %s167
    %s171 = sphi 0, %s170
    %s187 = sphi 0, %s171
    %s195 = sphi 0, %s197
    %s198 = sphi 0, %s195
    %s199 = sphi 0, %s198
    %s215 = sphi 0, %s199
    %s223 = sphi 0, %s225
    %s226 = sphi 0, %s223
    %s227 = sphi 0, %s226
    %s243 = sphi 0, %s227
  $region4: #{resnet_block_forward.7} parent=0 // loop_header_branch
    %17 = sbr.rel (%p15) target = $region8
  $region5: #{resnet_block_forward.7} parent=0 // loop_body
    %s19 = ssub.s32 %s14, 1
    %s20 = ssub.s32 %s14, 2
    %s30 = sadd.s32 1, %s23
    %p31 = scmp.ge.s32.totalorder %s30, 1
    %s32 = scalar_select %p31, 0, %s30
    %s33 = sadd.s32 1, %s22
    %s34 = scalar_select %p31, %s33, %s22
    %p35 = scmp.ge.s32.totalorder %s34, 1
    %s36 = scalar_select %p35, 0, %s34
    %s37 = sadd.s32 1, %s21
    %s38 = scalar_select %p35, %s37, %s21
    %p39 = scmp.ge.s32.totalorder %s38, 2
    %s40 = scalar_select %p39, 0, %s38
    %s41 = ssub.s32 %s21, %s40
    %p42 = scmp.eq.s32.totalorder %s41, 0
    %s44 = sadd.s32 %s43, 1
    %s45 = scalar_select %p42, %s43, %s44
    %p48 = pneg %p42
    %p49 = scmp.eq.s32.totalorder %s14, 1
    %p50 = por %p48, %p49
    %p51 = scmp.ne.s32.totalorder %s43, %s46
    %p52 = scmp.eq.s32.totalorder %s14, 0
    %p53 = por %p51, %p52
    %p54 = scmp.ne.s32.totalorder %s43, %s46
    %p55 = scmp.eq.s32.totalorder %s19, 1
    %p56 = por %p54, %p55
    %p57 = scmp.ne.s32.totalorder %s46, %s47
    %p58 = scmp.eq.s32.totalorder %s19, 0
    %p59 = por %p57, %p58
    %p60 = scmp.ne.s32.totalorder %s46, %s47
    %p61 = scmp.eq.s32.totalorder %s20, 1
    %p62 = por %p60, %p61
    %p64 = scmp.ne.s32.totalorder %s47, %s63
    %p65 = scmp.eq.s32.totalorder %s20, 0
    %p66 = por %p64, %p65
    %s67 = ssub.s32 %s22, %s36
    %p68 = scmp.eq.s32.totalorder %s67, 0
    %s70 = sadd.s32 %s69, 1
    %s71 = scalar_select %p68, %s69, %s70
    %p74 = pneg %p68
    %p75 = scmp.eq.s32.totalorder %s14, 1
    %p76 = por %p74, %p75
    %p77 = scmp.ne.s32.totalorder %s69, %s72
    %p78 = scmp.eq.s32.totalorder %s14, 0
    %p79 = por %p77, %p78
    %p80 = scmp.ne.s32.totalorder %s69, %s72
    %p81 = scmp.eq.s32.totalorder %s19, 1
    %p82 = por %p80, %p81
    %p83 = scmp.ne.s32.totalorder %s72, %s73
    %p84 = scmp.eq.s32.totalorder %s19, 0
    %p85 = por %p83, %p84
    %p86 = scmp.ne.s32.totalorder %s72, %s73
    %p87 = scmp.eq.s32.totalorder %s20, 1
    %p88 = por %p86, %p87
    %p90 = scmp.ne.s32.totalorder %s73, %s89
    %p91 = scmp.eq.s32.totalorder %s20, 0
    %p92 = por %p90, %p91
    %s94 = sadd.s32 %s93, 1
    %p97 = scmp.eq.s32.totalorder %s14, 1
    %p98 = scmp.ne.s32.totalorder %s93, %s95
    %p99 = scmp.eq.s32.totalorder %s14, 0
    %p100 = por %p98, %p99
    %p101 = scmp.ne.s32.totalorder %s93, %s95
    %p102 = scmp.eq.s32.totalorder %s19, 1
    %p103 = por %p101, %p102
    %p104 = scmp.ne.s32.totalorder %s95, %s96
    %p105 = scmp.eq.s32.totalorder %s19, 0
    %p106 = por %p104, %p105
    %p107 = scmp.ne.s32.totalorder %s95, %s96
    %p108 = scmp.eq.s32.totalorder %s20, 1
    %p109 = por %p107, %p108
    %p111 = scmp.ne.s32.totalorder %s96, %s110
    %p112 = scmp.eq.s32.totalorder %s20, 0
    %p113 = por %p111, %p112
    %s115 = sadd.s32 %s114, 1
    %p118 = scmp.eq.s32.totalorder %s14, 1
    %p119 = scmp.ne.s32.totalorder %s114, %s116
    %p120 = scmp.eq.s32.totalorder %s14, 0
    %p121 = por %p119, %p120
    %p122 = scmp.ne.s32.totalorder %s114, %s116
    %p123 = scmp.eq.s32.totalorder %s19, 1
    %p124 = por %p122, %p123
    %p125 = scmp.ne.s32.totalorder %s116, %s117
    %p126 = scmp.eq.s32.totalorder %s19, 0
    %p127 = por %p125, %p126
    %p128 = scmp.ne.s32.totalorder %s116, %s117
    %p129 = scmp.eq.s32.totalorder %s20, 1
    %p130 = por %p128, %p129
    %p132 = scmp.ne.s32.totalorder %s117, %s131
    %p133 = scmp.eq.s32.totalorder %s20, 0
    %p134 = por %p132, %p133
    %s135 = ssub.s32 %s22, %s36
    %p136 = scmp.eq.s32.totalorder %s135, 0
    %s138 = sadd.s32 %s137, 1
    %s139 = scalar_select %p136, %s137, %s138
    %p142 = pneg %p136
    %p143 = scmp.eq.s32.totalorder %s14, 1
    %p144 = por %p142, %p143
    %p145 = scmp.ne.s32.totalorder %s137, %s140
    %p146 = scmp.eq.s32.totalorder %s14, 0
    %p147 = por %p145, %p146
    %p148 = scmp.ne.s32.totalorder %s137, %s140
    %p149 = scmp.eq.s32.totalorder %s19, 1
    %p150 = por %p148, %p149
    %p151 = scmp.ne.s32.totalorder %s140, %s141
    %p152 = scmp.eq.s32.totalorder %s19, 0
    %p153 = por %p151, %p152
    %p154 = scmp.ne.s32.totalorder %s140, %s141
    %p155 = scmp.eq.s32.totalorder %s20, 1
    %p156 = por %p154, %p155
    %p158 = scmp.ne.s32.totalorder %s141, %s157
    %p159 = scmp.eq.s32.totalorder %s20, 0
    %p160 = por %p158, %p159
    %s161 = ssub.s32 %s21, %s40
    %s162 = ssub.s32 %s23, %s32
    %s163 = sor.u32 %s161, %s162
    %s164 = ssub.s32 %s22, %s36
    %s165 = sor.u32 %s163, %s164
    %p166 = scmp.eq.s32.totalorder %s165, 0
    %s168 = sadd.s32 %s167, 1
    %s169 = scalar_select %p166, %s167, %s168
    %p172 = pneg %p166
    %p173 = scmp.eq.s32.totalorder %s14, 1
    %p174 = por %p172, %p173
    %p175 = scmp.ne.s32.totalorder %s167, %s170
    %p176 = scmp.eq.s32.totalorder %s14, 0
    %p177 = por %p175, %p176
    %p178 = scmp.ne.s32.totalorder %s167, %s170
    %p179 = scmp.eq.s32.totalorder %s19, 1
    %p180 = por %p178, %p179
    %p181 = scmp.ne.s32.totalorder %s170, %s171
    %p182 = scmp.eq.s32.totalorder %s19, 0
    %p183 = por %p181, %p182
    %p184 = scmp.ne.s32.totalorder %s170, %s171
    %p185 = scmp.eq.s32.totalorder %s20, 1
    %p186 = por %p184, %p185
    %p188 = scmp.ne.s32.totalorder %s171, %s187
    %p189 = scmp.eq.s32.totalorder %s20, 0
    %p190 = por %p188, %p189
    %s191 = ssub.s32 %s21, %s40
    %s192 = ssub.s32 %s22, %s36
    %s193 = sor.u32 %s191, %s192
    %p194 = scmp.eq.s32.totalorder %s193, 0
    %s196 = sadd.s32 %s195, 1
    %s197 = scalar_select %p194, %s195, %s196
    %p200 = pneg %p194
    %p201 = scmp.eq.s32.totalorder %s14, 1
    %p202 = por %p200, %p201
    %p203 = scmp.ne.s32.totalorder %s195, %s198
    %p204 = scmp.eq.s32.totalorder %s14, 0
    %p205 = por %p203, %p204
    %p206 = scmp.ne.s32.totalorder %s195, %s198
    %p207 = scmp.eq.s32.totalorder %s19, 1
    %p208 = por %p206, %p207
    %p209 = scmp.ne.s32.totalorder %s198, %s199
    %p210 = scmp.eq.s32.totalorder %s19, 0
    %p211 = por %p209, %p210
    %p212 = scmp.ne.s32.totalorder %s198, %s199
    %p213 = scmp.eq.s32.totalorder %s20, 1
    %p214 = por %p212, %p213
    %p216 = scmp.ne.s32.totalorder %s199, %s215
    %p217 = scmp.eq.s32.totalorder %s20, 0
    %p218 = por %p216, %p217
    %s219 = ssub.s32 %s21, %s40
    %s220 = ssub.s32 %s22, %s36
    %s221 = sor.u32 %s219, %s220
    %p222 = scmp.eq.s32.totalorder %s221, 0
    %s224 = sadd.s32 %s223, 1
    %s225 = scalar_select %p222, %s223, %s224
    %p228 = pneg %p222
    %p229 = scmp.eq.s32.totalorder %s14, 1
    %p230 = por %p228, %p229
    %p231 = scmp.ne.s32.totalorder %s223, %s226
    %p232 = scmp.eq.s32.totalorder %s14, 0
    %p233 = por %p231, %p232
    %p234 = scmp.ne.s32.totalorder %s223, %s226
    %p235 = scmp.eq.s32.totalorder %s19, 1
    %p236 = por %p234, %p235
    %p237 = scmp.ne.s32.totalorder %s226, %s227
    %p238 = scmp.eq.s32.totalorder %s19, 0
    %p239 = por %p237, %p238
    %p240 = scmp.ne.s32.totalorder %s226, %s227
    %p241 = scmp.eq.s32.totalorder %s20, 1
    %p242 = por %p240, %p241
    %p244 = scmp.ne.s32.totalorder %s227, %s243
    %p245 = scmp.eq.s32.totalorder %s20, 0
    %p246 = por %p244, %p245
    %p247 = scmp.le.s32.totalorder 1, %s14
    %p248 = scmp.lt.s32.totalorder %s14, 3
    %p249 = pnand %p247, %p248
    %p250 = pneg %p249
    // Predicated region
    $region9: #{resnet_block_forward.7} parent=5 // pred_check
      _
    $region10: #{resnet_block_forward.7} parent=5 // pred_check_branch
      %252 = sbr.rel (%p249) target = $region12
    $region11: #{resnet_block_forward.7} parent=5 // pred_region
      %s253 = ssub.s32 %s14, 1
      // Predicated region
      $region13: #{resnet_block_forward.7} parent=11 // pred_check
        %p254 = pneg %p85
      $region14: #{resnet_block_forward.7} parent=11 // pred_check_branch
        %256 = sbr.rel (%p254) target = $region16
      $region15: #{resnet_block_forward.7} parent=11 // pred_region
        %p257 = scmp.lt.s32.totalorder %s25, 0
        %s258 = scalar_select %p257, %s25, 0
        %s259 = smul.addr %s258, 4
        %s260 = scalar_lea.vmem %s1, %s259
      $region16: #{resnet_block_forward.7} parent=11 // pred_fallthru
        _
      // Predicated region
      $region17: #{resnet_block_forward.7} parent=11 // pred_check
        %p261 = pneg %p106
      $region18: #{resnet_block_forward.7} parent=11 // pred_check_branch
        %263 = sbr.rel (%p261) target = $region20
      $region19: #{resnet_block_forward.7} parent=11 // pred_region
        _
      $region20: #{resnet_block_forward.7} parent=11 // pred_fallthru
        _
      // Predicated region
      $region21: #{resnet_block_forward.7} parent=11 // pred_check
        %p264 = pneg %p127
      $region22: #{resnet_block_forward.7} parent=11 // pred_check_branch
        %266 = sbr.rel (%p264) target = $region24
      $region23: #{resnet_block_forward.7} parent=11 // pred_region
        _
      $region24: #{resnet_block_forward.7} parent=11 // pred_fallthru
        _
      // Predicated region
      $region25: #{resnet_block_forward.7} parent=11 // pred_check
        %p267 = pneg %p153
      $region26: #{resnet_block_forward.7} parent=11 // pred_check_branch
        %269 = sbr.rel (%p267) target = $region28
      $region27: #{resnet_block_forward.7} parent=11 // pred_region
        %p270 = scmp.lt.s32.totalorder %s25, 0
        %s271 = scalar_select %p270, %s25, 0
        %s272 = scalar_lea.vmem %s4, %s271
      $region28: #{resnet_block_forward.7} parent=11 // pred_fallthru
        _
    $region12: #{resnet_block_forward.7} parent=5 // pred_fallthru
      _
    %p273 = scmp.lt.s32.totalorder %s14, 2
    // Predicated region
    $region29: #{resnet_block_forward.7} parent=5 // pred_check
      %p274 = pneg %p273
    $region30: #{resnet_block_forward.7} parent=5 // pred_check_branch
      %276 = sbr.rel (%p274) target = $region32
    $region31: #{resnet_block_forward.7} parent=5 // pred_region
      // Predicated region
      $region33: #{resnet_block_forward.7} parent=31 // pred_check
        %p277 = pneg %p53
      $region34: #{resnet_block_forward.7} parent=31 // pred_check_branch
        %279 = sbr.rel (%p277) target = $region36
      $region35: #{resnet_block_forward.7} parent=31 // pred_region
        %s280 = smul.u32 4, %s21
        %p281 = scmp.lt.s32.totalorder %s280, 7
        %s282 = scalar_select %p281, %s280, 7
        %s283 = smul.addr %s282, 18
        %s284 = smul.addr %s283, 4
        %s285 = scalar_lea.vmem %s0, %s284
        %s286 = smul.u32 4, %s21
      $region36: #{resnet_block_forward.7} parent=31 // pred_fallthru
        _
    $region32: #{resnet_block_forward.7} parent=5 // pred_fallthru
      _
    %p287 = scmp.le.s32.totalorder 1, %s14
    %p288 = scmp.lt.s32.totalorder %s14, 3
    %p289 = pnand %p287, %p288
    %p290 = pneg %p289
    // Predicated region
    $region37: #{resnet_block_forward.7} parent=5 // pred_check
      _
    $region38: #{resnet_block_forward.7} parent=5 // pred_check_branch
      %292 = sbr.rel (%p289) target = $region40
    $region39: #{resnet_block_forward.7} parent=5 // pred_region
      %s293 = ssub.s32 %s14, 1
      %s294 = smul.u32 4, %s24
      %p295 = scmp.lt.s32.totalorder %s294, 7
      %s296 = scalar_select %p295, %s294, 7
      %s297 = smul.addr %s296, 18
      %s298 = smul.addr %s297, 4
      %s299 = scalar_lea.vmem %s0, %s298
      %p300 = pneg %p59
      %p301 = pneg %p56
      %p302 = scmp.lt.s32.totalorder %s25, 0
      %s303 = scalar_select %p302, %s25, 0
      %s304 = smul.addr %s303, 4
      %s305 = scalar_lea.vmem %s1, %s304
      %p306 = pneg %p85
      %p307 = pneg %p82
      %p308 = pneg %p106
      %p309 = pneg %p103
      %p310 = pneg %p127
      %p311 = pneg %p124
      %p312 = scmp.lt.s32.totalorder %s25, 0
      %s313 = scalar_select %p312, %s25, 0
      %s314 = scalar_lea.vmem %s4, %s313
      %p315 = pneg %p153
      %p316 = pneg %p150
      %p317 = pneg %p183
      %p318 = pneg %p180
      %s319 = smul.u32 8, %s26
      %p320 = scmp.lt.s32.totalorder %s24, 1
      %s321 = scalar_select %p320, %s24, 1
      %p322 = scmp.lt.s32.totalorder %s319, 7
      %s323 = scalar_select %p322, %s319, 7
      %p324 = scmp.lt.s32.totalorder %s25, 0
      %s325 = scalar_select %p324, %s25, 0
      %s326 = sadd.s32 %s325, %s323
      %s327 = smul.addr %s321, 8
      %s328 = sadd.s32 %s326, %s327
      %s329 = smul.addr %s328, 4
      %s330 = scalar_lea.vmem %s5, %s329
      %p331 = pneg %p211
      %p332 = pneg %p208
      %p333 = scmp.lt.s32.totalorder %s24, 1
      %s334 = scalar_select %p333, %s24, 1
      %p335 = scmp.lt.s32.totalorder %s25, 0
      %s336 = scalar_select %p335, %s25, 0
      %s337 = sadd.s32 %s336, %s334
      %s338 = scalar_lea.vmem %s6, %s337
      %p339 = pneg %p239
      %p340 = pneg %p236
      %p341 = scmp.lt.s32.totalorder %s24, 1
      %s342 = scalar_select %p341, %s24, 1
      %p343 = scmp.lt.s32.totalorder %s25, 0
      %s344 = scalar_select %p343, %s25, 0
      %s345 = sadd.s32 %s344, %s342
      %s346 = scalar_lea.vmem %s7, %s345
      %s347 = smul.u32 4, %s24
      %p348 = scmp.lt.s32.totalorder %s347, 7
      %s349 = scalar_select %p348, %s347, 7
      %s350 = smul.addr %s349, 18
      %s351 = smul.addr %s350, 4
      %s352 = scalar_lea.vmem %s0, %s351
      %s353 = smul.u32 4, %s24
      %p354 = scmp.lt.s32.totalorder %s25, 0
      %s355 = scalar_select %p354, %s25, 0
      %s356 = smul.addr %s355, 4
      %s357 = scalar_lea.vmem %s1, %s356
      %p358 = scmp.lt.s32.totalorder %s25, 0
      %s359 = scalar_select %p358, %s25, 0
      %s360 = scalar_lea.vmem %s4, %s359
      %s361 = smul.u32 8, %s26
      %p362 = scmp.lt.s32.totalorder %s24, 1
      %s363 = scalar_select %p362, %s24, 1
      %p364 = scmp.lt.s32.totalorder %s361, 7
      %s365 = scalar_select %p364, %s361, 7
      %p366 = scmp.lt.s32.totalorder %s25, 0
      %s367 = scalar_select %p366, %s25, 0
      %s368 = sadd.s32 %s367, %s365
      %s369 = smul.addr %s363, 8
      %s370 = sadd.s32 %s368, %s369
      %s371 = smul.addr %s370, 4
      %s372 = scalar_lea.vmem %s5, %s371
      %s373 = smul.u32 8, %s26
      %p374 = scmp.lt.s32.totalorder %s24, 1
      %s375 = scalar_select %p374, %s24, 1
      %p376 = scmp.lt.s32.totalorder %s25, 0
      %s377 = scalar_select %p376, %s25, 0
      %s378 = sadd.s32 %s377, %s375
      %s379 = scalar_lea.vmem %s6, %s378
      %p380 = scmp.lt.s32.totalorder %s24, 1
      %s381 = scalar_select %p380, %s24, 1
      %p382 = scmp.lt.s32.totalorder %s25, 0
      %s383 = scalar_select %p382, %s25, 0
      %s384 = sadd.s32 %s383, %s381
      %s385 = scalar_lea.vmem %s7, %s384
      %s387 = smul.u32 %s26, 8
      %v388 = vstv %s387
      %v389 = vadd.s32 %v388, 1
      %v390 = vadd.s32 %v388, 2
      %v391 = vadd.s32 %v388, 3
      %v392 = vadd.s32 %v388, 4
      %v393 = vadd.s32 %v388, 5
      %v394 = vadd.s32 %v388, 6
      %v395 = vadd.s32 %v388, 7
      %v396 = vlaneseq
      %v397 = vshrl.u32 %v396, 7
      %s398 = smul.u32 %s387, 2
      %s399 = smul.addr %s398, 4
      %s400 = scalar_lea.vmem %s352, %s399
      %v401 = vld [vmem:[%s400] sm:$0xf]
      %v402 = vld [vmem:[%s400 + $0x8] sm:$0xf]
      %v403 = vld [vmem:[%s400 + $0x10] sm:$0xf]
      %v404 = vld [vmem:[%s400 + $0x18] sm:$0xf]
      %v405 = vld [vmem:[%s400 + $0x20] sm:$0xf]
      %v406 = vld [vmem:[%s400 + $0x28] sm:$0xf]
      %v407 = vld [vmem:[%s400 + $0x30] sm:$0xf]
      %v408 = vld [vmem:[%s400 + $0x38] sm:$0xf]
      %v409 = vunpack.c.l.bf16 %v401
      %v410 = vunpack.c.l.bf16 %v402
      %v411 = vunpack.c.l.bf16 %v403
      %v412 = vunpack.c.l.bf16 %v404
      %v413 = vunpack.c.l.bf16 %v405
      %v414 = vunpack.c.l.bf16 %v406
      %v415 = vunpack.c.l.bf16 %v407
      %v416 = vunpack.c.l.bf16 %v408
      %v417 = vld [vmem:[%s2] sm:$0x1]
      %v419 = vlaneseq
      %v420 = vshrl.u32 %v419, 7
      %v421 = vsub.s32 0, %v420
      %v422 = vrot.slane %v417, %v421
      %v424 = vmul.f32 %v409, %v422
      %v425 = vmul.f32 %v410, %v422
      %v426 = vmul.f32 %v411, %v422
      %v427 = vmul.f32 %v412, %v422
      %v428 = vmul.f32 %v413, %v422
      %v429 = vmul.f32 %v414, %v422
      %v430 = vmul.f32 %v415, %v422
      %v431 = vmul.f32 %v416, %v422
      %v432 = vld [vmem:[%s3] sm:$0x1]
      %v434 = vlaneseq
      %v435 = vshrl.u32 %v434, 7
      %v436 = vsub.s32 0, %v435
      %v437 = vrot.slane %v432, %v436
      %v439 = vadd.f32 %v424, %v437
      %v440 = vadd.f32 %v425, %v437
      %v441 = vadd.f32 %v426, %v437
      %v442 = vadd.f32 %v427, %v437
      %v443 = vadd.f32 %v428, %v437
      %v444 = vadd.f32 %v429, %v437
      %v445 = vadd.f32 %v430, %v437
      %v446 = vadd.f32 %v431, %v437
      %v447 = vmax.f32 %v439, 0.0
      %v448 = vmax.f32 %v440, 0.0
      %v449 = vmax.f32 %v441, 0.0
      %v450 = vmax.f32 %v442, 0.0
      %v451 = vmax.f32 %v443, 0.0
      %v452 = vmax.f32 %v444, 0.0
      %v453 = vmax.f32 %v445, 0.0
      %v454 = vmax.f32 %v446, 0.0
      %v455 = vmul.u32 %v388, 2
      %v456 = vmul.u32 %v389, 2
      %v457 = vmul.u32 %v390, 2
      %v458 = vmul.u32 %v391, 2
      %v459 = vmul.u32 %v392, 2
      %v460 = vmul.u32 %v393, 2
      %v461 = vmul.u32 %v394, 2
      %v462 = vmul.u32 %v395, 2
      %v463 = vmul.u32 %v397, 2
      %vm464 = vcmp.ge.s32.totalorder %v455, 1
      %vm465 = vcmp.ge.s32.totalorder %v456, 1
      %vm466 = vcmp.ge.s32.totalorder %v457, 1
      %vm467 = vcmp.ge.s32.totalorder %v458, 1
      %vm468 = vcmp.ge.s32.totalorder %v459, 1
      %vm469 = vcmp.ge.s32.totalorder %v460, 1
      %vm470 = vcmp.ge.s32.totalorder %v461, 1
      %vm471 = vcmp.ge.s32.totalorder %v462, 1
      %vm472 = vcmp.lt.s32.totalorder %v455, 17
      %vm473 = vcmp.lt.s32.totalorder %v456, 17
      %vm474 = vcmp.lt.s32.totalorder %v457, 17
      %vm475 = vcmp.lt.s32.totalorder %v458, 17
      %vm476 = vcmp.lt.s32.totalorder %v459, 17
      %vm477 = vcmp.lt.s32.totalorder %v460, 17
      %vm478 = vcmp.lt.s32.totalorder %v461, 17
      %vm479 = vcmp.lt.s32.totalorder %v462, 17
      %vm480 = vmand %vm464, %vm472
      %vm481 = vmand %vm465, %vm473
      %vm482 = vmand %vm466, %vm474
      %vm483 = vmand %vm467, %vm475
      %vm484 = vmand %vm468, %vm476
      %vm485 = vmand %vm469, %vm477
      %vm486 = vmand %vm470, %vm478
      %vm487 = vmand %vm471, %vm479
      %vm488 = vcmp.ge.s32.totalorder %v463, 1
      %vm489 = vmand %vm480, %vm488
      %vm490 = vmand %vm481, %vm488
      %vm491 = vmand %vm482, %vm488
      %vm492 = vmand %vm483, %vm488
      %vm493 = vmand %vm484, %vm488
      %vm494 = vmand %vm485, %vm488
      %vm495 = vmand %vm486, %vm488
      %vm496 = vmand %vm487, %vm488
      %vm497 = vcmp.lt.s32.totalorder %v463, 17
      %vm498 = vmand %vm489, %vm497
      %vm499 = vmand %vm490, %vm497
      %vm500 = vmand %vm491, %vm497
      %vm501 = vmand %vm492, %vm497
      %vm502 = vmand %vm493, %vm497
      %vm503 = vmand %vm494, %vm497
      %vm504 = vmand %vm495, %vm497
      %vm505 = vmand %vm496, %vm497
      %v506 = vsel %vm498, 1, 0
      %v507 = vsel %vm499, 1, 0
      %v508 = vsel %vm500, 1, 0
      %v509 = vsel %vm501, 1, 0
      %v510 = vsel %vm502, 1, 0
      %v511 = vsel %vm503, 1, 0
      %v512 = vsel %vm504, 1, 0
      %v513 = vsel %vm505, 1, 0
      %vm514 = vcmp.eq.s32.totalorder %v506, 1
      %vm515 = vcmp.eq.s32.totalorder %v507, 1
      %vm516 = vcmp.eq.s32.totalorder %v508, 1
      %vm517 = vcmp.eq.s32.totalorder %v509, 1
      %vm518 = vcmp.eq.s32.totalorder %v510, 1
      %vm519 = vcmp.eq.s32.totalorder %v511, 1
      %vm520 = vcmp.eq.s32.totalorder %v512, 1
      %vm521 = vcmp.eq.s32.totalorder %v513, 1
      %v522 = vsel %vm514, %v447, 0.0
      %v523 = vsel %vm515, %v448, 0.0
      %v524 = vsel %vm516, %v449, 0.0
      %v525 = vsel %vm517, %v450, 0.0
      %v526 = vsel %vm518, %v451, 0.0
      %v527 = vsel %vm519, %v452, 0.0
      %v528 = vsel %vm520, %v453, 0.0
      %v529 = vsel %vm521, %v454, 0.0
      %v530 = vpack.c.bf16 %v522, %v522
      %v531 = vpack.c.bf16 %v523, %v523
      %v532 = vpack.c.bf16 %v524, %v524
      %v533 = vpack.c.bf16 %v525, %v525
      %v534 = vpack.c.bf16 %v526, %v526
      %v535 = vpack.c.bf16 %v527, %v527
      %v536 = vpack.c.bf16 %v528, %v528
      %v537 = vpack.c.bf16 %v529, %v529
      %v538 = vld [vmem:[%s357] sm:$0xf]
      %v539 = vld [vmem:[%s357 + $0x4] sm:$0xf]
      %v540 = vld [vmem:[%s357 + $0x8] sm:$0xf]
      %v541 = vld [vmem:[%s357 + $0xc] sm:$0xf]
      %v542 = vld [vmem:[%s357 + $0x10] sm:$0xf]
      %v543 = vld [vmem:[%s357 + $0x14] sm:$0xf]
      %v544 = vld [vmem:[%s357 + $0x18] sm:$0xf]
      %v545 = vld [vmem:[%s357 + $0x1c] sm:$0xf]
      %s546 = sadd.s32 %s398, 18
      %s547 = smul.addr %s546, 4
      %s548 = scalar_lea.vmem %s352, %s547
      %v549 = vld [vmem:[%s548] sm:$0xf]
      %v550 = vld [vmem:[%s548 + $0x8] sm:$0xf]
      %v551 = vld [vmem:[%s548 + $0x10] sm:$0xf]
      %v552 = vld [vmem:[%s548 + $0x18] sm:$0xf]
      %v553 = vld [vmem:[%s548 + $0x20] sm:$0xf]
      %v554 = vld [vmem:[%s548 + $0x28] sm:$0xf]
      %v555 = vld [vmem:[%s548 + $0x30] sm:$0xf]
      %v556 = vld [vmem:[%s548 + $0x38] sm:$0xf]
      %v557 = vunpack.c.l.bf16 %v549
      %v558 = vunpack.c.l.bf16 %v550
      %v559 = vunpack.c.l.bf16 %v551
      %v560 = vunpack.c.l.bf16 %v552
      %v561 = vunpack.c.l.bf16 %v553
      %v562 = vunpack.c.l.bf16 %v554
      %v563 = vunpack.c.l.bf16 %v555
      %v564 = vunpack.c.l.bf16 %v556
      %v565 = vmul.f32 %v557, %v422
      %v566 = vmul.f32 %v558, %v422
      %v567 = vmul.f32 %v559, %v422
      %v568 = vmul.f32 %v560, %v422
      %v569 = vmul.f32 %v561, %v422
      %v570 = vmul.f32 %v562, %v422
      %v571 = vmul.f32 %v563, %v422
      %v572 = vmul.f32 %v564, %v422
      %v573 = vadd.f32 %v565, %v437
      %v574 = vadd.f32 %v566, %v437
      %v575 = vadd.f32 %v567, %v437
      %v576 = vadd.f32 %v568, %v437
      %v577 = vadd.f32 %v569, %v437
      %v578 = vadd.f32 %v570, %v437
      %v579 = vadd.f32 %v571, %v437
      %v580 = vadd.f32 %v572, %v437
      %v581 = vmax.f32 %v573, 0.0
      %v582 = vmax.f32 %v574, 0.0
      %v583 = vmax.f32 %v575, 0.0
      %v584 = vmax.f32 %v576, 0.0
      %v585 = vmax.f32 %v577, 0.0
      %v586 = vmax.f32 %v578, 0.0
      %v587 = vmax.f32 %v579, 0.0
      %v588 = vmax.f32 %v580, 0.0
      %v589 = vadd.s32 %v463, 1
      %vm590 = vcmp.ge.s32.totalorder %v589, 1
      %vm591 = vmand %vm480, %vm590
      %vm592 = vmand %vm481, %vm590
      %vm593 = vmand %vm482, %vm590
      %vm594 = vmand %vm483, %vm590
      %vm595 = vmand %vm484, %vm590
      %vm596 = vmand %vm485, %vm590
      %vm597 = vmand %vm486, %vm590
      %vm598 = vmand %vm487, %vm590
      %vm599 = vcmp.lt.s32.totalorder %v589, 17
      %vm600 = vmand %vm591, %vm599
      %vm601 = vmand %vm592, %vm599
      %vm602 = vmand %vm593, %vm599
      %vm603 = vmand %vm594, %vm599
      %vm604 = vmand %vm595, %vm599
      %vm605 = vmand %vm596, %vm599
      %vm606 = vmand %vm597, %vm599
      %vm607 = vmand %vm598, %vm599
      %v608 = vsel %vm600, 1, 0
      %v609 = vsel %vm601, 1, 0
      %v610 = vsel %vm602, 1, 0
      %v611 = vsel %vm603, 1, 0
      %v612 = vsel %vm604, 1, 0
      %v613 = vsel %vm605, 1, 0
      %v614 = vsel %vm606, 1, 0
      %v615 = vsel %vm607, 1, 0
      %vm616 = vcmp.eq.s32.totalorder %v608, 1
      %vm617 = vcmp.eq.s32.totalorder %v609, 1
      %vm618 = vcmp.eq.s32.totalorder %v610, 1
      %vm619 = vcmp.eq.s32.totalorder %v611, 1
      %vm620 = vcmp.eq.s32.totalorder %v612, 1
      %vm621 = vcmp.eq.s32.totalorder %v613, 1
      %vm622 = vcmp.eq.s32.totalorder %v614, 1
      %vm623 = vcmp.eq.s32.totalorder %v615, 1
      %v624 = vsel %vm616, %v581, 0.0
      %v625 = vsel %vm617, %v582, 0.0
      %v626 = vsel %vm618, %v583, 0.0
      %v627 = vsel %vm619, %v584, 0.0
      %v628 = vsel %vm620, %v585, 0.0
      %v629 = vsel %vm621, %v586, 0.0
      %v630 = vsel %vm622, %v587, 0.0
      %v631 = vsel %vm623, %v588, 0.0
      %v632 = vpack.c.bf16 %v624, %v624
      %v633 = vpack.c.bf16 %v625, %v625
      %v634 = vpack.c.bf16 %v626, %v626
      %v635 = vpack.c.bf16 %v627, %v627
      %v636 = vpack.c.bf16 %v628, %v628
      %v637 = vpack.c.bf16 %v629, %v629
      %v638 = vpack.c.bf16 %v630, %v630
      %v639 = vpack.c.bf16 %v631, %v631
      %s640 = scalar_lea.vmem %s357, 32
      %v641 = vld [vmem:[%s640] sm:$0xf]
      %v642 = vld [vmem:[%s640 + $0x4] sm:$0xf]
      %v643 = vld [vmem:[%s640 + $0x8] sm:$0xf]
      %v644 = vld [vmem:[%s640 + $0xc] sm:$0xf]
      %v645 = vld [vmem:[%s640 + $0x10] sm:$0xf]
      %v646 = vld [vmem:[%s640 + $0x14] sm:$0xf]
      %v647 = vld [vmem:[%s640 + $0x18] sm:$0xf]
      %v648 = vld [vmem:[%s640 + $0x1c] sm:$0xf]
      %v657 = vunpack.c.l.b16 %v632
      %v658 = vunpack.c.l.b16 %v633
      %v659 = vunpack.c.l.b16 %v634
      %v660 = vunpack.c.l.b16 %v635
      %v661 = vunpack.c.l.b16 %v636
      %v662 = vunpack.c.l.b16 %v637
      %v663 = vunpack.c.l.b16 %v638
      %v664 = vunpack.c.l.b16 %v639
      %v665 = vpack.c.b16 %v658, %v657
      %v666 = vpack.c.b16 %v660, %v659
      %v667 = vpack.c.b16 %v662, %v661
      %v668 = vpack.c.b16 %v664, %v663
      %v677 = vunpack.c.l.b16 %v641
      %v678 = vunpack.c.l.b16 %v642
      %v679 = vunpack.c.l.b16 %v643
      %v680 = vunpack.c.l.b16 %v644
      %v681 = vunpack.c.l.b16 %v645
      %v682 = vunpack.c.l.b16 %v646
      %v683 = vunpack.c.l.b16 %v647
      %v684 = vunpack.c.l.b16 %v648
      %v685 = vpack.c.b16 %v678, %v677
      %v686 = vpack.c.b16 %v680, %v679
      %v687 = vpack.c.b16 %v682, %v681
      %v688 = vpack.c.b16 %v684, %v683
      %vm693 = vcmask 523264
      %v695 = vsel %vm693, %v665, 0
      %v698 = vsel %vm693, %v666, 0
      %v701 = vsel %vm693, %v667, 0
      %v704 = vsel %vm693, %v668, 0
      %706 = vmatprep.subr.bf16.mxu0 0
      %707 = vmatpush1.bf16.msra.mxu0 %v685
      %708 = vmatprep.subr.bf16.mxu0 0
      %709 = vmatpush1.bf16.msra.mxu0 %v686
      %710 = vmatprep.subr.bf16.mxu0 0
      %711 = vmatpush1.bf16.msra.mxu0 %v687
      %712 = vmatprep.subr.bf16.mxu0 0
      %713 = vmatpush1.bf16.msra.mxu0 %v688
      %714 = vmatprep.subr.bf16.mxu0 0
      %715 = vmatpush1.bf16.msra.mxu0 0
      %716 = vmatprep.subr.bf16.mxu0 0
      %717 = vmatpush1.bf16.msra.mxu0 0
      %718 = vmatprep.subr.bf16.mxu0 0
      %719 = vmatpush1.bf16.msra.mxu0 0
      %720 = vmatprep.subr.bf16.mxu0 0
      %721 = vmatpush1.bf16.msra.mxu0 0
      %722 = vmatprep.subr.bf16.mxu0 0
      %723 = vmatpush1.bf16.msra.mxu0 0
      %724 = vmatprep.subr.bf16.mxu0 0
      %725 = vmatpush1.bf16.msra.mxu0 0
      %726 = vmatprep.subr.bf16.mxu0 0
      %727 = vmatpush1.bf16.msra.mxu0 0
      %728 = vmatprep.subr.bf16.mxu0 0
      %729 = vmatpush1.bf16.msra.mxu0 0
      %730 = vmatprep.subr.bf16.mxu0 0
      %731 = vmatpush1.bf16.msra.mxu0 0
      %732 = vmatprep.subr.bf16.mxu0 0
      %733 = vmatpush1.bf16.msra.mxu0 0
      %734 = vmatprep.subr.bf16.mxu0 0
      %735 = vmatpush1.bf16.msra.mxu0 0
      %736 = vmatprep.subr.bf16.mxu0 0
      %737 = vmatpush1.bf16.msra.mxu0 0
      %738 = vmatprep.mubr.bf16.mxu0 0
      %739 = vmatmul.mubr.bf16.gmra.mrb[0].mxu0 %v695
      %v740 = vpop.f32.mrb[0].mxu0
      %v741 = vadd.f32 0.0, %v740
      %v742 = vpop.f32.mrb[0].mxu0
      %v743 = vpop.f32.mrb[0].mxu0
      %v744 = vadd.f32 0.0, %v743
      %v745 = vpop.f32.mrb[0].mxu0
      %746 = vmatprep.mubr.bf16.mxu0 0
      %747 = vmatmul.mubr.bf16.gmra.mrb[0].mxu0 %v698
      %v748 = vpop.f32.mrb[0].mxu0
      %v749 = vadd.f32 0.0, %v748
      %v750 = vpop.f32.mrb[0].mxu0
      %v751 = vpop.f32.mrb[0].mxu0
      %v752 = vadd.f32 0.0, %v751
      %v753 = vpop.f32.mrb[0].mxu0
      %754 = vmatprep.mubr.bf16.mxu0 0
      %755 = vmatmul.mubr.bf16.gmra.mrb[0].mxu0 %v701
      %v756 = vpop.f32.mrb[0].mxu0
      %v757 = vadd.f32 0.0, %v756
      %v758 = vpop.f32.mrb[0].mxu0
      %v759 = vpop.f32.mrb[0].mxu0
      %v760 = vadd.f32 0.0, %v759
      %v761 = vpop.f32.mrb[0].mxu0
      %762 = vmatprep.mubr.bf16.mxu0 0
      %763 = vmatmul.mubr.bf16.gmra.mrb[0].mxu0 %v704
      %v764 = vpop.f32.mrb[0].mxu0
      %v765 = vadd.f32 0.0, %v764
      %v766 = vpop.f32.mrb[0].mxu0
      %v767 = vpop.f32.mrb[0].mxu0
      %v768 = vadd.f32 0.0, %v767
      %v769 = vpop.f32.mrb[0].mxu0
      %770 = vdwg.mxu0
      %v779 = vunpack.c.l.b16 %v530
      %v780 = vunpack.c.l.b16 %v531
      %v781 = vunpack.c.l.b16 %v532
      %v782 = vunpack.c.l.b16 %v533
      %v783 = vunpack.c.l.b16 %v534
      %v784 = vunpack.c.l.b16 %v535
      %v785 = vunpack.c.l.b16 %v536
      %v786 = vunpack.c.l.b16 %v537
      %v787 = vpack.c.b16 %v780, %v779
      %v788 = vpack.c.b16 %v782, %v781
      %v789 = vpack.c.b16 %v784, %v783
      %v790 = vpack.c.b16 %v786, %v785
      %v799 = vunpack.c.l.b16 %v538
      %v800 = vunpack.c.l.b16 %v539
      %v801 = vunpack.c.l.b16 %v540
      %v802 = vunpack.c.l.b16 %v541
      %v803 = vunpack.c.l.b16 %v542
      %v804 = vunpack.c.l.b16 %v543
      %v805 = vunpack.c.l.b16 %v544
      %v806 = vunpack.c.l.b16 %v545
      %v807 = vpack.c.b16 %v800, %v799
      %v808 = vpack.c.b16 %v802, %v801
      %v809 = vpack.c.b16 %v804, %v803
      %v810 = vpack.c.b16 %v806, %v805
      %v816 = vsel %vm693, %v787, 0
      %v819 = vsel %vm693, %v788, 0
      %v822 = vsel %vm693, %v789, 0
      %v825 = vsel %vm693, %v790, 0
      %827 = vmatprep.subr.bf16.mxu0 0
      %828 = vmatpush1.bf16.msra.mxu0 %v807
      %829 = vmatprep.subr.bf16.mxu0 0
      %830 = vmatpush1.bf16.msra.mxu0 %v808
      %831 = vmatprep.subr.bf16.mxu0 0
      %832 = vmatpush1.bf16.msra.mxu0 %v809
      %833 = vmatprep.subr.bf16.mxu0 0
      %834 = vmatpush1.bf16.msra.mxu0 %v810
      %835 = vmatprep.subr.bf16.mxu0 0
      %836 = vmatpush1.bf16.msra.mxu0 0
      %837 = vmatprep.subr.bf16.mxu0 0
      %838 = vmatpush1.bf16.msra.mxu0 0
      %839 = vmatprep.subr.bf16.mxu0 0
      %840 = vmatpush1.bf16.msra.mxu0 0
      %841 = vmatprep.subr.bf16.mxu0 0
      %842 = vmatpush1.bf16.msra.mxu0 0
      %843 = vmatprep.subr.bf16.mxu0 0
      %844 = vmatpush1.bf16.msra.mxu0 0
      %845 = vmatprep.subr.bf16.mxu0 0
      %846 = vmatpush1.bf16.msra.mxu0 0
      %847 = vmatprep.subr.bf16.mxu0 0
      %848 = vmatpush1.bf16.msra.mxu0 0
      %849 = vmatprep.subr.bf16.mxu0 0
      %850 = vmatpush1.bf16.msra.mxu0 0
      %851 = vmatprep.subr.bf16.mxu0 0
      %852 = vmatpush1.bf16.msra.mxu0 0
      %853 = vmatprep.subr.bf16.mxu0 0
      %854 = vmatpush1.bf16.msra.mxu0 0
      %855 = vmatprep.subr.bf16.mxu0 0
      %856 = vmatpush1.bf16.msra.mxu0 0
      %857 = vmatprep.subr.bf16.mxu0 0
      %858 = vmatpush1.bf16.msra.mxu0 0
      %859 = vmatprep.mubr.bf16.mxu0 0
      %860 = vmatmul.mubr.bf16.gmra.mrb[0].mxu0 %v816
      %v861 = vpop.f32.mrb[0].mxu0
      %v862 = vadd.f32 %v741, %v861
      %v863 = vpop.f32.mrb[0].mxu0
      %v864 = vpop.f32.mrb[0].mxu0
      %v865 = vadd.f32 %v744, %v864
      %v866 = vpop.f32.mrb[0].mxu0
      %867 = vmatprep.mubr.bf16.mxu0 0
      %868 = vmatmul.mubr.bf16.gmra.mrb[0].mxu0 %v819
      %v869 = vpop.f32.mrb[0].mxu0
      %v870 = vadd.f32 %v749, %v869
      %v871 = vpop.f32.mrb[0].mxu0
      %v872 = vpop.f32.mrb[0].mxu0
      %v873 = vadd.f32 %v752, %v872
      %v874 = vpop.f32.mrb[0].mxu0
      %875 = vmatprep.mubr.bf16.mxu0 0
      %876 = vmatmul.mubr.bf16.gmra.mrb[0].mxu0 %v822
      %v877 = vpop.f32.mrb[0].mxu0
      %v878 = vadd.f32 %v757, %v877
      %v879 = vpop.f32.mrb[0].mxu0
      %v880 = vpop.f32.mrb[0].mxu0
      %v881 = vadd.f32 %v760, %v880
      %v882 = vpop.f32.mrb[0].mxu0
      %883 = vmatprep.mubr.bf16.mxu0 0
      %884 = vmatmul.mubr.bf16.gmra.mrb[0].mxu0 %v825
      %v885 = vpop.f32.mrb[0].mxu0
      %v886 = vadd.f32 %v765, %v885
      %v887 = vpop.f32.mrb[0].mxu0
      %v888 = vpop.f32.mrb[0].mxu0
      %v889 = vadd.f32 %v768, %v888
      %v890 = vpop.f32.mrb[0].mxu0
      %891 = vdwg.mxu0
      %v892 = vld [vmem:[%s400] sm:$0xf]
      %v893 = vld [vmem:[%s400 + $0x4] sm:$0x1]
      %v894 = vld [vmem:[%s400 + $0x8] sm:$0xf]
      %v895 = vld [vmem:[%s400 + $0xc] sm:$0x1]
      %v896 = vld [vmem:[%s400 + $0x10] sm:$0xf]
      %v897 = vld [vmem:[%s400 + $0x14] sm:$0x1]
      %v898 = vld [vmem:[%s400 + $0x18] sm:$0xf]
      %v899 = vld [vmem:[%s400 + $0x1c] sm:$0x1]
      %v900 = vld [vmem:[%s400 + $0x20] sm:$0xf]
      %v901 = vld [vmem:[%s400 + $0x24] sm:$0x1]
      %v902 = vld [vmem:[%s400 + $0x28] sm:$0xf]
      %v903 = vld [vmem:[%s400 + $0x2c] sm:$0x1]
      %v904 = vld [vmem:[%s400 + $0x30] sm:$0xf]
      %v905 = vld [vmem:[%s400 + $0x34] sm:$0x1]
      %v906 = vld [vmem:[%s400 + $0x38] sm:$0xf]
      %v907 = vld [vmem:[%s400 + $0x3c] sm:$0x1]
      %v908 = vunpack.c.l.bf16 %v892
      %v909 = vunpack.c.l.bf16 %v893
      %v910 = vunpack.c.l.bf16 %v894
      %v911 = vunpack.c.l.bf16 %v895
      %v912 = vunpack.c.l.bf16 %v896
      %v913 = vunpack.c.l.bf16 %v897
      %v914 = vunpack.c.l.bf16 %v898
      %v915 = vunpack.c.l.bf16 %v899
      %v916 = vunpack.c.l.bf16 %v900
      %v917 = vunpack.c.l.bf16 %v901
      %v918 = vunpack.c.l.bf16 %v902
      %v919 = vunpack.c.l.bf16 %v903
      %v920 = vunpack.c.l.bf16 %v904
      %v921 = vunpack.c.l.bf16 %v905
      %v922 = vunpack.c.l.bf16 %v906
      %v923 = vunpack.c.l.bf16 %v907
      %v924 = vmul.f32 %v908, %v422
      %v925 = vmul.f32 %v909, %v422
      %v926 = vmul.f32 %v910, %v422
      %v927 = vmul.f32 %v911, %v422
      %v928 = vmul.f32 %v912, %v422
      %v929 = vmul.f32 %v913, %v422
      %v930 = vmul.f32 %v914, %v422
      %v931 = vmul.f32 %v915, %v422
      %v932 = vmul.f32 %v916, %v422
      %v933 = vmul.f32 %v917, %v422
      %v934 = vmul.f32 %v918, %v422
      %v935 = vmul.f32 %v919, %v422
      %v936 = vmul.f32 %v920, %v422
      %v937 = vmul.f32 %v921, %v422
      %v938 = vmul.f32 %v922, %v422
      %v939 = vmul.f32 %v923, %v422
      %v940 = vadd.f32 %v924, %v437
      %v941 = vadd.f32 %v925, %v437
      %v942 = vadd.f32 %v926, %v437
      %v943 = vadd.f32 %v927, %v437
      %v944 = vadd.f32 %v928, %v437
      %v945 = vadd.f32 %v929, %v437
      %v946 = vadd.f32 %v930, %v437
      %v947 = vadd.f32 %v931, %v437
      %v948 = vadd.f32 %v932, %v437
      %v949 = vadd.f32 %v933, %v437
      %v950 = vadd.f32 %v934, %v437
      %v951 = vadd.f32 %v935, %v437
      %v952 = vadd.f32 %v936, %v437
      %v953 = vadd.f32 %v937, %v437
      %v954 = vadd.f32 %v938, %v437
      %v955 = vadd.f32 %v939, %v437
      %v956 = vmax.f32 %v940, 0.0
      %v957 = vmax.f32 %v941, 0.0
      %v958 = vmax.f32 %v942, 0.0
      %v959 = vmax.f32 %v943, 0.0
      %v960 = vmax.f32 %v944, 0.0
      %v961 = vmax.f32 %v945, 0.0
      %v962 = vmax.f32 %v946, 0.0
      %v963 = vmax.f32 %v947, 0.0
      %v964 = vmax.f32 %v948, 0.0
      %v965 = vmax.f32 %v949, 0.0
      %v966 = vmax.f32 %v950, 0.0
      %v967 = vmax.f32 %v951, 0.0
      %v968 = vmax.f32 %v952, 0.0
      %v969 = vmax.f32 %v953, 0.0
      %v970 = vmax.f32 %v954, 0.0
      %v971 = vmax.f32 %v955, 0.0
      %v972 = vadd.s32 %v463, 2
      %vm973 = vcmp.ge.s32.totalorder %v972, 1
      %vm974 = vmand %vm480, %vm973
      %vm975 = vmand %vm481, %vm973
      %vm976 = vmand %vm482, %vm973
      %vm977 = vmand %vm483, %vm973
      %vm978 = vmand %vm484, %vm973
      %vm979 = vmand %vm485, %vm973
      %vm980 = vmand %vm486, %vm973
      %vm981 = vmand %vm487, %vm973
      %vm982 = vcmp.lt.s32.totalorder %v972, 17
      %vm983 = vmand %vm974, %vm982
      %vm984 = vmand %vm975, %vm982
      %vm985 = vmand %vm976, %vm982
      %vm986 = vmand %vm977, %vm982
      %vm987 = vmand %vm978, %vm982
      %vm988 = vmand %vm979, %vm982
      %vm989 = vmand %vm980, %vm982
      %vm990 = vmand %vm981, %vm982
      %v991 = vsel %vm983, 1, 0
      %v992 = vsel %vm984, 1, 0
      %v993 = vsel %vm985, 1, 0
      %v994 = vsel %vm986, 1, 0
      %v995 = vsel %vm987, 1, 0
      %v996 = vsel %vm988, 1, 0
      %v997 = vsel %vm989, 1, 0
      %v998 = vsel %vm990, 1, 0
      %vm999 = vcmp.eq.s32.totalorder %v991, 1
      %vm1000 = vcmp.eq.s32.totalorder %v992, 1
      %vm1001 = vcmp.eq.s32.totalorder %v993, 1
      %vm1002 = vcmp.eq.s32.totalorder %v994, 1
      %vm1003 = vcmp.eq.s32.totalorder %v995, 1
      %vm1004 = vcmp.eq.s32.totalorder %v996, 1
      %vm1005 = vcmp.eq.s32.totalorder %v997, 1
      %vm1006 = vcmp.eq.s32.totalorder %v998, 1
      %vm1023 = vcmask 1046528
      %v1024 = vrot.slane %v956, 1
      %v1025 = vrot.slane %v957, 1
      %v1026 = vsel %vm1023, %v1024, %v1025
      %v1027 = vrot.slane %v958, 1
      %v1028 = vrot.slane %v959, 1
      %v1029 = vsel %vm1023, %v1027, %v1028
      %v1030 = vrot.slane %v960, 1
      %v1031 = vrot.slane %v961, 1
      %v1032 = vsel %vm1023, %v1030, %v1031
      %v1033 = vrot.slane %v962, 1
      %v1034 = vrot.slane %v963, 1
      %v1035 = vsel %vm1023, %v1033, %v1034
      %v1036 = vrot.slane %v964, 1
      %v1037 = vrot.slane %v965, 1
      %v1038 = vsel %vm1023, %v1036, %v1037
      %v1039 = vrot.slane %v966, 1
      %v1040 = vrot.slane %v967, 1
      %v1041 = vsel %vm1023, %v1039, %v1040
      %v1042 = vrot.slane %v968, 1
      %v1043 = vrot.slane %v969, 1
      %v1044 = vsel %vm1023, %v1042, %v1043
      %v1045 = vrot.slane %v970, 1
      %v1046 = vrot.slane %v971, 1
      %v1047 = vsel %vm1023, %v1045, %v1046
      %v1056 = vsel %vm999, %v1026, 0.0
      %v1057 = vsel %vm1000, %v1029, 0.0
      %v1058 = vsel %vm1001, %v1032, 0.0
      %v1059 = vsel %vm1002, %v1035, 0.0
      %v1060 = vsel %vm1003, %v1038, 0.0
      %v1061 = vsel %vm1004, %v1041, 0.0
      %v1062 = vsel %vm1005, %v1044, 0.0
      %v1063 = vsel %vm1006, %v1047, 0.0
      %v1064 = vpack.c.bf16 %v1056, %v1056
      %v1065 = vpack.c.bf16 %v1057, %v1057
      %v1066 = vpack.c.bf16 %v1058, %v1058
      %v1067 = vpack.c.bf16 %v1059, %v1059
      %v1068 = vpack.c.bf16 %v1060, %v1060
      %v1069 = vpack.c.bf16 %v1061, %v1061
      %v1070 = vpack.c.bf16 %v1062, %v1062
      %v1071 = vpack.c.bf16 %v1063, %v1063
      %s1072 = scalar_lea.vmem %s357, 64
      %v1073 = vld [vmem:[%s1072] sm:$0xf]
      %v1074 = vld [vmem:[%s1072 + $0x4] sm:$0xf]
      %v1075 = vld [vmem:[%s1072 + $0x8] sm:$0xf]
      %v1076 = vld [vmem:[%s1072 + $0xc] sm:$0xf]
      %v1077 = vld [vmem:[%s1072 + $0x10] sm:$0xf]
      %v1078 = vld [vmem:[%s1072 + $0x14] sm:$0xf]
      %v1079 = vld [vmem:[%s1072 + $0x18] sm:$0xf]
      %v1080 = vld [vmem:[%s1072 + $0x1c] sm:$0xf]
      %v1089 = vunpack.c.l.b16 %v1064
      %v1090 = vunpack.c.l.b16 %v1065
      %v1091 = vunpack.c.l.b16 %v1066
      %v1092 = vunpack.c.l.b16 %v1067
      %v1093 = vunpack.c.l.b16 %v1068
      %v1094 = vunpack.c.l.b16 %v1069
      %v1095 = vunpack.c.l.b16 %v1070
      %v1096 = vunpack.c.l.b16 %v1071
      %v1097 = vpack.c.b16 %v1090, %v1089
      %v1098 = vpack.c.b16 %v1092, %v1091
      %v1099 = vpack.c.b16 %v1094, %v1093
      %v1100 = vpack.c.b16 %v1096, %v1095
      %v1109 = vunpack.c.l.b16 %v1073
      %v1110 = vunpack.c.l.b16 %v1074
      %v1111 = vunpack.c.l.b16 %v1075
      %v1112 = vunpack.c.l.b16 %v1076
      %v1113 = vunpack.c.l.b16 %v1077
      %v1114 = vunpack.c.l.b16 %v1078
      %v1115 = vunpack.c.l.b16 %v1079
      %v1116 = vunpack.c.l.b16 %v1080
      %v1117 = vpack.c.b16 %v1110, %v1109
      %v1118 = vpack.c.b16 %v1112, %v1111
      %v1119 = vpack.c.b16 %v1114, %v1113
      %v1120 = vpack.c.b16 %v1116, %v1115
      %v1126 = vsel %vm693, %v1097, 0
      %v1129 = vsel %vm693, %v1098, 0
      %v1132 = vsel %vm693, %v1099, 0
      %v1135 = vsel %vm693, %v1100, 0
      %1137 = vmatprep.subr.bf16.mxu0 0
      %1138 = vmatpush1.bf16.msra.mxu0 %v1117
      %1139 = vmatprep.subr.bf16.mxu0 0
      %1140 = vmatpush1.bf16.msra.mxu0 %v1118
      %1141 = vmatprep.subr.bf16.mxu0 0
      %1142 = vmatpush1.bf16.msra.mxu0 %v1119
      %1143 = vmatprep.subr.bf16.mxu0 0
      %1144 = vmatpush1.bf16.msra.mxu0 %v1120
      %1145 = vmatprep.subr.bf16.mxu0 0
      %1146 = vmatpush1.bf16.msra.mxu0 0
      %1147 = vmatprep.subr.bf16.mxu0 0
      %1148 = vmatpush1.bf16.msra.mxu0 0
      %1149 = vmatprep.subr.bf16.mxu0 0
      %1150 = vmatpush1.bf16.msra.mxu0 0
      %1151 = vmatprep.subr.bf16.mxu0 0
      %1152 = vmatpush1.bf16.msra.mxu0 0
      %1153 = vmatprep.subr.bf16.mxu0 0
      %1154 = vmatpush1.bf16.msra.mxu0 0
      %1155 = vmatprep.subr.bf16.mxu0 0
      %1156 = vmatpush1.bf16.msra.mxu0 0
      %1157 = vmatprep.subr.bf16.mxu0 0
      %1158 = vmatpush1.bf16.msra.mxu0 0
      %1159 = vmatprep.subr.bf16.mxu0 0
      %1160 = vmatpush1.bf16.msra.mxu0 0
      %1161 = vmatprep.subr.bf16.mxu0 0
      %1162 = vmatpush1.bf16.msra.mxu0 0
      %1163 = vmatprep.subr.bf16.mxu0 0
      %1164 = vmatpush1.bf16.msra.mxu0 0
      %1165 = vmatprep.subr.bf16.mxu0 0
      %1166 = vmatpush1.bf16.msra.mxu0 0
      %1167 = vmatprep.subr.bf16.mxu0 0
      %1168 = vmatpush1.bf16.msra.mxu0 0
      %1169 = vmatprep.mubr.bf16.mxu0 0
      %1170 = vmatmul.mubr.bf16.gmra.mrb[0].mxu0 %v1126
      %v1171 = vpop.f32.mrb[0].mxu0
      %v1172 = vadd.f32 0.0, %v1171
      %v1173 = vpop.f32.mrb[0].mxu0
      %v1174 = vpop.f32.mrb[0].mxu0
      %v1175 = vadd.f32 0.0, %v1174
      %v1176 = vpop.f32.mrb[0].mxu0
      %1177 = vmatprep.mubr.bf16.mxu0 0
      %1178 = vmatmul.mubr.bf16.gmra.mrb[0].mxu0 %v1129
      %v1179 = vpop.f32.mrb[0].mxu0
      %v1180 = vadd.f32 0.0, %v1179
      %v1181 = vpop.f32.mrb[0].mxu0
      %v1182 = vpop.f32.mrb[0].mxu0
      %v1183 = vadd.f32 0.0, %v1182
      %v1184 = vpop.f32.mrb[0].mxu0
      %1185 = vmatprep.mubr.bf16.mxu0 0
      %1186 = vmatmul.mubr.bf16.gmra.mrb[0].mxu0 %v1132
      %v1187 = vpop.f32.mrb[0].mxu0
      %v1188 = vadd.f32 0.0, %v1187
      %v1189 = vpop.f32.mrb[0].mxu0
      %v1190 = vpop.f32.mrb[0].mxu0
      %v1191 = vadd.f32 0.0, %v1190
      %v1192 = vpop.f32.mrb[0].mxu0
      %1193 = vmatprep.mubr.bf16.mxu0 0
      %1194 = vmatmul.mubr.bf16.gmra.mrb[0].mxu0 %v1135
      %v1195 = vpop.f32.mrb[0].mxu0
      %v1196 = vadd.f32 0.0, %v1195
      %v1197 = vpop.f32.mrb[0].mxu0
      %v1198 = vpop.f32.mrb[0].mxu0
      %v1199 = vadd.f32 0.0, %v1198
      %v1200 = vpop.f32.mrb[0].mxu0
      %1201 = vdwg.mxu0
      %v1202 = vadd.f32 %v862, %v1172
      %v1203 = vadd.f32 %v865, %v1175
      %v1204 = vadd.f32 %v870, %v1180
      %v1205 = vadd.f32 %v873, %v1183
      %v1206 = vadd.f32 %v878, %v1188
      %v1207 = vadd.f32 %v881, %v1191
      %v1208 = vadd.f32 %v886, %v1196
      %v1209 = vadd.f32 %v889, %v1199
      %s1210 = sadd.s32 %s398, 36
      %s1211 = smul.addr %s1210, 4
      %s1212 = scalar_lea.vmem %s352, %s1211
      %v1213 = vld [vmem:[%s1212] sm:$0xf]
      %v1214 = vld [vmem:[%s1212 + $0x8] sm:$0xf]
      %v1215 = vld [vmem:[%s1212 + $0x10] sm:$0xf]
      %v1216 = vld [vmem:[%s1212 + $0x18] sm:$0xf]
      %v1217 = vld [vmem:[%s1212 + $0x20] sm:$0xf]
      %v1218 = vld [vmem:[%s1212 + $0x28] sm:$0xf]
      %v1219 = vld [vmem:[%s1212 + $0x30] sm:$0xf]
      %v1220 = vld [vmem:[%s1212 + $0x38] sm:$0xf]
      %v1221 = vunpack.c.l.bf16 %v1213
      %v1222 = vunpack.c.l.bf16 %v1214
      %v1223 = vunpack.c.l.bf16 %v1215
      %v1224 = vunpack.c.l.bf16 %v1216
      %v1225 = vunpack.c.l.bf16 %v1217
      %v1226 = vunpack.c.l.bf16 %v1218
      %v1227 = vunpack.c.l.bf16 %v1219
      %v1228 = vunpack.c.l.bf16 %v1220
      %v1229 = vmul.f32 %v1221, %v422
      %v1230 = vmul.f32 %v1222, %v422
      %v1231 = vmul.f32 %v1223, %v422
      %v1232 = vmul.f32 %v1224, %v422
      %v1233 = vmul.f32 %v1225, %v422
      %v1234 = vmul.f32 %v1226, %v422
      %v1235 = vmul.f32 %v1227, %v422
      %v1236 = vmul.f32 %v1228, %v422
      %v1237 = vadd.f32 %v1229, %v437
      %v1238 = vadd.f32 %v1230, %v437
      %v1239 = vadd.f32 %v1231, %v437
      %v1240 = vadd.f32 %v1232, %v437
      %v1241 = vadd.f32 %v1233, %v437
      %v1242 = vadd.f32 %v1234, %v437
      %v1243 = vadd.f32 %v1235, %v437
      %v1244 = vadd.f32 %v1236, %v437
      %v1245 = vmax.f32 %v1237, 0.0
      %v1246 = vmax.f32 %v1238, 0.0
      %v1247 = vmax.f32 %v1239, 0.0
      %v1248 = vmax.f32 %v1240, 0.0
      %v1249 = vmax.f32 %v1241, 0.0
      %v1250 = vmax.f32 %v1242, 0.0
      %v1251 = vmax.f32 %v1243, 0.0
      %v1252 = vmax.f32 %v1244, 0.0
      %v1253 = vadd.s32 %v455, 1
      %v1254 = vadd.s32 %v456, 1
      %v1255 = vadd.s32 %v457, 1
      %v1256 = vadd.s32 %v458, 1
      %v1257 = vadd.s32 %v459, 1
      %v1258 = vadd.s32 %v460, 1
      %v1259 = vadd.s32 %v461, 1
      %v1260 = vadd.s32 %v462, 1
      %vm1261 = vcmp.ge.s32.totalorder %v1253, 1
      %vm1262 = vcmp.ge.s32.totalorder %v1254, 1
      %vm1263 = vcmp.ge.s32.totalorder %v1255, 1
      %vm1264 = vcmp.ge.s32.totalorder %v1256, 1
      %vm1265 = vcmp.ge.s32.totalorder %v1257, 1
      %vm1266 = vcmp.ge.s32.totalorder %v1258, 1
      %vm1267 = vcmp.ge.s32.totalorder %v1259, 1
      %vm1268 = vcmp.ge.s32.totalorder %v1260, 1
      %vm1269 = vcmp.lt.s32.totalorder %v1253, 17
      %vm1270 = vcmp.lt.s32.totalorder %v1254, 17
      %vm1271 = vcmp.lt.s32.totalorder %v1255, 17
      %vm1272 = vcmp.lt.s32.totalorder %v1256, 17
      %vm1273 = vcmp.lt.s32.totalorder %v1257, 17
      %vm1274 = vcmp.lt.s32.totalorder %v1258, 17
      %vm1275 = vcmp.lt.s32.totalorder %v1259, 17
      %vm1276 = vcmp.lt.s32.totalorder %v1260, 17
      %vm1277 = vmand %vm1261, %vm1269
      %vm1278 = vmand %vm1262, %vm1270
      %vm1279 = vmand %vm1263, %vm1271
      %vm1280 = vmand %vm1264, %vm1272
      %vm1281 = vmand %vm1265, %vm1273
      %vm1282 = vmand %vm1266, %vm1274
      %vm1283 = vmand %vm1267, %vm1275
      %vm1284 = vmand %vm1268, %vm1276
      %vm1285 = vmand %vm1277, %vm488
      %vm1286 = vmand %vm1278, %vm488
      %vm1287 = vmand %vm1279, %vm488
      %vm1288 = vmand %vm1280, %vm488
      %vm1289 = vmand %vm1281, %vm488
      %vm1290 = vmand %vm1282, %vm488
      %vm1291 = vmand %vm1283, %vm488
      %vm1292 = vmand %vm1284, %vm488
      %vm1293 = vmand %vm1285, %vm497
      %vm1294 = vmand %vm1286, %vm497
      %vm1295 = vmand %vm1287, %vm497
      %vm1296 = vmand %vm1288, %vm497
      %vm1297 = vmand %vm1289, %vm497
      %vm1298 = vmand %vm1290, %vm497
      %vm1299 = vmand %vm1291, %vm497
      %vm1300 = vmand %vm1292, %vm497
      %v1301 = vsel %vm1293, 1, 0
      %v1302 = vsel %vm1294, 1, 0
      %v1303 = vsel %vm1295, 1, 0
      %v1304 = vsel %vm1296, 1, 0
      %v1305 = vsel %vm1297, 1, 0
      %v1306 = vsel %vm1298, 1, 0
      %v1307 = vsel %vm1299, 1, 0
      %v1308 = vsel %vm1300, 1, 0
      %vm1309 = vcmp.eq.s32.totalorder %v1301, 1
      %vm1310 = vcmp.eq.s32.totalorder %v1302, 1
      %vm1311 = vcmp.eq.s32.totalorder %v1303, 1
      %vm1312 = vcmp.eq.s32.totalorder %v1304, 1
      %vm1313 = vcmp.eq.s32.totalorder %v1305, 1
      %vm1314 = vcmp.eq.s32.totalorder %v1306, 1
      %vm1315 = vcmp.eq.s32.totalorder %v1307, 1
      %vm1316 = vcmp.eq.s32.totalorder %v1308, 1
      %v1317 = vsel %vm1309, %v1245, 0.0
      %v1318 = vsel %vm1310, %v1246, 0.0
      %v1319 = vsel %vm1311, %v1247, 0.0
      %v1320 = vsel %vm1312, %v1248, 0.0
      %v1321 = vsel %vm1313, %v1249, 0.0
      %v1322 = vsel %vm1314, %v1250, 0.0
      %v1323 = vsel %vm1315, %v1251, 0.0
      %v1324 = vsel %vm1316, %v1252, 0.0
      %v1325 = vpack.c.bf16 %v1317, %v1317
      %v1326 = vpack.c.bf16 %v1318, %v1318
      %v1327 = vpack.c.bf16 %v1319, %v1319
      %v1328 = vpack.c.bf16 %v1320, %v1320
      %v1329 = vpack.c.bf16 %v1321, %v1321
      %v1330 = vpack.c.bf16 %v1322, %v1322
      %v1331 = vpack.c.bf16 %v1323, %v1323
      %v1332 = vpack.c.bf16 %v1324, %v1324
      %s1333 = scalar_lea.vmem %s357, 96
      %v1334 = vld [vmem:[%s1333] sm:$0xf]
      %v1335 = vld [vmem:[%s1333 + $0x4] sm:$0xf]
      %v1336 = vld [vmem:[%s1333 + $0x8] sm:$0xf]
      %v1337 = vld [vmem:[%s1333 + $0xc] sm:$0xf]
      %v1338 = vld [vmem:[%s1333 + $0x10] sm:$0xf]
      %v1339 = vld [vmem:[%s1333 + $0x14] sm:$0xf]
      %v1340 = vld [vmem:[%s1333 + $0x18] sm:$0xf]
      %v1341 = vld [vmem:[%s1333 + $0x1c] sm:$0xf]
      %v1350 = vunpack.c.l.b16 %v1325
      %v1351 = vunpack.c.l.b16 %v1326
      %v1352 = vunpack.c.l.b16 %v1327
      %v1353 = vunpack.c.l.b16 %v1328
      %v1354 = vunpack.c.l.b16 %v1329
      %v1355 = vunpack.c.l.b16 %v1330
      %v1356 = vunpack.c.l.b16 %v1331
      %v1357 = vunpack.c.l.b16 %v1332
      %v1358 = vpack.c.b16 %v1351, %v1350
      %v1359 = vpack.c.b16 %v1353, %v1352
      %v1360 = vpack.c.b16 %v1355, %v1354
      %v1361 = vpack.c.b16 %v1357, %v1356
      %v1370 = vunpack.c.l.b16 %v1334
      %v1371 = vunpack.c.l.b16 %v1335
      %v1372 = vunpack.c.l.b16 %v1336
      %v1373 = vunpack.c.l.b16 %v1337
      %v1374 = vunpack.c.l.b16 %v1338
      %v1375 = vunpack.c.l.b16 %v1339
      %v1376 = vunpack.c.l.b16 %v1340
      %v1377 = vunpack.c.l.b16 %v1341
      %v1378 = vpack.c.b16 %v1371, %v1370
      %v1379 = vpack.c.b16 %v1373, %v1372
      %v1380 = vpack.c.b16 %v1375, %v1374
      %v1381 = vpack.c.b16 %v1377, %v1376
      %v1387 = vsel %vm693, %v1358, 0
      %v1390 = vsel %vm693, %v1359, 0
      %v1393 = vsel %vm693, %v1360, 0
      %v1396 = vsel %vm693, %v1361, 0
      %1398 = vmatprep.subr.bf16.mxu0 0
      %1399 = vmatpush1.bf16.msra.mxu0 %v1378
      %1400 = vmatprep.subr.bf16.mxu0 0
      %1401 = vmatpush1.bf16.msra.mxu0 %v1379
      %1402 = vmatprep.subr.bf16.mxu0 0
      %1403 = vmatpush1.bf16.msra.mxu0 %v1380
      %1404 = vmatprep.subr.bf16.mxu0 0
      %1405 = vmatpush1.bf16.msra.mxu0 %v1381
      %1406 = vmatprep.subr.bf16.mxu0 0
      %1407 = vmatpush1.bf16.msra.mxu0 0
      %1408 = vmatprep.subr.bf16.mxu0 0
      %1409 = vmatpush1.bf16.msra.mxu0 0
      %1410 = vmatprep.subr.bf16.mxu0 0
      %1411 = vmatpush1.bf16.msra.mxu0 0
      %1412 = vmatprep.subr.bf16.mxu0 0
      %1413 = vmatpush1.bf16.msra.mxu0 0
      %1414 = vmatprep.subr.bf16.mxu0 0
      %1415 = vmatpush1.bf16.msra.mxu0 0
      %1416 = vmatprep.subr.bf16.mxu0 0
      %1417 = vmatpush1.bf16.msra.mxu0 0
      %1418 = vmatprep.subr.bf16.mxu0 0
      %1419 = vmatpush1.bf16.msra.mxu0 0
      %1420 = vmatprep.subr.bf16.mxu0 0
      %1421 = vmatpush1.bf16.msra.mxu0 0
      %1422 = vmatprep.subr.bf16.mxu0 0
      %1423 = vmatpush1.bf16.msra.mxu0 0
      %1424 = vmatprep.subr.bf16.mxu0 0
      %1425 = vmatpush1.bf16.msra.mxu0 0
      %1426 = vmatprep.subr.bf16.mxu0 0
      %1427 = vmatpush1.bf16.msra.mxu0 0
      %1428 = vmatprep.subr.bf16.mxu0 0
      %1429 = vmatpush1.bf16.msra.mxu0 0
      %1430 = vmatprep.mubr.bf16.mxu0 0
      %1431 = vmatmul.mubr.bf16.gmra.mrb[0].mxu0 %v1387
      %v1432 = vpop.f32.mrb[0].mxu0
      %v1433 = vadd.f32 0.0, %v1432
      %v1434 = vpop.f32.mrb[0].mxu0
      %v1435 = vpop.f32.mrb[0].mxu0
      %v1436 = vadd.f32 0.0, %v1435
      %v1437 = vpop.f32.mrb[0].mxu0
      %1438 = vmatprep.mubr.bf16.mxu0 0
      %1439 = vmatmul.mubr.bf16.gmra.mrb[0].mxu0 %v1390
      %v1440 = vpop.f32.mrb[0].mxu0
      %v1441 = vadd.f32 0.0, %v1440
      %v1442 = vpop.f32.mrb[0].mxu0
      %v1443 = vpop.f32.mrb[0].mxu0
      %v1444 = vadd.f32 0.0, %v1443
      %v1445 = vpop.f32.mrb[0].mxu0
      %1446 = vmatprep.mubr.bf16.mxu0 0
      %1447 = vmatmul.mubr.bf16.gmra.mrb[0].mxu0 %v1393
      %v1448 = vpop.f32.mrb[0].mxu0
      %v1449 = vadd.f32 0.0, %v1448
      %v1450 = vpop.f32.mrb[0].mxu0
      %v1451 = vpop.f32.mrb[0].mxu0
      %v1452 = vadd.f32 0.0, %v1451
      %v1453 = vpop.f32.mrb[0].mxu0
      %1454 = vmatprep.mubr.bf16.mxu0 0
      %1455 = vmatmul.mubr.bf16.gmra.mrb[0].mxu0 %v1396
      %v1456 = vpop.f32.mrb[0].mxu0
      %v1457 = vadd.f32 0.0, %v1456
      %v1458 = vpop.f32.mrb[0].mxu0
      %v1459 = vpop.f32.mrb[0].mxu0
      %v1460 = vadd.f32 0.0, %v1459
      %v1461 = vpop.f32.mrb[0].mxu0
      %1462 = vdwg.mxu0
      %v1463 = vadd.f32 %v1202, %v1433
      %v1464 = vadd.f32 %v1203, %v1436
      %v1465 = vadd.f32 %v1204, %v1441
      %v1466 = vadd.f32 %v1205, %v1444
      %v1467 = vadd.f32 %v1206, %v1449
      %v1468 = vadd.f32 %v1207, %v1452
      %v1469 = vadd.f32 %v1208, %v1457
      %v1470 = vadd.f32 %v1209, %v1460
      %s1471 = sadd.s32 %s398, 54
      %s1472 = smul.addr %s1471, 4
      %s1473 = scalar_lea.vmem %s352, %s1472
      %v1474 = vld [vmem:[%s1473] sm:$0xf]
      %v1475 = vld [vmem:[%s1473 + $0x8] sm:$0xf]
      %v1476 = vld [vmem:[%s1473 + $0x10] sm:$0xf]
      %v1477 = vld [vmem:[%s1473 + $0x18] sm:$0xf]
      %v1478 = vld [vmem:[%s1473 + $0x20] sm:$0xf]
      %v1479 = vld [vmem:[%s1473 + $0x28] sm:$0xf]
      %v1480 = vld [vmem:[%s1473 + $0x30] sm:$0xf]
      %v1481 = vld [vmem:[%s1473 + $0x38] sm:$0xf]
      %v1482 = vunpack.c.l.bf16 %v1474
      %v1483 = vunpack.c.l.bf16 %v1475
      %v1484 = vunpack.c.l.bf16 %v1476
      %v1485 = vunpack.c.l.bf16 %v1477
      %v1486 = vunpack.c.l.bf16 %v1478
      %v1487 = vunpack.c.l.bf16 %v1479
      %v1488 = vunpack.c.l.bf16 %v1480
      %v1489 = vunpack.c.l.bf16 %v1481
      %v1490 = vmul.f32 %v1482, %v422
      %v1491 = vmul.f32 %v1483, %v422
      %v1492 = vmul.f32 %v1484, %v422
      %v1493 = vmul.f32 %v1485, %v422
      %v1494 = vmul.f32 %v1486, %v422
      %v1495 = vmul.f32 %v1487, %v422
      %v1496 = vmul.f32 %v1488, %v422
      %v1497 = vmul.f32 %v1489, %v422
      %v1498 = vadd.f32 %v1490, %v437
      %v1499 = vadd.f32 %v1491, %v437
      %v1500 = vadd.f32 %v1492, %v437
      %v1501 = vadd.f32 %v1493, %v437
      %v1502 = vadd.f32 %v1494, %v437
      %v1503 = vadd.f32 %v1495, %v437
      %v1504 = vadd.f32 %v1496, %v437
      %v1505 = vadd.f32 %v1497, %v437
      %v1506 = vmax.f32 %v1498, 0.0
      %v1507 = vmax.f32 %v1499, 0.0
      %v1508 = vmax.f32 %v1500, 0.0
      %v1509 = vmax.f32 %v1501, 0.0
      %v1510 = vmax.f32 %v1502, 0.0
      %v1511 = vmax.f32 %v1503, 0.0
      %v1512 = vmax.f32 %v1504, 0.0
      %v1513 = vmax.f32 %v1505, 0.0
      %vm1514 = vmand %vm1277, %vm590
      %vm1515 = vmand %vm1278, %vm590
      %vm1516 = vmand %vm1279, %vm590
      %vm1517 = vmand %vm1280, %vm590
      %vm1518 = vmand %vm1281, %vm590
      %vm1519 = vmand %vm1282, %vm590
      %vm1520 = vmand %vm1283, %vm590
      %vm1521 = vmand %vm1284, %vm590
      %vm1522 = vmand %vm1514, %vm599
      %vm1523 = vmand %vm1515, %vm599
      %vm1524 = vmand %vm1516, %vm599
      %vm1525 = vmand %vm1517, %vm599
      %vm1526 = vmand %vm1518, %vm599
      %vm1527 = vmand %vm1519, %vm599
      %vm1528 = vmand %vm1520, %vm599
      %vm1529 = vmand %vm1521, %vm599
      %v1530 = vsel %vm1522, 1, 0
      %v1531 = vsel %vm1523, 1, 0
      %v1532 = vsel %vm1524, 1, 0
      %v1533 = vsel %vm1525, 1, 0
      %v1534 = vsel %vm1526, 1, 0
      %v1535 = vsel %vm1527, 1, 0
      %v1536 = vsel %vm1528, 1, 0
      %v1537 = vsel %vm1529, 1, 0
      %vm1538 = vcmp.eq.s32.totalorder %v1530, 1
      %vm1539 = vcmp.eq.s32.totalorder %v1531, 1
      %vm1540 = vcmp.eq.s32.totalorder %v1532, 1
      %vm1541 = vcmp.eq.s32.totalorder %v1533, 1
      %vm1542 = vcmp.eq.s32.totalorder %v1534, 1
      %vm1543 = vcmp.eq.s32.totalorder %v1535, 1
      %vm1544 = vcmp.eq.s32.totalorder %v1536, 1
      %vm1545 = vcmp.eq.s32.totalorder %v1537, 1
      %v1546 = vsel %vm1538, %v1506, 0.0
      %v1547 = vsel %vm1539, %v1507, 0.0
      %v1548 = vsel %vm1540, %v1508, 0.0
      %v1549 = vsel %vm1541, %v1509, 0.0
      %v1550 = vsel %vm1542, %v1510, 0.0
      %v1551 = vsel %vm1543, %v1511, 0.0
      %v1552 = vsel %vm1544, %v1512, 0.0
      %v1553 = vsel %vm1545, %v1513, 0.0
      %v1554 = vpack.c.bf16 %v1546, %v1546
      %v1555 = vpack.c.bf16 %v1547, %v1547
      %v1556 = vpack.c.bf16 %v1548, %v1548
      %v1557 = vpack.c.bf16 %v1549, %v1549
      %v1558 = vpack.c.bf16 %v1550, %v1550
      %v1559 = vpack.c.bf16 %v1551, %v1551
      %v1560 = vpack.c.bf16 %v1552, %v1552
      %v1561 = vpack.c.bf16 %v1553, %v1553
      %s1562 = scalar_lea.vmem %s357, 128
      %v1563 = vld [vmem:[%s1562] sm:$0xf]
      %v1564 = vld [vmem:[%s1562 + $0x4] sm:$0xf]
      %v1565 = vld [vmem:[%s1562 + $0x8] sm:$0xf]
      %v1566 = vld [vmem:[%s1562 + $0xc] sm:$0xf]
      %v1567 = vld [vmem:[%s1562 + $0x10] sm:$0xf]
      %v1568 = vld [vmem:[%s1562 + $0x14] sm:$0xf]
      %v1569 = vld [vmem:[%s1562 + $0x18] sm:$0xf]
      %v1570 = vld [vmem:[%s1562 + $0x1c] sm:$0xf]
      %v1579 = vunpack.c.l.b16 %v1554
      %v1580 = vunpack.c.l.b16 %v1555
      %v1581 = vunpack.c.l.b16 %v1556
      %v1582 = vunpack.c.l.b16 %v1557
      %v1583 = vunpack.c.l.b16 %v1558
      %v1584 = vunpack.c.l.b16 %v1559
      %v1585 = vunpack.c.l.b16 %v1560
      %v1586 = vunpack.c.l.b16 %v1561
      %v1587 = vpack.c.b16 %v1580, %v1579
      %v1588 = vpack.c.b16 %v1582, %v1581
      %v1589 = vpack.c.b16 %v1584, %v1583
      %v1590 = vpack.c.b16 %v1586, %v1585
      %v1599 = vunpack.c.l.b16 %v1563
      %v1600 = vunpack.c.l.b16 %v1564
      %v1601 = vunpack.c.l.b16 %v1565
      %v1602 = vunpack.c.l.b16 %v1566
      %v1603 = vunpack.c.l.b16 %v1567
      %v1604 = vunpack.c.l.b16 %v1568
      %v1605 = vunpack.c.l.b16 %v1569
      %v1606 = vunpack.c.l.b16 %v1570
      %v1607 = vpack.c.b16 %v1600, %v1599
      %v1608 = vpack.c.b16 %v1602, %v1601
      %v1609 = vpack.c.b16 %v1604, %v1603
      %v1610 = vpack.c.b16 %v1606, %v1605
      %v1616 = vsel %vm693, %v1587, 0
      %v1619 = vsel %vm693, %v1588, 0
      %v1622 = vsel %vm693, %v1589, 0
      %v1625 = vsel %vm693, %v1590, 0
      %1627 = vmatprep.subr.bf16.mxu0 0
      %1628 = vmatpush1.bf16.msra.mxu0 %v1607
      %1629 = vmatprep.subr.bf16.mxu0 0
      %1630 = vmatpush1.bf16.msra.mxu0 %v1608
      %1631 = vmatprep.subr.bf16.mxu0 0
      %1632 = vmatpush1.bf16.msra.mxu0 %v1609
      %1633 = vmatprep.subr.bf16.mxu0 0
      %1634 = vmatpush1.bf16.msra.mxu0 %v1610
      %1635 = vmatprep.subr.bf16.mxu0 0
      %1636 = vmatpush1.bf16.msra.mxu0 0
      %1637 = vmatprep.subr.bf16.mxu0 0
      %1638 = vmatpush1.bf16.msra.mxu0 0
      %1639 = vmatprep.subr.bf16.mxu0 0
      %1640 = vmatpush1.bf16.msra.mxu0 0
      %1641 = vmatprep.subr.bf16.mxu0 0
      %1642 = vmatpush1.bf16.msra.mxu0 0
      %1643 = vmatprep.subr.bf16.mxu0 0
      %1644 = vmatpush1.bf16.msra.mxu0 0
      %1645 = vmatprep.subr.bf16.mxu0 0
      %1646 = vmatpush1.bf16.msra.mxu0 0
      %1647 = vmatprep.subr.bf16.mxu0 0
      %1648 = vmatpush1.bf16.msra.mxu0 0
      %1649 = vmatprep.subr.bf16.mxu0 0
      %1650 = vmatpush1.bf16.msra.mxu0 0
      %1651 = vmatprep.subr.bf16.mxu0 0
      %1652 = vmatpush1.bf16.msra.mxu0 0
      %1653 = vmatprep.subr.bf16.mxu0 0
      %1654 = vmatpush1.bf16.msra.mxu0 0
      %1655 = vmatprep.subr.bf16.mxu0 0
      %1656 = vmatpush1.bf16.msra.mxu0 0
      %1657 = vmatprep.subr.bf16.mxu0 0
      %1658 = vmatpush1.bf16.msra.mxu0 0
      %1659 = vmatprep.mubr.bf16.mxu0 0
      %1660 = vmatmul.mubr.bf16.gmra.mrb[0].mxu0 %v1616
      %v1661 = vpop.f32.mrb[0].mxu0
      %v1662 = vadd.f32 0.0, %v1661
      %v1663 = vpop.f32.mrb[0].mxu0
      %v1664 = vpop.f32.mrb[0].mxu0
      %v1665 = vadd.f32 0.0, %v1664
      %v1666 = vpop.f32.mrb[0].mxu0
      %1667 = vmatprep.mubr.bf16.mxu0 0
      %1668 = vmatmul.mubr.bf16.gmra.mrb[0].mxu0 %v1619
      %v1669 = vpop.f32.mrb[0].mxu0
      %v1670 = vadd.f32 0.0, %v1669
      %v1671 = vpop.f32.mrb[0].mxu0
      %v1672 = vpop.f32.mrb[0].mxu0
      %v1673 = vadd.f32 0.0, %v1672
      %v1674 = vpop.f32.mrb[0].mxu0
      %1675 = vmatprep.mubr.bf16.mxu0 0
      %1676 = vmatmul.mubr.bf16.gmra.mrb[0].mxu0 %v1622
      %v1677 = vpop.f32.mrb[0].mxu0
      %v1678 = vadd.f32 0.0, %v1677
      %v1679 = vpop.f32.mrb[0].mxu0
      %v1680 = vpop.f32.mrb[0].mxu0
      %v1681 = vadd.f32 0.0, %v1680
      %v1682 = vpop.f32.mrb[0].mxu0
      %1683 = vmatprep.mubr.bf16.mxu0 0
      %1684 = vmatmul.mubr.bf16.gmra.mrb[0].mxu0 %v1625
      %v1685 = vpop.f32.mrb[0].mxu0
      %v1686 = vadd.f32 0.0, %v1685
      %v1687 = vpop.f32.mrb[0].mxu0
      %v1688 = vpop.f32.mrb[0].mxu0
      %v1689 = vadd.f32 0.0, %v1688
      %v1690 = vpop.f32.mrb[0].mxu0
      %1691 = vdwg.mxu0
      %v1692 = vadd.f32 %v1463, %v1662
      %v1693 = vadd.f32 %v1464, %v1665
      %v1694 = vadd.f32 %v1465, %v1670
      %v1695 = vadd.f32 %v1466, %v1673
      %v1696 = vadd.f32 %v1467, %v1678
      %v1697 = vadd.f32 %v1468, %v1681
      %v1698 = vadd.f32 %v1469, %v1686
      %v1699 = vadd.f32 %v1470, %v1689
      %v1700 = vld [vmem:[%s1212] sm:$0xf]
      %v1701 = vld [vmem:[%s1212 + $0x4] sm:$0x1]
      %v1702 = vld [vmem:[%s1212 + $0x8] sm:$0xf]
      %v1703 = vld [vmem:[%s1212 + $0xc] sm:$0x1]
      %v1704 = vld [vmem:[%s1212 + $0x10] sm:$0xf]
      %v1705 = vld [vmem:[%s1212 + $0x14] sm:$0x1]
      %v1706 = vld [vmem:[%s1212 + $0x18] sm:$0xf]
      %v1707 = vld [vmem:[%s1212 + $0x1c] sm:$0x1]
      %v1708 = vld [vmem:[%s1212 + $0x20] sm:$0xf]
      %v1709 = vld [vmem:[%s1212 + $0x24] sm:$0x1]
      %v1710 = vld [vmem:[%s1212 + $0x28] sm:$0xf]
      %v1711 = vld [vmem:[%s1212 + $0x2c] sm:$0x1]
      %v1712 = vld [vmem:[%s1212 + $0x30] sm:$0xf]
      %v1713 = vld [vmem:[%s1212 + $0x34] sm:$0x1]
      %v1714 = vld [vmem:[%s1212 + $0x38] sm:$0xf]
      %v1715 = vld [vmem:[%s1212 + $0x3c] sm:$0x1]
      %v1716 = vunpack.c.l.bf16 %v1700
      %v1717 = vunpack.c.l.bf16 %v1701
      %v1718 = vunpack.c.l.bf16 %v1702
      %v1719 = vunpack.c.l.bf16 %v1703
      %v1720 = vunpack.c.l.bf16 %v1704
      %v1721 = vunpack.c.l.bf16 %v1705
      %v1722 = vunpack.c.l.bf16 %v1706
      %v1723 = vunpack.c.l.bf16 %v1707
      %v1724 = vunpack.c.l.bf16 %v1708
      %v1725 = vunpack.c.l.bf16 %v1709
      %v1726 = vunpack.c.l.bf16 %v1710
      %v1727 = vunpack.c.l.bf16 %v1711
      %v1728 = vunpack.c.l.bf16 %v1712
      %v1729 = vunpack.c.l.bf16 %v1713
      %v1730 = vunpack.c.l.bf16 %v1714
      %v1731 = vunpack.c.l.bf16 %v1715
      %v1732 = vmul.f32 %v1716, %v422
      %v1733 = vmul.f32 %v1717, %v422
      %v1734 = vmul.f32 %v1718, %v422
      %v1735 = vmul.f32 %v1719, %v422
      %v1736 = vmul.f32 %v1720, %v422
      %v1737 = vmul.f32 %v1721, %v422
      %v1738 = vmul.f32 %v1722, %v422
      %v1739 = vmul.f32 %v1723, %v422
      %v1740 = vmul.f32 %v1724, %v422
      %v1741 = vmul.f32 %v1725, %v422
      %v1742 = vmul.f32 %v1726, %v422
      %v1743 = vmul.f32 %v1727, %v422
      %v1744 = vmul.f32 %v1728, %v422
      %v1745 = vmul.f32 %v1729, %v422
      %v1746 = vmul.f32 %v1730, %v422
      %v1747 = vmul.f32 %v1731, %v422
      %v1748 = vadd.f32 %v1732, %v437
      %v1749 = vadd.f32 %v1733, %v437
      %v1750 = vadd.f32 %v1734, %v437
      %v1751 = vadd.f32 %v1735, %v437
      %v1752 = vadd.f32 %v1736, %v437
      %v1753 = vadd.f32 %v1737, %v437
      %v1754 = vadd.f32 %v1738, %v437
      %v1755 = vadd.f32 %v1739, %v437
      %v1756 = vadd.f32 %v1740, %v437
      %v1757 = vadd.f32 %v1741, %v437
      %v1758 = vadd.f32 %v1742, %v437
      %v1759 = vadd.f32 %v1743, %v437
      %v1760 = vadd.f32 %v1744, %v437
      %v1761 = vadd.f32 %v1745, %v437
      %v1762 = vadd.f32 %v1746, %v437
      %v1763 = vadd.f32 %v1747, %v437
      %v1764 = vmax.f32 %v1748, 0.0
      %v1765 = vmax.f32 %v1749, 0.0
      %v1766 = vmax.f32 %v1750, 0.0
      %v1767 = vmax.f32 %v1751, 0.0
      %v1768 = vmax.f32 %v1752, 0.0
      %v1769 = vmax.f32 %v1753, 0.0
      %v1770 = vmax.f32 %v1754, 0.0
      %v1771 = vmax.f32 %v1755, 0.0
      %v1772 = vmax.f32 %v1756, 0.0
      %v1773 = vmax.f32 %v1757, 0.0
      %v1774 = vmax.f32 %v1758, 0.0
      %v1775 = vmax.f32 %v1759, 0.0
      %v1776 = vmax.f32 %v1760, 0.0
      %v1777 = vmax.f32 %v1761, 0.0
      %v1778 = vmax.f32 %v1762, 0.0
      %v1779 = vmax.f32 %v1763, 0.0
      %vm1780 = vmand %vm1277, %vm973
      %vm1781 = vmand %vm1278, %vm973
      %vm1782 = vmand %vm1279, %vm973
      %vm1783 = vmand %vm1280, %vm973
      %vm1784 = vmand %vm1281, %vm973
      %vm1785 = vmand %vm1282, %vm973
      %vm1786 = vmand %vm1283, %vm973
      %vm1787 = vmand %vm1284, %vm973
      %vm1788 = vmand %vm1780, %vm982
      %vm1789 = vmand %vm1781, %vm982
      %vm1790 = vmand %vm1782, %vm982
      %vm1791 = vmand %vm1783, %vm982
      %vm1792 = vmand %vm1784, %vm982
      %vm1793 = vmand %vm1785, %vm982
      %vm1794 = vmand %vm1786, %vm982
      %vm1795 = vmand %vm1787, %vm982
      %v1796 = vsel %vm1788, 1, 0
      %v1797 = vsel %vm1789, 1, 0
      %v1798 = vsel %vm1790, 1, 0
      %v1799 = vsel %vm1791, 1, 0
      %v1800 = vsel %vm1792, 1, 0
      %v1801 = vsel %vm1793, 1, 0
      %v1802 = vsel %vm1794, 1, 0
      %v1803 = vsel %vm1795, 1, 0
      %vm1804 = vcmp.eq.s32.totalorder %v1796, 1
      %vm1805 = vcmp.eq.s32.totalorder %v1797, 1
      %vm1806 = vcmp.eq.s32.totalorder %v1798, 1
      %vm1807 = vcmp.eq.s32.totalorder %v1799, 1
      %vm1808 = vcmp.eq.s32.totalorder %v1800, 1
      %vm1809 = vcmp.eq.s32.totalorder %v1801, 1
      %vm1810 = vcmp.eq.s32.totalorder %v1802, 1
      %vm1811 = vcmp.eq.s32.totalorder %v1803, 1
      %v1828 = vrot.slane %v1764, 1
      %v1829 = vrot.slane %v1765, 1
      %v1830 = vsel %vm1023, %v1828, %v1829
      %v1831 = vrot.slane %v1766, 1
      %v1832 = vrot.slane %v1767, 1
      %v1833 = vsel %vm1023, %v1831, %v1832
      %v1834 = vrot.slane %v1768, 1
      %v1835 = vrot.slane %v1769, 1
      %v1836 = vsel %vm1023, %v1834, %v1835
      %v1837 = vrot.slane %v1770, 1
      %v1838 = vrot.slane %v1771, 1
      %v1839 = vsel %vm1023, %v1837, %v1838
      %v1840 = vrot.slane %v1772, 1
      %v1841 = vrot.slane %v1773, 1
      %v1842 = vsel %vm1023, %v1840, %v1841
      %v1843 = vrot.slane %v1774, 1
      %v1844 = vrot.slane %v1775, 1
      %v1845 = vsel %vm1023, %v1843, %v1844
      %v1846 = vrot.slane %v1776, 1
      %v1847 = vrot.slane %v1777, 1
      %v1848 = vsel %vm1023, %v1846, %v1847
      %v1849 = vrot.slane %v1778, 1
      %v1850 = vrot.slane %v1779, 1
      %v1851 = vsel %vm1023, %v1849, %v1850
      %v1860 = vsel %vm1804, %v1830, 0.0
      %v1861 = vsel %vm1805, %v1833, 0.0
      %v1862 = vsel %vm1806, %v1836, 0.0
      %v1863 = vsel %vm1807, %v1839, 0.0
      %v1864 = vsel %vm1808, %v1842, 0.0
      %v1865 = vsel %vm1809, %v1845, 0.0
      %v1866 = vsel %vm1810, %v1848, 0.0
      %v1867 = vsel %vm1811, %v1851, 0.0
      %v1868 = vpack.c.bf16 %v1860, %v1860
      %v1869 = vpack.c.bf16 %v1861, %v1861
      %v1870 = vpack.c.bf16 %v1862, %v1862
      %v1871 = vpack.c.bf16 %v1863, %v1863
      %v1872 = vpack.c.bf16 %v1864, %v1864
      %v1873 = vpack.c.bf16 %v1865, %v1865
      %v1874 = vpack.c.bf16 %v1866, %v1866
      %v1875 = vpack.c.bf16 %v1867, %v1867
      %s1876 = scalar_lea.vmem %s357, 160
      %v1877 = vld [vmem:[%s1876] sm:$0xf]
      %v1878 = vld [vmem:[%s1876 + $0x4] sm:$0xf]
      %v1879 = vld [vmem:[%s1876 + $0x8] sm:$0xf]
      %v1880 = vld [vmem:[%s1876 + $0xc] sm:$0xf]
      %v1881 = vld [vmem:[%s1876 + $0x10] sm:$0xf]
      %v1882 = vld [vmem:[%s1876 + $0x14] sm:$0xf]
      %v1883 = vld [vmem:[%s1876 + $0x18] sm:$0xf]
      %v1884 = vld [vmem:[%s1876 + $0x1c] sm:$0xf]
      %v1893 = vunpack.c.l.b16 %v1868
      %v1894 = vunpack.c.l.b16 %v1869
      %v1895 = vunpack.c.l.b16 %v1870
      %v1896 = vunpack.c.l.b16 %v1871
      %v1897 = vunpack.c.l.b16 %v1872
      %v1898 = vunpack.c.l.b16 %v1873
      %v1899 = vunpack.c.l.b16 %v1874
      %v1900 = vunpack.c.l.b16 %v1875
      %v1901 = vpack.c.b16 %v1894, %v1893
      %v1902 = vpack.c.b16 %v1896, %v1895
      %v1903 = vpack.c.b16 %v1898, %v1897
      %v1904 = vpack.c.b16 %v1900, %v1899
      %v1913 = vunpack.c.l.b16 %v1877
      %v1914 = vunpack.c.l.b16 %v1878
      %v1915 = vunpack.c.l.b16 %v1879
      %v1916 = vunpack.c.l.b16 %v1880
      %v1917 = vunpack.c.l.b16 %v1881
      %v1918 = vunpack.c.l.b16 %v1882
      %v1919 = vunpack.c.l.b16 %v1883
      %v1920 = vunpack.c.l.b16 %v1884
      %v1921 = vpack.c.b16 %v1914, %v1913
      %v1922 = vpack.c.b16 %v1916, %v1915
      %v1923 = vpack.c.b16 %v1918, %v1917
      %v1924 = vpack.c.b16 %v1920, %v1919
      %v1930 = vsel %vm693, %v1901, 0
      %v1933 = vsel %vm693, %v1902, 0
      %v1936 = vsel %vm693, %v1903, 0
      %v1939 = vsel %vm693, %v1904, 0
      %1941 = vmatprep.subr.bf16.mxu0 0
      %1942 = vmatpush1.bf16.msra.mxu0 %v1921
      %1943 = vmatprep.subr.bf16.mxu0 0
      %1944 = vmatpush1.bf16.msra.mxu0 %v1922
      %1945 = vmatprep.subr.bf16.mxu0 0
      %1946 = vmatpush1.bf16.msra.mxu0 %v1923
      %1947 = vmatprep.subr.bf16.mxu0 0
      %1948 = vmatpush1.bf16.msra.mxu0 %v1924
      %1949 = vmatprep.subr.bf16.mxu0 0
      %1950 = vmatpush1.bf16.msra.mxu0 0
      %1951 = vmatprep.subr.bf16.mxu0 0
      %1952 = vmatpush1.bf16.msra.mxu0 0
      %1953 = vmatprep.subr.bf16.mxu0 0
      %1954 = vmatpush1.bf16.msra.mxu0 0
      %1955 = vmatprep.subr.bf16.mxu0 0
      %1956 = vmatpush1.bf16.msra.mxu0 0
      %1957 = vmatprep.subr.bf16.mxu0 0
      %1958 = vmatpush1.bf16.msra.mxu0 0
      %1959 = vmatprep.subr.bf16.mxu0 0
      %1960 = vmatpush1.bf16.msra.mxu0 0
      %1961 = vmatprep.subr.bf16.mxu0 0
      %1962 = vmatpush1.bf16.msra.mxu0 0
      %1963 = vmatprep.subr.bf16.mxu0 0
      %1964 = vmatpush1.bf16.msra.mxu0 0
      %1965 = vmatprep.subr.bf16.mxu0 0
      %1966 = vmatpush1.bf16.msra.mxu0 0
      %1967 = vmatprep.subr.bf16.mxu0 0
      %1968 = vmatpush1.bf16.msra.mxu0 0
      %1969 = vmatprep.subr.bf16.mxu0 0
      %1970 = vmatpush1.bf16.msra.mxu0 0
      %1971 = vmatprep.subr.bf16.mxu0 0
      %1972 = vmatpush1.bf16.msra.mxu0 0
      %1973 = vmatprep.mubr.bf16.mxu0 0
      %1974 = vmatmul.mubr.bf16.gmra.mrb[0].mxu0 %v1930
      %v1975 = vpop.f32.mrb[0].mxu0
      %v1976 = vadd.f32 0.0, %v1975
      %v1977 = vpop.f32.mrb[0].mxu0
      %v1978 = vpop.f32.mrb[0].mxu0
      %v1979 = vadd.f32 0.0, %v1978
      %v1980 = vpop.f32.mrb[0].mxu0
      %1981 = vmatprep.mubr.bf16.mxu0 0
      %1982 = vmatmul.mubr.bf16.gmra.mrb[0].mxu0 %v1933
      %v1983 = vpop.f32.mrb[0].mxu0
      %v1984 = vadd.f32 0.0, %v1983
      %v1985 = vpop.f32.mrb[0].mxu0
      %v1986 = vpop.f32.mrb[0].mxu0
      %v1987 = vadd.f32 0.0, %v1986
      %v1988 = vpop.f32.mrb[0].mxu0
      %1989 = vmatprep.mubr.bf16.mxu0 0
      %1990 = vmatmul.mubr.bf16.gmra.mrb[0].mxu0 %v1936
      %v1991 = vpop.f32.mrb[0].mxu0
      %v1992 = vadd.f32 0.0, %v1991
      %v1993 = vpop.f32.mrb[0].mxu0
      %v1994 = vpop.f32.mrb[0].mxu0
      %v1995 = vadd.f32 0.0, %v1994
      %v1996 = vpop.f32.mrb[0].mxu0
      %1997 = vmatprep.mubr.bf16.mxu0 0
      %1998 = vmatmul.mubr.bf16.gmra.mrb[0].mxu0 %v1939
      %v1999 = vpop.f32.mrb[0].mxu0
      %v2000 = vadd.f32 0.0, %v1999
      %v2001 = vpop.f32.mrb[0].mxu0
      %v2002 = vpop.f32.mrb[0].mxu0
      %v2003 = vadd.f32 0.0, %v2002
      %v2004 = vpop.f32.mrb[0].mxu0
      %2005 = vdwg.mxu0
      %v2006 = vadd.f32 %v1692, %v1976
      %v2007 = vadd.f32 %v1693, %v1979
      %v2008 = vadd.f32 %v1694, %v1984
      %v2009 = vadd.f32 %v1695, %v1987
      %v2010 = vadd.f32 %v1696, %v1992
      %v2011 = vadd.f32 %v1697, %v1995
      %v2012 = vadd.f32 %v1698, %v2000
      %v2013 = vadd.f32 %v1699, %v2003
      %s2014 = sadd.s32 %s387, 1
      %s2015 = smul.u32 %s2014, 2
      %s2016 = smul.addr %s2015, 4
      %s2017 = scalar_lea.vmem %s352, %s2016
      %v2018 = vld [vmem:[%s2017] sm:$0xf]
      %v2019 = vld [vmem:[%s2017 + $0x8] sm:$0xf]
      %v2020 = vld [vmem:[%s2017 + $0x10] sm:$0xf]
      %v2021 = vld [vmem:[%s2017 + $0x18] sm:$0xf]
      %v2022 = vld [vmem:[%s2017 + $0x20] sm:$0xf]
      %v2023 = vld [vmem:[%s2017 + $0x28] sm:$0xf]
      %v2024 = vld [vmem:[%s2017 + $0x30] sm:$0xf]
      %v2025 = vld [vmem:[%s2017 + $0x38] sm:$0xf]
      %v2026 = vunpack.c.l.bf16 %v2018
      %v2027 = vunpack.c.l.bf16 %v2019
      %v2028 = vunpack.c.l.bf16 %v2020
      %v2029 = vunpack.c.l.bf16 %v2021
      %v2030 = vunpack.c.l.bf16 %v2022
      %v2031 = vunpack.c.l.bf16 %v2023
      %v2032 = vunpack.c.l.bf16 %v2024
      %v2033 = vunpack.c.l.bf16 %v2025
      %v2034 = vmul.f32 %v2026, %v422
      %v2035 = vmul.f32 %v2027, %v422
      %v2036 = vmul.f32 %v2028, %v422
      %v2037 = vmul.f32 %v2029, %v422
      %v2038 = vmul.f32 %v2030, %v422
      %v2039 = vmul.f32 %v2031, %v422
      %v2040 = vmul.f32 %v2032, %v422
      %v2041 = vmul.f32 %v2033, %v422
      %v2042 = vadd.f32 %v2034, %v437
      %v2043 = vadd.f32 %v2035, %v437
      %v2044 = vadd.f32 %v2036, %v437
      %v2045 = vadd.f32 %v2037, %v437
      %v2046 = vadd.f32 %v2038, %v437
      %v2047 = vadd.f32 %v2039, %v437
      %v2048 = vadd.f32 %v2040, %v437
      %v2049 = vadd.f32 %v2041, %v437
      %v2050 = vmax.f32 %v2042, 0.0
      %v2051 = vmax.f32 %v2043, 0.0
      %v2052 = vmax.f32 %v2044, 0.0
      %v2053 = vmax.f32 %v2045, 0.0
      %v2054 = vmax.f32 %v2046, 0.0
      %v2055 = vmax.f32 %v2047, 0.0
      %v2056 = vmax.f32 %v2048, 0.0
      %v2057 = vmax.f32 %v2049, 0.0
      %v2058 = vadd.s32 %v455, 2
      %v2059 = vadd.s32 %v456, 2
      %v2060 = vadd.s32 %v457, 2
      %v2061 = vadd.s32 %v458, 2
      %v2062 = vadd.s32 %v459, 2
      %v2063 = vadd.s32 %v460, 2
      %v2064 = vadd.s32 %v461, 2
      %v2065 = vadd.s32 %v462, 2
      %vm2066 = vcmp.ge.s32.totalorder %v2058, 1
      %vm2067 = vcmp.ge.s32.totalorder %v2059, 1
      %vm2068 = vcmp.ge.s32.totalorder %v2060, 1
      %vm2069 = vcmp.ge.s32.totalorder %v2061, 1
      %vm2070 = vcmp.ge.s32.totalorder %v2062, 1
      %vm2071 = vcmp.ge.s32.totalorder %v2063, 1
      %vm2072 = vcmp.ge.s32.totalorder %v2064, 1
      %vm2073 = vcmp.ge.s32.totalorder %v2065, 1
      %vm2074 = vcmp.lt.s32.totalorder %v2058, 17
      %vm2075 = vcmp.lt.s32.totalorder %v2059, 17
      %vm2076 = vcmp.lt.s32.totalorder %v2060, 17
      %vm2077 = vcmp.lt.s32.totalorder %v2061, 17
      %vm2078 = vcmp.lt.s32.totalorder %v2062, 17
      %vm2079 = vcmp.lt.s32.totalorder %v2063, 17
      %vm2080 = vcmp.lt.s32.totalorder %v2064, 17
      %vm2081 = vcmp.lt.s32.totalorder %v2065, 17
      %vm2082 = vmand %vm2066, %vm2074
      %vm2083 = vmand %vm2067, %vm2075
      %vm2084 = vmand %vm2068, %vm2076
      %vm2085 = vmand %vm2069, %vm2077
      %vm2086 = vmand %vm2070, %vm2078
      %vm2087 = vmand %vm2071, %vm2079
      %vm2088 = vmand %vm2072, %vm2080
      %vm2089 = vmand %vm2073, %vm2081
      %vm2090 = vmand %vm2082, %vm488
      %vm2091 = vmand %vm2083, %vm488
      %vm2092 = vmand %vm2084, %vm488
      %vm2093 = vmand %vm2085, %vm488
      %vm2094 = vmand %vm2086, %vm488
      %vm2095 = vmand %vm2087, %vm488
      %vm2096 = vmand %vm2088, %vm488
      %vm2097 = vmand %vm2089, %vm488
      %vm2098 = vmand %vm2090, %vm497
      %vm2099 = vmand %vm2091, %vm497
      %vm2100 = vmand %vm2092, %vm497
      %vm2101 = vmand %vm2093, %vm497
      %vm2102 = vmand %vm2094, %vm497
      %vm2103 = vmand %vm2095, %vm497
      %vm2104 = vmand %vm2096, %vm497
      %vm2105 = vmand %vm2097, %vm497
      %v2106 = vsel %vm2098, 1, 0
      %v2107 = vsel %vm2099, 1, 0
      %v2108 = vsel %vm2100, 1, 0
      %v2109 = vsel %vm2101, 1, 0
      %v2110 = vsel %vm2102, 1, 0
      %v2111 = vsel %vm2103, 1, 0
      %v2112 = vsel %vm2104, 1, 0
      %v2113 = vsel %vm2105, 1, 0
      %vm2114 = vcmp.eq.s32.totalorder %v2106, 1
      %vm2115 = vcmp.eq.s32.totalorder %v2107, 1
      %vm2116 = vcmp.eq.s32.totalorder %v2108, 1
      %vm2117 = vcmp.eq.s32.totalorder %v2109, 1
      %vm2118 = vcmp.eq.s32.totalorder %v2110, 1
      %vm2119 = vcmp.eq.s32.totalorder %v2111, 1
      %vm2120 = vcmp.eq.s32.totalorder %v2112, 1
      %vm2121 = vcmp.eq.s32.totalorder %v2113, 1
      %v2122 = vsel %vm2114, %v2050, 0.0
      %v2123 = vsel %vm2115, %v2051, 0.0
      %v2124 = vsel %vm2116, %v2052, 0.0
      %v2125 = vsel %vm2117, %v2053, 0.0
      %v2126 = vsel %vm2118, %v2054, 0.0
      %v2127 = vsel %vm2119, %v2055, 0.0
      %v2128 = vsel %vm2120, %v2056, 0.0
      %v2129 = vsel %vm2121, %v2057, 0.0
      %v2130 = vpack.c.bf16 %v2122, %v2122
      %v2131 = vpack.c.bf16 %v2123, %v2123
      %v2132 = vpack.c.bf16 %v2124, %v2124
      %v2133 = vpack.c.bf16 %v2125, %v2125
      %v2134 = vpack.c.bf16 %v2126, %v2126
      %v2135 = vpack.c.bf16 %v2127, %v2127
      %v2136 = vpack.c.bf16 %v2128, %v2128
      %v2137 = vpack.c.bf16 %v2129, %v2129
      %s2138 = scalar_lea.vmem %s357, 192
      %v2139 = vld [vmem:[%s2138] sm:$0xf]
      %v2140 = vld [vmem:[%s2138 + $0x4] sm:$0xf]
      %v2141 = vld [vmem:[%s2138 + $0x8] sm:$0xf]
      %v2142 = vld [vmem:[%s2138 + $0xc] sm:$0xf]
      %v2143 = vld [vmem:[%s2138 + $0x10] sm:$0xf]
      %v2144 = vld [vmem:[%s2138 + $0x14] sm:$0xf]
      %v2145 = vld [vmem:[%s2138 + $0x18] sm:$0xf]
      %v2146 = vld [vmem:[%s2138 + $0x1c] sm:$0xf]
      %v2155 = vunpack.c.l.b16 %v2130
      %v2156 = vunpack.c.l.b16 %v2131
      %v2157 = vunpack.c.l.b16 %v2132
      %v2158 = vunpack.c.l.b16 %v2133
      %v2159 = vunpack.c.l.b16 %v2134
      %v2160 = vunpack.c.l.b16 %v2135
      %v2161 = vunpack.c.l.b16 %v2136
      %v2162 = vunpack.c.l.b16 %v2137
      %v2163 = vpack.c.b16 %v2156, %v2155
      %v2164 = vpack.c.b16 %v2158, %v2157
      %v2165 = vpack.c.b16 %v2160, %v2159
      %v2166 = vpack.c.b16 %v2162, %v2161
      %v2175 = vunpack.c.l.b16 %v2139
      %v2176 = vunpack.c.l.b16 %v2140
      %v2177 = vunpack.c.l.b16 %v2141
      %v2178 = vunpack.c.l.b16 %v2142
      %v2179 = vunpack.c.l.b16 %v2143
      %v2180 = vunpack.c.l.b16 %v2144
      %v2181 = vunpack.c.l.b16 %v2145
      %v2182 = vunpack.c.l.b16 %v2146
      %v2183 = vpack.c.b16 %v2176, %v2175
      %v2184 = vpack.c.b16 %v2178, %v2177
      %v2185 = vpack.c.b16 %v2180, %v2179
      %v2186 = vpack.c.b16 %v2182, %v2181
      %v2192 = vsel %vm693, %v2163, 0
      %v2195 = vsel %vm693, %v2164, 0
      %v2198 = vsel %vm693, %v2165, 0
      %v2201 = vsel %vm693, %v2166, 0
      %2203 = vmatprep.subr.bf16.mxu0 0
      %2204 = vmatpush1.bf16.msra.mxu0 %v2183
      %2205 = vmatprep.subr.bf16.mxu0 0
      %2206 = vmatpush1.bf16.msra.mxu0 %v2184
      %2207 = vmatprep.subr.bf16.mxu0 0
      %2208 = vmatpush1.bf16.msra.mxu0 %v2185
      %2209 = vmatprep.subr.bf16.mxu0 0
      %2210 = vmatpush1.bf16.msra.mxu0 %v2186
      %2211 = vmatprep.subr.bf16.mxu0 0
      %2212 = vmatpush1.bf16.msra.mxu0 0
      %2213 = vmatprep.subr.bf16.mxu0 0
      %2214 = vmatpush1.bf16.msra.mxu0 0
      %2215 = vmatprep.subr.bf16.mxu0 0
      %2216 = vmatpush1.bf16.msra.mxu0 0
      %2217 = vmatprep.subr.bf16.mxu0 0
      %2218 = vmatpush1.bf16.msra.mxu0 0
      %2219 = vmatprep.subr.bf16.mxu0 0
      %2220 = vmatpush1.bf16.msra.mxu0 0
      %2221 = vmatprep.subr.bf16.mxu0 0
      %2222 = vmatpush1.bf16.msra.mxu0 0
      %2223 = vmatprep.subr.bf16.mxu0 0
      %2224 = vmatpush1.bf16.msra.mxu0 0
      %2225 = vmatprep.subr.bf16.mxu0 0
      %2226 = vmatpush1.bf16.msra.mxu0 0
      %2227 = vmatprep.subr.bf16.mxu0 0
      %2228 = vmatpush1.bf16.msra.mxu0 0
      %2229 = vmatprep.subr.bf16.mxu0 0
      %2230 = vmatpush1.bf16.msra.mxu0 0
      %2231 = vmatprep.subr.bf16.mxu0 0
      %2232 = vmatpush1.bf16.msra.mxu0 0
      %2233 = vmatprep.subr.bf16.mxu0 0
      %2234 = vmatpush1.bf16.msra.mxu0 0
      %2235 = vmatprep.mubr.bf16.mxu0 0
      %2236 = vmatmul.mubr.bf16.gmra.mrb[0].mxu0 %v2192
      %v2237 = vpop.f32.mrb[0].mxu0
      %v2238 = vadd.f32 0.0, %v2237
      %v2239 = vpop.f32.mrb[0].mxu0
      %v2240 = vpop.f32.mrb[0].mxu0
      %v2241 = vadd.f32 0.0, %v2240
      %v2242 = vpop.f32.mrb[0].mxu0
      %2243 = vmatprep.mubr.bf16.mxu0 0
      %2244 = vmatmul.mubr.bf16.gmra.mrb[0].mxu0 %v2195
      %v2245 = vpop.f32.mrb[0].mxu0
      %v2246 = vadd.f32 0.0, %v2245
      %v2247 = vpop.f32.mrb[0].mxu0
      %v2248 = vpop.f32.mrb[0].mxu0
      %v2249 = vadd.f32 0.0, %v2248
      %v2250 = vpop.f32.mrb[0].mxu0
      %2251 = vmatprep.mubr.bf16.mxu0 0
      %2252 = vmatmul.mubr.bf16.gmra.mrb[0].mxu0 %v2198
      %v2253 = vpop.f32.mrb[0].mxu0
      %v2254 = vadd.f32 0.0, %v2253
      %v2255 = vpop.f32.mrb[0].mxu0
      %v2256 = vpop.f32.mrb[0].mxu0
      %v2257 = vadd.f32 0.0, %v2256
      %v2258 = vpop.f32.mrb[0].mxu0
      %2259 = vmatprep.mubr.bf16.mxu0 0
      %2260 = vmatmul.mubr.bf16.gmra.mrb[0].mxu0 %v2201
      %v2261 = vpop.f32.mrb[0].mxu0
      %v2262 = vadd.f32 0.0, %v2261
      %v2263 = vpop.f32.mrb[0].mxu0
      %v2264 = vpop.f32.mrb[0].mxu0
      %v2265 = vadd.f32 0.0, %v2264
      %v2266 = vpop.f32.mrb[0].mxu0
      %2267 = vdwg.mxu0
      %v2268 = vadd.f32 %v2006, %v2238
      %v2269 = vadd.f32 %v2007, %v2241
      %v2270 = vadd.f32 %v2008, %v2246
      %v2271 = vadd.f32 %v2009, %v2249
      %v2272 = vadd.f32 %v2010, %v2254
      %v2273 = vadd.f32 %v2011, %v2257
      %v2274 = vadd.f32 %v2012, %v2262
      %v2275 = vadd.f32 %v2013, %v2265
      %s2276 = sadd.s32 %s2015, 18
      %s2277 = smul.addr %s2276, 4
      %s2278 = scalar_lea.vmem %s352, %s2277
      %v2279 = vld [vmem:[%s2278] sm:$0xf]
      %v2280 = vld [vmem:[%s2278 + $0x8] sm:$0xf]
      %v2281 = vld [vmem:[%s2278 + $0x10] sm:$0xf]
      %v2282 = vld [vmem:[%s2278 + $0x18] sm:$0xf]
      %v2283 = vld [vmem:[%s2278 + $0x20] sm:$0xf]
      %v2284 = vld [vmem:[%s2278 + $0x28] sm:$0xf]
      %v2285 = vld [vmem:[%s2278 + $0x30] sm:$0xf]
      %v2286 = vld [vmem:[%s2278 + $0x38] sm:$0xf]
      %v2287 = vunpack.c.l.bf16 %v2279
      %v2288 = vunpack.c.l.bf16 %v2280
      %v2289 = vunpack.c.l.bf16 %v2281
      %v2290 = vunpack.c.l.bf16 %v2282
      %v2291 = vunpack.c.l.bf16 %v2283
      %v2292 = vunpack.c.l.bf16 %v2284
      %v2293 = vunpack.c.l.bf16 %v2285
      %v2294 = vunpack.c.l.bf16 %v2286
      %v2295 = vmul.f32 %v2287, %v422
      %v2296 = vmul.f32 %v2288, %v422
      %v2297 = vmul.f32 %v2289, %v422
      %v2298 = vmul.f32 %v2290, %v422
      %v2299 = vmul.f32 %v2291, %v422
      %v2300 = vmul.f32 %v2292, %v422
      %v2301 = vmul.f32 %v2293, %v422
      %v2302 = vmul.f32 %v2294, %v422
      %v2303 = vadd.f32 %v2295, %v437
      %v2304 = vadd.f32 %v2296, %v437
      %v2305 = vadd.f32 %v2297, %v437
      %v2306 = vadd.f32 %v2298, %v437
      %v2307 = vadd.f32 %v2299, %v437
      %v2308 = vadd.f32 %v2300, %v437
      %v2309 = vadd.f32 %v2301, %v437
      %v2310 = vadd.f32 %v2302, %v437
      %v2311 = vmax.f32 %v2303, 0.0
      %v2312 = vmax.f32 %v2304, 0.0
      %v2313 = vmax.f32 %v2305, 0.0
      %v2314 = vmax.f32 %v2306, 0.0
      %v2315 = vmax.f32 %v2307, 0.0
      %v2316 = vmax.f32 %v2308, 0.0
      %v2317 = vmax.f32 %v2309, 0.0
      %v2318 = vmax.f32 %v2310, 0.0
      %vm2319 = vmand %vm2082, %vm590
      %vm2320 = vmand %vm2083, %vm590
      %vm2321 = vmand %vm2084, %vm590
      %vm2322 = vmand %vm2085, %vm590
      %vm2323 = vmand %vm2086, %vm590
      %vm2324 = vmand %vm2087, %vm590
      %vm2325 = vmand %vm2088, %vm590
      %vm2326 = vmand %vm2089, %vm590
      %vm2327 = vmand %vm2319, %vm599
      %vm2328 = vmand %vm2320, %vm599
      %vm2329 = vmand %vm2321, %vm599
      %vm2330 = vmand %vm2322, %vm599
      %vm2331 = vmand %vm2323, %vm599
      %vm2332 = vmand %vm2324, %vm599
      %vm2333 = vmand %vm2325, %vm599
      %vm2334 = vmand %vm2326, %vm599
      %v2335 = vsel %vm2327, 1, 0
      %v2336 = vsel %vm2328, 1, 0
      %v2337 = vsel %vm2329, 1, 0
      %v2338 = vsel %vm2330, 1, 0
      %v2339 = vsel %vm2331, 1, 0
      %v2340 = vsel %vm2332, 1, 0
      %v2341 = vsel %vm2333, 1, 0
      %v2342 = vsel %vm2334, 1, 0
      %vm2343 = vcmp.eq.s32.totalorder %v2335, 1
      %vm2344 = vcmp.eq.s32.totalorder %v2336, 1
      %vm2345 = vcmp.eq.s32.totalorder %v2337, 1
      %vm2346 = vcmp.eq.s32.totalorder %v2338, 1
      %vm2347 = vcmp.eq.s32.totalorder %v2339, 1
      %vm2348 = vcmp.eq.s32.totalorder %v2340, 1
      %vm2349 = vcmp.eq.s32.totalorder %v2341, 1
      %vm2350 = vcmp.eq.s32.totalorder %v2342, 1
      %v2351 = vsel %vm2343, %v2311, 0.0
      %v2352 = vsel %vm2344, %v2312, 0.0
      %v2353 = vsel %vm2345, %v2313, 0.0
      %v2354 = vsel %vm2346, %v2314, 0.0
      %v2355 = vsel %vm2347, %v2315, 0.0
      %v2356 = vsel %vm2348, %v2316, 0.0
      %v2357 = vsel %vm2349, %v2317, 0.0
      %v2358 = vsel %vm2350, %v2318, 0.0
      %v2359 = vpack.c.bf16 %v2351, %v2351
      %v2360 = vpack.c.bf16 %v2352, %v2352
      %v2361 = vpack.c.bf16 %v2353, %v2353
      %v2362 = vpack.c.bf16 %v2354, %v2354
      %v2363 = vpack.c.bf16 %v2355, %v2355
      %v2364 = vpack.c.bf16 %v2356, %v2356
      %v2365 = vpack.c.bf16 %v2357, %v2357
      %v2366 = vpack.c.bf16 %v2358, %v2358
      %s2367 = scalar_lea.vmem %s357, 224
      %v2368 = vld [vmem:[%s2367] sm:$0xf]
      %v2369 = vld [vmem:[%s2367 + $0x4] sm:$0xf]
      %v2370 = vld [vmem:[%s2367 + $0x8] sm:$0xf]
      %v2371 = vld [vmem:[%s2367 + $0xc] sm:$0xf]
      %v2372 = vld [vmem:[%s2367 + $0x10] sm:$0xf]
      %v2373 = vld [vmem:[%s2367 + $0x14] sm:$0xf]
      %v2374 = vld [vmem:[%s2367 + $0x18] sm:$0xf]
      %v2375 = vld [vmem:[%s2367 + $0x1c] sm:$0xf]
      %v2384 = vunpack.c.l.b16 %v2359
      %v2385 = vunpack.c.l.b16 %v2360
      %v2386 = vunpack.c.l.b16 %v2361
      %v2387 = vunpack.c.l.b16 %v2362
      %v2388 = vunpack.c.l.b16 %v2363
      %v2389 = vunpack.c.l.b16 %v2364
      %v2390 = vunpack.c.l.b16 %v2365
      %v2391 = vunpack.c.l.b16 %v2366
      %v2392 = vpack.c.b16 %v2385, %v2384
      %v2393 = vpack.c.b16 %v2387, %v2386
      %v2394 = vpack.c.b16 %v2389, %v2388
      %v2395 = vpack.c.b16 %v2391, %v2390
      %v2404 = vunpack.c.l.b16 %v2368
      %v2405 = vunpack.c.l.b16 %v2369
      %v2406 = vunpack.c.l.b16 %v2370
      %v2407 = vunpack.c.l.b16 %v2371
      %v2408 = vunpack.c.l.b16 %v2372
      %v2409 = vunpack.c.l.b16 %v2373
      %v2410 = vunpack.c.l.b16 %v2374
      %v2411 = vunpack.c.l.b16 %v2375
      %v2412 = vpack.c.b16 %v2405, %v2404
      %v2413 = vpack.c.b16 %v2407, %v2406
      %v2414 = vpack.c.b16 %v2409, %v2408
      %v2415 = vpack.c.b16 %v2411, %v2410
      %v2421 = vsel %vm693, %v2392, 0
      %v2424 = vsel %vm693, %v2393, 0
      %v2427 = vsel %vm693, %v2394, 0
      %v2430 = vsel %vm693, %v2395, 0
      %2432 = vmatprep.subr.bf16.mxu0 0
      %2433 = vmatpush1.bf16.msra.mxu0 %v2412
      %2434 = vmatprep.subr.bf16.mxu0 0
      %2435 = vmatpush1.bf16.msra.mxu0 %v2413
      %2436 = vmatprep.subr.bf16.mxu0 0
      %2437 = vmatpush1.bf16.msra.mxu0 %v2414
      %2438 = vmatprep.subr.bf16.mxu0 0
      %2439 = vmatpush1.bf16.msra.mxu0 %v2415
      %2440 = vmatprep.subr.bf16.mxu0 0
      %2441 = vmatpush1.bf16.msra.mxu0 0
      %2442 = vmatprep.subr.bf16.mxu0 0
      %2443 = vmatpush1.bf16.msra.mxu0 0
      %2444 = vmatprep.subr.bf16.mxu0 0
      %2445 = vmatpush1.bf16.msra.mxu0 0
      %2446 = vmatprep.subr.bf16.mxu0 0
      %2447 = vmatpush1.bf16.msra.mxu0 0
      %2448 = vmatprep.subr.bf16.mxu0 0
      %2449 = vmatpush1.bf16.msra.mxu0 0
      %2450 = vmatprep.subr.bf16.mxu0 0
      %2451 = vmatpush1.bf16.msra.mxu0 0
      %2452 = vmatprep.subr.bf16.mxu0 0
      %2453 = vmatpush1.bf16.msra.mxu0 0
      %2454 = vmatprep.subr.bf16.mxu0 0
      %2455 = vmatpush1.bf16.msra.mxu0 0
      %2456 = vmatprep.subr.bf16.mxu0 0
      %2457 = vmatpush1.bf16.msra.mxu0 0
      %2458 = vmatprep.subr.bf16.mxu0 0
      %2459 = vmatpush1.bf16.msra.mxu0 0
      %2460 = vmatprep.subr.bf16.mxu0 0
      %2461 = vmatpush1.bf16.msra.mxu0 0
      %2462 = vmatprep.subr.bf16.mxu0 0
      %2463 = vmatpush1.bf16.msra.mxu0 0
      %2464 = vmatprep.mubr.bf16.mxu0 0
      %2465 = vmatmul.mubr.bf16.gmra.mrb[0].mxu0 %v2421
      %v2466 = vpop.f32.mrb[0].mxu0
      %v2467 = vadd.f32 0.0, %v2466
      %v2468 = vpop.f32.mrb[0].mxu0
      %v2469 = vpop.f32.mrb[0].mxu0
      %v2470 = vadd.f32 0.0, %v2469
      %v2471 = vpop.f32.mrb[0].mxu0
      %2472 = vmatprep.mubr.bf16.mxu0 0
      %2473 = vmatmul.mubr.bf16.gmra.mrb[0].mxu0 %v2424
      %v2474 = vpop.f32.mrb[0].mxu0
      %v2475 = vadd.f32 0.0, %v2474
      %v2476 = vpop.f32.mrb[0].mxu0
      %v2477 = vpop.f32.mrb[0].mxu0
      %v2478 = vadd.f32 0.0, %v2477
      %v2479 = vpop.f32.mrb[0].mxu0
      %2480 = vmatprep.mubr.bf16.mxu0 0
      %2481 = vmatmul.mubr.bf16.gmra.mrb[0].mxu0 %v2427
      %v2482 = vpop.f32.mrb[0].mxu0
      %v2483 = vadd.f32 0.0, %v2482
      %v2484 = vpop.f32.mrb[0].mxu0
      %v2485 = vpop.f32.mrb[0].mxu0
      %v2486 = vadd.f32 0.0, %v2485
      %v2487 = vpop.f32.mrb[0].mxu0
      %2488 = vmatprep.mubr.bf16.mxu0 0
      %2489 = vmatmul.mubr.bf16.gmra.mrb[0].mxu0 %v2430
      %v2490 = vpop.f32.mrb[0].mxu0
      %v2491 = vadd.f32 0.0, %v2490
      %v2492 = vpop.f32.mrb[0].mxu0
      %v2493 = vpop.f32.mrb[0].mxu0
      %v2494 = vadd.f32 0.0, %v2493
      %v2495 = vpop.f32.mrb[0].mxu0
      %2496 = vdwg.mxu0
      %v2497 = vadd.f32 %v2268, %v2467
      %v2498 = vadd.f32 %v2269, %v2470
      %v2499 = vadd.f32 %v2270, %v2475
      %v2500 = vadd.f32 %v2271, %v2478
      %v2501 = vadd.f32 %v2272, %v2483
      %v2502 = vadd.f32 %v2273, %v2486
      %v2503 = vadd.f32 %v2274, %v2491
      %v2504 = vadd.f32 %v2275, %v2494
      %v2505 = vld [vmem:[%s2017] sm:$0xf]
      %v2506 = vld [vmem:[%s2017 + $0x4] sm:$0x1]
      %v2507 = vld [vmem:[%s2017 + $0x8] sm:$0xf]
      %v2508 = vld [vmem:[%s2017 + $0xc] sm:$0x1]
      %v2509 = vld [vmem:[%s2017 + $0x10] sm:$0xf]
      %v2510 = vld [vmem:[%s2017 + $0x14] sm:$0x1]
      %v2511 = vld [vmem:[%s2017 + $0x18] sm:$0xf]
      %v2512 = vld [vmem:[%s2017 + $0x1c] sm:$0x1]
      %v2513 = vld [vmem:[%s2017 + $0x20] sm:$0xf]
      %v2514 = vld [vmem:[%s2017 + $0x24] sm:$0x1]
      %v2515 = vld [vmem:[%s2017 + $0x28] sm:$0xf]
      %v2516 = vld [vmem:[%s2017 + $0x2c] sm:$0x1]
      %v2517 = vld [vmem:[%s2017 + $0x30] sm:$0xf]
      %v2518 = vld [vmem:[%s2017 + $0x34] sm:$0x1]
      %v2519 = vld [vmem:[%s2017 + $0x38] sm:$0xf]
      %v2520 = vld [vmem:[%s2017 + $0x3c] sm:$0x1]
      %v2521 = vunpack.c.l.bf16 %v2505
      %v2522 = vunpack.c.l.bf16 %v2506
      %v2523 = vunpack.c.l.bf16 %v2507
      %v2524 = vunpack.c.l.bf16 %v2508
      %v2525 = vunpack.c.l.bf16 %v2509
      %v2526 = vunpack.c.l.bf16 %v2510
      %v2527 = vunpack.c.l.bf16 %v2511
      %v2528 = vunpack.c.l.bf16 %v2512
      %v2529 = vunpack.c.l.bf16 %v2513
      %v2530 = vunpack.c.l.bf16 %v2514
      %v2531 = vunpack.c.l.bf16 %v2515
      %v2532 = vunpack.c.l.bf16 %v2516
      %v2533 = vunpack.c.l.bf16 %v2517
      %v2534 = vunpack.c.l.bf16 %v2518
      %v2535 = vunpack.c.l.bf16 %v2519
      %v2536 = vunpack.c.l.bf16 %v2520
      %v2537 = vmul.f32 %v2521, %v422
      %v2538 = vmul.f32 %v2522, %v422
      %v2539 = vmul.f32 %v2523, %v422
      %v2540 = vmul.f32 %v2524, %v422
      %v2541 = vmul.f32 %v2525, %v422
      %v2542 = vmul.f32 %v2526, %v422
      %v2543 = vmul.f32 %v2527, %v422
      %v2544 = vmul.f32 %v2528, %v422
      %v2545 = vmul.f32 %v2529, %v422
      %v2546 = vmul.f32 %v2530, %v422
      %v2547 = vmul.f32 %v2531, %v422
      %v2548 = vmul.f32 %v2532, %v422
      %v2549 = vmul.f32 %v2533, %v422
      %v2550 = vmul.f32 %v2534, %v422
      %v2551 = vmul.f32 %v2535, %v422
      %v2552 = vmul.f32 %v2536, %v422
      %v2553 = vadd.f32 %v2537, %v437
      %v2554 = vadd.f32 %v2538, %v437
      %v2555 = vadd.f32 %v2539, %v437
      %v2556 = vadd.f32 %v2540, %v437
      %v2557 = vadd.f32 %v2541, %v437
      %v2558 = vadd.f32 %v2542, %v437
      %v2559 = vadd.f32 %v2543, %v437
      %v2560 = vadd.f32 %v2544, %v437
      %v2561 = vadd.f32 %v2545, %v437
      %v2562 = vadd.f32 %v2546, %v437
      %v2563 = vadd.f32 %v2547, %v437
      %v2564 = vadd.f32 %v2548, %v437
      %v2565 = vadd.f32 %v2549, %v437
      %v2566 = vadd.f32 %v2550, %v437
      %v2567 = vadd.f32 %v2551, %v437
      %v2568 = vadd.f32 %v2552, %v437
      %v2569 = vmax.f32 %v2553, 0.0
      %v2570 = vmax.f32 %v2554, 0.0
      %v2571 = vmax.f32 %v2555, 0.0
      %v2572 = vmax.f32 %v2556, 0.0
      %v2573 = vmax.f32 %v2557, 0.0
      %v2574 = vmax.f32 %v2558, 0.0
      %v2575 = vmax.f32 %v2559, 0.0
      %v2576 = vmax.f32 %v2560, 0.0
      %v2577 = vmax.f32 %v2561, 0.0
      %v2578 = vmax.f32 %v2562, 0.0
      %v2579 = vmax.f32 %v2563, 0.0
      %v2580 = vmax.f32 %v2564, 0.0
      %v2581 = vmax.f32 %v2565, 0.0
      %v2582 = vmax.f32 %v2566, 0.0
      %v2583 = vmax.f32 %v2567, 0.0
      %v2584 = vmax.f32 %v2568, 0.0
      %vm2585 = vmand %vm2082, %vm973
      %vm2586 = vmand %vm2083, %vm973
      %vm2587 = vmand %vm2084, %vm973
      %vm2588 = vmand %vm2085, %vm973
      %vm2589 = vmand %vm2086, %vm973
      %vm2590 = vmand %vm2087, %vm973
      %vm2591 = vmand %vm2088, %vm973
      %vm2592 = vmand %vm2089, %vm973
      %vm2593 = vmand %vm2585, %vm982
      %vm2594 = vmand %vm2586, %vm982
      %vm2595 = vmand %vm2587, %vm982
      %vm2596 = vmand %vm2588, %vm982
      %vm2597 = vmand %vm2589, %vm982
      %vm2598 = vmand %vm2590, %vm982
      %vm2599 = vmand %vm2591, %vm982
      %vm2600 = vmand %vm2592, %vm982
      %v2601 = vsel %vm2593, 1, 0
      %v2602 = vsel %vm2594, 1, 0
      %v2603 = vsel %vm2595, 1, 0
      %v2604 = vsel %vm2596, 1, 0
      %v2605 = vsel %vm2597, 1, 0
      %v2606 = vsel %vm2598, 1, 0
      %v2607 = vsel %vm2599, 1, 0
      %v2608 = vsel %vm2600, 1, 0
      %vm2609 = vcmp.eq.s32.totalorder %v2601, 1
      %vm2610 = vcmp.eq.s32.totalorder %v2602, 1
      %vm2611 = vcmp.eq.s32.totalorder %v2603, 1
      %vm2612 = vcmp.eq.s32.totalorder %v2604, 1
      %vm2613 = vcmp.eq.s32.totalorder %v2605, 1
      %vm2614 = vcmp.eq.s32.totalorder %v2606, 1
      %vm2615 = vcmp.eq.s32.totalorder %v2607, 1
      %vm2616 = vcmp.eq.s32.totalorder %v2608, 1
      %v2633 = vrot.slane %v2569, 1
      %v2634 = vrot.slane %v2570, 1
      %v2635 = vsel %vm1023, %v2633, %v2634
      %v2636 = vrot.slane %v2571, 1
      %v2637 = vrot.slane %v2572, 1
      %v2638 = vsel %vm1023, %v2636, %v2637
      %v2639 = vrot.slane %v2573, 1
      %v2640 = vrot.slane %v2574, 1
      %v2641 = vsel %vm1023, %v2639, %v2640
      %v2642 = vrot.slane %v2575, 1
      %v2643 = vrot.slane %v2576, 1
      %v2644 = vsel %vm1023, %v2642, %v2643
      %v2645 = vrot.slane %v2577, 1
      %v2646 = vrot.slane %v2578, 1
      %v2647 = vsel %vm1023, %v2645, %v2646
      %v2648 = vrot.slane %v2579, 1
      %v2649 = vrot.slane %v2580, 1
      %v2650 = vsel %vm1023, %v2648, %v2649
      %v2651 = vrot.slane %v2581, 1
      %v2652 = vrot.slane %v2582, 1
      %v2653 = vsel %vm1023, %v2651, %v2652
      %v2654 = vrot.slane %v2583, 1
      %v2655 = vrot.slane %v2584, 1
      %v2656 = vsel %vm1023, %v2654, %v2655
      %v2665 = vsel %vm2609, %v2635, 0.0
      %v2666 = vsel %vm2610, %v2638, 0.0
      %v2667 = vsel %vm2611, %v2641, 0.0
      %v2668 = vsel %vm2612, %v2644, 0.0
      %v2669 = vsel %vm2613, %v2647, 0.0
      %v2670 = vsel %vm2614, %v2650, 0.0
      %v2671 = vsel %vm2615, %v2653, 0.0
      %v2672 = vsel %vm2616, %v2656, 0.0
      %v2673 = vpack.c.bf16 %v2665, %v2665
      %v2674 = vpack.c.bf16 %v2666, %v2666
      %v2675 = vpack.c.bf16 %v2667, %v2667
      %v2676 = vpack.c.bf16 %v2668, %v2668
      %v2677 = vpack.c.bf16 %v2669, %v2669
      %v2678 = vpack.c.bf16 %v2670, %v2670
      %v2679 = vpack.c.bf16 %v2671, %v2671
      %v2680 = vpack.c.bf16 %v2672, %v2672
      %s2681 = scalar_lea.vmem %s357, 256
      %v2682 = vld [vmem:[%s2681] sm:$0xf]
      %v2683 = vld [vmem:[%s2681 + $0x4] sm:$0xf]
      %v2684 = vld [vmem:[%s2681 + $0x8] sm:$0xf]
      %v2685 = vld [vmem:[%s2681 + $0xc] sm:$0xf]
      %v2686 = vld [vmem:[%s2681 + $0x10] sm:$0xf]
      %v2687 = vld [vmem:[%s2681 + $0x14] sm:$0xf]
      %v2688 = vld [vmem:[%s2681 + $0x18] sm:$0xf]
      %v2689 = vld [vmem:[%s2681 + $0x1c] sm:$0xf]
      %v2698 = vunpack.c.l.b16 %v2673
      %v2699 = vunpack.c.l.b16 %v2674
      %v2700 = vunpack.c.l.b16 %v2675
      %v2701 = vunpack.c.l.b16 %v2676
      %v2702 = vunpack.c.l.b16 %v2677
      %v2703 = vunpack.c.l.b16 %v2678
      %v2704 = vunpack.c.l.b16 %v2679
      %v2705 = vunpack.c.l.b16 %v2680
      %v2706 = vpack.c.b16 %v2699, %v2698
      %v2707 = vpack.c.b16 %v2701, %v2700
      %v2708 = vpack.c.b16 %v2703, %v2702
      %v2709 = vpack.c.b16 %v2705, %v2704
      %v2718 = vunpack.c.l.b16 %v2682
      %v2719 = vunpack.c.l.b16 %v2683
      %v2720 = vunpack.c.l.b16 %v2684
      %v2721 = vunpack.c.l.b16 %v2685
      %v2722 = vunpack.c.l.b16 %v2686
      %v2723 = vunpack.c.l.b16 %v2687
      %v2724 = vunpack.c.l.b16 %v2688
      %v2725 = vunpack.c.l.b16 %v2689
      %v2726 = vpack.c.b16 %v2719, %v2718
      %v2727 = vpack.c.b16 %v2721, %v2720
      %v2728 = vpack.c.b16 %v2723, %v2722
      %v2729 = vpack.c.b16 %v2725, %v2724
      %v2735 = vsel %vm693, %v2706, 0
      %v2738 = vsel %vm693, %v2707, 0
      %v2741 = vsel %vm693, %v2708, 0
      %v2744 = vsel %vm693, %v2709, 0
      %2746 = vmatprep.subr.bf16.mxu0 0
      %2747 = vmatpush1.bf16.msra.mxu0 %v2726
      %2748 = vmatprep.subr.bf16.mxu0 0
      %2749 = vmatpush1.bf16.msra.mxu0 %v2727
      %2750 = vmatprep.subr.bf16.mxu0 0
      %2751 = vmatpush1.bf16.msra.mxu0 %v2728
      %2752 = vmatprep.subr.bf16.mxu0 0
      %2753 = vmatpush1.bf16.msra.mxu0 %v2729
      %2754 = vmatprep.subr.bf16.mxu0 0
      %2755 = vmatpush1.bf16.msra.mxu0 0
      %2756 = vmatprep.subr.bf16.mxu0 0
      %2757 = vmatpush1.bf16.msra.mxu0 0
      %2758 = vmatprep.subr.bf16.mxu0 0
      %2759 = vmatpush1.bf16.msra.mxu0 0
      %2760 = vmatprep.subr.bf16.mxu0 0
      %2761 = vmatpush1.bf16.msra.mxu0 0
      %2762 = vmatprep.subr.bf16.mxu0 0
      %2763 = vmatpush1.bf16.msra.mxu0 0
      %2764 = vmatprep.subr.bf16.mxu0 0
      %2765 = vmatpush1.bf16.msra.mxu0 0
      %2766 = vmatprep.subr.bf16.mxu0 0
      %2767 = vmatpush1.bf16.msra.mxu0 0
      %2768 = vmatprep.subr.bf16.mxu0 0
      %2769 = vmatpush1.bf16.msra.mxu0 0
      %2770 = vmatprep.subr.bf16.mxu0 0
      %2771 = vmatpush1.bf16.msra.mxu0 0
      %2772 = vmatprep.subr.bf16.mxu0 0
      %2773 = vmatpush1.bf16.msra.mxu0 0
      %2774 = vmatprep.subr.bf16.mxu0 0
      %2775 = vmatpush1.bf16.msra.mxu0 0
      %2776 = vmatprep.subr.bf16.mxu0 0
      %2777 = vmatpush1.bf16.msra.mxu0 0
      %2778 = vmatprep.mubr.bf16.mxu0 0
      %2779 = vmatmul.mubr.bf16.gmra.mrb[0].mxu0 %v2735
      %v2780 = vpop.f32.mrb[0].mxu0
      %v2781 = vadd.f32 0.0, %v2780
      %v2782 = vpop.f32.mrb[0].mxu0
      %v2783 = vpop.f32.mrb[0].mxu0
      %v2784 = vadd.f32 0.0, %v2783
      %v2785 = vpop.f32.mrb[0].mxu0
      %2786 = vmatprep.mubr.bf16.mxu0 0
      %2787 = vmatmul.mubr.bf16.gmra.mrb[0].mxu0 %v2738
      %v2788 = vpop.f32.mrb[0].mxu0
      %v2789 = vadd.f32 0.0, %v2788
      %v2790 = vpop.f32.mrb[0].mxu0
      %v2791 = vpop.f32.mrb[0].mxu0
      %v2792 = vadd.f32 0.0, %v2791
      %v2793 = vpop.f32.mrb[0].mxu0
      %2794 = vmatprep.mubr.bf16.mxu0 0
      %2795 = vmatmul.mubr.bf16.gmra.mrb[0].mxu0 %v2741
      %v2796 = vpop.f32.mrb[0].mxu0
      %v2797 = vadd.f32 0.0, %v2796
      %v2798 = vpop.f32.mrb[0].mxu0
      %v2799 = vpop.f32.mrb[0].mxu0
      %v2800 = vadd.f32 0.0, %v2799
      %v2801 = vpop.f32.mrb[0].mxu0
      %2802 = vmatprep.mubr.bf16.mxu0 0
      %2803 = vmatmul.mubr.bf16.gmra.mrb[0].mxu0 %v2744
      %v2804 = vpop.f32.mrb[0].mxu0
      %v2805 = vadd.f32 0.0, %v2804
      %v2806 = vpop.f32.mrb[0].mxu0
      %v2807 = vpop.f32.mrb[0].mxu0
      %v2808 = vadd.f32 0.0, %v2807
      %v2809 = vpop.f32.mrb[0].mxu0
      %2810 = vdwg.mxu0
      %v2811 = vadd.f32 %v2497, %v2781
      %v2812 = vadd.f32 %v2498, %v2784
      %v2813 = vadd.f32 %v2499, %v2789
      %v2814 = vadd.f32 %v2500, %v2792
      %v2815 = vadd.f32 %v2501, %v2797
      %v2816 = vadd.f32 %v2502, %v2800
      %v2817 = vadd.f32 %v2503, %v2805
      %v2818 = vadd.f32 %v2504, %v2808
      %v2819 = vld [vmem:[%s360] sm:$0x1]
      %v2821 = vlaneseq
      %v2822 = vshrl.u32 %v2821, 7
      %v2823 = vsub.s32 0, %v2822
      %v2824 = vrot.slane %v2819, %v2823
      %v2826 = vadd.f32 %v2811, %v2824
      %v2827 = vadd.f32 %v2812, %v2824
      %v2828 = vadd.f32 %v2813, %v2824
      %v2829 = vadd.f32 %v2814, %v2824
      %v2830 = vadd.f32 %v2815, %v2824
      %v2831 = vadd.f32 %v2816, %v2824
      %v2832 = vadd.f32 %v2817, %v2824
      %v2833 = vadd.f32 %v2818, %v2824
      %v2834 = vpack.c.bf16 %v2827, %v2826
      %v2835 = vpack.c.bf16 %v2829, %v2828
      %v2836 = vpack.c.bf16 %v2831, %v2830
      %v2837 = vpack.c.bf16 %v2833, %v2832
      %v2842 = vunpack.c.l.b16 %v2834
      %v2843 = vunpack.c.h.b16 %v2834
      %v2844 = vunpack.c.l.b16 %v2835
      %v2845 = vunpack.c.h.b16 %v2835
      %v2846 = vunpack.c.l.b16 %v2836
      %v2847 = vunpack.c.h.b16 %v2836
      %v2848 = vunpack.c.l.b16 %v2837
      %v2849 = vunpack.c.h.b16 %v2837
      %v2850 = vpack.c.b16 %v2842, %v2842
      %v2851 = vpack.c.b16 %v2843, %v2843
      %v2852 = vpack.c.b16 %v2844, %v2844
      %v2853 = vpack.c.b16 %v2845, %v2845
      %v2854 = vpack.c.b16 %v2846, %v2846
      %v2855 = vpack.c.b16 %v2847, %v2847
      %v2856 = vpack.c.b16 %v2848, %v2848
      %v2857 = vpack.c.b16 %v2849, %v2849
      %2866 = vst [vmem:[%s372] sm:$0xf] %v2850
      %2867 = vst [vmem:[%s372 + $0x4] sm:$0xf] %v2851
      %2868 = vst [vmem:[%s372 + $0x8] sm:$0xf] %v2852
      %2869 = vst [vmem:[%s372 + $0xc] sm:$0xf] %v2853
      %2870 = vst [vmem:[%s372 + $0x10] sm:$0xf] %v2854
      %2871 = vst [vmem:[%s372 + $0x14] sm:$0xf] %v2855
      %2872 = vst [vmem:[%s372 + $0x18] sm:$0xf] %v2856
      %2873 = vst [vmem:[%s372 + $0x1c] sm:$0xf] %v2857
      %p2874 = scmp.eq.s32.totalorder %s26, 0
      // Predicated region
      $region41: #{resnet_block_forward.7} parent=39 // pred_check
        %p2875 = pneg %p2874
      $region42: #{resnet_block_forward.7} parent=39 // pred_check_branch
        %2877 = sbr.rel (%p2875) target = $region44
      $region43: #{resnet_block_forward.7} parent=39 // pred_region
        %2878 = vst [vmem:[%s379] sm:$0x1] 0.0
        %2879 = vst [vmem:[%s385] sm:$0x1] 0.0
      $region44: #{resnet_block_forward.7} parent=39 // pred_fallthru
        _
      %v2880 = vld [vmem:[%s379] sm:$0x1]
      %v2881 = vadd.f32 %v2826, %v2827
      %v2882 = vadd.f32 %v2881, %v2828
      %v2883 = vadd.f32 %v2882, %v2829
      %v2884 = vadd.f32 %v2883, %v2830
      %v2885 = vadd.f32 %v2884, %v2831
      %v2886 = vadd.f32 %v2885, %v2832
      %v2887 = vadd.f32 %v2886, %v2833
      %v2888 = vrot.slane %v2887, 4
      %v2889 = vadd.f32 %v2887, %v2888
      %v2890 = vrot.slane %v2889, 2
      %v2891 = vadd.f32 %v2889, %v2890
      %v2892 = vrot.slane %v2891, 1
      %v2893 = vadd.f32 %v2891, %v2892
      %v2894 = vadd.f32 %v2880, %v2893
      %2895 = vst [vmem:[%s379] sm:$0x1] %v2894
      %v2896 = vld [vmem:[%s385] sm:$0x1]
      %v2897 = vmul.f32 %v2826, %v2826
      %v2898 = vmul.f32 %v2827, %v2827
      %v2899 = vmul.f32 %v2828, %v2828
      %v2900 = vmul.f32 %v2829, %v2829
      %v2901 = vmul.f32 %v2830, %v2830
      %v2902 = vmul.f32 %v2831, %v2831
      %v2903 = vmul.f32 %v2832, %v2832
      %v2904 = vmul.f32 %v2833, %v2833
      %v2905 = vadd.f32 %v2897, %v2898
      %v2906 = vadd.f32 %v2905, %v2899
      %v2907 = vadd.f32 %v2906, %v2900
      %v2908 = vadd.f32 %v2907, %v2901
      %v2909 = vadd.f32 %v2908, %v2902
      %v2910 = vadd.f32 %v2909, %v2903
      %v2911 = vadd.f32 %v2910, %v2904
      %v2912 = vrot.slane %v2911, 4
      %v2913 = vadd.f32 %v2911, %v2912
      %v2914 = vrot.slane %v2913, 2
      %v2915 = vadd.f32 %v2913, %v2914
      %v2916 = vrot.slane %v2915, 1
      %v2917 = vadd.f32 %v2915, %v2916
      %v2918 = vadd.f32 %v2896, %v2917
      %2919 = vst [vmem:[%s385] sm:$0x1] %v2918
      %s2920 = smul.u32 8, %s26
      %p2921 = scmp.lt.s32.totalorder %s24, 1
      %s2922 = scalar_select %p2921, %s24, 1
      %p2923 = scmp.lt.s32.totalorder %s2920, 7
      %s2924 = scalar_select %p2923, %s2920, 7
      %p2925 = scmp.lt.s32.totalorder %s25, 0
      %s2926 = scalar_select %p2925, %s25, 0
      %s2927 = sadd.s32 %s2926, %s2924
      %s2928 = smul.addr %s2922, 8
      %s2929 = sadd.s32 %s2927, %s2928
      %s2930 = smul.addr %s2929, 4
      %s2931 = scalar_lea.vmem %s5, %s2930
      %p2932 = scmp.lt.s32.totalorder %s24, 1
      %s2933 = scalar_select %p2932, %s24, 1
      %p2934 = scmp.lt.s32.totalorder %s25, 0
      %s2935 = scalar_select %p2934, %s25, 0
      %s2936 = sadd.s32 %s2935, %s2933
      %s2937 = scalar_lea.vmem %s6, %s2936
      %p2938 = scmp.lt.s32.totalorder %s24, 1
      %s2939 = scalar_select %p2938, %s24, 1
      %p2940 = scmp.lt.s32.totalorder %s25, 0
      %s2941 = scalar_select %p2940, %s25, 0
      %s2942 = sadd.s32 %s2941, %s2939
      %s2943 = scalar_lea.vmem %s7, %s2942
      // Predicated region
      $region45: #{resnet_block_forward.7} parent=39 // pred_check
        %p2944 = pneg %p180
      $region46: #{resnet_block_forward.7} parent=39 // pred_check_branch
        %2946 = sbr.rel (%p2944) target = $region48
      $region47: #{resnet_block_forward.7} parent=39 // pred_region
        %s2947 = smul.u32 8, %s26
      $region48: #{resnet_block_forward.7} parent=39 // pred_fallthru
        _
      // Predicated region
      $region49: #{resnet_block_forward.7} parent=39 // pred_check
        %p2948 = pneg %p208
      $region50: #{resnet_block_forward.7} parent=39 // pred_check_branch
        %2950 = sbr.rel (%p2948) target = $region52
      $region51: #{resnet_block_forward.7} parent=39 // pred_region
        _
      $region52: #{resnet_block_forward.7} parent=39 // pred_fallthru
        _
      // Predicated region
      $region53: #{resnet_block_forward.7} parent=39 // pred_check
        %p2951 = pneg %p236
      $region54: #{resnet_block_forward.7} parent=39 // pred_check_branch
        %2953 = sbr.rel (%p2951) target = $region56
      $region55: #{resnet_block_forward.7} parent=39 // pred_region
        _
      $region56: #{resnet_block_forward.7} parent=39 // pred_fallthru
        _
    $region40: #{resnet_block_forward.7} parent=5 // pred_fallthru
      _
    %p2954 = scmp.le.s32.totalorder 2, %s14
    // Predicated region
    $region57: #{resnet_block_forward.7} parent=5 // pred_check
      %p2955 = pneg %p2954
    $region58: #{resnet_block_forward.7} parent=5 // pred_check_branch
      %2957 = sbr.rel (%p2955) target = $region60
    $region59: #{resnet_block_forward.7} parent=5 // pred_region
      %s2958 = ssub.s32 %s14, 2
      // Predicated region
      $region61: #{resnet_block_forward.7} parent=59 // pred_check
        %p2959 = pneg %p186
      $region62: #{resnet_block_forward.7} parent=59 // pred_check_branch
        %2961 = sbr.rel (%p2959) target = $region64
      $region63: #{resnet_block_forward.7} parent=59 // pred_region
        %s2962 = smul.u32 8, %s29
        %p2963 = scmp.lt.s32.totalorder %s27, 1
        %s2964 = scalar_select %p2963, %s27, 1
        %p2965 = scmp.lt.s32.totalorder %s2962, 7
        %s2966 = scalar_select %p2965, %s2962, 7
        %p2967 = scmp.lt.s32.totalorder %s28, 0
        %s2968 = scalar_select %p2967, %s28, 0
        %s2969 = sadd.s32 %s2968, %s2966
        %s2970 = smul.addr %s2964, 8
        %s2971 = sadd.s32 %s2969, %s2970
        %s2972 = smul.addr %s2971, 4
        %s2973 = scalar_lea.vmem %s5, %s2972
      $region64: #{resnet_block_forward.7} parent=59 // pred_fallthru
        _
      // Predicated region
      $region65: #{resnet_block_forward.7} parent=59 // pred_check
        %p2974 = pneg %p214
      $region66: #{resnet_block_forward.7} parent=59 // pred_check_branch
        %2976 = sbr.rel (%p2974) target = $region68
      $region67: #{resnet_block_forward.7} parent=59 // pred_region
        %p2977 = scmp.lt.s32.totalorder %s27, 1
        %s2978 = scalar_select %p2977, %s27, 1
        %p2979 = scmp.lt.s32.totalorder %s28, 0
        %s2980 = scalar_select %p2979, %s28, 0
        %s2981 = sadd.s32 %s2980, %s2978
        %s2982 = scalar_lea.vmem %s6, %s2981
      $region68: #{resnet_block_forward.7} parent=59 // pred_fallthru
        _
      // Predicated region
      $region69: #{resnet_block_forward.7} parent=59 // pred_check
        %p2983 = pneg %p242
      $region70: #{resnet_block_forward.7} parent=59 // pred_check_branch
        %2985 = sbr.rel (%p2983) target = $region72
      $region71: #{resnet_block_forward.7} parent=59 // pred_region
        %p2986 = scmp.lt.s32.totalorder %s27, 1
        %s2987 = scalar_select %p2986, %s27, 1
        %p2988 = scmp.lt.s32.totalorder %s28, 0
        %s2989 = scalar_select %p2988, %s28, 0
        %s2990 = sadd.s32 %s2989, %s2987
        %s2991 = scalar_lea.vmem %s7, %s2990
      $region72: #{resnet_block_forward.7} parent=59 // pred_fallthru
        _
    $region60: #{resnet_block_forward.7} parent=5 // pred_fallthru
      _
  $region6: #{resnet_block_forward.7} parent=0 // loop_footer
    %s18 = sadd.s32 1, %s14
  $region7: #{resnet_block_forward.7} parent=0 // loop_footer_branch
    %13 = sbr.rel target = $region3
  $region8: #{resnet_block_forward.7} parent=0 // loop_exit
    _

// kernel: resnet_block_forward.8
$region0: #{resnet_block_forward.8}
  #allocation0 [shape = 'u32[]', space=smem, size = 0x4, offset = 0x4, fixed_abs, tag = 'smem constant byte address 0x4 - core index']
  #allocation1 [shape = 'u32[144,128]{1,0:T(1,128)}', space=vmem, size = 0x12000, scoped, tag = 'internal scratch']
  %s0 = inlined_call_operand.vmem [shape: bf16[2,10,10,128], index: 0, kind: input, shape index: {}]
  %s1 = inlined_call_operand.vmem [shape: bf16[9,128,128], index: 1, kind: input, shape index: {}]
  %s2 = inlined_call_operand.vmem [shape: f32[1,1,128], index: 2, kind: input, shape index: {}]
  %s3 = inlined_call_operand.vmem [shape: f32[1,1,128], index: 3, kind: input, shape index: {}]
  %s4 = inlined_call_operand.vmem [shape: f32[1,128], index: 4, kind: input, shape index: {}]
  %s5 = inlined_call_operand.vmem [shape: bf16[2,64,128], index: 5, kind: output, shape index: {0}]
  %s6 = inlined_call_operand.hbm [shape: f32[2,1,128], index: 6, kind: output, shape index: {1}]
  %s7 = inlined_call_operand.hbm [shape: f32[2,1,128], index: 7, kind: output, shape index: {2}]
  %8 = xla_tuple %s5, %s6, %s7
  %s9 = sld [smem:[#allocation0]]
  $region73: #{resnet_block_forward.8} parent=0
    _
  %s11 = ssub.s32 1, %s9
  %s12 = scalar_select 0, %s11, %s9
  $region1: #{resnet_block_forward.8} parent=0
    #allocation2 [shape = 'u8[1024]{0}', space=vmem, size = 0x400, scoped, tag = 'output window, operand 1']
    #allocation3 [shape = 's32[2]{0}', space=sflag, size = 0x8, scoped, tag = 'scoped memory for resnet_block_forward.8']
    #allocation4 [shape = 'u8[1024]{0}', space=vmem, size = 0x400, scoped, tag = 'output window, operand 2']
    #allocation5 [shape = 's32[2]{0}', space=sflag, size = 0x8, scoped, tag = 'scoped memory for resnet_block_forward.8']
    %13 = vsyncpa [#allocation3], 0
    %s14 = scalar_lea.sflag [#allocation3], 1
    %15 = vsyncpa %s14, 0
    %16 = vsyncpa [#allocation5], 0
    %s17 = scalar_lea.sflag [#allocation5], 1
    %18 = vsyncpa %s17, 0
    loop: start=0, step=1, limit=4
    $region2: #{resnet_block_forward.8} parent=1 // loop_pre_header
      _
    $region3: #{resnet_block_forward.8} parent=1 // loop_header
      %s20 = sphi 0, %s24
      %p21 = scmp.ge.s32.totalorder %s20, 4
      %s27 = sphi 0, %s46
      %s28 = sphi 0, %s42
      %s29 = sphi 0, %s38
      %s30 = sphi 0, %s27
      %s31 = sphi 0, %s28
      %s32 = sphi 0, %s29
      %s33 = sphi 0, %s30
      %s34 = sphi 0, %s31
      %s35 = sphi 0, %s32
      %s49 = sphi 0, %s51
      %s52 = sphi 0, %s49
      %s53 = sphi 0, %s52
      %s69 = sphi 0, %s53
      %s75 = sphi 0, %s77
      %s78 = sphi 0, %s75
      %s79 = sphi 0, %s78
      %s95 = sphi 0, %s79
      %s99 = sphi 0, %s99
      %s101 = sphi 0, %s99
      %s102 = sphi 0, %s101
      %s116 = sphi 0, %s102
      %s120 = sphi 0, %s120
      %s122 = sphi 0, %s120
      %s123 = sphi 0, %s122
      %s137 = sphi 0, %s123
      %s143 = sphi 0, %s145
      %s146 = sphi 0, %s143
      %s147 = sphi 0, %s146
      %s163 = sphi 0, %s147
      %s173 = sphi 0, %s175
      %s176 = sphi 0, %s173
      %s177 = sphi 0, %s176
      %s193 = sphi 0, %s177
      %s201 = sphi 0, %s203
      %s204 = sphi 0, %s201
      %s205 = sphi 0, %s204
      %s221 = sphi 0, %s205
      %s229 = sphi 0, %s231
      %s232 = sphi 0, %s229
      %s233 = sphi 0, %s232
      %s249 = sphi 0, %s233
    $region4: #{resnet_block_forward.8} parent=1 // loop_header_branch
      %23 = sbr.rel (%p21) target = $region8
    $region5: #{resnet_block_forward.8} parent=1 // loop_body
      %s25 = ssub.s32 %s20, 1
      %s26 = ssub.s32 %s20, 2
      %s36 = sadd.s32 1, %s29
      %p37 = scmp.ge.s32.totalorder %s36, 1
      %s38 = scalar_select %p37, 0, %s36
      %s39 = sadd.s32 1, %s28
      %s40 = scalar_select %p37, %s39, %s28
      %p41 = scmp.ge.s32.totalorder %s40, 1
      %s42 = scalar_select %p41, 0, %s40
      %s43 = sadd.s32 1, %s27
      %s44 = scalar_select %p41, %s43, %s27
      %p45 = scmp.ge.s32.totalorder %s44, 2
      %s46 = scalar_select %p45, 0, %s44
      %s47 = ssub.s32 %s27, %s46
      %p48 = scmp.eq.s32.totalorder %s47, 0
      %s50 = sadd.s32 %s49, 1
      %s51 = scalar_select %p48, %s49, %s50
      %p54 = pneg %p48
      %p55 = scmp.eq.s32.totalorder %s20, 1
      %p56 = por %p54, %p55
      %p57 = scmp.ne.s32.totalorder %s49, %s52
      %p58 = scmp.eq.s32.totalorder %s20, 0
      %p59 = por %p57, %p58
      %p60 = scmp.ne.s32.totalorder %s49, %s52
      %p61 = scmp.eq.s32.totalorder %s25, 1
      %p62 = por %p60, %p61
      %p63 = scmp.ne.s32.totalorder %s52, %s53
      %p64 = scmp.eq.s32.totalorder %s25, 0
      %p65 = por %p63, %p64
      %p66 = scmp.ne.s32.totalorder %s52, %s53
      %p67 = scmp.eq.s32.totalorder %s26, 1
      %p68 = por %p66, %p67
      %p70 = scmp.ne.s32.totalorder %s53, %s69
      %p71 = scmp.eq.s32.totalorder %s26, 0
      %p72 = por %p70, %p71
      %s73 = ssub.s32 %s28, %s42
      %p74 = scmp.eq.s32.totalorder %s73, 0
      %s76 = sadd.s32 %s75, 1
      %s77 = scalar_select %p74, %s75, %s76
      %p80 = pneg %p74
      %p81 = scmp.eq.s32.totalorder %s20, 1
      %p82 = por %p80, %p81
      %p83 = scmp.ne.s32.totalorder %s75, %s78
      %p84 = scmp.eq.s32.totalorder %s20, 0
      %p85 = por %p83, %p84
      %p86 = scmp.ne.s32.totalorder %s75, %s78
      %p87 = scmp.eq.s32.totalorder %s25, 1
      %p88 = por %p86, %p87
      %p89 = scmp.ne.s32.totalorder %s78, %s79
      %p90 = scmp.eq.s32.totalorder %s25, 0
      %p91 = por %p89, %p90
      %p92 = scmp.ne.s32.totalorder %s78, %s79
      %p93 = scmp.eq.s32.totalorder %s26, 1
      %p94 = por %p92, %p93
      %p96 = scmp.ne.s32.totalorder %s79, %s95
      %p97 = scmp.eq.s32.totalorder %s26, 0
      %p98 = por %p96, %p97
      %s100 = sadd.s32 %s99, 1
      %p103 = scmp.eq.s32.totalorder %s20, 1
      %p104 = scmp.ne.s32.totalorder %s99, %s101
      %p105 = scmp.eq.s32.totalorder %s20, 0
      %p106 = por %p104, %p105
      %p107 = scmp.ne.s32.totalorder %s99, %s101
      %p108 = scmp.eq.s32.totalorder %s25, 1
      %p109 = por %p107, %p108
      %p110 = scmp.ne.s32.totalorder %s101, %s102
      %p111 = scmp.eq.s32.totalorder %s25, 0
      %p112 = por %p110, %p111
      %p113 = scmp.ne.s32.totalorder %s101, %s102
      %p114 = scmp.eq.s32.totalorder %s26, 1
      %p115 = por %p113, %p114
      %p117 = scmp.ne.s32.totalorder %s102, %s116
      %p118 = scmp.eq.s32.totalorder %s26, 0
      %p119 = por %p117, %p118
      %s121 = sadd.s32 %s120, 1
      %p124 = scmp.eq.s32.totalorder %s20, 1
      %p125 = scmp.ne.s32.totalorder %s120, %s122
      %p126 = scmp.eq.s32.totalorder %s20, 0
      %p127 = por %p125, %p126
      %p128 = scmp.ne.s32.totalorder %s120, %s122
      %p129 = scmp.eq.s32.totalorder %s25, 1
      %p130 = por %p128, %p129
      %p131 = scmp.ne.s32.totalorder %s122, %s123
      %p132 = scmp.eq.s32.totalorder %s25, 0
      %p133 = por %p131, %p132
      %p134 = scmp.ne.s32.totalorder %s122, %s123
      %p135 = scmp.eq.s32.totalorder %s26, 1
      %p136 = por %p134, %p135
      %p138 = scmp.ne.s32.totalorder %s123, %s137
      %p139 = scmp.eq.s32.totalorder %s26, 0
      %p140 = por %p138, %p139
      %s141 = ssub.s32 %s28, %s42
      %p142 = scmp.eq.s32.totalorder %s141, 0
      %s144 = sadd.s32 %s143, 1
      %s145 = scalar_select %p142, %s143, %s144
      %p148 = pneg %p142
      %p149 = scmp.eq.s32.totalorder %s20, 1
      %p150 = por %p148, %p149
      %p151 = scmp.ne.s32.totalorder %s143, %s146
      %p152 = scmp.eq.s32.totalorder %s20, 0
      %p153 = por %p151, %p152
      %p154 = scmp.ne.s32.totalorder %s143, %s146
      %p155 = scmp.eq.s32.totalorder %s25, 1
      %p156 = por %p154, %p155
      %p157 = scmp.ne.s32.totalorder %s146, %s147
      %p158 = scmp.eq.s32.totalorder %s25, 0
      %p159 = por %p157, %p158
      %p160 = scmp.ne.s32.totalorder %s146, %s147
      %p161 = scmp.eq.s32.totalorder %s26, 1
      %p162 = por %p160, %p161
      %p164 = scmp.ne.s32.totalorder %s147, %s163
      %p165 = scmp.eq.s32.totalorder %s26, 0
      %p166 = por %p164, %p165
      %s167 = ssub.s32 %s27, %s46
      %s168 = ssub.s32 %s29, %s38
      %s169 = sor.u32 %s167, %s168
      %s170 = ssub.s32 %s28, %s42
      %s171 = sor.u32 %s169, %s170
      %p172 = scmp.eq.s32.totalorder %s171, 0
      %s174 = sadd.s32 %s173, 1
      %s175 = scalar_select %p172, %s173, %s174
      %p178 = pneg %p172
      %p179 = scmp.eq.s32.totalorder %s20, 1
      %p180 = por %p178, %p179
      %p181 = scmp.ne.s32.totalorder %s173, %s176
      %p182 = scmp.eq.s32.totalorder %s20, 0
      %p183 = por %p181, %p182
      %p184 = scmp.ne.s32.totalorder %s173, %s176
      %p185 = scmp.eq.s32.totalorder %s25, 1
      %p186 = por %p184, %p185
      %p187 = scmp.ne.s32.totalorder %s176, %s177
      %p188 = scmp.eq.s32.totalorder %s25, 0
      %p189 = por %p187, %p188
      %p190 = scmp.ne.s32.totalorder %s176, %s177
      %p191 = scmp.eq.s32.totalorder %s26, 1
      %p192 = por %p190, %p191
      %p194 = scmp.ne.s32.totalorder %s177, %s193
      %p195 = scmp.eq.s32.totalorder %s26, 0
      %p196 = por %p194, %p195
      %s197 = ssub.s32 %s27, %s46
      %s198 = ssub.s32 %s28, %s42
      %s199 = sor.u32 %s197, %s198
      %p200 = scmp.eq.s32.totalorder %s199, 0
      %s202 = sadd.s32 %s201, 1
      %s203 = scalar_select %p200, %s201, %s202
      %p206 = pneg %p200
      %p207 = scmp.eq.s32.totalorder %s20, 1
      %p208 = por %p206, %p207
      %p209 = scmp.ne.s32.totalorder %s201, %s204
      %p210 = scmp.eq.s32.totalorder %s20, 0
      %p211 = por %p209, %p210
      %p212 = scmp.ne.s32.totalorder %s201, %s204
      %p213 = scmp.eq.s32.totalorder %s25, 1
      %p214 = por %p212, %p213
      %p215 = scmp.ne.s32.totalorder %s204, %s205
      %p216 = scmp.eq.s32.totalorder %s25, 0
      %p217 = por %p215, %p216
      %p218 = scmp.ne.s32.totalorder %s204, %s205
      %p219 = scmp.eq.s32.totalorder %s26, 1
      %p220 = por %p218, %p219
      %p222 = scmp.ne.s32.totalorder %s205, %s221
      %p223 = scmp.eq.s32.totalorder %s26, 0
      %p224 = por %p222, %p223
      %s225 = ssub.s32 %s27, %s46
      %s226 = ssub.s32 %s28, %s42
      %s227 = sor.u32 %s225, %s226
      %p228 = scmp.eq.s32.totalorder %s227, 0
      %s230 = sadd.s32 %s229, 1
      %s231 = scalar_select %p228, %s229, %s230
      %p234 = pneg %p228
      %p235 = scmp.eq.s32.totalorder %s20, 1
      %p236 = por %p234, %p235
      %p237 = scmp.ne.s32.totalorder %s229, %s232
      %p238 = scmp.eq.s32.totalorder %s20, 0
      %p239 = por %p237, %p238
      %p240 = scmp.ne.s32.totalorder %s229, %s232
      %p241 = scmp.eq.s32.totalorder %s25, 1
      %p242 = por %p240, %p241
      %p243 = scmp.ne.s32.totalorder %s232, %s233
      %p244 = scmp.eq.s32.totalorder %s25, 0
      %p245 = por %p243, %p244
      %p246 = scmp.ne.s32.totalorder %s232, %s233
      %p247 = scmp.eq.s32.totalorder %s26, 1
      %p248 = por %p246, %p247
      %p250 = scmp.ne.s32.totalorder %s233, %s249
      %p251 = scmp.eq.s32.totalorder %s26, 0
      %p252 = por %p250, %p251
      %p253 = scmp.le.s32.totalorder 1, %s20
      %p254 = scmp.lt.s32.totalorder %s20, 3
      %p255 = pnand %p253, %p254
      %p256 = pneg %p255
      // Predicated region
      $region9: #{resnet_block_forward.8} parent=5 // pred_check
        _
      $region10: #{resnet_block_forward.8} parent=5 // pred_check_branch
        %258 = sbr.rel (%p255) target = $region12
      $region11: #{resnet_block_forward.8} parent=5 // pred_region
        %s259 = ssub.s32 %s20, 1
        // Predicated region
        $region13: #{resnet_block_forward.8} parent=11 // pred_check
          %p260 = pneg %p91
        $region14: #{resnet_block_forward.8} parent=11 // pred_check_branch
          %262 = sbr.rel (%p260) target = $region16
        $region15: #{resnet_block_forward.8} parent=11 // pred_region
          %p263 = scmp.lt.s32.totalorder %s31, 0
          %s264 = scalar_select %p263, %s31, 0
          %s265 = smul.addr %s264, 4
          %s266 = scalar_lea.vmem %s1, %s265
        $region16: #{resnet_block_forward.8} parent=11 // pred_fallthru
          _
        // Predicated region
        $region17: #{resnet_block_forward.8} parent=11 // pred_check
          %p267 = pneg %p112
        $region18: #{resnet_block_forward.8} parent=11 // pred_check_branch
          %269 = sbr.rel (%p267) target = $region20
        $region19: #{resnet_block_forward.8} parent=11 // pred_region
          _
        $region20: #{resnet_block_forward.8} parent=11 // pred_fallthru
          _
        // Predicated region
        $region21: #{resnet_block_forward.8} parent=11 // pred_check
          %p270 = pneg %p133
        $region22: #{resnet_block_forward.8} parent=11 // pred_check_branch
          %272 = sbr.rel (%p270) target = $region24
        $region23: #{resnet_block_forward.8} parent=11 // pred_region
          _
        $region24: #{resnet_block_forward.8} parent=11 // pred_fallthru
          _
        // Predicated region
        $region25: #{resnet_block_forward.8} parent=11 // pred_check
          %p273 = pneg %p159
        $region26: #{resnet_block_forward.8} parent=11 // pred_check_branch
          %275 = sbr.rel (%p273) target = $region28
        $region27: #{resnet_block_forward.8} parent=11 // pred_region
          %p276 = scmp.lt.s32.totalorder %s31, 0
          %s277 = scalar_select %p276, %s31, 0
          %s278 = scalar_lea.vmem %s4, %s277
        $region28: #{resnet_block_forward.8} parent=11 // pred_fallthru
          _
      $region12: #{resnet_block_forward.8} parent=5 // pred_fallthru
        _
      %p279 = scmp.lt.s32.totalorder %s20, 2
      // Predicated region
      $region29: #{resnet_block_forward.8} parent=5 // pred_check
        %p280 = pneg %p279
      $region30: #{resnet_block_forward.8} parent=5 // pred_check_branch
        %282 = sbr.rel (%p280) target = $region32
      $region31: #{resnet_block_forward.8} parent=5 // pred_region
        // Predicated region
        $region33: #{resnet_block_forward.8} parent=31 // pred_check
          %p283 = pneg %p59
        $region34: #{resnet_block_forward.8} parent=31 // pred_check_branch
          %285 = sbr.rel (%p283) target = $region36
        $region35: #{resnet_block_forward.8} parent=31 // pred_region
          %p286 = scmp.lt.s32.totalorder %s27, 1
          %s287 = scalar_select %p286, %s27, 1
          %s288 = smul.addr %s287, 20
          %s289 = smul.addr %s288, 4
          %s290 = scalar_lea.vmem %s0, %s289
        $region36: #{resnet_block_forward.8} parent=31 // pred_fallthru
          _
      $region32: #{resnet_block_forward.8} parent=5 // pred_fallthru
        _
      %p291 = scmp.le.s32.totalorder 1, %s20
      %p292 = scmp.lt.s32.totalorder %s20, 3
      %p293 = pnand %p291, %p292
      %p294 = pneg %p293
      // Predicated region
      $region37: #{resnet_block_forward.8} parent=5 // pred_check
        _
      $region38: #{resnet_block_forward.8} parent=5 // pred_check_branch
        %296 = sbr.rel (%p293) target = $region40
      $region39: #{resnet_block_forward.8} parent=5 // pred_region
        %s297 = ssub.s32 %s20, 1
        %p298 = scmp.lt.s32.totalorder %s30, 1
        %s299 = scalar_select %p298, %s30, 1
        %s300 = smul.addr %s299, 20
        %s301 = smul.addr %s300, 4
        %s302 = scalar_lea.vmem %s0, %s301
        %p303 = pneg %p65
        %p304 = pneg %p62
        %p305 = scmp.lt.s32.totalorder %s31, 0
        %s306 = scalar_select %p305, %s31, 0
        %s307 = smul.addr %s306, 4
        %s308 = scalar_lea.vmem %s1, %s307
        %p309 = pneg %p91
        %p310 = pneg %p88
        %p311 = pneg %p112
        %p312 = pneg %p109
        %p313 = pneg %p133
        %p314 = pneg %p130
        %p315 = scmp.lt.s32.totalorder %s31, 0
        %s316 = scalar_select %p315, %s31, 0
        %s317 = scalar_lea.vmem %s4, %s316
        %p318 = pneg %p159
        %p319 = pneg %p156
        %p320 = pneg %p189
        %p321 = pneg %p186
        %s322 = smul.u32 8, %s32
        %p323 = scmp.lt.s32.totalorder %s30, 1
        %s324 = scalar_select %p323, %s30, 1
        %p325 = scmp.lt.s32.totalorder %s322, 7
        %s326 = scalar_select %p325, %s322, 7
        %p327 = scmp.lt.s32.totalorder %s31, 0
        %s328 = scalar_select %p327, %s31, 0
        %s329 = sadd.s32 %s328, %s326
        %s330 = smul.addr %s324, 8
        %s331 = sadd.s32 %s329, %s330
        %s332 = smul.addr %s331, 4
        %s333 = scalar_lea.vmem %s5, %s332
        %p334 = pneg %p217
        %p335 = pneg %p214
        %s336 = sand.u32 %s204, 1
        %s337 = scalar_lea.sflag [#allocation3], %s336
        %s338 = sand.u32 %s204, 1
        %s339 = scalar_lea.vmem [#allocation2], %s338
        %p340 = pneg %p245
        %p341 = pneg %p242
        %s342 = sand.u32 %s232, 1
        %s343 = scalar_lea.sflag [#allocation5], %s342
        %s344 = sand.u32 %s232, 1
        %s345 = scalar_lea.vmem [#allocation4], %s344
        %p346 = scmp.lt.s32.totalorder %s30, 1
        %s347 = scalar_select %p346, %s30, 1
        %s348 = smul.addr %s347, 20
        %s349 = smul.addr %s348, 4
        %s350 = scalar_lea.vmem %s0, %s349
        %p351 = scmp.lt.s32.totalorder %s31, 0
        %s352 = scalar_select %p351, %s31, 0
        %s353 = smul.addr %s352, 4
        %s354 = scalar_lea.vmem %s1, %s353
        %p355 = scmp.lt.s32.totalorder %s31, 0
        %s356 = scalar_select %p355, %s31, 0
        %s357 = scalar_lea.vmem %s4, %s356
        %s358 = smul.u32 8, %s32
        %p359 = scmp.lt.s32.totalorder %s30, 1
        %s360 = scalar_select %p359, %s30, 1
        %p361 = scmp.lt.s32.totalorder %s358, 7
        %s362 = scalar_select %p361, %s358, 7
        %p363 = scmp.lt.s32.totalorder %s31, 0
        %s364 = scalar_select %p363, %s31, 0
        %s365 = sadd.s32 %s364, %s362
        %s366 = smul.addr %s360, 8
        %s367 = sadd.s32 %s365, %s366
        %s368 = smul.addr %s367, 4
        %s369 = scalar_lea.vmem %s5, %s368
        %s370 = smul.u32 8, %s32
        %s372 = smul.u32 %s32, 8
        %v373 = vstv %s372
        %v374 = vadd.s32 %v373, 1
        %v375 = vadd.s32 %v373, 2
        %v376 = vadd.s32 %v373, 3
        %v377 = vadd.s32 %v373, 4
        %v378 = vadd.s32 %v373, 5
        %v379 = vadd.s32 %v373, 6
        %v380 = vadd.s32 %v373, 7
        %v381 = vlaneseq
        %v382 = vshrl.u32 %v381, 7
        %s383 = smul.u32 %s372, 2
        %s384 = smul.addr %s383, 4
        %s385 = scalar_lea.vmem %s350, %s384
        %v386 = vld [vmem:[%s385] sm:$0xf]
        %v387 = vld [vmem:[%s385 + $0x8] sm:$0xf]
        %v388 = vld [vmem:[%s385 + $0x10] sm:$0xf]
        %v389 = vld [vmem:[%s385 + $0x18] sm:$0xf]
        %v390 = vld [vmem:[%s385 + $0x20] sm:$0xf]
        %v391 = vld [vmem:[%s385 + $0x28] sm:$0xf]
        %v392 = vld [vmem:[%s385 + $0x30] sm:$0xf]
        %v393 = vld [vmem:[%s385 + $0x38] sm:$0xf]
        %v394 = vunpack.c.l.bf16 %v386
        %v395 = vunpack.c.l.bf16 %v387
        %v396 = vunpack.c.l.bf16 %v388
        %v397 = vunpack.c.l.bf16 %v389
        %v398 = vunpack.c.l.bf16 %v390
        %v399 = vunpack.c.l.bf16 %v391
        %v400 = vunpack.c.l.bf16 %v392
        %v401 = vunpack.c.l.bf16 %v393
        %v402 = vld [vmem:[%s2] sm:$0x1]
        %v404 = vlaneseq
        %v405 = vshrl.u32 %v404, 7
        %v406 = vsub.s32 0, %v405
        %v407 = vrot.slane %v402, %v406
        %v409 = vmul.f32 %v394, %v407
        %v410 = vmul.f32 %v395, %v407
        %v411 = vmul.f32 %v396, %v407
        %v412 = vmul.f32 %v397, %v407
        %v413 = vmul.f32 %v398, %v407
        %v414 = vmul.f32 %v399, %v407
        %v415 = vmul.f32 %v400, %v407
        %v416 = vmul.f32 %v401, %v407
        %v417 = vld [vmem:[%s3] sm:$0x1]
        %v419 = vlaneseq
        %v420 = vshrl.u32 %v419, 7
        %v421 = vsub.s32 0, %v420
        %v422 = vrot.slane %v417, %v421
        %v424 = vadd.f32 %v409, %v422
        %v425 = vadd.f32 %v410, %v422
        %v426 = vadd.f32 %v411, %v422
        %v427 = vadd.f32 %v412, %v422
        %v428 = vadd.f32 %v413, %v422
        %v429 = vadd.f32 %v414, %v422
        %v430 = vadd.f32 %v415, %v422
        %v431 = vadd.f32 %v416, %v422
        %v432 = vmax.f32 %v424, 0.0
        %v433 = vmax.f32 %v425, 0.0
        %v434 = vmax.f32 %v426, 0.0
        %v435 = vmax.f32 %v427, 0.0
        %v436 = vmax.f32 %v428, 0.0
        %v437 = vmax.f32 %v429, 0.0
        %v438 = vmax.f32 %v430, 0.0
        %v439 = vmax.f32 %v431, 0.0
        %vm440 = vcmp.ge.s32.totalorder %v373, 1
        %vm441 = vcmp.ge.s32.totalorder %v374, 1
        %vm442 = vcmp.ge.s32.totalorder %v375, 1
        %vm443 = vcmp.ge.s32.totalorder %v376, 1
        %vm444 = vcmp.ge.s32.totalorder %v377, 1
        %vm445 = vcmp.ge.s32.totalorder %v378, 1
        %vm446 = vcmp.ge.s32.totalorder %v379, 1
        %vm447 = vcmp.ge.s32.totalorder %v380, 1
        %vm448 = vcmp.lt.s32.totalorder %v373, 9
        %vm449 = vcmp.lt.s32.totalorder %v374, 9
        %vm450 = vcmp.lt.s32.totalorder %v375, 9
        %vm451 = vcmp.lt.s32.totalorder %v376, 9
        %vm452 = vcmp.lt.s32.totalorder %v377, 9
        %vm453 = vcmp.lt.s32.totalorder %v378, 9
        %vm454 = vcmp.lt.s32.totalorder %v379, 9
        %vm455 = vcmp.lt.s32.totalorder %v380, 9
        %vm456 = vmand %vm440, %vm448
        %vm457 = vmand %vm441, %vm449
        %vm458 = vmand %vm442, %vm450
        %vm459 = vmand %vm443, %vm451
        %vm460 = vmand %vm444, %vm452
        %vm461 = vmand %vm445, %vm453
        %vm462 = vmand %vm446, %vm454
        %vm463 = vmand %vm447, %vm455
        %vm464 = vcmp.ge.s32.totalorder %v382, 1
        %vm465 = vmand %vm456, %vm464
        %vm466 = vmand %vm457, %vm464
        %vm467 = vmand %vm458, %vm464
        %vm468 = vmand %vm459, %vm464
        %vm469 = vmand %vm460, %vm464
        %vm470 = vmand %vm461, %vm464
        %vm471 = vmand %vm462, %vm464
        %vm472 = vmand %vm463, %vm464
        %vm473 = vcmp.lt.s32.totalorder %v382, 9
        %vm474 = vmand %vm465, %vm473
        %vm475 = vmand %vm466, %vm473
        %vm476 = vmand %vm467, %vm473
        %vm477 = vmand %vm468, %vm473
        %vm478 = vmand %vm469, %vm473
        %vm479 = vmand %vm470, %vm473
        %vm480 = vmand %vm471, %vm473
        %vm481 = vmand %vm472, %vm473
        %v482 = vsel %vm474, 1, 0
        %v483 = vsel %vm475, 1, 0
        %v484 = vsel %vm476, 1, 0
        %v485 = vsel %vm477, 1, 0
        %v486 = vsel %vm478, 1, 0
        %v487 = vsel %vm479, 1, 0
        %v488 = vsel %vm480, 1, 0
        %v489 = vsel %vm481, 1, 0
        %vm490 = vcmp.eq.s32.totalorder %v482, 1
        %vm491 = vcmp.eq.s32.totalorder %v483, 1
        %vm492 = vcmp.eq.s32.totalorder %v484, 1
        %vm493 = vcmp.eq.s32.totalorder %v485, 1
        %vm494 = vcmp.eq.s32.totalorder %v486, 1
        %vm495 = vcmp.eq.s32.totalorder %v487, 1
        %vm496 = vcmp.eq.s32.totalorder %v488, 1
        %vm497 = vcmp.eq.s32.totalorder %v489, 1
        %v498 = vsel %vm490, %v432, 0.0
        %v499 = vsel %vm491, %v433, 0.0
        %v500 = vsel %vm492, %v434, 0.0
        %v501 = vsel %vm493, %v435, 0.0
        %v502 = vsel %vm494, %v436, 0.0
        %v503 = vsel %vm495, %v437, 0.0
        %v504 = vsel %vm496, %v438, 0.0
        %v505 = vsel %vm497, %v439, 0.0
        %v506 = vpack.c.bf16 %v498, %v498
        %v507 = vpack.c.bf16 %v499, %v499
        %v508 = vpack.c.bf16 %v500, %v500
        %v509 = vpack.c.bf16 %v501, %v501
        %v510 = vpack.c.bf16 %v502, %v502
        %v511 = vpack.c.bf16 %v503, %v503
        %v512 = vpack.c.bf16 %v504, %v504
        %v513 = vpack.c.bf16 %v505, %v505
        %v514 = vld [vmem:[%s354] sm:$0xf]
        %v515 = vld [vmem:[%s354 + $0x4] sm:$0xf]
        %v516 = vld [vmem:[%s354 + $0x8] sm:$0xf]
        %v517 = vld [vmem:[%s354 + $0xc] sm:$0xf]
        %v518 = vld [vmem:[%s354 + $0x10] sm:$0xf]
        %v519 = vld [vmem:[%s354 + $0x14] sm:$0xf]
        %v520 = vld [vmem:[%s354 + $0x18] sm:$0xf]
        %v521 = vld [vmem:[%s354 + $0x1c] sm:$0xf]
        %v522 = vld [vmem:[%s354 + $0x20] sm:$0xf]
        %v523 = vld [vmem:[%s354 + $0x24] sm:$0xf]
        %v524 = vld [vmem:[%s354 + $0x28] sm:$0xf]
        %v525 = vld [vmem:[%s354 + $0x2c] sm:$0xf]
        %v526 = vld [vmem:[%s354 + $0x30] sm:$0xf]
        %v527 = vld [vmem:[%s354 + $0x34] sm:$0xf]
        %v528 = vld [vmem:[%s354 + $0x38] sm:$0xf]
        %v529 = vld [vmem:[%s354 + $0x3c] sm:$0xf]
        %v530 = vld [vmem:[%s385 + $0x4] sm:$0x1]
        %v531 = vld [vmem:[%s385 + $0xc] sm:$0x1]
        %v532 = vld [vmem:[%s385 + $0x14] sm:$0x1]
        %v533 = vld [vmem:[%s385 + $0x1c] sm:$0x1]
        %v534 = vld [vmem:[%s385 + $0x24] sm:$0x1]
        %v535 = vld [vmem:[%s385 + $0x2c] sm:$0x1]
        %v536 = vld [vmem:[%s385 + $0x34] sm:$0x1]
        %v537 = vld [vmem:[%s385 + $0x3c] sm:$0x1]
        %v538 = vunpack.c.l.bf16 %v530
        %v539 = vunpack.c.l.bf16 %v531
        %v540 = vunpack.c.l.bf16 %v532
        %v541 = vunpack.c.l.bf16 %v533
        %v542 = vunpack.c.l.bf16 %v534
        %v543 = vunpack.c.l.bf16 %v535
        %v544 = vunpack.c.l.bf16 %v536
        %v545 = vunpack.c.l.bf16 %v537
        %v546 = vmul.f32 %v538, %v407
        %v547 = vmul.f32 %v539, %v407
        %v548 = vmul.f32 %v540, %v407
        %v549 = vmul.f32 %v541, %v407
        %v550 = vmul.f32 %v542, %v407
        %v551 = vmul.f32 %v543, %v407
        %v552 = vmul.f32 %v544, %v407
        %v553 = vmul.f32 %v545, %v407
        %v554 = vadd.f32 %v546, %v422
        %v555 = vadd.f32 %v547, %v422
        %v556 = vadd.f32 %v548, %v422
        %v557 = vadd.f32 %v549, %v422
        %v558 = vadd.f32 %v550, %v422
        %v559 = vadd.f32 %v551, %v422
        %v560 = vadd.f32 %v552, %v422
        %v561 = vadd.f32 %v553, %v422
        %v562 = vmax.f32 %v554, 0.0
        %v563 = vmax.f32 %v555, 0.0
        %v564 = vmax.f32 %v556, 0.0
        %v565 = vmax.f32 %v557, 0.0
        %v566 = vmax.f32 %v558, 0.0
        %v567 = vmax.f32 %v559, 0.0
        %v568 = vmax.f32 %v560, 0.0
        %v569 = vmax.f32 %v561, 0.0
        %v570 = vadd.s32 %v382, 1
        %vm571 = vcmp.ge.s32.totalorder %v570, 1
        %vm572 = vmand %vm456, %vm571
        %vm573 = vmand %vm457, %vm571
        %vm574 = vmand %vm458, %vm571
        %vm575 = vmand %vm459, %vm571
        %vm576 = vmand %vm460, %vm571
        %vm577 = vmand %vm461, %vm571
        %vm578 = vmand %vm462, %vm571
        %vm579 = vmand %vm463, %vm571
        %vm580 = vcmp.lt.s32.totalorder %v570, 9
        %vm581 = vmand %vm572, %vm580
        %vm582 = vmand %vm573, %vm580
        %vm583 = vmand %vm574, %vm580
        %vm584 = vmand %vm575, %vm580
        %vm585 = vmand %vm576, %vm580
        %vm586 = vmand %vm577, %vm580
        %vm587 = vmand %vm578, %vm580
        %vm588 = vmand %vm579, %vm580
        %v589 = vsel %vm581, 1, 0
        %v590 = vsel %vm582, 1, 0
        %v591 = vsel %vm583, 1, 0
        %v592 = vsel %vm584, 1, 0
        %v593 = vsel %vm585, 1, 0
        %v594 = vsel %vm586, 1, 0
        %v595 = vsel %vm587, 1, 0
        %v596 = vsel %vm588, 1, 0
        %vm597 = vcmp.eq.s32.totalorder %v589, 1
        %vm598 = vcmp.eq.s32.totalorder %v590, 1
        %vm599 = vcmp.eq.s32.totalorder %v591, 1
        %vm600 = vcmp.eq.s32.totalorder %v592, 1
        %vm601 = vcmp.eq.s32.totalorder %v593, 1
        %vm602 = vcmp.eq.s32.totalorder %v594, 1
        %vm603 = vcmp.eq.s32.totalorder %v595, 1
        %vm604 = vcmp.eq.s32.totalorder %v596, 1
        %vm621 = vcmask 1046528
        %v622 = vrot.slane %v432, 1
        %v623 = vrot.slane %v562, 1
        %v624 = vsel %vm621, %v622, %v623
        %v625 = vrot.slane %v433, 1
        %v626 = vrot.slane %v563, 1
        %v627 = vsel %vm621, %v625, %v626
        %v628 = vrot.slane %v434, 1
        %v629 = vrot.slane %v564, 1
        %v630 = vsel %vm621, %v628, %v629
        %v631 = vrot.slane %v435, 1
        %v632 = vrot.slane %v565, 1
        %v633 = vsel %vm621, %v631, %v632
        %v634 = vrot.slane %v436, 1
        %v635 = vrot.slane %v566, 1
        %v636 = vsel %vm621, %v634, %v635
        %v637 = vrot.slane %v437, 1
        %v638 = vrot.slane %v567, 1
        %v639 = vsel %vm621, %v637, %v638
        %v640 = vrot.slane %v438, 1
        %v641 = vrot.slane %v568, 1
        %v642 = vsel %vm621, %v640, %v641
        %v643 = vrot.slane %v439, 1
        %v644 = vrot.slane %v569, 1
        %v645 = vsel %vm621, %v643, %v644
        %v654 = vsel %vm597, %v624, 0.0
        %v655 = vsel %vm598, %v627, 0.0
        %v656 = vsel %vm599, %v630, 0.0
        %v657 = vsel %vm600, %v633, 0.0
        %v658 = vsel %vm601, %v636, 0.0
        %v659 = vsel %vm602, %v639, 0.0
        %v660 = vsel %vm603, %v642, 0.0
        %v661 = vsel %vm604, %v645, 0.0
        %v662 = vpack.c.bf16 %v654, %v654
        %v663 = vpack.c.bf16 %v655, %v655
        %v664 = vpack.c.bf16 %v656, %v656
        %v665 = vpack.c.bf16 %v657, %v657
        %v666 = vpack.c.bf16 %v658, %v658
        %v667 = vpack.c.bf16 %v659, %v659
        %v668 = vpack.c.bf16 %v660, %v660
        %v669 = vpack.c.bf16 %v661, %v661
        %s670 = scalar_lea.vmem %s354, 64
        %v671 = vld [vmem:[%s670] sm:$0xf]
        %v672 = vld [vmem:[%s670 + $0x4] sm:$0xf]
        %v673 = vld [vmem:[%s670 + $0x8] sm:$0xf]
        %v674 = vld [vmem:[%s670 + $0xc] sm:$0xf]
        %v675 = vld [vmem:[%s670 + $0x10] sm:$0xf]
        %v676 = vld [vmem:[%s670 + $0x14] sm:$0xf]
        %v677 = vld [vmem:[%s670 + $0x18] sm:$0xf]
        %v678 = vld [vmem:[%s670 + $0x1c] sm:$0xf]
        %v679 = vld [vmem:[%s670 + $0x20] sm:$0xf]
        %v680 = vld [vmem:[%s670 + $0x24] sm:$0xf]
        %v681 = vld [vmem:[%s670 + $0x28] sm:$0xf]
        %v682 = vld [vmem:[%s670 + $0x2c] sm:$0xf]
        %v683 = vld [vmem:[%s670 + $0x30] sm:$0xf]
        %v684 = vld [vmem:[%s670 + $0x34] sm:$0xf]
        %v685 = vld [vmem:[%s670 + $0x38] sm:$0xf]
        %v686 = vld [vmem:[%s670 + $0x3c] sm:$0xf]
        %v695 = vunpack.c.l.b16 %v662
        %v696 = vunpack.c.l.b16 %v663
        %v697 = vunpack.c.l.b16 %v664
        %v698 = vunpack.c.l.b16 %v665
        %v699 = vunpack.c.l.b16 %v666
        %v700 = vunpack.c.l.b16 %v667
        %v701 = vunpack.c.l.b16 %v668
        %v702 = vunpack.c.l.b16 %v669
        %v703 = vpack.c.b16 %v696, %v695
        %v704 = vpack.c.b16 %v698, %v697
        %v705 = vpack.c.b16 %v700, %v699
        %v706 = vpack.c.b16 %v702, %v701
        %v727 = vunpack.c.l.b16 %v671
        %v728 = vunpack.c.l.b16 %v672
        %v729 = vunpack.c.l.b16 %v673
        %v730 = vunpack.c.l.b16 %v674
        %v731 = vunpack.c.l.b16 %v675
        %v732 = vunpack.c.l.b16 %v676
        %v733 = vunpack.c.l.b16 %v677
        %v734 = vunpack.c.l.b16 %v678
        %v735 = vunpack.c.l.b16 %v679
        %v736 = vunpack.c.l.b16 %v680
        %v737 = vunpack.c.l.b16 %v681
        %v738 = vunpack.c.l.b16 %v682
        %v739 = vunpack.c.l.b16 %v683
        %v740 = vunpack.c.l.b16 %v684
        %v741 = vunpack.c.l.b16 %v685
        %v742 = vunpack.c.l.b16 %v686
        %v743 = vpack.c.b16 %v728, %v727
        %v744 = vpack.c.b16 %v730, %v729
        %v745 = vpack.c.b16 %v732, %v731
        %v746 = vpack.c.b16 %v734, %v733
        %v747 = vpack.c.b16 %v736, %v735
        %v748 = vpack.c.b16 %v738, %v737
        %v749 = vpack.c.b16 %v740, %v739
        %v750 = vpack.c.b16 %v742, %v741
        %759 = vmatprep.subr.bf16.mxu0 0
        %760 = vmatpush1.bf16.msra.mxu0 %v743
        %761 = vmatprep.subr.bf16.mxu0 0
        %762 = vmatpush1.bf16.msra.mxu0 %v744
        %763 = vmatprep.subr.bf16.mxu0 0
        %764 = vmatpush1.bf16.msra.mxu0 %v745
        %765 = vmatprep.subr.bf16.mxu0 0
        %766 = vmatpush1.bf16.msra.mxu0 %v746
        %767 = vmatprep.subr.bf16.mxu0 0
        %768 = vmatpush1.bf16.msra.mxu0 %v747
        %769 = vmatprep.subr.bf16.mxu0 0
        %770 = vmatpush1.bf16.msra.mxu0 %v748
        %771 = vmatprep.subr.bf16.mxu0 0
        %772 = vmatpush1.bf16.msra.mxu0 %v749
        %773 = vmatprep.subr.bf16.mxu0 0
        %774 = vmatpush1.bf16.msra.mxu0 %v750
        %775 = vmatprep.subr.bf16.mxu0 0
        %776 = vmatpush1.bf16.msra.mxu0 0
        %777 = vmatprep.subr.bf16.mxu0 0
        %778 = vmatpush1.bf16.msra.mxu0 0
        %779 = vmatprep.subr.bf16.mxu0 0
        %780 = vmatpush1.bf16.msra.mxu0 0
        %781 = vmatprep.subr.bf16.mxu0 0
        %782 = vmatpush1.bf16.msra.mxu0 0
        %783 = vmatprep.subr.bf16.mxu0 0
        %784 = vmatpush1.bf16.msra.mxu0 0
        %785 = vmatprep.subr.bf16.mxu0 0
        %786 = vmatpush1.bf16.msra.mxu0 0
        %787 = vmatprep.subr.bf16.mxu0 0
        %788 = vmatpush1.bf16.msra.mxu0 0
        %789 = vmatprep.subr.bf16.mxu0 0
        %790 = vmatpush1.bf16.msra.mxu0 0
        %791 = vmatprep.mubr.bf16.mxu0 0
        %792 = vmatmul.mubr.bf16.gmra.mrb[0].mxu0 %v703
        %v793 = vpop.f32.mrb[0].mxu0
        %v794 = vadd.f32 0.0, %v793
        %v795 = vpop.f32.mrb[0].mxu0
        %v796 = vpop.f32.mrb[0].mxu0
        %v797 = vadd.f32 0.0, %v796
        %v798 = vpop.f32.mrb[0].mxu0
        %799 = vmatprep.mubr.bf16.mxu0 0
        %800 = vmatmul.mubr.bf16.gmra.mrb[0].mxu0 %v704
        %v801 = vpop.f32.mrb[0].mxu0
        %v802 = vadd.f32 0.0, %v801
        %v803 = vpop.f32.mrb[0].mxu0
        %v804 = vpop.f32.mrb[0].mxu0
        %v805 = vadd.f32 0.0, %v804
        %v806 = vpop.f32.mrb[0].mxu0
        %807 = vmatprep.mubr.bf16.mxu0 0
        %808 = vmatmul.mubr.bf16.gmra.mrb[0].mxu0 %v705
        %v809 = vpop.f32.mrb[0].mxu0
        %v810 = vadd.f32 0.0, %v809
        %v811 = vpop.f32.mrb[0].mxu0
        %v812 = vpop.f32.mrb[0].mxu0
        %v813 = vadd.f32 0.0, %v812
        %v814 = vpop.f32.mrb[0].mxu0
        %815 = vmatprep.mubr.bf16.mxu0 0
        %816 = vmatmul.mubr.bf16.gmra.mrb[0].mxu0 %v706
        %v817 = vpop.f32.mrb[0].mxu0
        %v818 = vadd.f32 0.0, %v817
        %v819 = vpop.f32.mrb[0].mxu0
        %v820 = vpop.f32.mrb[0].mxu0
        %v821 = vadd.f32 0.0, %v820
        %v822 = vpop.f32.mrb[0].mxu0
        %823 = vdwg.mxu0
        %v832 = vunpack.c.l.b16 %v506
        %v833 = vunpack.c.l.b16 %v507
        %v834 = vunpack.c.l.b16 %v508
        %v835 = vunpack.c.l.b16 %v509
        %v836 = vunpack.c.l.b16 %v510
        %v837 = vunpack.c.l.b16 %v511
        %v838 = vunpack.c.l.b16 %v512
        %v839 = vunpack.c.l.b16 %v513
        %v840 = vpack.c.b16 %v833, %v832
        %v841 = vpack.c.b16 %v835, %v834
        %v842 = vpack.c.b16 %v837, %v836
        %v843 = vpack.c.b16 %v839, %v838
        %v864 = vunpack.c.l.b16 %v514
        %v865 = vunpack.c.l.b16 %v515
        %v866 = vunpack.c.l.b16 %v516
        %v867 = vunpack.c.l.b16 %v517
        %v868 = vunpack.c.l.b16 %v518
        %v869 = vunpack.c.l.b16 %v519
        %v870 = vunpack.c.l.b16 %v520
        %v871 = vunpack.c.l.b16 %v521
        %v872 = vunpack.c.l.b16 %v522
        %v873 = vunpack.c.l.b16 %v523
        %v874 = vunpack.c.l.b16 %v524
        %v875 = vunpack.c.l.b16 %v525
        %v876 = vunpack.c.l.b16 %v526
        %v877 = vunpack.c.l.b16 %v527
        %v878 = vunpack.c.l.b16 %v528
        %v879 = vunpack.c.l.b16 %v529
        %v880 = vpack.c.b16 %v865, %v864
        %v881 = vpack.c.b16 %v867, %v866
        %v882 = vpack.c.b16 %v869, %v868
        %v883 = vpack.c.b16 %v871, %v870
        %v884 = vpack.c.b16 %v873, %v872
        %v885 = vpack.c.b16 %v875, %v874
        %v886 = vpack.c.b16 %v877, %v876
        %v887 = vpack.c.b16 %v879, %v878
        %896 = vmatprep.subr.bf16.mxu0 0
        %897 = vmatpush1.bf16.msra.mxu0 %v880
        %898 = vmatprep.subr.bf16.mxu0 0
        %899 = vmatpush1.bf16.msra.mxu0 %v881
        %900 = vmatprep.subr.bf16.mxu0 0
        %901 = vmatpush1.bf16.msra.mxu0 %v882
        %902 = vmatprep.subr.bf16.mxu0 0
        %903 = vmatpush1.bf16.msra.mxu0 %v883
        %904 = vmatprep.subr.bf16.mxu0 0
        %905 = vmatpush1.bf16.msra.mxu0 %v884
        %906 = vmatprep.subr.bf16.mxu0 0
        %907 = vmatpush1.bf16.msra.mxu0 %v885
        %908 = vmatprep.subr.bf16.mxu0 0
        %909 = vmatpush1.bf16.msra.mxu0 %v886
        %910 = vmatprep.subr.bf16.mxu0 0
        %911 = vmatpush1.bf16.msra.mxu0 %v887
        %912 = vmatprep.subr.bf16.mxu0 0
        %913 = vmatpush1.bf16.msra.mxu0 0
        %914 = vmatprep.subr.bf16.mxu0 0
        %915 = vmatpush1.bf16.msra.mxu0 0
        %916 = vmatprep.subr.bf16.mxu0 0
        %917 = vmatpush1.bf16.msra.mxu0 0
        %918 = vmatprep.subr.bf16.mxu0 0
        %919 = vmatpush1.bf16.msra.mxu0 0
        %920 = vmatprep.subr.bf16.mxu0 0
        %921 = vmatpush1.bf16.msra.mxu0 0
        %922 = vmatprep.subr.bf16.mxu0 0
        %923 = vmatpush1.bf16.msra.mxu0 0
        %924 = vmatprep.subr.bf16.mxu0 0
        %925 = vmatpush1.bf16.msra.mxu0 0
        %926 = vmatprep.subr.bf16.mxu0 0
        %927 = vmatpush1.bf16.msra.mxu0 0
        %928 = vmatprep.mubr.bf16.mxu0 0
        %929 = vmatmul.mubr.bf16.gmra.mrb[0].mxu0 %v840
        %v930 = vpop.f32.mrb[0].mxu0
        %v931 = vadd.f32 %v794, %v930
        %v932 = vpop.f32.mrb[0].mxu0
        %v933 = vpop.f32.mrb[0].mxu0
        %v934 = vadd.f32 %v797, %v933
        %v935 = vpop.f32.mrb[0].mxu0
        %936 = vmatprep.mubr.bf16.mxu0 0
        %937 = vmatmul.mubr.bf16.gmra.mrb[0].mxu0 %v841
        %v938 = vpop.f32.mrb[0].mxu0
        %v939 = vadd.f32 %v802, %v938
        %v940 = vpop.f32.mrb[0].mxu0
        %v941 = vpop.f32.mrb[0].mxu0
        %v942 = vadd.f32 %v805, %v941
        %v943 = vpop.f32.mrb[0].mxu0
        %944 = vmatprep.mubr.bf16.mxu0 0
        %945 = vmatmul.mubr.bf16.gmra.mrb[0].mxu0 %v842
        %v946 = vpop.f32.mrb[0].mxu0
        %v947 = vadd.f32 %v810, %v946
        %v948 = vpop.f32.mrb[0].mxu0
        %v949 = vpop.f32.mrb[0].mxu0
        %v950 = vadd.f32 %v813, %v949
        %v951 = vpop.f32.mrb[0].mxu0
        %952 = vmatprep.mubr.bf16.mxu0 0
        %953 = vmatmul.mubr.bf16.gmra.mrb[0].mxu0 %v843
        %v954 = vpop.f32.mrb[0].mxu0
        %v955 = vadd.f32 %v818, %v954
        %v956 = vpop.f32.mrb[0].mxu0
        %v957 = vpop.f32.mrb[0].mxu0
        %v958 = vadd.f32 %v821, %v957
        %v959 = vpop.f32.mrb[0].mxu0
        %960 = vdwg.mxu0
        %v961 = vld [vmem:[%s385] sm:$0xe]
        %v962 = vld [vmem:[%s385 + $0x8] sm:$0xe]
        %v963 = vld [vmem:[%s385 + $0x10] sm:$0xe]
        %v964 = vld [vmem:[%s385 + $0x18] sm:$0xe]
        %v965 = vld [vmem:[%s385 + $0x20] sm:$0xe]
        %v966 = vld [vmem:[%s385 + $0x28] sm:$0xe]
        %v967 = vld [vmem:[%s385 + $0x30] sm:$0xe]
        %v968 = vld [vmem:[%s385 + $0x38] sm:$0xe]
        %v969 = vunpack.c.l.bf16 %v961
        %v970 = vunpack.c.l.bf16 %v962
        %v971 = vunpack.c.l.bf16 %v963
        %v972 = vunpack.c.l.bf16 %v964
        %v973 = vunpack.c.l.bf16 %v965
        %v974 = vunpack.c.l.bf16 %v966
        %v975 = vunpack.c.l.bf16 %v967
        %v976 = vunpack.c.l.bf16 %v968
        %v977 = vmul.f32 %v969, %v407
        %v978 = vmul.f32 %v970, %v407
        %v979 = vmul.f32 %v971, %v407
        %v980 = vmul.f32 %v972, %v407
        %v981 = vmul.f32 %v973, %v407
        %v982 = vmul.f32 %v974, %v407
        %v983 = vmul.f32 %v975, %v407
        %v984 = vmul.f32 %v976, %v407
        %v985 = vadd.f32 %v977, %v422
        %v986 = vadd.f32 %v978, %v422
        %v987 = vadd.f32 %v979, %v422
        %v988 = vadd.f32 %v980, %v422
        %v989 = vadd.f32 %v981, %v422
        %v990 = vadd.f32 %v982, %v422
        %v991 = vadd.f32 %v983, %v422
        %v992 = vadd.f32 %v984, %v422
        %v993 = vmax.f32 %v985, 0.0
        %v994 = vmax.f32 %v986, 0.0
        %v995 = vmax.f32 %v987, 0.0
        %v996 = vmax.f32 %v988, 0.0
        %v997 = vmax.f32 %v989, 0.0
        %v998 = vmax.f32 %v990, 0.0
        %v999 = vmax.f32 %v991, 0.0
        %v1000 = vmax.f32 %v992, 0.0
        %v1001 = vadd.s32 %v382, 2
        %vm1002 = vcmp.ge.s32.totalorder %v1001, 1
        %vm1003 = vmand %vm456, %vm1002
        %vm1004 = vmand %vm457, %vm1002
        %vm1005 = vmand %vm458, %vm1002
        %vm1006 = vmand %vm459, %vm1002
        %vm1007 = vmand %vm460, %vm1002
        %vm1008 = vmand %vm461, %vm1002
        %vm1009 = vmand %vm462, %vm1002
        %vm1010 = vmand %vm463, %vm1002
        %vm1011 = vcmp.lt.s32.totalorder %v1001, 9
        %vm1012 = vmand %vm1003, %vm1011
        %vm1013 = vmand %vm1004, %vm1011
        %vm1014 = vmand %vm1005, %vm1011
        %vm1015 = vmand %vm1006, %vm1011
        %vm1016 = vmand %vm1007, %vm1011
        %vm1017 = vmand %vm1008, %vm1011
        %vm1018 = vmand %vm1009, %vm1011
        %vm1019 = vmand %vm1010, %vm1011
        %v1020 = vsel %vm1012, 1, 0
        %v1021 = vsel %vm1013, 1, 0
        %v1022 = vsel %vm1014, 1, 0
        %v1023 = vsel %vm1015, 1, 0
        %v1024 = vsel %vm1016, 1, 0
        %v1025 = vsel %vm1017, 1, 0
        %v1026 = vsel %vm1018, 1, 0
        %v1027 = vsel %vm1019, 1, 0
        %vm1028 = vcmp.eq.s32.totalorder %v1020, 1
        %vm1029 = vcmp.eq.s32.totalorder %v1021, 1
        %vm1030 = vcmp.eq.s32.totalorder %v1022, 1
        %vm1031 = vcmp.eq.s32.totalorder %v1023, 1
        %vm1032 = vcmp.eq.s32.totalorder %v1024, 1
        %vm1033 = vcmp.eq.s32.totalorder %v1025, 1
        %vm1034 = vcmp.eq.s32.totalorder %v1026, 1
        %vm1035 = vcmp.eq.s32.totalorder %v1027, 1
        %vm1044 = vcmask 1045504
        %v1045 = vrot.slane %v993, 2
        %v1046 = vrot.slane %v562, 2
        %v1047 = vsel %vm1044, %v1045, %v1046
        %v1048 = vrot.slane %v994, 2
        %v1049 = vrot.slane %v563, 2
        %v1050 = vsel %vm1044, %v1048, %v1049
        %v1051 = vrot.slane %v995, 2
        %v1052 = vrot.slane %v564, 2
        %v1053 = vsel %vm1044, %v1051, %v1052
        %v1054 = vrot.slane %v996, 2
        %v1055 = vrot.slane %v565, 2
        %v1056 = vsel %vm1044, %v1054, %v1055
        %v1057 = vrot.slane %v997, 2
        %v1058 = vrot.slane %v566, 2
        %v1059 = vsel %vm1044, %v1057, %v1058
        %v1060 = vrot.slane %v998, 2
        %v1061 = vrot.slane %v567, 2
        %v1062 = vsel %vm1044, %v1060, %v1061
        %v1063 = vrot.slane %v999, 2
        %v1064 = vrot.slane %v568, 2
        %v1065 = vsel %vm1044, %v1063, %v1064
        %v1066 = vrot.slane %v1000, 2
        %v1067 = vrot.slane %v569, 2
        %v1068 = vsel %vm1044, %v1066, %v1067
        %v1077 = vsel %vm1028, %v1047, 0.0
        %v1078 = vsel %vm1029, %v1050, 0.0
        %v1079 = vsel %vm1030, %v1053, 0.0
        %v1080 = vsel %vm1031, %v1056, 0.0
        %v1081 = vsel %vm1032, %v1059, 0.0
        %v1082 = vsel %vm1033, %v1062, 0.0
        %v1083 = vsel %vm1034, %v1065, 0.0
        %v1084 = vsel %vm1035, %v1068, 0.0
        %v1085 = vpack.c.bf16 %v1077, %v1077
        %v1086 = vpack.c.bf16 %v1078, %v1078
        %v1087 = vpack.c.bf16 %v1079, %v1079
        %v1088 = vpack.c.bf16 %v1080, %v1080
        %v1089 = vpack.c.bf16 %v1081, %v1081
        %v1090 = vpack.c.bf16 %v1082, %v1082
        %v1091 = vpack.c.bf16 %v1083, %v1083
        %v1092 = vpack.c.bf16 %v1084, %v1084
        %s1093 = scalar_lea.vmem %s354, 128
        %v1094 = vld [vmem:[%s1093] sm:$0xf]
        %v1095 = vld [vmem:[%s1093 + $0x4] sm:$0xf]
        %v1096 = vld [vmem:[%s1093 + $0x8] sm:$0xf]
        %v1097 = vld [vmem:[%s1093 + $0xc] sm:$0xf]
        %v1098 = vld [vmem:[%s1093 + $0x10] sm:$0xf]
        %v1099 = vld [vmem:[%s1093 + $0x14] sm:$0xf]
        %v1100 = vld [vmem:[%s1093 + $0x18] sm:$0xf]
        %v1101 = vld [vmem:[%s1093 + $0x1c] sm:$0xf]
        %v1102 = vld [vmem:[%s1093 + $0x20] sm:$0xf]
        %v1103 = vld [vmem:[%s1093 + $0x24] sm:$0xf]
        %v1104 = vld [vmem:[%s1093 + $0x28] sm:$0xf]
        %v1105 = vld [vmem:[%s1093 + $0x2c] sm:$0xf]
        %v1106 = vld [vmem:[%s1093 + $0x30] sm:$0xf]
        %v1107 = vld [vmem:[%s1093 + $0x34] sm:$0xf]
        %v1108 = vld [vmem:[%s1093 + $0x38] sm:$0xf]
        %v1109 = vld [vmem:[%s1093 + $0x3c] sm:$0xf]
        %v1118 = vunpack.c.l.b16 %v1085
        %v1119 = vunpack.c.l.b16 %v1086
        %v1120 = vunpack.c.l.b16 %v1087
        %v1121 = vunpack.c.l.b16 %v1088
        %v1122 = vunpack.c.l.b16 %v1089
        %v1123 = vunpack.c.l.b16 %v1090
        %v1124 = vunpack.c.l.b16 %v1091
        %v1125 = vunpack.c.l.b16 %v1092
        %v1126 = vpack.c.b16 %v1119, %v1118
        %v1127 = vpack.c.b16 %v1121, %v1120
        %v1128 = vpack.c.b16 %v1123, %v1122
        %v1129 = vpack.c.b16 %v1125, %v1124
        %v1150 = vunpack.c.l.b16 %v1094
        %v1151 = vunpack.c.l.b16 %v1095
        %v1152 = vunpack.c.l.b16 %v1096
        %v1153 = vunpack.c.l.b16 %v1097
        %v1154 = vunpack.c.l.b16 %v1098
        %v1155 = vunpack.c.l.b16 %v1099
        %v1156 = vunpack.c.l.b16 %v1100
        %v1157 = vunpack.c.l.b16 %v1101
        %v1158 = vunpack.c.l.b16 %v1102
        %v1159 = vunpack.c.l.b16 %v1103
        %v1160 = vunpack.c.l.b16 %v1104
        %v1161 = vunpack.c.l.b16 %v1105
        %v1162 = vunpack.c.l.b16 %v1106
        %v1163 = vunpack.c.l.b16 %v1107
        %v1164 = vunpack.c.l.b16 %v1108
        %v1165 = vunpack.c.l.b16 %v1109
        %v1166 = vpack.c.b16 %v1151, %v1150
        %v1167 = vpack.c.b16 %v1153, %v1152
        %v1168 = vpack.c.b16 %v1155, %v1154
        %v1169 = vpack.c.b16 %v1157, %v1156
        %v1170 = vpack.c.b16 %v1159, %v1158
        %v1171 = vpack.c.b16 %v1161, %v1160
        %v1172 = vpack.c.b16 %v1163, %v1162
        %v1173 = vpack.c.b16 %v1165, %v1164
        %1182 = vmatprep.subr.bf16.mxu0 0
        %1183 = vmatpush1.bf16.msra.mxu0 %v1166
        %1184 = vmatprep.subr.bf16.mxu0 0
        %1185 = vmatpush1.bf16.msra.mxu0 %v1167
        %1186 = vmatprep.subr.bf16.mxu0 0
        %1187 = vmatpush1.bf16.msra.mxu0 %v1168
        %1188 = vmatprep.subr.bf16.mxu0 0
        %1189 = vmatpush1.bf16.msra.mxu0 %v1169
        %1190 = vmatprep.subr.bf16.mxu0 0
        %1191 = vmatpush1.bf16.msra.mxu0 %v1170
        %1192 = vmatprep.subr.bf16.mxu0 0
        %1193 = vmatpush1.bf16.msra.mxu0 %v1171
        %1194 = vmatprep.subr.bf16.mxu0 0
        %1195 = vmatpush1.bf16.msra.mxu0 %v1172
        %1196 = vmatprep.subr.bf16.mxu0 0
        %1197 = vmatpush1.bf16.msra.mxu0 %v1173
        %1198 = vmatprep.subr.bf16.mxu0 0
        %1199 = vmatpush1.bf16.msra.mxu0 0
        %1200 = vmatprep.subr.bf16.mxu0 0
        %1201 = vmatpush1.bf16.msra.mxu0 0
        %1202 = vmatprep.subr.bf16.mxu0 0
        %1203 = vmatpush1.bf16.msra.mxu0 0
        %1204 = vmatprep.subr.bf16.mxu0 0
        %1205 = vmatpush1.bf16.msra.mxu0 0
        %1206 = vmatprep.subr.bf16.mxu0 0
        %1207 = vmatpush1.bf16.msra.mxu0 0
        %1208 = vmatprep.subr.bf16.mxu0 0
        %1209 = vmatpush1.bf16.msra.mxu0 0
        %1210 = vmatprep.subr.bf16.mxu0 0
        %1211 = vmatpush1.bf16.msra.mxu0 0
        %1212 = vmatprep.subr.bf16.mxu0 0
        %1213 = vmatpush1.bf16.msra.mxu0 0
        %1214 = vmatprep.mubr.bf16.mxu0 0
        %1215 = vmatmul.mubr.bf16.gmra.mrb[0].mxu0 %v1126
        %v1216 = vpop.f32.mrb[0].mxu0
        %v1217 = vadd.f32 0.0, %v1216
        %v1218 = vpop.f32.mrb[0].mxu0
        %v1219 = vpop.f32.mrb[0].mxu0
        %v1220 = vadd.f32 0.0, %v1219
        %v1221 = vpop.f32.mrb[0].mxu0
        %1222 = vmatprep.mubr.bf16.mxu0 0
        %1223 = vmatmul.mubr.bf16.gmra.mrb[0].mxu0 %v1127
        %v1224 = vpop.f32.mrb[0].mxu0
        %v1225 = vadd.f32 0.0, %v1224
        %v1226 = vpop.f32.mrb[0].mxu0
        %v1227 = vpop.f32.mrb[0].mxu0
        %v1228 = vadd.f32 0.0, %v1227
        %v1229 = vpop.f32.mrb[0].mxu0
        %1230 = vmatprep.mubr.bf16.mxu0 0
        %1231 = vmatmul.mubr.bf16.gmra.mrb[0].mxu0 %v1128
        %v1232 = vpop.f32.mrb[0].mxu0
        %v1233 = vadd.f32 0.0, %v1232
        %v1234 = vpop.f32.mrb[0].mxu0
        %v1235 = vpop.f32.mrb[0].mxu0
        %v1236 = vadd.f32 0.0, %v1235
        %v1237 = vpop.f32.mrb[0].mxu0
        %1238 = vmatprep.mubr.bf16.mxu0 0
        %1239 = vmatmul.mubr.bf16.gmra.mrb[0].mxu0 %v1129
        %v1240 = vpop.f32.mrb[0].mxu0
        %v1241 = vadd.f32 0.0, %v1240
        %v1242 = vpop.f32.mrb[0].mxu0
        %v1243 = vpop.f32.mrb[0].mxu0
        %v1244 = vadd.f32 0.0, %v1243
        %v1245 = vpop.f32.mrb[0].mxu0
        %1246 = vdwg.mxu0
        %v1247 = vadd.f32 %v931, %v1217
        %v1248 = vadd.f32 %v934, %v1220
        %v1249 = vadd.f32 %v939, %v1225
        %v1250 = vadd.f32 %v942, %v1228
        %v1251 = vadd.f32 %v947, %v1233
        %v1252 = vadd.f32 %v950, %v1236
        %v1253 = vadd.f32 %v955, %v1241
        %v1254 = vadd.f32 %v958, %v1244
        %s1255 = sadd.s32 %s372, 1
        %s1256 = smul.u32 %s1255, 2
        %s1257 = smul.addr %s1256, 4
        %s1258 = scalar_lea.vmem %s350, %s1257
        %v1259 = vld [vmem:[%s1258] sm:$0xf]
        %v1260 = vld [vmem:[%s1258 + $0x8] sm:$0xf]
        %v1261 = vld [vmem:[%s1258 + $0x10] sm:$0xf]
        %v1262 = vld [vmem:[%s1258 + $0x18] sm:$0xf]
        %v1263 = vld [vmem:[%s1258 + $0x20] sm:$0xf]
        %v1264 = vld [vmem:[%s1258 + $0x28] sm:$0xf]
        %v1265 = vld [vmem:[%s1258 + $0x30] sm:$0xf]
        %v1266 = vld [vmem:[%s1258 + $0x38] sm:$0xf]
        %v1267 = vunpack.c.l.bf16 %v1259
        %v1268 = vunpack.c.l.bf16 %v1260
        %v1269 = vunpack.c.l.bf16 %v1261
        %v1270 = vunpack.c.l.bf16 %v1262
        %v1271 = vunpack.c.l.bf16 %v1263
        %v1272 = vunpack.c.l.bf16 %v1264
        %v1273 = vunpack.c.l.bf16 %v1265
        %v1274 = vunpack.c.l.bf16 %v1266
        %v1275 = vmul.f32 %v1267, %v407
        %v1276 = vmul.f32 %v1268, %v407
        %v1277 = vmul.f32 %v1269, %v407
        %v1278 = vmul.f32 %v1270, %v407
        %v1279 = vmul.f32 %v1271, %v407
        %v1280 = vmul.f32 %v1272, %v407
        %v1281 = vmul.f32 %v1273, %v407
        %v1282 = vmul.f32 %v1274, %v407
        %v1283 = vadd.f32 %v1275, %v422
        %v1284 = vadd.f32 %v1276, %v422
        %v1285 = vadd.f32 %v1277, %v422
        %v1286 = vadd.f32 %v1278, %v422
        %v1287 = vadd.f32 %v1279, %v422
        %v1288 = vadd.f32 %v1280, %v422
        %v1289 = vadd.f32 %v1281, %v422
        %v1290 = vadd.f32 %v1282, %v422
        %v1291 = vmax.f32 %v1283, 0.0
        %v1292 = vmax.f32 %v1284, 0.0
        %v1293 = vmax.f32 %v1285, 0.0
        %v1294 = vmax.f32 %v1286, 0.0
        %v1295 = vmax.f32 %v1287, 0.0
        %v1296 = vmax.f32 %v1288, 0.0
        %v1297 = vmax.f32 %v1289, 0.0
        %v1298 = vmax.f32 %v1290, 0.0
        %v1299 = vadd.s32 %v374, 1
        %v1300 = vadd.s32 %v375, 1
        %v1301 = vadd.s32 %v376, 1
        %v1302 = vadd.s32 %v377, 1
        %v1303 = vadd.s32 %v378, 1
        %v1304 = vadd.s32 %v379, 1
        %v1305 = vadd.s32 %v380, 1
        %vm1306 = vcmp.ge.s32.totalorder %v1299, 1
        %vm1307 = vcmp.ge.s32.totalorder %v1300, 1
        %vm1308 = vcmp.ge.s32.totalorder %v1301, 1
        %vm1309 = vcmp.ge.s32.totalorder %v1302, 1
        %vm1310 = vcmp.ge.s32.totalorder %v1303, 1
        %vm1311 = vcmp.ge.s32.totalorder %v1304, 1
        %vm1312 = vcmp.ge.s32.totalorder %v1305, 1
        %vm1313 = vcmp.lt.s32.totalorder %v1299, 9
        %vm1314 = vcmp.lt.s32.totalorder %v1300, 9
        %vm1315 = vcmp.lt.s32.totalorder %v1301, 9
        %vm1316 = vcmp.lt.s32.totalorder %v1302, 9
        %vm1317 = vcmp.lt.s32.totalorder %v1303, 9
        %vm1318 = vcmp.lt.s32.totalorder %v1304, 9
        %vm1319 = vcmp.lt.s32.totalorder %v1305, 9
        %vm1320 = vmand %vm1306, %vm1313
        %vm1321 = vmand %vm1307, %vm1314
        %vm1322 = vmand %vm1308, %vm1315
        %vm1323 = vmand %vm1309, %vm1316
        %vm1324 = vmand %vm1310, %vm1317
        %vm1325 = vmand %vm1311, %vm1318
        %vm1326 = vmand %vm1312, %vm1319
        %vm1327 = vmand %vm1320, %vm464
        %vm1328 = vmand %vm1321, %vm464
        %vm1329 = vmand %vm1322, %vm464
        %vm1330 = vmand %vm1323, %vm464
        %vm1331 = vmand %vm1324, %vm464
        %vm1332 = vmand %vm1325, %vm464
        %vm1333 = vmand %vm1326, %vm464
        %vm1334 = vmand %vm1327, %vm473
        %vm1335 = vmand %vm1328, %vm473
        %vm1336 = vmand %vm1329, %vm473
        %vm1337 = vmand %vm1330, %vm473
        %vm1338 = vmand %vm1331, %vm473
        %vm1339 = vmand %vm1332, %vm473
        %vm1340 = vmand %vm1333, %vm473
        %v1341 = vsel %vm1334, 1, 0
        %v1342 = vsel %vm1335, 1, 0
        %v1343 = vsel %vm1336, 1, 0
        %v1344 = vsel %vm1337, 1, 0
        %v1345 = vsel %vm1338, 1, 0
        %v1346 = vsel %vm1339, 1, 0
        %v1347 = vsel %vm1340, 1, 0
        %vm1348 = vcmp.eq.s32.totalorder %v1341, 1
        %vm1349 = vcmp.eq.s32.totalorder %v1342, 1
        %vm1350 = vcmp.eq.s32.totalorder %v1343, 1
        %vm1351 = vcmp.eq.s32.totalorder %v1344, 1
        %vm1352 = vcmp.eq.s32.totalorder %v1345, 1
        %vm1353 = vcmp.eq.s32.totalorder %v1346, 1
        %vm1354 = vcmp.eq.s32.totalorder %v1347, 1
        %v1355 = vsel %vm491, %v1291, 0.0
        %v1356 = vsel %vm1348, %v1292, 0.0
        %v1357 = vsel %vm1349, %v1293, 0.0
        %v1358 = vsel %vm1350, %v1294, 0.0
        %v1359 = vsel %vm1351, %v1295, 0.0
        %v1360 = vsel %vm1352, %v1296, 0.0
        %v1361 = vsel %vm1353, %v1297, 0.0
        %v1362 = vsel %vm1354, %v1298, 0.0
        %v1363 = vpack.c.bf16 %v1355, %v1355
        %v1364 = vpack.c.bf16 %v1356, %v1356
        %v1365 = vpack.c.bf16 %v1357, %v1357
        %v1366 = vpack.c.bf16 %v1358, %v1358
        %v1367 = vpack.c.bf16 %v1359, %v1359
        %v1368 = vpack.c.bf16 %v1360, %v1360
        %v1369 = vpack.c.bf16 %v1361, %v1361
        %v1370 = vpack.c.bf16 %v1362, %v1362
        %s1371 = scalar_lea.vmem %s354, 192
        %v1372 = vld [vmem:[%s1371] sm:$0xf]
        %v1373 = vld [vmem:[%s1371 + $0x4] sm:$0xf]
        %v1374 = vld [vmem:[%s1371 + $0x8] sm:$0xf]
        %v1375 = vld [vmem:[%s1371 + $0xc] sm:$0xf]
        %v1376 = vld [vmem:[%s1371 + $0x10] sm:$0xf]
        %v1377 = vld [vmem:[%s1371 + $0x14] sm:$0xf]
        %v1378 = vld [vmem:[%s1371 + $0x18] sm:$0xf]
        %v1379 = vld [vmem:[%s1371 + $0x1c] sm:$0xf]
        %v1380 = vld [vmem:[%s1371 + $0x20] sm:$0xf]
        %v1381 = vld [vmem:[%s1371 + $0x24] sm:$0xf]
        %v1382 = vld [vmem:[%s1371 + $0x28] sm:$0xf]
        %v1383 = vld [vmem:[%s1371 + $0x2c] sm:$0xf]
        %v1384 = vld [vmem:[%s1371 + $0x30] sm:$0xf]
        %v1385 = vld [vmem:[%s1371 + $0x34] sm:$0xf]
        %v1386 = vld [vmem:[%s1371 + $0x38] sm:$0xf]
        %v1387 = vld [vmem:[%s1371 + $0x3c] sm:$0xf]
        %v1396 = vunpack.c.l.b16 %v1363
        %v1397 = vunpack.c.l.b16 %v1364
        %v1398 = vunpack.c.l.b16 %v1365
        %v1399 = vunpack.c.l.b16 %v1366
        %v1400 = vunpack.c.l.b16 %v1367
        %v1401 = vunpack.c.l.b16 %v1368
        %v1402 = vunpack.c.l.b16 %v1369
        %v1403 = vunpack.c.l.b16 %v1370
        %v1404 = vpack.c.b16 %v1397, %v1396
        %v1405 = vpack.c.b16 %v1399, %v1398
        %v1406 = vpack.c.b16 %v1401, %v1400
        %v1407 = vpack.c.b16 %v1403, %v1402
        %v1428 = vunpack.c.l.b16 %v1372
        %v1429 = vunpack.c.l.b16 %v1373
        %v1430 = vunpack.c.l.b16 %v1374
        %v1431 = vunpack.c.l.b16 %v1375
        %v1432 = vunpack.c.l.b16 %v1376
        %v1433 = vunpack.c.l.b16 %v1377
        %v1434 = vunpack.c.l.b16 %v1378
        %v1435 = vunpack.c.l.b16 %v1379
        %v1436 = vunpack.c.l.b16 %v1380
        %v1437 = vunpack.c.l.b16 %v1381
        %v1438 = vunpack.c.l.b16 %v1382
        %v1439 = vunpack.c.l.b16 %v1383
        %v1440 = vunpack.c.l.b16 %v1384
        %v1441 = vunpack.c.l.b16 %v1385
        %v1442 = vunpack.c.l.b16 %v1386
        %v1443 = vunpack.c.l.b16 %v1387
        %v1444 = vpack.c.b16 %v1429, %v1428
        %v1445 = vpack.c.b16 %v1431, %v1430
        %v1446 = vpack.c.b16 %v1433, %v1432
        %v1447 = vpack.c.b16 %v1435, %v1434
        %v1448 = vpack.c.b16 %v1437, %v1436
        %v1449 = vpack.c.b16 %v1439, %v1438
        %v1450 = vpack.c.b16 %v1441, %v1440
        %v1451 = vpack.c.b16 %v1443, %v1442
        %1460 = vmatprep.subr.bf16.mxu0 0
        %1461 = vmatpush1.bf16.msra.mxu0 %v1444
        %1462 = vmatprep.subr.bf16.mxu0 0
        %1463 = vmatpush1.bf16.msra.mxu0 %v1445
        %1464 = vmatprep.subr.bf16.mxu0 0
        %1465 = vmatpush1.bf16.msra.mxu0 %v1446
        %1466 = vmatprep.subr.bf16.mxu0 0
        %1467 = vmatpush1.bf16.msra.mxu0 %v1447
        %1468 = vmatprep.subr.bf16.mxu0 0
        %1469 = vmatpush1.bf16.msra.mxu0 %v1448
        %1470 = vmatprep.subr.bf16.mxu0 0
        %1471 = vmatpush1.bf16.msra.mxu0 %v1449
        %1472 = vmatprep.subr.bf16.mxu0 0
        %1473 = vmatpush1.bf16.msra.mxu0 %v1450
        %1474 = vmatprep.subr.bf16.mxu0 0
        %1475 = vmatpush1.bf16.msra.mxu0 %v1451
        %1476 = vmatprep.subr.bf16.mxu0 0
        %1477 = vmatpush1.bf16.msra.mxu0 0
        %1478 = vmatprep.subr.bf16.mxu0 0
        %1479 = vmatpush1.bf16.msra.mxu0 0
        %1480 = vmatprep.subr.bf16.mxu0 0
        %1481 = vmatpush1.bf16.msra.mxu0 0
        %1482 = vmatprep.subr.bf16.mxu0 0
        %1483 = vmatpush1.bf16.msra.mxu0 0
        %1484 = vmatprep.subr.bf16.mxu0 0
        %1485 = vmatpush1.bf16.msra.mxu0 0
        %1486 = vmatprep.subr.bf16.mxu0 0
        %1487 = vmatpush1.bf16.msra.mxu0 0
        %1488 = vmatprep.subr.bf16.mxu0 0
        %1489 = vmatpush1.bf16.msra.mxu0 0
        %1490 = vmatprep.subr.bf16.mxu0 0
        %1491 = vmatpush1.bf16.msra.mxu0 0
        %1492 = vmatprep.mubr.bf16.mxu0 0
        %1493 = vmatmul.mubr.bf16.gmra.mrb[0].mxu0 %v1404
        %v1494 = vpop.f32.mrb[0].mxu0
        %v1495 = vadd.f32 0.0, %v1494
        %v1496 = vpop.f32.mrb[0].mxu0
        %v1497 = vpop.f32.mrb[0].mxu0
        %v1498 = vadd.f32 0.0, %v1497
        %v1499 = vpop.f32.mrb[0].mxu0
        %1500 = vmatprep.mubr.bf16.mxu0 0
        %1501 = vmatmul.mubr.bf16.gmra.mrb[0].mxu0 %v1405
        %v1502 = vpop.f32.mrb[0].mxu0
        %v1503 = vadd.f32 0.0, %v1502
        %v1504 = vpop.f32.mrb[0].mxu0
        %v1505 = vpop.f32.mrb[0].mxu0
        %v1506 = vadd.f32 0.0, %v1505
        %v1507 = vpop.f32.mrb[0].mxu0
        %1508 = vmatprep.mubr.bf16.mxu0 0
        %1509 = vmatmul.mubr.bf16.gmra.mrb[0].mxu0 %v1406
        %v1510 = vpop.f32.mrb[0].mxu0
        %v1511 = vadd.f32 0.0, %v1510
        %v1512 = vpop.f32.mrb[0].mxu0
        %v1513 = vpop.f32.mrb[0].mxu0
        %v1514 = vadd.f32 0.0, %v1513
        %v1515 = vpop.f32.mrb[0].mxu0
        %1516 = vmatprep.mubr.bf16.mxu0 0
        %1517 = vmatmul.mubr.bf16.gmra.mrb[0].mxu0 %v1407
        %v1518 = vpop.f32.mrb[0].mxu0
        %v1519 = vadd.f32 0.0, %v1518
        %v1520 = vpop.f32.mrb[0].mxu0
        %v1521 = vpop.f32.mrb[0].mxu0
        %v1522 = vadd.f32 0.0, %v1521
        %v1523 = vpop.f32.mrb[0].mxu0
        %1524 = vdwg.mxu0
        %v1525 = vadd.f32 %v1247, %v1495
        %v1526 = vadd.f32 %v1248, %v1498
        %v1527 = vadd.f32 %v1249, %v1503
        %v1528 = vadd.f32 %v1250, %v1506
        %v1529 = vadd.f32 %v1251, %v1511
        %v1530 = vadd.f32 %v1252, %v1514
        %v1531 = vadd.f32 %v1253, %v1519
        %v1532 = vadd.f32 %v1254, %v1522
        %v1533 = vld [vmem:[%s1258] sm:$0xf]
        %v1534 = vld [vmem:[%s1258 + $0x4] sm:$0x1]
        %v1535 = vld [vmem:[%s1258 + $0x8] sm:$0xf]
        %v1536 = vld [vmem:[%s1258 + $0xc] sm:$0x1]
        %v1537 = vld [vmem:[%s1258 + $0x10] sm:$0xf]
        %v1538 = vld [vmem:[%s1258 + $0x14] sm:$0x1]
        %v1539 = vld [vmem:[%s1258 + $0x18] sm:$0xf]
        %v1540 = vld [vmem:[%s1258 + $0x1c] sm:$0x1]
        %v1541 = vld [vmem:[%s1258 + $0x20] sm:$0xf]
        %v1542 = vld [vmem:[%s1258 + $0x24] sm:$0x1]
        %v1543 = vld [vmem:[%s1258 + $0x28] sm:$0xf]
        %v1544 = vld [vmem:[%s1258 + $0x2c] sm:$0x1]
        %v1545 = vld [vmem:[%s1258 + $0x30] sm:$0xf]
        %v1546 = vld [vmem:[%s1258 + $0x34] sm:$0x1]
        %v1547 = vld [vmem:[%s1258 + $0x38] sm:$0xf]
        %v1548 = vld [vmem:[%s1258 + $0x3c] sm:$0x1]
        %v1549 = vunpack.c.l.bf16 %v1533
        %v1550 = vunpack.c.l.bf16 %v1534
        %v1551 = vunpack.c.l.bf16 %v1535
        %v1552 = vunpack.c.l.bf16 %v1536
        %v1553 = vunpack.c.l.bf16 %v1537
        %v1554 = vunpack.c.l.bf16 %v1538
        %v1555 = vunpack.c.l.bf16 %v1539
        %v1556 = vunpack.c.l.bf16 %v1540
        %v1557 = vunpack.c.l.bf16 %v1541
        %v1558 = vunpack.c.l.bf16 %v1542
        %v1559 = vunpack.c.l.bf16 %v1543
        %v1560 = vunpack.c.l.bf16 %v1544
        %v1561 = vunpack.c.l.bf16 %v1545
        %v1562 = vunpack.c.l.bf16 %v1546
        %v1563 = vunpack.c.l.bf16 %v1547
        %v1564 = vunpack.c.l.bf16 %v1548
        %v1565 = vmul.f32 %v1549, %v407
        %v1566 = vmul.f32 %v1550, %v407
        %v1567 = vmul.f32 %v1551, %v407
        %v1568 = vmul.f32 %v1552, %v407
        %v1569 = vmul.f32 %v1553, %v407
        %v1570 = vmul.f32 %v1554, %v407
        %v1571 = vmul.f32 %v1555, %v407
        %v1572 = vmul.f32 %v1556, %v407
        %v1573 = vmul.f32 %v1557, %v407
        %v1574 = vmul.f32 %v1558, %v407
        %v1575 = vmul.f32 %v1559, %v407
        %v1576 = vmul.f32 %v1560, %v407
        %v1577 = vmul.f32 %v1561, %v407
        %v1578 = vmul.f32 %v1562, %v407
        %v1579 = vmul.f32 %v1563, %v407
        %v1580 = vmul.f32 %v1564, %v407
        %v1581 = vadd.f32 %v1565, %v422
        %v1582 = vadd.f32 %v1566, %v422
        %v1583 = vadd.f32 %v1567, %v422
        %v1584 = vadd.f32 %v1568, %v422
        %v1585 = vadd.f32 %v1569, %v422
        %v1586 = vadd.f32 %v1570, %v422
        %v1587 = vadd.f32 %v1571, %v422
        %v1588 = vadd.f32 %v1572, %v422
        %v1589 = vadd.f32 %v1573, %v422
        %v1590 = vadd.f32 %v1574, %v422
        %v1591 = vadd.f32 %v1575, %v422
        %v1592 = vadd.f32 %v1576, %v422
        %v1593 = vadd.f32 %v1577, %v422
        %v1594 = vadd.f32 %v1578, %v422
        %v1595 = vadd.f32 %v1579, %v422
        %v1596 = vadd.f32 %v1580, %v422
        %v1597 = vmax.f32 %v1581, 0.0
        %v1598 = vmax.f32 %v1582, 0.0
        %v1599 = vmax.f32 %v1583, 0.0
        %v1600 = vmax.f32 %v1584, 0.0
        %v1601 = vmax.f32 %v1585, 0.0
        %v1602 = vmax.f32 %v1586, 0.0
        %v1603 = vmax.f32 %v1587, 0.0
        %v1604 = vmax.f32 %v1588, 0.0
        %v1605 = vmax.f32 %v1589, 0.0
        %v1606 = vmax.f32 %v1590, 0.0
        %v1607 = vmax.f32 %v1591, 0.0
        %v1608 = vmax.f32 %v1592, 0.0
        %v1609 = vmax.f32 %v1593, 0.0
        %v1610 = vmax.f32 %v1594, 0.0
        %v1611 = vmax.f32 %v1595, 0.0
        %v1612 = vmax.f32 %v1596, 0.0
        %vm1613 = vmand %vm1320, %vm571
        %vm1614 = vmand %vm1321, %vm571
        %vm1615 = vmand %vm1322, %vm571
        %vm1616 = vmand %vm1323, %vm571
        %vm1617 = vmand %vm1324, %vm571
        %vm1618 = vmand %vm1325, %vm571
        %vm1619 = vmand %vm1326, %vm571
        %vm1620 = vmand %vm1613, %vm580
        %vm1621 = vmand %vm1614, %vm580
        %vm1622 = vmand %vm1615, %vm580
        %vm1623 = vmand %vm1616, %vm580
        %vm1624 = vmand %vm1617, %vm580
        %vm1625 = vmand %vm1618, %vm580
        %vm1626 = vmand %vm1619, %vm580
        %v1627 = vsel %vm1620, 1, 0
        %v1628 = vsel %vm1621, 1, 0
        %v1629 = vsel %vm1622, 1, 0
        %v1630 = vsel %vm1623, 1, 0
        %v1631 = vsel %vm1624, 1, 0
        %v1632 = vsel %vm1625, 1, 0
        %v1633 = vsel %vm1626, 1, 0
        %vm1634 = vcmp.eq.s32.totalorder %v1627, 1
        %vm1635 = vcmp.eq.s32.totalorder %v1628, 1
        %vm1636 = vcmp.eq.s32.totalorder %v1629, 1
        %vm1637 = vcmp.eq.s32.totalorder %v1630, 1
        %vm1638 = vcmp.eq.s32.totalorder %v1631, 1
        %vm1639 = vcmp.eq.s32.totalorder %v1632, 1
        %vm1640 = vcmp.eq.s32.totalorder %v1633, 1
        %v1657 = vrot.slane %v1597, 1
        %v1658 = vrot.slane %v1598, 1
        %v1659 = vsel %vm621, %v1657, %v1658
        %v1660 = vrot.slane %v1599, 1
        %v1661 = vrot.slane %v1600, 1
        %v1662 = vsel %vm621, %v1660, %v1661
        %v1663 = vrot.slane %v1601, 1
        %v1664 = vrot.slane %v1602, 1
        %v1665 = vsel %vm621, %v1663, %v1664
        %v1666 = vrot.slane %v1603, 1
        %v1667 = vrot.slane %v1604, 1
        %v1668 = vsel %vm621, %v1666, %v1667
        %v1669 = vrot.slane %v1605, 1
        %v1670 = vrot.slane %v1606, 1
        %v1671 = vsel %vm621, %v1669, %v1670
        %v1672 = vrot.slane %v1607, 1
        %v1673 = vrot.slane %v1608, 1
        %v1674 = vsel %vm621, %v1672, %v1673
        %v1675 = vrot.slane %v1609, 1
        %v1676 = vrot.slane %v1610, 1
        %v1677 = vsel %vm621, %v1675, %v1676
        %v1678 = vrot.slane %v1611, 1
        %v1679 = vrot.slane %v1612, 1
        %v1680 = vsel %vm621, %v1678, %v1679
        %v1689 = vsel %vm598, %v1659, 0.0
        %v1690 = vsel %vm1634, %v1662, 0.0
        %v1691 = vsel %vm1635, %v1665, 0.0
        %v1692 = vsel %vm1636, %v1668, 0.0
        %v1693 = vsel %vm1637, %v1671, 0.0
        %v1694 = vsel %vm1638, %v1674, 0.0
        %v1695 = vsel %vm1639, %v1677, 0.0
        %v1696 = vsel %vm1640, %v1680, 0.0
        %v1697 = vpack.c.bf16 %v1689, %v1689
        %v1698 = vpack.c.bf16 %v1690, %v1690
        %v1699 = vpack.c.bf16 %v1691, %v1691
        %v1700 = vpack.c.bf16 %v1692, %v1692
        %v1701 = vpack.c.bf16 %v1693, %v1693
        %v1702 = vpack.c.bf16 %v1694, %v1694
        %v1703 = vpack.c.bf16 %v1695, %v1695
        %v1704 = vpack.c.bf16 %v1696, %v1696
        %s1705 = scalar_lea.vmem %s354, 256
        %v1706 = vld [vmem:[%s1705] sm:$0xf]
        %v1707 = vld [vmem:[%s1705 + $0x4] sm:$0xf]
        %v1708 = vld [vmem:[%s1705 + $0x8] sm:$0xf]
        %v1709 = vld [vmem:[%s1705 + $0xc] sm:$0xf]
        %v1710 = vld [vmem:[%s1705 + $0x10] sm:$0xf]
        %v1711 = vld [vmem:[%s1705 + $0x14] sm:$0xf]
        %v1712 = vld [vmem:[%s1705 + $0x18] sm:$0xf]
        %v1713 = vld [vmem:[%s1705 + $0x1c] sm:$0xf]
        %v1714 = vld [vmem:[%s1705 + $0x20] sm:$0xf]
        %v1715 = vld [vmem:[%s1705 + $0x24] sm:$0xf]
        %v1716 = vld [vmem:[%s1705 + $0x28] sm:$0xf]
        %v1717 = vld [vmem:[%s1705 + $0x2c] sm:$0xf]
        %v1718 = vld [vmem:[%s1705 + $0x30] sm:$0xf]
        %v1719 = vld [vmem:[%s1705 + $0x34] sm:$0xf]
        %v1720 = vld [vmem:[%s1705 + $0x38] sm:$0xf]
        %v1721 = vld [vmem:[%s1705 + $0x3c] sm:$0xf]
        %v1730 = vunpack.c.l.b16 %v1697
        %v1731 = vunpack.c.l.b16 %v1698
        %v1732 = vunpack.c.l.b16 %v1699
        %v1733 = vunpack.c.l.b16 %v1700
        %v1734 = vunpack.c.l.b16 %v1701
        %v1735 = vunpack.c.l.b16 %v1702
        %v1736 = vunpack.c.l.b16 %v1703
        %v1737 = vunpack.c.l.b16 %v1704
        %v1738 = vpack.c.b16 %v1731, %v1730
        %v1739 = vpack.c.b16 %v1733, %v1732
        %v1740 = vpack.c.b16 %v1735, %v1734
        %v1741 = vpack.c.b16 %v1737, %v1736
        %v1762 = vunpack.c.l.b16 %v1706
        %v1763 = vunpack.c.l.b16 %v1707
        %v1764 = vunpack.c.l.b16 %v1708
        %v1765 = vunpack.c.l.b16 %v1709
        %v1766 = vunpack.c.l.b16 %v1710
        %v1767 = vunpack.c.l.b16 %v1711
        %v1768 = vunpack.c.l.b16 %v1712
        %v1769 = vunpack.c.l.b16 %v1713
        %v1770 = vunpack.c.l.b16 %v1714
        %v1771 = vunpack.c.l.b16 %v1715
        %v1772 = vunpack.c.l.b16 %v1716
        %v1773 = vunpack.c.l.b16 %v1717
        %v1774 = vunpack.c.l.b16 %v1718
        %v1775 = vunpack.c.l.b16 %v1719
        %v1776 = vunpack.c.l.b16 %v1720
        %v1777 = vunpack.c.l.b16 %v1721
        %v1778 = vpack.c.b16 %v1763, %v1762
        %v1779 = vpack.c.b16 %v1765, %v1764
        %v1780 = vpack.c.b16 %v1767, %v1766
        %v1781 = vpack.c.b16 %v1769, %v1768
        %v1782 = vpack.c.b16 %v1771, %v1770
        %v1783 = vpack.c.b16 %v1773, %v1772
        %v1784 = vpack.c.b16 %v1775, %v1774
        %v1785 = vpack.c.b16 %v1777, %v1776
        %1794 = vmatprep.subr.bf16.mxu0 0
        %1795 = vmatpush1.bf16.msra.mxu0 %v1778
        %1796 = vmatprep.subr.bf16.mxu0 0
        %1797 = vmatpush1.bf16.msra.mxu0 %v1779
        %1798 = vmatprep.subr.bf16.mxu0 0
        %1799 = vmatpush1.bf16.msra.mxu0 %v1780
        %1800 = vmatprep.subr.bf16.mxu0 0
        %1801 = vmatpush1.bf16.msra.mxu0 %v1781
        %1802 = vmatprep.subr.bf16.mxu0 0
        %1803 = vmatpush1.bf16.msra.mxu0 %v1782
        %1804 = vmatprep.subr.bf16.mxu0 0
        %1805 = vmatpush1.bf16.msra.mxu0 %v1783
        %1806 = vmatprep.subr.bf16.mxu0 0
        %1807 = vmatpush1.bf16.msra.mxu0 %v1784
        %1808 = vmatprep.subr.bf16.mxu0 0
        %1809 = vmatpush1.bf16.msra.mxu0 %v1785
        %1810 = vmatprep.subr.bf16.mxu0 0
        %1811 = vmatpush1.bf16.msra.mxu0 0
        %1812 = vmatprep.subr.bf16.mxu0 0
        %1813 = vmatpush1.bf16.msra.mxu0 0
        %1814 = vmatprep.subr.bf16.mxu0 0
        %1815 = vmatpush1.bf16.msra.mxu0 0
        %1816 = vmatprep.subr.bf16.mxu0 0
        %1817 = vmatpush1.bf16.msra.mxu0 0
        %1818 = vmatprep.subr.bf16.mxu0 0
        %1819 = vmatpush1.bf16.msra.mxu0 0
        %1820 = vmatprep.subr.bf16.mxu0 0
        %1821 = vmatpush1.bf16.msra.mxu0 0
        %1822 = vmatprep.subr.bf16.mxu0 0
        %1823 = vmatpush1.bf16.msra.mxu0 0
        %1824 = vmatprep.subr.bf16.mxu0 0
        %1825 = vmatpush1.bf16.msra.mxu0 0
        %1826 = vmatprep.mubr.bf16.mxu0 0
        %1827 = vmatmul.mubr.bf16.gmra.mrb[0].mxu0 %v1738
        %v1828 = vpop.f32.mrb[0].mxu0
        %v1829 = vadd.f32 0.0, %v1828
        %v1830 = vpop.f32.mrb[0].mxu0
        %v1831 = vpop.f32.mrb[0].mxu0
        %v1832 = vadd.f32 0.0, %v1831
        %v1833 = vpop.f32.mrb[0].mxu0
        %1834 = vmatprep.mubr.bf16.mxu0 0
        %1835 = vmatmul.mubr.bf16.gmra.mrb[0].mxu0 %v1739
        %v1836 = vpop.f32.mrb[0].mxu0
        %v1837 = vadd.f32 0.0, %v1836
        %v1838 = vpop.f32.mrb[0].mxu0
        %v1839 = vpop.f32.mrb[0].mxu0
        %v1840 = vadd.f32 0.0, %v1839
        %v1841 = vpop.f32.mrb[0].mxu0
        %1842 = vmatprep.mubr.bf16.mxu0 0
        %1843 = vmatmul.mubr.bf16.gmra.mrb[0].mxu0 %v1740
        %v1844 = vpop.f32.mrb[0].mxu0
        %v1845 = vadd.f32 0.0, %v1844
        %v1846 = vpop.f32.mrb[0].mxu0
        %v1847 = vpop.f32.mrb[0].mxu0
        %v1848 = vadd.f32 0.0, %v1847
        %v1849 = vpop.f32.mrb[0].mxu0
        %1850 = vmatprep.mubr.bf16.mxu0 0
        %1851 = vmatmul.mubr.bf16.gmra.mrb[0].mxu0 %v1741
        %v1852 = vpop.f32.mrb[0].mxu0
        %v1853 = vadd.f32 0.0, %v1852
        %v1854 = vpop.f32.mrb[0].mxu0
        %v1855 = vpop.f32.mrb[0].mxu0
        %v1856 = vadd.f32 0.0, %v1855
        %v1857 = vpop.f32.mrb[0].mxu0
        %1858 = vdwg.mxu0
        %v1859 = vadd.f32 %v1525, %v1829
        %v1860 = vadd.f32 %v1526, %v1832
        %v1861 = vadd.f32 %v1527, %v1837
        %v1862 = vadd.f32 %v1528, %v1840
        %v1863 = vadd.f32 %v1529, %v1845
        %v1864 = vadd.f32 %v1530, %v1848
        %v1865 = vadd.f32 %v1531, %v1853
        %v1866 = vadd.f32 %v1532, %v1856
        %v1867 = vld [vmem:[%s1258] sm:$0xe]
        %v1868 = vld [vmem:[%s1258 + $0x8] sm:$0xe]
        %v1869 = vld [vmem:[%s1258 + $0x10] sm:$0xe]
        %v1870 = vld [vmem:[%s1258 + $0x18] sm:$0xe]
        %v1871 = vld [vmem:[%s1258 + $0x20] sm:$0xe]
        %v1872 = vld [vmem:[%s1258 + $0x28] sm:$0xe]
        %v1873 = vld [vmem:[%s1258 + $0x30] sm:$0xe]
        %v1874 = vld [vmem:[%s1258 + $0x38] sm:$0xe]
        %v1875 = vunpack.c.l.bf16 %v1867
        %v1876 = vunpack.c.l.bf16 %v1868
        %v1877 = vunpack.c.l.bf16 %v1869
        %v1878 = vunpack.c.l.bf16 %v1870
        %v1879 = vunpack.c.l.bf16 %v1871
        %v1880 = vunpack.c.l.bf16 %v1872
        %v1881 = vunpack.c.l.bf16 %v1873
        %v1882 = vunpack.c.l.bf16 %v1874
        %v1883 = vmul.f32 %v1875, %v407
        %v1884 = vmul.f32 %v1876, %v407
        %v1885 = vmul.f32 %v1877, %v407
        %v1886 = vmul.f32 %v1878, %v407
        %v1887 = vmul.f32 %v1879, %v407
        %v1888 = vmul.f32 %v1880, %v407
        %v1889 = vmul.f32 %v1881, %v407
        %v1890 = vmul.f32 %v1882, %v407
        %v1891 = vadd.f32 %v1883, %v422
        %v1892 = vadd.f32 %v1884, %v422
        %v1893 = vadd.f32 %v1885, %v422
        %v1894 = vadd.f32 %v1886, %v422
        %v1895 = vadd.f32 %v1887, %v422
        %v1896 = vadd.f32 %v1888, %v422
        %v1897 = vadd.f32 %v1889, %v422
        %v1898 = vadd.f32 %v1890, %v422
        %v1899 = vmax.f32 %v1891, 0.0
        %v1900 = vmax.f32 %v1892, 0.0
        %v1901 = vmax.f32 %v1893, 0.0
        %v1902 = vmax.f32 %v1894, 0.0
        %v1903 = vmax.f32 %v1895, 0.0
        %v1904 = vmax.f32 %v1896, 0.0
        %v1905 = vmax.f32 %v1897, 0.0
        %v1906 = vmax.f32 %v1898, 0.0
        %vm1907 = vmand %vm1320, %vm1002
        %vm1908 = vmand %vm1321, %vm1002
        %vm1909 = vmand %vm1322, %vm1002
        %vm1910 = vmand %vm1323, %vm1002
        %vm1911 = vmand %vm1324, %vm1002
        %vm1912 = vmand %vm1325, %vm1002
        %vm1913 = vmand %vm1326, %vm1002
        %vm1914 = vmand %vm1907, %vm1011
        %vm1915 = vmand %vm1908, %vm1011
        %vm1916 = vmand %vm1909, %vm1011
        %vm1917 = vmand %vm1910, %vm1011
        %vm1918 = vmand %vm1911, %vm1011
        %vm1919 = vmand %vm1912, %vm1011
        %vm1920 = vmand %vm1913, %vm1011
        %v1921 = vsel %vm1914, 1, 0
        %v1922 = vsel %vm1915, 1, 0
        %v1923 = vsel %vm1916, 1, 0
        %v1924 = vsel %vm1917, 1, 0
        %v1925 = vsel %vm1918, 1, 0
        %v1926 = vsel %vm1919, 1, 0
        %v1927 = vsel %vm1920, 1, 0
        %vm1928 = vcmp.eq.s32.totalorder %v1921, 1
        %vm1929 = vcmp.eq.s32.totalorder %v1922, 1
        %vm1930 = vcmp.eq.s32.totalorder %v1923, 1
        %vm1931 = vcmp.eq.s32.totalorder %v1924, 1
        %vm1932 = vcmp.eq.s32.totalorder %v1925, 1
        %vm1933 = vcmp.eq.s32.totalorder %v1926, 1
        %vm1934 = vcmp.eq.s32.totalorder %v1927, 1
        %v1943 = vrot.slane %v1899, 2
        %v1944 = vrot.slane %v1598, 2
        %v1945 = vsel %vm1044, %v1943, %v1944
        %v1946 = vrot.slane %v1900, 2
        %v1947 = vrot.slane %v1600, 2
        %v1948 = vsel %vm1044, %v1946, %v1947
        %v1949 = vrot.slane %v1901, 2
        %v1950 = vrot.slane %v1602, 2
        %v1951 = vsel %vm1044, %v1949, %v1950
        %v1952 = vrot.slane %v1902, 2
        %v1953 = vrot.slane %v1604, 2
        %v1954 = vsel %vm1044, %v1952, %v1953
        %v1955 = vrot.slane %v1903, 2
        %v1956 = vrot.slane %v1606, 2
        %v1957 = vsel %vm1044, %v1955, %v1956
        %v1958 = vrot.slane %v1904, 2
        %v1959 = vrot.slane %v1608, 2
        %v1960 = vsel %vm1044, %v1958, %v1959
        %v1961 = vrot.slane %v1905, 2
        %v1962 = vrot.slane %v1610, 2
        %v1963 = vsel %vm1044, %v1961, %v1962
        %v1964 = vrot.slane %v1906, 2
        %v1965 = vrot.slane %v1612, 2
        %v1966 = vsel %vm1044, %v1964, %v1965
        %v1975 = vsel %vm1029, %v1945, 0.0
        %v1976 = vsel %vm1928, %v1948, 0.0
        %v1977 = vsel %vm1929, %v1951, 0.0
        %v1978 = vsel %vm1930, %v1954, 0.0
        %v1979 = vsel %vm1931, %v1957, 0.0
        %v1980 = vsel %vm1932, %v1960, 0.0
        %v1981 = vsel %vm1933, %v1963, 0.0
        %v1982 = vsel %vm1934, %v1966, 0.0
        %v1983 = vpack.c.bf16 %v1975, %v1975
        %v1984 = vpack.c.bf16 %v1976, %v1976
        %v1985 = vpack.c.bf16 %v1977, %v1977
        %v1986 = vpack.c.bf16 %v1978, %v1978
        %v1987 = vpack.c.bf16 %v1979, %v1979
        %v1988 = vpack.c.bf16 %v1980, %v1980
        %v1989 = vpack.c.bf16 %v1981, %v1981
        %v1990 = vpack.c.bf16 %v1982, %v1982
        %s1991 = scalar_lea.vmem %s354, 320
        %v1992 = vld [vmem:[%s1991] sm:$0xf]
        %v1993 = vld [vmem:[%s1991 + $0x4] sm:$0xf]
        %v1994 = vld [vmem:[%s1991 + $0x8] sm:$0xf]
        %v1995 = vld [vmem:[%s1991 + $0xc] sm:$0xf]
        %v1996 = vld [vmem:[%s1991 + $0x10] sm:$0xf]
        %v1997 = vld [vmem:[%s1991 + $0x14] sm:$0xf]
        %v1998 = vld [vmem:[%s1991 + $0x18] sm:$0xf]
        %v1999 = vld [vmem:[%s1991 + $0x1c] sm:$0xf]
        %v2000 = vld [vmem:[%s1991 + $0x20] sm:$0xf]
        %v2001 = vld [vmem:[%s1991 + $0x24] sm:$0xf]
        %v2002 = vld [vmem:[%s1991 + $0x28] sm:$0xf]
        %v2003 = vld [vmem:[%s1991 + $0x2c] sm:$0xf]
        %v2004 = vld [vmem:[%s1991 + $0x30] sm:$0xf]
        %v2005 = vld [vmem:[%s1991 + $0x34] sm:$0xf]
        %v2006 = vld [vmem:[%s1991 + $0x38] sm:$0xf]
        %v2007 = vld [vmem:[%s1991 + $0x3c] sm:$0xf]
        %v2016 = vunpack.c.l.b16 %v1983
        %v2017 = vunpack.c.l.b16 %v1984
        %v2018 = vunpack.c.l.b16 %v1985
        %v2019 = vunpack.c.l.b16 %v1986
        %v2020 = vunpack.c.l.b16 %v1987
        %v2021 = vunpack.c.l.b16 %v1988
        %v2022 = vunpack.c.l.b16 %v1989
        %v2023 = vunpack.c.l.b16 %v1990
        %v2024 = vpack.c.b16 %v2017, %v2016
        %v2025 = vpack.c.b16 %v2019, %v2018
        %v2026 = vpack.c.b16 %v2021, %v2020
        %v2027 = vpack.c.b16 %v2023, %v2022
        %v2048 = vunpack.c.l.b16 %v1992
        %v2049 = vunpack.c.l.b16 %v1993
        %v2050 = vunpack.c.l.b16 %v1994
        %v2051 = vunpack.c.l.b16 %v1995
        %v2052 = vunpack.c.l.b16 %v1996
        %v2053 = vunpack.c.l.b16 %v1997
        %v2054 = vunpack.c.l.b16 %v1998
        %v2055 = vunpack.c.l.b16 %v1999
        %v2056 = vunpack.c.l.b16 %v2000
        %v2057 = vunpack.c.l.b16 %v2001
        %v2058 = vunpack.c.l.b16 %v2002
        %v2059 = vunpack.c.l.b16 %v2003
        %v2060 = vunpack.c.l.b16 %v2004
        %v2061 = vunpack.c.l.b16 %v2005
        %v2062 = vunpack.c.l.b16 %v2006
        %v2063 = vunpack.c.l.b16 %v2007
        %v2064 = vpack.c.b16 %v2049, %v2048
        %v2065 = vpack.c.b16 %v2051, %v2050
        %v2066 = vpack.c.b16 %v2053, %v2052
        %v2067 = vpack.c.b16 %v2055, %v2054
        %v2068 = vpack.c.b16 %v2057, %v2056
        %v2069 = vpack.c.b16 %v2059, %v2058
        %v2070 = vpack.c.b16 %v2061, %v2060
        %v2071 = vpack.c.b16 %v2063, %v2062
        %2080 = vmatprep.subr.bf16.mxu0 0
        %2081 = vmatpush1.bf16.msra.mxu0 %v2064
        %2082 = vmatprep.subr.bf16.mxu0 0
        %2083 = vmatpush1.bf16.msra.mxu0 %v2065
        %2084 = vmatprep.subr.bf16.mxu0 0
        %2085 = vmatpush1.bf16.msra.mxu0 %v2066
        %2086 = vmatprep.subr.bf16.mxu0 0
        %2087 = vmatpush1.bf16.msra.mxu0 %v2067
        %2088 = vmatprep.subr.bf16.mxu0 0
        %2089 = vmatpush1.bf16.msra.mxu0 %v2068
        %2090 = vmatprep.subr.bf16.mxu0 0
        %2091 = vmatpush1.bf16.msra.mxu0 %v2069
        %2092 = vmatprep.subr.bf16.mxu0 0
        %2093 = vmatpush1.bf16.msra.mxu0 %v2070
        %2094 = vmatprep.subr.bf16.mxu0 0
        %2095 = vmatpush1.bf16.msra.mxu0 %v2071
        %2096 = vmatprep.subr.bf16.mxu0 0
        %2097 = vmatpush1.bf16.msra.mxu0 0
        %2098 = vmatprep.subr.bf16.mxu0 0
        %2099 = vmatpush1.bf16.msra.mxu0 0
        %2100 = vmatprep.subr.bf16.mxu0 0
        %2101 = vmatpush1.bf16.msra.mxu0 0
        %2102 = vmatprep.subr.bf16.mxu0 0
        %2103 = vmatpush1.bf16.msra.mxu0 0
        %2104 = vmatprep.subr.bf16.mxu0 0
        %2105 = vmatpush1.bf16.msra.mxu0 0
        %2106 = vmatprep.subr.bf16.mxu0 0
        %2107 = vmatpush1.bf16.msra.mxu0 0
        %2108 = vmatprep.subr.bf16.mxu0 0
        %2109 = vmatpush1.bf16.msra.mxu0 0
        %2110 = vmatprep.subr.bf16.mxu0 0
        %2111 = vmatpush1.bf16.msra.mxu0 0
        %2112 = vmatprep.mubr.bf16.mxu0 0
        %2113 = vmatmul.mubr.bf16.gmra.mrb[0].mxu0 %v2024
        %v2114 = vpop.f32.mrb[0].mxu0
        %v2115 = vadd.f32 0.0, %v2114
        %v2116 = vpop.f32.mrb[0].mxu0
        %v2117 = vpop.f32.mrb[0].mxu0
        %v2118 = vadd.f32 0.0, %v2117
        %v2119 = vpop.f32.mrb[0].mxu0
        %2120 = vmatprep.mubr.bf16.mxu0 0
        %2121 = vmatmul.mubr.bf16.gmra.mrb[0].mxu0 %v2025
        %v2122 = vpop.f32.mrb[0].mxu0
        %v2123 = vadd.f32 0.0, %v2122
        %v2124 = vpop.f32.mrb[0].mxu0
        %v2125 = vpop.f32.mrb[0].mxu0
        %v2126 = vadd.f32 0.0, %v2125
        %v2127 = vpop.f32.mrb[0].mxu0
        %2128 = vmatprep.mubr.bf16.mxu0 0
        %2129 = vmatmul.mubr.bf16.gmra.mrb[0].mxu0 %v2026
        %v2130 = vpop.f32.mrb[0].mxu0
        %v2131 = vadd.f32 0.0, %v2130
        %v2132 = vpop.f32.mrb[0].mxu0
        %v2133 = vpop.f32.mrb[0].mxu0
        %v2134 = vadd.f32 0.0, %v2133
        %v2135 = vpop.f32.mrb[0].mxu0
        %2136 = vmatprep.mubr.bf16.mxu0 0
        %2137 = vmatmul.mubr.bf16.gmra.mrb[0].mxu0 %v2027
        %v2138 = vpop.f32.mrb[0].mxu0
        %v2139 = vadd.f32 0.0, %v2138
        %v2140 = vpop.f32.mrb[0].mxu0
        %v2141 = vpop.f32.mrb[0].mxu0
        %v2142 = vadd.f32 0.0, %v2141
        %v2143 = vpop.f32.mrb[0].mxu0
        %2144 = vdwg.mxu0
        %v2145 = vadd.f32 %v1859, %v2115
        %v2146 = vadd.f32 %v1860, %v2118
        %v2147 = vadd.f32 %v1861, %v2123
        %v2148 = vadd.f32 %v1862, %v2126
        %v2149 = vadd.f32 %v1863, %v2131
        %v2150 = vadd.f32 %v1864, %v2134
        %v2151 = vadd.f32 %v1865, %v2139
        %v2152 = vadd.f32 %v1866, %v2142
        %s2153 = sadd.s32 %s372, 2
        %s2154 = smul.u32 %s2153, 2
        %s2155 = smul.addr %s2154, 4
        %s2156 = scalar_lea.vmem %s350, %s2155
        %v2157 = vld [vmem:[%s2156] sm:$0xf]
        %v2158 = vld [vmem:[%s2156 + $0x8] sm:$0xf]
        %v2159 = vld [vmem:[%s2156 + $0x10] sm:$0xf]
        %v2160 = vld [vmem:[%s2156 + $0x18] sm:$0xf]
        %v2161 = vld [vmem:[%s2156 + $0x20] sm:$0xf]
        %v2162 = vld [vmem:[%s2156 + $0x28] sm:$0xf]
        %v2163 = vld [vmem:[%s2156 + $0x30] sm:$0xf]
        %v2164 = vld [vmem:[%s2156 + $0x38] sm:$0xf]
        %v2165 = vunpack.c.l.bf16 %v2157
        %v2166 = vunpack.c.l.bf16 %v2158
        %v2167 = vunpack.c.l.bf16 %v2159
        %v2168 = vunpack.c.l.bf16 %v2160
        %v2169 = vunpack.c.l.bf16 %v2161
        %v2170 = vunpack.c.l.bf16 %v2162
        %v2171 = vunpack.c.l.bf16 %v2163
        %v2172 = vunpack.c.l.bf16 %v2164
        %v2173 = vmul.f32 %v2165, %v407
        %v2174 = vmul.f32 %v2166, %v407
        %v2175 = vmul.f32 %v2167, %v407
        %v2176 = vmul.f32 %v2168, %v407
        %v2177 = vmul.f32 %v2169, %v407
        %v2178 = vmul.f32 %v2170, %v407
        %v2179 = vmul.f32 %v2171, %v407
        %v2180 = vmul.f32 %v2172, %v407
        %v2181 = vadd.f32 %v2173, %v422
        %v2182 = vadd.f32 %v2174, %v422
        %v2183 = vadd.f32 %v2175, %v422
        %v2184 = vadd.f32 %v2176, %v422
        %v2185 = vadd.f32 %v2177, %v422
        %v2186 = vadd.f32 %v2178, %v422
        %v2187 = vadd.f32 %v2179, %v422
        %v2188 = vadd.f32 %v2180, %v422
        %v2189 = vmax.f32 %v2181, 0.0
        %v2190 = vmax.f32 %v2182, 0.0
        %v2191 = vmax.f32 %v2183, 0.0
        %v2192 = vmax.f32 %v2184, 0.0
        %v2193 = vmax.f32 %v2185, 0.0
        %v2194 = vmax.f32 %v2186, 0.0
        %v2195 = vmax.f32 %v2187, 0.0
        %v2196 = vmax.f32 %v2188, 0.0
        %v2197 = vadd.s32 %v374, 2
        %v2198 = vadd.s32 %v375, 2
        %v2199 = vadd.s32 %v376, 2
        %v2200 = vadd.s32 %v377, 2
        %v2201 = vadd.s32 %v378, 2
        %v2202 = vadd.s32 %v379, 2
        %v2203 = vadd.s32 %v380, 2
        %vm2204 = vcmp.ge.s32.totalorder %v2197, 1
        %vm2205 = vcmp.ge.s32.totalorder %v2198, 1
        %vm2206 = vcmp.ge.s32.totalorder %v2199, 1
        %vm2207 = vcmp.ge.s32.totalorder %v2200, 1
        %vm2208 = vcmp.ge.s32.totalorder %v2201, 1
        %vm2209 = vcmp.ge.s32.totalorder %v2202, 1
        %vm2210 = vcmp.ge.s32.totalorder %v2203, 1
        %vm2211 = vcmp.lt.s32.totalorder %v2197, 9
        %vm2212 = vcmp.lt.s32.totalorder %v2198, 9
        %vm2213 = vcmp.lt.s32.totalorder %v2199, 9
        %vm2214 = vcmp.lt.s32.totalorder %v2200, 9
        %vm2215 = vcmp.lt.s32.totalorder %v2201, 9
        %vm2216 = vcmp.lt.s32.totalorder %v2202, 9
        %vm2217 = vcmp.lt.s32.totalorder %v2203, 9
        %vm2218 = vmand %vm2204, %vm2211
        %vm2219 = vmand %vm2205, %vm2212
        %vm2220 = vmand %vm2206, %vm2213
        %vm2221 = vmand %vm2207, %vm2214
        %vm2222 = vmand %vm2208, %vm2215
        %vm2223 = vmand %vm2209, %vm2216
        %vm2224 = vmand %vm2210, %vm2217
        %vm2225 = vmand %vm2218, %vm464
        %vm2226 = vmand %vm2219, %vm464
        %vm2227 = vmand %vm2220, %vm464
        %vm2228 = vmand %vm2221, %vm464
        %vm2229 = vmand %vm2222, %vm464
        %vm2230 = vmand %vm2223, %vm464
        %vm2231 = vmand %vm2224, %vm464
        %vm2232 = vmand %vm2225, %vm473
        %vm2233 = vmand %vm2226, %vm473
        %vm2234 = vmand %vm2227, %vm473
        %vm2235 = vmand %vm2228, %vm473
        %vm2236 = vmand %vm2229, %vm473
        %vm2237 = vmand %vm2230, %vm473
        %vm2238 = vmand %vm2231, %vm473
        %v2239 = vsel %vm2232, 1, 0
        %v2240 = vsel %vm2233, 1, 0
        %v2241 = vsel %vm2234, 1, 0
        %v2242 = vsel %vm2235, 1, 0
        %v2243 = vsel %vm2236, 1, 0
        %v2244 = vsel %vm2237, 1, 0
        %v2245 = vsel %vm2238, 1, 0
        %vm2246 = vcmp.eq.s32.totalorder %v2239, 1
        %vm2247 = vcmp.eq.s32.totalorder %v2240, 1
        %vm2248 = vcmp.eq.s32.totalorder %v2241, 1
        %vm2249 = vcmp.eq.s32.totalorder %v2242, 1
        %vm2250 = vcmp.eq.s32.totalorder %v2243, 1
        %vm2251 = vcmp.eq.s32.totalorder %v2244, 1
        %vm2252 = vcmp.eq.s32.totalorder %v2245, 1
        %v2253 = vsel %vm492, %v2189, 0.0
        %v2254 = vsel %vm2246, %v2190, 0.0
        %v2255 = vsel %vm2247, %v2191, 0.0
        %v2256 = vsel %vm2248, %v2192, 0.0
        %v2257 = vsel %vm2249, %v2193, 0.0
        %v2258 = vsel %vm2250, %v2194, 0.0
        %v2259 = vsel %vm2251, %v2195, 0.0
        %v2260 = vsel %vm2252, %v2196, 0.0
        %v2261 = vpack.c.bf16 %v2253, %v2253
        %v2262 = vpack.c.bf16 %v2254, %v2254
        %v2263 = vpack.c.bf16 %v2255, %v2255
        %v2264 = vpack.c.bf16 %v2256, %v2256
        %v2265 = vpack.c.bf16 %v2257, %v2257
        %v2266 = vpack.c.bf16 %v2258, %v2258
        %v2267 = vpack.c.bf16 %v2259, %v2259
        %v2268 = vpack.c.bf16 %v2260, %v2260
        %s2269 = scalar_lea.vmem %s354, 384
        %v2270 = vld [vmem:[%s2269] sm:$0xf]
        %v2271 = vld [vmem:[%s2269 + $0x4] sm:$0xf]
        %v2272 = vld [vmem:[%s2269 + $0x8] sm:$0xf]
        %v2273 = vld [vmem:[%s2269 + $0xc] sm:$0xf]
        %v2274 = vld [vmem:[%s2269 + $0x10] sm:$0xf]
        %v2275 = vld [vmem:[%s2269 + $0x14] sm:$0xf]
        %v2276 = vld [vmem:[%s2269 + $0x18] sm:$0xf]
        %v2277 = vld [vmem:[%s2269 + $0x1c] sm:$0xf]
        %v2278 = vld [vmem:[%s2269 + $0x20] sm:$0xf]
        %v2279 = vld [vmem:[%s2269 + $0x24] sm:$0xf]
        %v2280 = vld [vmem:[%s2269 + $0x28] sm:$0xf]
        %v2281 = vld [vmem:[%s2269 + $0x2c] sm:$0xf]
        %v2282 = vld [vmem:[%s2269 + $0x30] sm:$0xf]
        %v2283 = vld [vmem:[%s2269 + $0x34] sm:$0xf]
        %v2284 = vld [vmem:[%s2269 + $0x38] sm:$0xf]
        %v2285 = vld [vmem:[%s2269 + $0x3c] sm:$0xf]
        %v2294 = vunpack.c.l.b16 %v2261
        %v2295 = vunpack.c.l.b16 %v2262
        %v2296 = vunpack.c.l.b16 %v2263
        %v2297 = vunpack.c.l.b16 %v2264
        %v2298 = vunpack.c.l.b16 %v2265
        %v2299 = vunpack.c.l.b16 %v2266
        %v2300 = vunpack.c.l.b16 %v2267
        %v2301 = vunpack.c.l.b16 %v2268
        %v2302 = vpack.c.b16 %v2295, %v2294
        %v2303 = vpack.c.b16 %v2297, %v2296
        %v2304 = vpack.c.b16 %v2299, %v2298
        %v2305 = vpack.c.b16 %v2301, %v2300
        %v2326 = vunpack.c.l.b16 %v2270
        %v2327 = vunpack.c.l.b16 %v2271
        %v2328 = vunpack.c.l.b16 %v2272
        %v2329 = vunpack.c.l.b16 %v2273
        %v2330 = vunpack.c.l.b16 %v2274
        %v2331 = vunpack.c.l.b16 %v2275
        %v2332 = vunpack.c.l.b16 %v2276
        %v2333 = vunpack.c.l.b16 %v2277
        %v2334 = vunpack.c.l.b16 %v2278
        %v2335 = vunpack.c.l.b16 %v2279
        %v2336 = vunpack.c.l.b16 %v2280
        %v2337 = vunpack.c.l.b16 %v2281
        %v2338 = vunpack.c.l.b16 %v2282
        %v2339 = vunpack.c.l.b16 %v2283
        %v2340 = vunpack.c.l.b16 %v2284
        %v2341 = vunpack.c.l.b16 %v2285
        %v2342 = vpack.c.b16 %v2327, %v2326
        %v2343 = vpack.c.b16 %v2329, %v2328
        %v2344 = vpack.c.b16 %v2331, %v2330
        %v2345 = vpack.c.b16 %v2333, %v2332
        %v2346 = vpack.c.b16 %v2335, %v2334
        %v2347 = vpack.c.b16 %v2337, %v2336
        %v2348 = vpack.c.b16 %v2339, %v2338
        %v2349 = vpack.c.b16 %v2341, %v2340
        %2358 = vmatprep.subr.bf16.mxu0 0
        %2359 = vmatpush1.bf16.msra.mxu0 %v2342
        %2360 = vmatprep.subr.bf16.mxu0 0
        %2361 = vmatpush1.bf16.msra.mxu0 %v2343
        %2362 = vmatprep.subr.bf16.mxu0 0
        %2363 = vmatpush1.bf16.msra.mxu0 %v2344
        %2364 = vmatprep.subr.bf16.mxu0 0
        %2365 = vmatpush1.bf16.msra.mxu0 %v2345
        %2366 = vmatprep.subr.bf16.mxu0 0
        %2367 = vmatpush1.bf16.msra.mxu0 %v2346
        %2368 = vmatprep.subr.bf16.mxu0 0
        %2369 = vmatpush1.bf16.msra.mxu0 %v2347
        %2370 = vmatprep.subr.bf16.mxu0 0
        %2371 = vmatpush1.bf16.msra.mxu0 %v2348
        %2372 = vmatprep.subr.bf16.mxu0 0
        %2373 = vmatpush1.bf16.msra.mxu0 %v2349
        %2374 = vmatprep.subr.bf16.mxu0 0
        %2375 = vmatpush1.bf16.msra.mxu0 0
        %2376 = vmatprep.subr.bf16.mxu0 0
        %2377 = vmatpush1.bf16.msra.mxu0 0
        %2378 = vmatprep.subr.bf16.mxu0 0
        %2379 = vmatpush1.bf16.msra.mxu0 0
        %2380 = vmatprep.subr.bf16.mxu0 0
        %2381 = vmatpush1.bf16.msra.mxu0 0
        %2382 = vmatprep.subr.bf16.mxu0 0
        %2383 = vmatpush1.bf16.msra.mxu0 0
        %2384 = vmatprep.subr.bf16.mxu0 0
        %2385 = vmatpush1.bf16.msra.mxu0 0
        %2386 = vmatprep.subr.bf16.mxu0 0
        %2387 = vmatpush1.bf16.msra.mxu0 0
        %2388 = vmatprep.subr.bf16.mxu0 0
        %2389 = vmatpush1.bf16.msra.mxu0 0
        %2390 = vmatprep.mubr.bf16.mxu0 0
        %2391 = vmatmul.mubr.bf16.gmra.mrb[0].mxu0 %v2302
        %v2392 = vpop.f32.mrb[0].mxu0
        %v2393 = vadd.f32 0.0, %v2392
        %v2394 = vpop.f32.mrb[0].mxu0
        %v2395 = vpop.f32.mrb[0].mxu0
        %v2396 = vadd.f32 0.0, %v2395
        %v2397 = vpop.f32.mrb[0].mxu0
        %2398 = vmatprep.mubr.bf16.mxu0 0
        %2399 = vmatmul.mubr.bf16.gmra.mrb[0].mxu0 %v2303
        %v2400 = vpop.f32.mrb[0].mxu0
        %v2401 = vadd.f32 0.0, %v2400
        %v2402 = vpop.f32.mrb[0].mxu0
        %v2403 = vpop.f32.mrb[0].mxu0
        %v2404 = vadd.f32 0.0, %v2403
        %v2405 = vpop.f32.mrb[0].mxu0
        %2406 = vmatprep.mubr.bf16.mxu0 0
        %2407 = vmatmul.mubr.bf16.gmra.mrb[0].mxu0 %v2304
        %v2408 = vpop.f32.mrb[0].mxu0
        %v2409 = vadd.f32 0.0, %v2408
        %v2410 = vpop.f32.mrb[0].mxu0
        %v2411 = vpop.f32.mrb[0].mxu0
        %v2412 = vadd.f32 0.0, %v2411
        %v2413 = vpop.f32.mrb[0].mxu0
        %2414 = vmatprep.mubr.bf16.mxu0 0
        %2415 = vmatmul.mubr.bf16.gmra.mrb[0].mxu0 %v2305
        %v2416 = vpop.f32.mrb[0].mxu0
        %v2417 = vadd.f32 0.0, %v2416
        %v2418 = vpop.f32.mrb[0].mxu0
        %v2419 = vpop.f32.mrb[0].mxu0
        %v2420 = vadd.f32 0.0, %v2419
        %v2421 = vpop.f32.mrb[0].mxu0
        %2422 = vdwg.mxu0
        %v2423 = vadd.f32 %v2145, %v2393
        %v2424 = vadd.f32 %v2146, %v2396
        %v2425 = vadd.f32 %v2147, %v2401
        %v2426 = vadd.f32 %v2148, %v2404
        %v2427 = vadd.f32 %v2149, %v2409
        %v2428 = vadd.f32 %v2150, %v2412
        %v2429 = vadd.f32 %v2151, %v2417
        %v2430 = vadd.f32 %v2152, %v2420
        %v2431 = vld [vmem:[%s2156] sm:$0xf]
        %v2432 = vld [vmem:[%s2156 + $0x4] sm:$0x1]
        %v2433 = vld [vmem:[%s2156 + $0x8] sm:$0xf]
        %v2434 = vld [vmem:[%s2156 + $0xc] sm:$0x1]
        %v2435 = vld [vmem:[%s2156 + $0x10] sm:$0xf]
        %v2436 = vld [vmem:[%s2156 + $0x14] sm:$0x1]
        %v2437 = vld [vmem:[%s2156 + $0x18] sm:$0xf]
        %v2438 = vld [vmem:[%s2156 + $0x1c] sm:$0x1]
        %v2439 = vld [vmem:[%s2156 + $0x20] sm:$0xf]
        %v2440 = vld [vmem:[%s2156 + $0x24] sm:$0x1]
        %v2441 = vld [vmem:[%s2156 + $0x28] sm:$0xf]
        %v2442 = vld [vmem:[%s2156 + $0x2c] sm:$0x1]
        %v2443 = vld [vmem:[%s2156 + $0x30] sm:$0xf]
        %v2444 = vld [vmem:[%s2156 + $0x34] sm:$0x1]
        %v2445 = vld [vmem:[%s2156 + $0x38] sm:$0xf]
        %v2446 = vld [vmem:[%s2156 + $0x3c] sm:$0x1]
        %v2447 = vunpack.c.l.bf16 %v2431
        %v2448 = vunpack.c.l.bf16 %v2432
        %v2449 = vunpack.c.l.bf16 %v2433
        %v2450 = vunpack.c.l.bf16 %v2434
        %v2451 = vunpack.c.l.bf16 %v2435
        %v2452 = vunpack.c.l.bf16 %v2436
        %v2453 = vunpack.c.l.bf16 %v2437
        %v2454 = vunpack.c.l.bf16 %v2438
        %v2455 = vunpack.c.l.bf16 %v2439
        %v2456 = vunpack.c.l.bf16 %v2440
        %v2457 = vunpack.c.l.bf16 %v2441
        %v2458 = vunpack.c.l.bf16 %v2442
        %v2459 = vunpack.c.l.bf16 %v2443
        %v2460 = vunpack.c.l.bf16 %v2444
        %v2461 = vunpack.c.l.bf16 %v2445
        %v2462 = vunpack.c.l.bf16 %v2446
        %v2463 = vmul.f32 %v2447, %v407
        %v2464 = vmul.f32 %v2448, %v407
        %v2465 = vmul.f32 %v2449, %v407
        %v2466 = vmul.f32 %v2450, %v407
        %v2467 = vmul.f32 %v2451, %v407
        %v2468 = vmul.f32 %v2452, %v407
        %v2469 = vmul.f32 %v2453, %v407
        %v2470 = vmul.f32 %v2454, %v407
        %v2471 = vmul.f32 %v2455, %v407
        %v2472 = vmul.f32 %v2456, %v407
        %v2473 = vmul.f32 %v2457, %v407
        %v2474 = vmul.f32 %v2458, %v407
        %v2475 = vmul.f32 %v2459, %v407
        %v2476 = vmul.f32 %v2460, %v407
        %v2477 = vmul.f32 %v2461, %v407
        %v2478 = vmul.f32 %v2462, %v407
        %v2479 = vadd.f32 %v2463, %v422
        %v2480 = vadd.f32 %v2464, %v422
        %v2481 = vadd.f32 %v2465, %v422
        %v2482 = vadd.f32 %v2466, %v422
        %v2483 = vadd.f32 %v2467, %v422
        %v2484 = vadd.f32 %v2468, %v422
        %v2485 = vadd.f32 %v2469, %v422
        %v2486 = vadd.f32 %v2470, %v422
        %v2487 = vadd.f32 %v2471, %v422
        %v2488 = vadd.f32 %v2472, %v422
        %v2489 = vadd.f32 %v2473, %v422
        %v2490 = vadd.f32 %v2474, %v422
        %v2491 = vadd.f32 %v2475, %v422
        %v2492 = vadd.f32 %v2476, %v422
        %v2493 = vadd.f32 %v2477, %v422
        %v2494 = vadd.f32 %v2478, %v422
        %v2495 = vmax.f32 %v2479, 0.0
        %v2496 = vmax.f32 %v2480, 0.0
        %v2497 = vmax.f32 %v2481, 0.0
        %v2498 = vmax.f32 %v2482, 0.0
        %v2499 = vmax.f32 %v2483, 0.0
        %v2500 = vmax.f32 %v2484, 0.0
        %v2501 = vmax.f32 %v2485, 0.0
        %v2502 = vmax.f32 %v2486, 0.0
        %v2503 = vmax.f32 %v2487, 0.0
        %v2504 = vmax.f32 %v2488, 0.0
        %v2505 = vmax.f32 %v2489, 0.0
        %v2506 = vmax.f32 %v2490, 0.0
        %v2507 = vmax.f32 %v2491, 0.0
        %v2508 = vmax.f32 %v2492, 0.0
        %v2509 = vmax.f32 %v2493, 0.0
        %v2510 = vmax.f32 %v2494, 0.0
        %vm2511 = vmand %vm2218, %vm571
        %vm2512 = vmand %vm2219, %vm571
        %vm2513 = vmand %vm2220, %vm571
        %vm2514 = vmand %vm2221, %vm571
        %vm2515 = vmand %vm2222, %vm571
        %vm2516 = vmand %vm2223, %vm571
        %vm2517 = vmand %vm2224, %vm571
        %vm2518 = vmand %vm2511, %vm580
        %vm2519 = vmand %vm2512, %vm580
        %vm2520 = vmand %vm2513, %vm580
        %vm2521 = vmand %vm2514, %vm580
        %vm2522 = vmand %vm2515, %vm580
        %vm2523 = vmand %vm2516, %vm580
        %vm2524 = vmand %vm2517, %vm580
        %v2525 = vsel %vm2518, 1, 0
        %v2526 = vsel %vm2519, 1, 0
        %v2527 = vsel %vm2520, 1, 0
        %v2528 = vsel %vm2521, 1, 0
        %v2529 = vsel %vm2522, 1, 0
        %v2530 = vsel %vm2523, 1, 0
        %v2531 = vsel %vm2524, 1, 0
        %vm2532 = vcmp.eq.s32.totalorder %v2525, 1
        %vm2533 = vcmp.eq.s32.totalorder %v2526, 1
        %vm2534 = vcmp.eq.s32.totalorder %v2527, 1
        %vm2535 = vcmp.eq.s32.totalorder %v2528, 1
        %vm2536 = vcmp.eq.s32.totalorder %v2529, 1
        %vm2537 = vcmp.eq.s32.totalorder %v2530, 1
        %vm2538 = vcmp.eq.s32.totalorder %v2531, 1
        %v2555 = vrot.slane %v2495, 1
        %v2556 = vrot.slane %v2496, 1
        %v2557 = vsel %vm621, %v2555, %v2556
        %v2558 = vrot.slane %v2497, 1
        %v2559 = vrot.slane %v2498, 1
        %v2560 = vsel %vm621, %v2558, %v2559
        %v2561 = vrot.slane %v2499, 1
        %v2562 = vrot.slane %v2500, 1
        %v2563 = vsel %vm621, %v2561, %v2562
        %v2564 = vrot.slane %v2501, 1
        %v2565 = vrot.slane %v2502, 1
        %v2566 = vsel %vm621, %v2564, %v2565
        %v2567 = vrot.slane %v2503, 1
        %v2568 = vrot.slane %v2504, 1
        %v2569 = vsel %vm621, %v2567, %v2568
        %v2570 = vrot.slane %v2505, 1
        %v2571 = vrot.slane %v2506, 1
        %v2572 = vsel %vm621, %v2570, %v2571
        %v2573 = vrot.slane %v2507, 1
        %v2574 = vrot.slane %v2508, 1
        %v2575 = vsel %vm621, %v2573, %v2574
        %v2576 = vrot.slane %v2509, 1
        %v2577 = vrot.slane %v2510, 1
        %v2578 = vsel %vm621, %v2576, %v2577
        %v2587 = vsel %vm599, %v2557, 0.0
        %v2588 = vsel %vm2532, %v2560, 0.0
        %v2589 = vsel %vm2533, %v2563, 0.0
        %v2590 = vsel %vm2534, %v2566, 0.0
        %v2591 = vsel %vm2535, %v2569, 0.0
        %v2592 = vsel %vm2536, %v2572, 0.0
        %v2593 = vsel %vm2537, %v2575, 0.0
        %v2594 = vsel %vm2538, %v2578, 0.0
        %v2595 = vpack.c.bf16 %v2587, %v2587
        %v2596 = vpack.c.bf16 %v2588, %v2588
        %v2597 = vpack.c.bf16 %v2589, %v2589
        %v2598 = vpack.c.bf16 %v2590, %v2590
        %v2599 = vpack.c.bf16 %v2591, %v2591
        %v2600 = vpack.c.bf16 %v2592, %v2592
        %v2601 = vpack.c.bf16 %v2593, %v2593
        %v2602 = vpack.c.bf16 %v2594, %v2594
        %s2603 = scalar_lea.vmem %s354, 448
        %v2604 = vld [vmem:[%s2603] sm:$0xf]
        %v2605 = vld [vmem:[%s2603 + $0x4] sm:$0xf]
        %v2606 = vld [vmem:[%s2603 + $0x8] sm:$0xf]
        %v2607 = vld [vmem:[%s2603 + $0xc] sm:$0xf]
        %v2608 = vld [vmem:[%s2603 + $0x10] sm:$0xf]
        %v2609 = vld [vmem:[%s2603 + $0x14] sm:$0xf]
        %v2610 = vld [vmem:[%s2603 + $0x18] sm:$0xf]
        %v2611 = vld [vmem:[%s2603 + $0x1c] sm:$0xf]
        %v2612 = vld [vmem:[%s2603 + $0x20] sm:$0xf]
        %v2613 = vld [vmem:[%s2603 + $0x24] sm:$0xf]
        %v2614 = vld [vmem:[%s2603 + $0x28] sm:$0xf]
        %v2615 = vld [vmem:[%s2603 + $0x2c] sm:$0xf]
        %v2616 = vld [vmem:[%s2603 + $0x30] sm:$0xf]
        %v2617 = vld [vmem:[%s2603 + $0x34] sm:$0xf]
        %v2618 = vld [vmem:[%s2603 + $0x38] sm:$0xf]
        %v2619 = vld [vmem:[%s2603 + $0x3c] sm:$0xf]
        %v2628 = vunpack.c.l.b16 %v2595
        %v2629 = vunpack.c.l.b16 %v2596
        %v2630 = vunpack.c.l.b16 %v2597
        %v2631 = vunpack.c.l.b16 %v2598
        %v2632 = vunpack.c.l.b16 %v2599
        %v2633 = vunpack.c.l.b16 %v2600
        %v2634 = vunpack.c.l.b16 %v2601
        %v2635 = vunpack.c.l.b16 %v2602
        %v2636 = vpack.c.b16 %v2629, %v2628
        %v2637 = vpack.c.b16 %v2631, %v2630
        %v2638 = vpack.c.b16 %v2633, %v2632
        %v2639 = vpack.c.b16 %v2635, %v2634
        %v2660 = vunpack.c.l.b16 %v2604
        %v2661 = vunpack.c.l.b16 %v2605
        %v2662 = vunpack.c.l.b16 %v2606
        %v2663 = vunpack.c.l.b16 %v2607
        %v2664 = vunpack.c.l.b16 %v2608
        %v2665 = vunpack.c.l.b16 %v2609
        %v2666 = vunpack.c.l.b16 %v2610
        %v2667 = vunpack.c.l.b16 %v2611
        %v2668 = vunpack.c.l.b16 %v2612
        %v2669 = vunpack.c.l.b16 %v2613
        %v2670 = vunpack.c.l.b16 %v2614
        %v2671 = vunpack.c.l.b16 %v2615
        %v2672 = vunpack.c.l.b16 %v2616
        %v2673 = vunpack.c.l.b16 %v2617
        %v2674 = vunpack.c.l.b16 %v2618
        %v2675 = vunpack.c.l.b16 %v2619
        %v2676 = vpack.c.b16 %v2661, %v2660
        %v2677 = vpack.c.b16 %v2663, %v2662
        %v2678 = vpack.c.b16 %v2665, %v2664
        %v2679 = vpack.c.b16 %v2667, %v2666
        %v2680 = vpack.c.b16 %v2669, %v2668
        %v2681 = vpack.c.b16 %v2671, %v2670
        %v2682 = vpack.c.b16 %v2673, %v2672
        %v2683 = vpack.c.b16 %v2675, %v2674
        %2692 = vmatprep.subr.bf16.mxu0 0
        %2693 = vmatpush1.bf16.msra.mxu0 %v2676
        %2694 = vmatprep.subr.bf16.mxu0 0
        %2695 = vmatpush1.bf16.msra.mxu0 %v2677
        %2696 = vmatprep.subr.bf16.mxu0 0
        %2697 = vmatpush1.bf16.msra.mxu0 %v2678
        %2698 = vmatprep.subr.bf16.mxu0 0
        %2699 = vmatpush1.bf16.msra.mxu0 %v2679
        %2700 = vmatprep.subr.bf16.mxu0 0
        %2701 = vmatpush1.bf16.msra.mxu0 %v2680
        %2702 = vmatprep.subr.bf16.mxu0 0
        %2703 = vmatpush1.bf16.msra.mxu0 %v2681
        %2704 = vmatprep.subr.bf16.mxu0 0
        %2705 = vmatpush1.bf16.msra.mxu0 %v2682
        %2706 = vmatprep.subr.bf16.mxu0 0
        %2707 = vmatpush1.bf16.msra.mxu0 %v2683
        %2708 = vmatprep.subr.bf16.mxu0 0
        %2709 = vmatpush1.bf16.msra.mxu0 0
        %2710 = vmatprep.subr.bf16.mxu0 0
        %2711 = vmatpush1.bf16.msra.mxu0 0
        %2712 = vmatprep.subr.bf16.mxu0 0
        %2713 = vmatpush1.bf16.msra.mxu0 0
        %2714 = vmatprep.subr.bf16.mxu0 0
        %2715 = vmatpush1.bf16.msra.mxu0 0
        %2716 = vmatprep.subr.bf16.mxu0 0
        %2717 = vmatpush1.bf16.msra.mxu0 0
        %2718 = vmatprep.subr.bf16.mxu0 0
        %2719 = vmatpush1.bf16.msra.mxu0 0
        %2720 = vmatprep.subr.bf16.mxu0 0
        %2721 = vmatpush1.bf16.msra.mxu0 0
        %2722 = vmatprep.subr.bf16.mxu0 0
        %2723 = vmatpush1.bf16.msra.mxu0 0
        %2724 = vmatprep.mubr.bf16.mxu0 0
        %2725 = vmatmul.mubr.bf16.gmra.mrb[0].mxu0 %v2636
        %v2726 = vpop.f32.mrb[0].mxu0
        %v2727 = vadd.f32 0.0, %v2726
        %v2728 = vpop.f32.mrb[0].mxu0
        %v2729 = vpop.f32.mrb[0].mxu0
        %v2730 = vadd.f32 0.0, %v2729
        %v2731 = vpop.f32.mrb[0].mxu0
        %2732 = vmatprep.mubr.bf16.mxu0 0
        %2733 = vmatmul.mubr.bf16.gmra.mrb[0].mxu0 %v2637
        %v2734 = vpop.f32.mrb[0].mxu0
        %v2735 = vadd.f32 0.0, %v2734
        %v2736 = vpop.f32.mrb[0].mxu0
        %v2737 = vpop.f32.mrb[0].mxu0
        %v2738 = vadd.f32 0.0, %v2737
        %v2739 = vpop.f32.mrb[0].mxu0
        %2740 = vmatprep.mubr.bf16.mxu0 0
        %2741 = vmatmul.mubr.bf16.gmra.mrb[0].mxu0 %v2638
        %v2742 = vpop.f32.mrb[0].mxu0
        %v2743 = vadd.f32 0.0, %v2742
        %v2744 = vpop.f32.mrb[0].mxu0
        %v2745 = vpop.f32.mrb[0].mxu0
        %v2746 = vadd.f32 0.0, %v2745
        %v2747 = vpop.f32.mrb[0].mxu0
        %2748 = vmatprep.mubr.bf16.mxu0 0
        %2749 = vmatmul.mubr.bf16.gmra.mrb[0].mxu0 %v2639
        %v2750 = vpop.f32.mrb[0].mxu0
        %v2751 = vadd.f32 0.0, %v2750
        %v2752 = vpop.f32.mrb[0].mxu0
        %v2753 = vpop.f32.mrb[0].mxu0
        %v2754 = vadd.f32 0.0, %v2753
        %v2755 = vpop.f32.mrb[0].mxu0
        %2756 = vdwg.mxu0
        %v2757 = vadd.f32 %v2423, %v2727
        %v2758 = vadd.f32 %v2424, %v2730
        %v2759 = vadd.f32 %v2425, %v2735
        %v2760 = vadd.f32 %v2426, %v2738
        %v2761 = vadd.f32 %v2427, %v2743
        %v2762 = vadd.f32 %v2428, %v2746
        %v2763 = vadd.f32 %v2429, %v2751
        %v2764 = vadd.f32 %v2430, %v2754
        %v2765 = vld [vmem:[%s2156] sm:$0xe]
        %v2766 = vld [vmem:[%s2156 + $0x8] sm:$0xe]
        %v2767 = vld [vmem:[%s2156 + $0x10] sm:$0xe]
        %v2768 = vld [vmem:[%s2156 + $0x18] sm:$0xe]
        %v2769 = vld [vmem:[%s2156 + $0x20] sm:$0xe]
        %v2770 = vld [vmem:[%s2156 + $0x28] sm:$0xe]
        %v2771 = vld [vmem:[%s2156 + $0x30] sm:$0xe]
        %v2772 = vld [vmem:[%s2156 + $0x38] sm:$0xe]
        %v2773 = vunpack.c.l.bf16 %v2765
        %v2774 = vunpack.c.l.bf16 %v2766
        %v2775 = vunpack.c.l.bf16 %v2767
        %v2776 = vunpack.c.l.bf16 %v2768
        %v2777 = vunpack.c.l.bf16 %v2769
        %v2778 = vunpack.c.l.bf16 %v2770
        %v2779 = vunpack.c.l.bf16 %v2771
        %v2780 = vunpack.c.l.bf16 %v2772
        %v2781 = vmul.f32 %v2773, %v407
        %v2782 = vmul.f32 %v2774, %v407
        %v2783 = vmul.f32 %v2775, %v407
        %v2784 = vmul.f32 %v2776, %v407
        %v2785 = vmul.f32 %v2777, %v407
        %v2786 = vmul.f32 %v2778, %v407
        %v2787 = vmul.f32 %v2779, %v407
        %v2788 = vmul.f32 %v2780, %v407
        %v2789 = vadd.f32 %v2781, %v422
        %v2790 = vadd.f32 %v2782, %v422
        %v2791 = vadd.f32 %v2783, %v422
        %v2792 = vadd.f32 %v2784, %v422
        %v2793 = vadd.f32 %v2785, %v422
        %v2794 = vadd.f32 %v2786, %v422
        %v2795 = vadd.f32 %v2787, %v422
        %v2796 = vadd.f32 %v2788, %v422
        %v2797 = vmax.f32 %v2789, 0.0
        %v2798 = vmax.f32 %v2790, 0.0
        %v2799 = vmax.f32 %v2791, 0.0
        %v2800 = vmax.f32 %v2792, 0.0
        %v2801 = vmax.f32 %v2793, 0.0
        %v2802 = vmax.f32 %v2794, 0.0
        %v2803 = vmax.f32 %v2795, 0.0
        %v2804 = vmax.f32 %v2796, 0.0
        %vm2805 = vmand %vm2218, %vm1002
        %vm2806 = vmand %vm2219, %vm1002
        %vm2807 = vmand %vm2220, %vm1002
        %vm2808 = vmand %vm2221, %vm1002
        %vm2809 = vmand %vm2222, %vm1002
        %vm2810 = vmand %vm2223, %vm1002
        %vm2811 = vmand %vm2224, %vm1002
        %vm2812 = vmand %vm2805, %vm1011
        %vm2813 = vmand %vm2806, %vm1011
        %vm2814 = vmand %vm2807, %vm1011
        %vm2815 = vmand %vm2808, %vm1011
        %vm2816 = vmand %vm2809, %vm1011
        %vm2817 = vmand %vm2810, %vm1011
        %vm2818 = vmand %vm2811, %vm1011
        %v2819 = vsel %vm2812, 1, 0
        %v2820 = vsel %vm2813, 1, 0
        %v2821 = vsel %vm2814, 1, 0
        %v2822 = vsel %vm2815, 1, 0
        %v2823 = vsel %vm2816, 1, 0
        %v2824 = vsel %vm2817, 1, 0
        %v2825 = vsel %vm2818, 1, 0
        %vm2826 = vcmp.eq.s32.totalorder %v2819, 1
        %vm2827 = vcmp.eq.s32.totalorder %v2820, 1
        %vm2828 = vcmp.eq.s32.totalorder %v2821, 1
        %vm2829 = vcmp.eq.s32.totalorder %v2822, 1
        %vm2830 = vcmp.eq.s32.totalorder %v2823, 1
        %vm2831 = vcmp.eq.s32.totalorder %v2824, 1
        %vm2832 = vcmp.eq.s32.totalorder %v2825, 1
        %v2841 = vrot.slane %v2797, 2
        %v2842 = vrot.slane %v2496, 2
        %v2843 = vsel %vm1044, %v2841, %v2842
        %v2844 = vrot.slane %v2798, 2
        %v2845 = vrot.slane %v2498, 2
        %v2846 = vsel %vm1044, %v2844, %v2845
        %v2847 = vrot.slane %v2799, 2
        %v2848 = vrot.slane %v2500, 2
        %v2849 = vsel %vm1044, %v2847, %v2848
        %v2850 = vrot.slane %v2800, 2
        %v2851 = vrot.slane %v2502, 2
        %v2852 = vsel %vm1044, %v2850, %v2851
        %v2853 = vrot.slane %v2801, 2
        %v2854 = vrot.slane %v2504, 2
        %v2855 = vsel %vm1044, %v2853, %v2854
        %v2856 = vrot.slane %v2802, 2
        %v2857 = vrot.slane %v2506, 2
        %v2858 = vsel %vm1044, %v2856, %v2857
        %v2859 = vrot.slane %v2803, 2
        %v2860 = vrot.slane %v2508, 2
        %v2861 = vsel %vm1044, %v2859, %v2860
        %v2862 = vrot.slane %v2804, 2
        %v2863 = vrot.slane %v2510, 2
        %v2864 = vsel %vm1044, %v2862, %v2863
        %v2873 = vsel %vm1030, %v2843, 0.0
        %v2874 = vsel %vm2826, %v2846, 0.0
        %v2875 = vsel %vm2827, %v2849, 0.0
        %v2876 = vsel %vm2828, %v2852, 0.0
        %v2877 = vsel %vm2829, %v2855, 0.0
        %v2878 = vsel %vm2830, %v2858, 0.0
        %v2879 = vsel %vm2831, %v2861, 0.0
        %v2880 = vsel %vm2832, %v2864, 0.0
        %v2881 = vpack.c.bf16 %v2873, %v2873
        %v2882 = vpack.c.bf16 %v2874, %v2874
        %v2883 = vpack.c.bf16 %v2875, %v2875
        %v2884 = vpack.c.bf16 %v2876, %v2876
        %v2885 = vpack.c.bf16 %v2877, %v2877
        %v2886 = vpack.c.bf16 %v2878, %v2878
        %v2887 = vpack.c.bf16 %v2879, %v2879
        %v2888 = vpack.c.bf16 %v2880, %v2880
        %s2889 = scalar_lea.vmem %s354, 512
        %v2890 = vld [vmem:[%s2889] sm:$0xf]
        %v2891 = vld [vmem:[%s2889 + $0x4] sm:$0xf]
        %v2892 = vld [vmem:[%s2889 + $0x8] sm:$0xf]
        %v2893 = vld [vmem:[%s2889 + $0xc] sm:$0xf]
        %v2894 = vld [vmem:[%s2889 + $0x10] sm:$0xf]
        %v2895 = vld [vmem:[%s2889 + $0x14] sm:$0xf]
        %v2896 = vld [vmem:[%s2889 + $0x18] sm:$0xf]
        %v2897 = vld [vmem:[%s2889 + $0x1c] sm:$0xf]
        %v2898 = vld [vmem:[%s2889 + $0x20] sm:$0xf]
        %v2899 = vld [vmem:[%s2889 + $0x24] sm:$0xf]
        %v2900 = vld [vmem:[%s2889 + $0x28] sm:$0xf]
        %v2901 = vld [vmem:[%s2889 + $0x2c] sm:$0xf]
        %v2902 = vld [vmem:[%s2889 + $0x30] sm:$0xf]
        %v2903 = vld [vmem:[%s2889 + $0x34] sm:$0xf]
        %v2904 = vld [vmem:[%s2889 + $0x38] sm:$0xf]
        %v2905 = vld [vmem:[%s2889 + $0x3c] sm:$0xf]
        %v2914 = vunpack.c.l.b16 %v2881
        %v2915 = vunpack.c.l.b16 %v2882
        %v2916 = vunpack.c.l.b16 %v2883
        %v2917 = vunpack.c.l.b16 %v2884
        %v2918 = vunpack.c.l.b16 %v2885
        %v2919 = vunpack.c.l.b16 %v2886
        %v2920 = vunpack.c.l.b16 %v2887
        %v2921 = vunpack.c.l.b16 %v2888
        %v2922 = vpack.c.b16 %v2915, %v2914
        %v2923 = vpack.c.b16 %v2917, %v2916
        %v2924 = vpack.c.b16 %v2919, %v2918
        %v2925 = vpack.c.b16 %v2921, %v2920
        %v2946 = vunpack.c.l.b16 %v2890
        %v2947 = vunpack.c.l.b16 %v2891
        %v2948 = vunpack.c.l.b16 %v2892
        %v2949 = vunpack.c.l.b16 %v2893
        %v2950 = vunpack.c.l.b16 %v2894
        %v2951 = vunpack.c.l.b16 %v2895
        %v2952 = vunpack.c.l.b16 %v2896
        %v2953 = vunpack.c.l.b16 %v2897
        %v2954 = vunpack.c.l.b16 %v2898
        %v2955 = vunpack.c.l.b16 %v2899
        %v2956 = vunpack.c.l.b16 %v2900
        %v2957 = vunpack.c.l.b16 %v2901
        %v2958 = vunpack.c.l.b16 %v2902
        %v2959 = vunpack.c.l.b16 %v2903
        %v2960 = vunpack.c.l.b16 %v2904
        %v2961 = vunpack.c.l.b16 %v2905
        %v2962 = vpack.c.b16 %v2947, %v2946
        %v2963 = vpack.c.b16 %v2949, %v2948
        %v2964 = vpack.c.b16 %v2951, %v2950
        %v2965 = vpack.c.b16 %v2953, %v2952
        %v2966 = vpack.c.b16 %v2955, %v2954
        %v2967 = vpack.c.b16 %v2957, %v2956
        %v2968 = vpack.c.b16 %v2959, %v2958
        %v2969 = vpack.c.b16 %v2961, %v2960
        %2978 = vmatprep.subr.bf16.mxu0 0
        %2979 = vmatpush1.bf16.msra.mxu0 %v2962
        %2980 = vmatprep.subr.bf16.mxu0 0
        %2981 = vmatpush1.bf16.msra.mxu0 %v2963
        %2982 = vmatprep.subr.bf16.mxu0 0
        %2983 = vmatpush1.bf16.msra.mxu0 %v2964
        %2984 = vmatprep.subr.bf16.mxu0 0
        %2985 = vmatpush1.bf16.msra.mxu0 %v2965
        %2986 = vmatprep.subr.bf16.mxu0 0
        %2987 = vmatpush1.bf16.msra.mxu0 %v2966
        %2988 = vmatprep.subr.bf16.mxu0 0
        %2989 = vmatpush1.bf16.msra.mxu0 %v2967
        %2990 = vmatprep.subr.bf16.mxu0 0
        %2991 = vmatpush1.bf16.msra.mxu0 %v2968
        %2992 = vmatprep.subr.bf16.mxu0 0
        %2993 = vmatpush1.bf16.msra.mxu0 %v2969
        %2994 = vmatprep.subr.bf16.mxu0 0
        %2995 = vmatpush1.bf16.msra.mxu0 0
        %2996 = vmatprep.subr.bf16.mxu0 0
        %2997 = vmatpush1.bf16.msra.mxu0 0
        %2998 = vmatprep.subr.bf16.mxu0 0
        %2999 = vmatpush1.bf16.msra.mxu0 0
        %3000 = vmatprep.subr.bf16.mxu0 0
        %3001 = vmatpush1.bf16.msra.mxu0 0
        %3002 = vmatprep.subr.bf16.mxu0 0
        %3003 = vmatpush1.bf16.msra.mxu0 0
        %3004 = vmatprep.subr.bf16.mxu0 0
        %3005 = vmatpush1.bf16.msra.mxu0 0
        %3006 = vmatprep.subr.bf16.mxu0 0
        %3007 = vmatpush1.bf16.msra.mxu0 0
        %3008 = vmatprep.subr.bf16.mxu0 0
        %3009 = vmatpush1.bf16.msra.mxu0 0
        %3010 = vmatprep.mubr.bf16.mxu0 0
        %3011 = vmatmul.mubr.bf16.gmra.mrb[0].mxu0 %v2922
        %v3012 = vpop.f32.mrb[0].mxu0
        %v3013 = vadd.f32 0.0, %v3012
        %v3014 = vpop.f32.mrb[0].mxu0
        %v3015 = vpop.f32.mrb[0].mxu0
        %v3016 = vadd.f32 0.0, %v3015
        %v3017 = vpop.f32.mrb[0].mxu0
        %3018 = vmatprep.mubr.bf16.mxu0 0
        %3019 = vmatmul.mubr.bf16.gmra.mrb[0].mxu0 %v2923
        %v3020 = vpop.f32.mrb[0].mxu0
        %v3021 = vadd.f32 0.0, %v3020
        %v3022 = vpop.f32.mrb[0].mxu0
        %v3023 = vpop.f32.mrb[0].mxu0
        %v3024 = vadd.f32 0.0, %v3023
        %v3025 = vpop.f32.mrb[0].mxu0
        %3026 = vmatprep.mubr.bf16.mxu0 0
        %3027 = vmatmul.mubr.bf16.gmra.mrb[0].mxu0 %v2924
        %v3028 = vpop.f32.mrb[0].mxu0
        %v3029 = vadd.f32 0.0, %v3028
        %v3030 = vpop.f32.mrb[0].mxu0
        %v3031 = vpop.f32.mrb[0].mxu0
        %v3032 = vadd.f32 0.0, %v3031
        %v3033 = vpop.f32.mrb[0].mxu0
        %3034 = vmatprep.mubr.bf16.mxu0 0
        %3035 = vmatmul.mubr.bf16.gmra.mrb[0].mxu0 %v2925
        %v3036 = vpop.f32.mrb[0].mxu0
        %v3037 = vadd.f32 0.0, %v3036
        %v3038 = vpop.f32.mrb[0].mxu0
        %v3039 = vpop.f32.mrb[0].mxu0
        %v3040 = vadd.f32 0.0, %v3039
        %v3041 = vpop.f32.mrb[0].mxu0
        %3042 = vdwg.mxu0
        %v3043 = vadd.f32 %v2757, %v3013
        %v3044 = vadd.f32 %v2758, %v3016
        %v3045 = vadd.f32 %v2759, %v3021
        %v3046 = vadd.f32 %v2760, %v3024
        %v3047 = vadd.f32 %v2761, %v3029
        %v3048 = vadd.f32 %v2762, %v3032
        %v3049 = vadd.f32 %v2763, %v3037
        %v3050 = vadd.f32 %v2764, %v3040
        %v3051 = vld [vmem:[%s357] sm:$0x1]
        %v3053 = vlaneseq
        %v3054 = vshrl.u32 %v3053, 7
        %v3055 = vsub.s32 0, %v3054
        %v3056 = vrot.slane %v3051, %v3055
        %v3058 = vadd.f32 %v3043, %v3056
        %v3059 = vadd.f32 %v3044, %v3056
        %v3060 = vadd.f32 %v3045, %v3056
        %v3061 = vadd.f32 %v3046, %v3056
        %v3062 = vadd.f32 %v3047, %v3056
        %v3063 = vadd.f32 %v3048, %v3056
        %v3064 = vadd.f32 %v3049, %v3056
        %v3065 = vadd.f32 %v3050, %v3056
        %v3066 = vpack.c.bf16 %v3059, %v3058
        %v3067 = vpack.c.bf16 %v3061, %v3060
        %v3068 = vpack.c.bf16 %v3063, %v3062
        %v3069 = vpack.c.bf16 %v3065, %v3064
        %v3074 = vunpack.c.l.b16 %v3066
        %v3075 = vunpack.c.h.b16 %v3066
        %v3076 = vunpack.c.l.b16 %v3067
        %v3077 = vunpack.c.h.b16 %v3067
        %v3078 = vunpack.c.l.b16 %v3068
        %v3079 = vunpack.c.h.b16 %v3068
        %v3080 = vunpack.c.l.b16 %v3069
        %v3081 = vunpack.c.h.b16 %v3069
        %v3082 = vpack.c.b16 %v3074, %v3074
        %v3083 = vpack.c.b16 %v3075, %v3075
        %v3084 = vpack.c.b16 %v3076, %v3076
        %v3085 = vpack.c.b16 %v3077, %v3077
        %v3086 = vpack.c.b16 %v3078, %v3078
        %v3087 = vpack.c.b16 %v3079, %v3079
        %v3088 = vpack.c.b16 %v3080, %v3080
        %v3089 = vpack.c.b16 %v3081, %v3081
        %3098 = vst [vmem:[%s369] sm:$0xf] %v3082
        %3099 = vst [vmem:[%s369 + $0x4] sm:$0xf] %v3083
        %3100 = vst [vmem:[%s369 + $0x8] sm:$0xf] %v3084
        %3101 = vst [vmem:[%s369 + $0xc] sm:$0xf] %v3085
        %3102 = vst [vmem:[%s369 + $0x10] sm:$0xf] %v3086
        %3103 = vst [vmem:[%s369 + $0x14] sm:$0xf] %v3087
        %3104 = vst [vmem:[%s369 + $0x18] sm:$0xf] %v3088
        %3105 = vst [vmem:[%s369 + $0x1c] sm:$0xf] %v3089
        %p3106 = scmp.eq.s32.totalorder %s32, 0
        // Predicated region
        $region41: #{resnet_block_forward.8} parent=39 // pred_check
          %p3107 = pneg %p3106
        $region42: #{resnet_block_forward.8} parent=39 // pred_check_branch
          %3109 = sbr.rel (%p3107) target = $region44
        $region43: #{resnet_block_forward.8} parent=39 // pred_region
          %3110 = vst [vmem:[%s339] sm:$0x1] 0.0
          %3111 = vst [vmem:[%s345] sm:$0x1] 0.0
        $region44: #{resnet_block_forward.8} parent=39 // pred_fallthru
          _
        %v3112 = vld [vmem:[%s339] sm:$0x1]
        %v3113 = vadd.f32 %v3058, %v3059
        %v3114 = vadd.f32 %v3113, %v3060
        %v3115 = vadd.f32 %v3114, %v3061
        %v3116 = vadd.f32 %v3115, %v3062
        %v3117 = vadd.f32 %v3116, %v3063
        %v3118 = vadd.f32 %v3117, %v3064
        %v3119 = vadd.f32 %v3118, %v3065
        %v3120 = vrot.slane %v3119, 4
        %v3121 = vadd.f32 %v3119, %v3120
        %v3122 = vrot.slane %v3121, 2
        %v3123 = vadd.f32 %v3121, %v3122
        %v3124 = vrot.slane %v3123, 1
        %v3125 = vadd.f32 %v3123, %v3124
        %v3126 = vadd.f32 %v3112, %v3125
        %3127 = vst [vmem:[%s339] sm:$0x1] %v3126
        %v3128 = vld [vmem:[%s345] sm:$0x1]
        %v3129 = vmul.f32 %v3058, %v3058
        %v3130 = vmul.f32 %v3059, %v3059
        %v3131 = vmul.f32 %v3060, %v3060
        %v3132 = vmul.f32 %v3061, %v3061
        %v3133 = vmul.f32 %v3062, %v3062
        %v3134 = vmul.f32 %v3063, %v3063
        %v3135 = vmul.f32 %v3064, %v3064
        %v3136 = vmul.f32 %v3065, %v3065
        %v3137 = vadd.f32 %v3129, %v3130
        %v3138 = vadd.f32 %v3137, %v3131
        %v3139 = vadd.f32 %v3138, %v3132
        %v3140 = vadd.f32 %v3139, %v3133
        %v3141 = vadd.f32 %v3140, %v3134
        %v3142 = vadd.f32 %v3141, %v3135
        %v3143 = vadd.f32 %v3142, %v3136
        %v3144 = vrot.slane %v3143, 4
        %v3145 = vadd.f32 %v3143, %v3144
        %v3146 = vrot.slane %v3145, 2
        %v3147 = vadd.f32 %v3145, %v3146
        %v3148 = vrot.slane %v3147, 1
        %v3149 = vadd.f32 %v3147, %v3148
        %v3150 = vadd.f32 %v3128, %v3149
        %3151 = vst [vmem:[%s345] sm:$0x1] %v3150
        %s3152 = smul.u32 8, %s32
        %p3153 = scmp.lt.s32.totalorder %s30, 1
        %s3154 = scalar_select %p3153, %s30, 1
        %p3155 = scmp.lt.s32.totalorder %s3152, 7
        %s3156 = scalar_select %p3155, %s3152, 7
        %p3157 = scmp.lt.s32.totalorder %s31, 0
        %s3158 = scalar_select %p3157, %s31, 0
        %s3159 = sadd.s32 %s3158, %s3156
        %s3160 = smul.addr %s3154, 8
        %s3161 = sadd.s32 %s3159, %s3160
        %s3162 = smul.addr %s3161, 4
        %s3163 = scalar_lea.vmem %s5, %s3162
        %s3164 = sand.u32 %s204, 1
        %s3165 = scalar_lea.sflag [#allocation3], %s3164
        %s3166 = sand.u32 %s204, 1
        %s3167 = scalar_lea.vmem [#allocation2], %s3166
        %s3168 = sand.u32 %s232, 1
        %s3169 = scalar_lea.sflag [#allocation5], %s3168
        %s3170 = sand.u32 %s232, 1
        %s3171 = scalar_lea.vmem [#allocation4], %s3170
        // Predicated region
        $region45: #{resnet_block_forward.8} parent=39 // pred_check
          %p3172 = pneg %p186
        $region46: #{resnet_block_forward.8} parent=39 // pred_check_branch
          %3174 = sbr.rel (%p3172) target = $region48
        $region47: #{resnet_block_forward.8} parent=39 // pred_region
          %s3175 = smul.u32 8, %s32
        $region48: #{resnet_block_forward.8} parent=39 // pred_fallthru
          _
        // Predicated region
        $region49: #{resnet_block_forward.8} parent=39 // pred_check
          %p3176 = pneg %p214
        $region50: #{resnet_block_forward.8} parent=39 // pred_check_branch
          %3178 = sbr.rel (%p3176) target = $region52
        $region51: #{resnet_block_forward.8} parent=39 // pred_region
          %s3180 = ssub.s32 16, 16
          %3181 = vsyncadd %s3165, %s3180
          %s3182 = sadd.s32 %s31, %s30
          %s3183 = smul.addr %s3182, 16
          %s3184 = scalar_lea.hbm %s6, %s3183
          %s3186 = sshll.u32 %s3167, 4
          %s3187 = int_to_ptr.vmem [resolvable:$true] %s3186
          %3189 = dma.vmem_to_hbm [thread:$0]  %s3187, 16, %s3184, %s3165
        $region52: #{resnet_block_forward.8} parent=39 // pred_fallthru
          _
        // Predicated region
        $region53: #{resnet_block_forward.8} parent=39 // pred_check
          %p3190 = pneg %p242
        $region54: #{resnet_block_forward.8} parent=39 // pred_check_branch
          %3192 = sbr.rel (%p3190) target = $region56
        $region55: #{resnet_block_forward.8} parent=39 // pred_region
          %s3194 = ssub.s32 16, 16
          %3195 = vsyncadd %s3169, %s3194
          %s3196 = sadd.s32 %s31, %s30
          %s3197 = smul.addr %s3196, 16
          %s3198 = scalar_lea.hbm %s7, %s3197
          %s3200 = sshll.u32 %s3171, 4
          %s3201 = int_to_ptr.vmem [resolvable:$true] %s3200
          %3203 = dma.vmem_to_hbm [thread:$0]  %s3201, 16, %s3198, %s3169
        $region56: #{resnet_block_forward.8} parent=39 // pred_fallthru
          _
      $region40: #{resnet_block_forward.8} parent=5 // pred_fallthru
        _
      %p3204 = scmp.le.s32.totalorder 2, %s20
      // Predicated region
      $region57: #{resnet_block_forward.8} parent=5 // pred_check
        %p3205 = pneg %p3204
      $region58: #{resnet_block_forward.8} parent=5 // pred_check_branch
        %3207 = sbr.rel (%p3205) target = $region60
      $region59: #{resnet_block_forward.8} parent=5 // pred_region
        %s3208 = ssub.s32 %s20, 2
        // Predicated region
        $region61: #{resnet_block_forward.8} parent=59 // pred_check
          %p3209 = pneg %p192
        $region62: #{resnet_block_forward.8} parent=59 // pred_check_branch
          %3211 = sbr.rel (%p3209) target = $region64
        $region63: #{resnet_block_forward.8} parent=59 // pred_region
          %s3212 = smul.u32 8, %s35
          %p3213 = scmp.lt.s32.totalorder %s33, 1
          %s3214 = scalar_select %p3213, %s33, 1
          %p3215 = scmp.lt.s32.totalorder %s3212, 7
          %s3216 = scalar_select %p3215, %s3212, 7
          %p3217 = scmp.lt.s32.totalorder %s34, 0
          %s3218 = scalar_select %p3217, %s34, 0
          %s3219 = sadd.s32 %s3218, %s3216
          %s3220 = smul.addr %s3214, 8
          %s3221 = sadd.s32 %s3219, %s3220
          %s3222 = smul.addr %s3221, 4
          %s3223 = scalar_lea.vmem %s5, %s3222
        $region64: #{resnet_block_forward.8} parent=59 // pred_fallthru
          _
        // Predicated region
        $region65: #{resnet_block_forward.8} parent=59 // pred_check
          %p3224 = pneg %p220
        $region66: #{resnet_block_forward.8} parent=59 // pred_check_branch
          %3226 = sbr.rel (%p3224) target = $region68
        $region67: #{resnet_block_forward.8} parent=59 // pred_region
          %s3227 = sand.u32 %s205, 1
          %s3228 = scalar_lea.sflag [#allocation3], %s3227
          %s3229 = sand.u32 %s205, 1
          %s3230 = scalar_lea.vmem [#allocation2], %s3229
          %3231 = dma.done %s3228, 16
        $region68: #{resnet_block_forward.8} parent=59 // pred_fallthru
          _
        // Predicated region
        $region69: #{resnet_block_forward.8} parent=59 // pred_check
          %p3232 = pneg %p248
        $region70: #{resnet_block_forward.8} parent=59 // pred_check_branch
          %3234 = sbr.rel (%p3232) target = $region72
        $region71: #{resnet_block_forward.8} parent=59 // pred_region
          %s3235 = sand.u32 %s233, 1
          %s3236 = scalar_lea.sflag [#allocation5], %s3235
          %s3237 = sand.u32 %s233, 1
          %s3238 = scalar_lea.vmem [#allocation4], %s3237
          %3239 = dma.done %s3236, 16
        $region72: #{resnet_block_forward.8} parent=59 // pred_fallthru
          _
      $region60: #{resnet_block_forward.8} parent=5 // pred_fallthru
        _
    $region6: #{resnet_block_forward.8} parent=1 // loop_footer
      %s24 = sadd.s32 1, %s20
    $region7: #{resnet_block_forward.8} parent=1 // loop_footer_branch
      %19 = sbr.rel target = $region3
    $region8: #{resnet_block_forward.8} parent=1 // loop_exit
      _
    %3240 = vsyncpa [#allocation3], 1
    %s3241 = scalar_lea.sflag [#allocation3], 1
    %3242 = vsyncpa %s3241, 1
    %3243 = vsyncpa [#allocation5], 1
    %s3244 = scalar_lea.sflag [#allocation5], 1
    %3245 = vsyncpa %s3244, 1

</llo_original>
